<compile_context>
chip_gen: v5e
topology: v5e:2x2
jax: 0.10.0
libtpu: 0.0.40
codegen_flags: <defaults>
</compile_context>

<pallas_src>
import jax
import jax.numpy as jnp
from jax import lax
from jax.experimental import pallas as pl
from jax.experimental.pallas import tpu as pltpu


# ------------------------------ Pallas kernel -------------------------------


def _pick_rb(oh, ow):
    # Row-block height: a divisor of OH chosen so the matmul lane width RB*OW is
    # as large as possible but <= 256 (keeps the in-register rhs footprint sane);
    # full OH when it cannot be halved further.
    rb = oh
    while rb % 2 == 0 and rb * ow > 256:
        rb //= 2
    return rb


def _make_conv_kernel(K, RB, n_blocks, OW, leaky, add_bias, emit_stats):
    """Fused conv: in-register im2col + one matmul / one lane-dense store per
    row block + bias/LeakyReLU epilogue + BN partial stats (f32)."""
    nrows = RB + K - 1
    lane_w = RB * OW

    def kernel(*refs):
        idx = 0
        x_ref = refs[idx]; idx += 1
        w_ref = refs[idx]; idx += 1
        b_ref = None
        if add_bias:
            b_ref = refs[idx]; idx += 1
        y_ref = refs[idx]; idx += 1
        stats_ref = refs[idx] if emit_stats else None

        w = w_ref[...]                                   # (Cout_p, K*K*Cin_eff) bf16
        ssum = ssq = None

        for blk in range(n_blocks):                      # static inner loop (1-4 iters)
            r0 = blk * RB
            # Hoisted row loads + shifted slices: one per (input row, lane offset),
            # reused by the K output rows that touch each input row.
            rows = [x_ref[r0 + t] for t in range(nrows)]             # (Cin_eff, Win)
            shifted = [[rows[t][:, b:b + OW] for b in range(K)] for t in range(nrows)]
            # One (K*K*Cin_eff, RB*OW) rhs per block: sublane-concat of the K*K taps
            # of each output row, lane-concat of the RB output rows.
            row_blocks = [
                jnp.concatenate(
                    [shifted[r + a][b] for a in range(K) for b in range(K)], axis=0)
                for r in range(RB)
            ]
            rhs = jnp.concatenate(row_blocks, axis=1) if RB > 1 else row_blocks[0]

            acc = jnp.dot(w, rhs, preferred_element_type=jnp.float32)  # (Cout_p, RB*OW)
            if add_bias:
                acc = acc + b_ref[...]                   # (Cout_p, 1) broadcast
            if leaky:
                acc = jnp.where(acc > 0, acc, 0.2 * acc)

            # single lane-dense store per block (256-lane aligned slabs on big layers)
            y_ref[0, :, blk * lane_w:(blk + 1) * lane_w] = acc.astype(y_ref.dtype)

            if emit_stats:
                s1 = jnp.sum(acc, axis=1, keepdims=True)
                s2 = jnp.sum(acc * acc, axis=1, keepdims=True)
                ssum = s1 if ssum is None else ssum + s1
                ssq = s2 if ssq is None else ssq + s2

        if emit_stats:
            # accumulate in registers, store once per grid step: (Cout_p, 2)
            stats_ref[0] = jnp.concatenate([ssum, ssq], axis=1)

    return kernel


def conv_pallas(x_prep, wm, bias, n_batch, K, leaky, emit_stats,
                out_dtype=jnp.bfloat16):
    """x_prep: (N*Hin, Cin_eff, Win) bf16 prepared input; wm: (Cout_p, K*K*Cin_eff)."""
    NH, cin_eff, win = x_prep.shape
    hin = NH // n_batch
    cout_p, kkc = wm.shape
    assert kkc == K * K * cin_eff
    oh, ow = hin - K + 1, win - K + 1
    rb = _pick_rb(oh, ow)
    n_blocks = oh // rb
    assert rb * n_blocks == oh

    kern = _make_conv_kernel(K, rb, n_blocks, ow, leaky, bias is not None, emit_stats)

    in_specs = [
        # one whole image per grid step (all row blocks looped inside the kernel)
        pl.BlockSpec((hin, cin_eff, win), lambda n: (n, 0, 0)),
        pl.BlockSpec((cout_p, kkc), lambda n: (0, 0)),
    ]
    args = [x_prep, wm]
    if bias is not None:
        in_specs.append(pl.BlockSpec((cout_p, 1), lambda n: (0, 0)))
        args.append(bias)

    y_shape = jax.ShapeDtypeStruct((n_batch, cout_p, oh * ow), out_dtype)
    y_spec = pl.BlockSpec((1, cout_p, oh * ow), lambda n: (n, 0, 0))
    if emit_stats:
        out_shape = (y_shape,
                     jax.ShapeDtypeStruct((n_batch, cout_p, 2), jnp.float32))
        out_specs = (y_spec, pl.BlockSpec((1, cout_p, 2), lambda n: (n, 0, 0)))
    else:
        out_shape = y_shape
        out_specs = y_spec

    out = pl.pallas_call(
        kern,
        grid=(n_batch,),
        in_specs=in_specs,
        out_specs=out_specs,
        out_shape=out_shape,
        compiler_params=pltpu.CompilerParams(
            dimension_semantics=("parallel",),           # 2 TCs on v7x: 1 image each
            vmem_limit_bytes=32 * 1024 * 1024),
    )(*args)

    if emit_stats:
        return out[0], out[1], oh, ow
    return out, None, oh, ow


# ------------------------------ XLA glue (1x) --------------------------------


def prepare_input(y_nchw, scale, shift, leaky, stride):
    """Fused: previous block's BN affine + LeakyReLU + pad + (space-to-depth) + bf16.

    Pure elementwise + layout work, ~1x the activation size (no im2col blowup).
    """
    x = y_nchw
    if scale is not None:
        x = x * scale.reshape(1, -1, 1, 1) + shift.reshape(1, -1, 1, 1)
    if leaky:
        x = jnp.where(x > 0, x, 0.2 * x)
    x = jnp.pad(x, ((0, 0), (0, 0), (1, 1), (1, 1)))
    n, c, hp, wp = x.shape
    if stride == 2:
        assert hp % 2 == 0 and wp % 2 == 0
        h2, w2 = hp // 2, wp // 2
        x = x.reshape(n, c, h2, 2, w2, 2)
        x = jnp.transpose(x, (0, 2, 3, 5, 1, 4))      # (n, h2, dy, dx, c, w2)
        x = x.reshape(n * h2, 4 * c, w2)              # stride-2 4x4 -> stride-1 2x2
    else:
        x = jnp.transpose(x, (0, 2, 1, 3))            # (n, hp, c, wp)
        x = x.reshape(n * hp, c, wp)
    return x.astype(jnp.bfloat16)


def _prep_w(w_oihw, stride, cout_pad=None):
    cout, cin, kh, kw = w_oihw.shape
    if stride == 2:
        w6 = w_oihw.reshape(cout, cin, 2, 2, 2, 2)    # (co, ci, A, dy, B, dx)
        wt = jnp.transpose(w6, (0, 2, 4, 3, 5, 1))    # (co, A, B, dy, dx, ci)
        wm = wt.reshape(cout, kh * kw * cin)
    else:
        wt = jnp.transpose(w_oihw, (0, 2, 3, 1))      # (co, i, j, ci)
        wm = wt.reshape(cout, kh * kw * cin)
    if cout_pad is not None and cout_pad > cout:
        wm = jnp.pad(wm, ((0, cout_pad - cout), (0, 0)))
    return wm.astype(jnp.bfloat16)


def bn_scale_shift(stats, gamma, beta, count, eps=1e-5):
    # Finalize the per-image (sum, sumsq) partials emitted by the conv kernel.
    # TODO(synk): single-pass E[x^2]-E[x]^2 in f32; fine at these magnitudes.
    s1 = jnp.sum(stats[..., 0], axis=0)
    s2 = jnp.sum(stats[..., 1], axis=0)
    mean = s1 / count
    var = jnp.maximum(s2 / count - mean * mean, 0.0)
    scale = gamma / jnp.sqrt(var + eps)
    shift = beta - mean * scale
    return scale, shift


# ----------------------------- parameters ------------------------------------


def make_params(key, input_nc, ndf, n_layers=3):
    """Raw PyTorch-layout parameters (weights rounded to bf16-representable f32)."""
    kw = 4
    keys = iter(jax.random.split(key, 4 * n_layers + 8))

    def bf16r(a):
        return a.astype(jnp.bfloat16).astype(jnp.float32)

    def conv_w(cout, cin):
        return bf16r(0.1 * jax.random.normal(next(keys), (cout, cin, kw, kw), jnp.float32))

    params = {"w0": conv_w(ndf, input_nc),
              "b0": 0.05 * jax.random.normal(next(keys), (ndf,), jnp.float32)}

    nf_mult = 1
    chans = []
    for n in range(1, n_layers):
        nf_prev, nf_mult = nf_mult, min(2 ** n, 8)
        chans.append((ndf * nf_prev, ndf * nf_mult))
    nf_prev, nf_mult = nf_mult, min(2 ** n_layers, 8)
    chans.append((ndf * nf_prev, ndf * nf_mult))

    mid = []
    for cin, cout in chans:
        mid.append({"w": conv_w(cout, cin),
                    "gamma": 1.0 + 0.1 * jax.random.normal(next(keys), (cout,), jnp.float32),
                    "beta": 0.05 * jax.random.normal(next(keys), (cout,), jnp.float32)})
    params["mid"] = mid
    params["wf"] = conv_w(1, ndf * nf_mult)
    params["bf"] = 0.05 * jax.random.normal(next(keys), (1,), jnp.float32)
    return params


def prepare_params(raw):
    """One-time weight reshuffle / padding / bf16 cast (hoisted out of forward).

    NB: strides are NOT stored as pytree leaves (they would become tracers under
    jit); they are derived positionally, matching the PyTorch module.
    """
    prep = {"w0": {"wm": _prep_w(raw["w0"], stride=2),
                   "b": raw["b0"].reshape(-1, 1).astype(jnp.float32)}}
    n_mid = len(raw["mid"])
    mids = []
    for i, blk in enumerate(raw["mid"]):
        stride = 2 if i < n_mid - 1 else 1
        mids.append({"wm": _prep_w(blk["w"], stride),
                     "gamma": blk["gamma"], "beta": blk["beta"]})
    prep["mid"] = mids
    cout_p = 8  # pad the final Cout=1 to 8 sublanes; sliced back outside
    prep["wf"] = {"wm": _prep_w(raw["wf"], stride=1, cout_pad=cout_p),
                  "b": jnp.pad(raw["bf"], (0, cout_p - raw["bf"].shape[0]))
                          .reshape(-1, 1).astype(jnp.float32)}
    return prep


# ----------------------------- full forward ----------------------------------


def pallas_forward(x_nchw, prep):
    n_batch = x_nchw.shape[0]

    # layer 0: conv(stride 2) + bias + LeakyReLU fused in the kernel epilogue
    x0 = prepare_input(x_nchw.astype(jnp.float32), None, None, False, 2)
    y, _, oh, ow = conv_pallas(x0, prep["w0"]["wm"], prep["w0"]["b"], n_batch,
                               K=2, leaky=True, emit_stats=False)

    # mid blocks: conv with fused BN partial stats; the BN affine + LeakyReLU of
    # block i is folded into the prepare step of layer i+1.
    scale = shift = None
    n_mid = len(prep["mid"])
    for i, blk in enumerate(prep["mid"]):
        stride = 2 if i < n_mid - 1 else 1
        k = 2 if stride == 2 else 4
        y4 = y.reshape(n_batch, -1, oh, ow)
        xk = prepare_input(y4, scale, shift, leaky=scale is not None, stride=stride)
        y, stats, oh, ow = conv_pallas(xk, blk["wm"], None, n_batch,
                                       K=k, leaky=False, emit_stats=True)
        scale, shift = bn_scale_shift(stats, blk["gamma"], blk["beta"],
                                      n_batch * oh * ow)

    # final conv: last BN + LeakyReLU folded into prepare, conv + bias in kernel
    y4 = y.reshape(n_batch, -1, oh, ow)
    xf = prepare_input(y4, scale, shift, True, 1)
    yf, _, ohf, owf = conv_pallas(xf, prep["wf"]["wm"], prep["wf"]["b"], n_batch,
                                  K=4, leaky=False, emit_stats=False,
                                  out_dtype=jnp.float32)
    return yf[:, :1, :].reshape(n_batch, 1, ohf, owf)


# --------------------------- pure-JAX reference -------------------------------


def ref_forward(x, params):
    def conv(x, w, b, stride):
        y = lax.conv_general_dilated(
            x, w, (stride, stride), [(1, 1), (1, 1)],
            dimension_numbers=("NCHW", "OIHW", "NCHW"))
        if b is not None:
            y = y + b.reshape(1, -1, 1, 1)
        return y

    def bn(x, g, b):
        mean = jnp.mean(x, axis=(0, 2, 3), keepdims=True)
        var = jnp.mean((x - mean) ** 2, axis=(0, 2, 3), keepdims=True)
        return (x - mean) / jnp.sqrt(var + 1e-5) * g.reshape(1, -1, 1, 1) \
            + b.reshape(1, -1, 1, 1)

    def lrelu(x):
        return jnp.where(x > 0, x, 0.2 * x)

    x = lrelu(conv(x, params["w0"], params["b0"], 2))
    n_mid = len(params["mid"])
    for i, blk in enumerate(params["mid"]):
        stride = 2 if i < n_mid - 1 else 1
        x = lrelu(bn(conv(x, blk["w"], None, stride), blk["gamma"], blk["beta"]))
    return conv(x, params["wf"], params["bf"], 1)


# --------------------------------- driver -------------------------------------


if __name__ == "__main__":
    key = jax.random.PRNGKey(0)
    k_x, k_p = jax.random.split(key)

    # spatial=64 so the final PatchGAN conv output is non-empty (16 would give
    # a zero-sized last layer and a vacuous check).
    batch, input_nc, spatial, ndf = 2, 4, 64, 8
    x = jax.random.normal(k_x, (batch, input_nc, spatial, spatial), jnp.float32)
    x = x.astype(jnp.bfloat16).astype(jnp.float32)  # bf16-exact input -> tight check

    raw_params = make_params(k_p, input_nc, ndf, n_layers=3)
    prep_params = prepare_params(raw_params)

    fwd = jax.jit(pallas_forward)
    out = jax.block_until_ready(fwd(x, prep_params))

    ref = ref_forward(x, raw_params)
    assert out.shape == ref.shape, (out.shape, ref.shape)
    err = float(jnp.max(jnp.abs(out - ref)))
    scl = float(jnp.max(jnp.abs(ref)))
    # tolerance covers bf16 matmul operands + bf16 intermediate activation storage
    assert err <= 0.08 * scl + 8e-3, (err, scl)

    print("KERNEL_OK")
</pallas_src>

<mosaic_0001>
module attributes {stable_mosaic.version = 11 : i64} {
  func.func @kernel(%arg0: i32, %arg1: memref<33x16x33xbf16, #tpu.memory_space<vmem>>, %arg2: memref<8x64xbf16, #tpu.memory_space<vmem>>, %arg3: memref<8x1xf32, #tpu.memory_space<vmem>>, %arg4: memref<1x8x1024xbf16, #tpu.memory_space<vmem>>) attributes {dimension_semantics = [#tpu.dimension_semantics<parallel>], iteration_bounds = array<i64: 2>, scalar_prefetch = 0 : i64, scratch_operands = 0 : i64, tpu.core_type = #tpu.core_type<tc>, window_params = [{transform_indices = @transform_0, window_bounds = array<i64: 33, 16, 33>}, {pipeline_mode = #tpu.pipeline_mode<synchronous>, transform_indices = @transform_1, window_bounds = array<i64: 8, 64>}, {pipeline_mode = #tpu.pipeline_mode<synchronous>, transform_indices = @transform_2, window_bounds = array<i64: 8, 1>}, {transform_indices = @transform_3, window_bounds = array<i64: 1, 8, 1024>}]} {
    %c0 = arith.constant 0 : index
    %c0_0 = arith.constant 0 : index
    %0 = vector.load %arg2[%c0, %c0_0] : memref<8x64xbf16, #tpu.memory_space<vmem>>, vector<8x64xbf16>
    %c0_1 = arith.constant 0 : index
    %c0_2 = arith.constant 0 : index
    %c0_3 = arith.constant 0 : index
    %1 = vector.load %arg1[%c0_1, %c0_2, %c0_3] : memref<33x16x33xbf16, #tpu.memory_space<vmem>>, vector<1x16x33xbf16>
    %2 = vector.shape_cast %1 : vector<1x16x33xbf16> to vector<16x33xbf16>
    %c1 = arith.constant 1 : index
    %c0_4 = arith.constant 0 : index
    %c0_5 = arith.constant 0 : index
    %3 = vector.load %arg1[%c1, %c0_4, %c0_5] : memref<33x16x33xbf16, #tpu.memory_space<vmem>>, vector<1x16x33xbf16>
    %4 = vector.shape_cast %3 : vector<1x16x33xbf16> to vector<16x33xbf16>
    %c2 = arith.constant 2 : index
    %c0_6 = arith.constant 0 : index
    %c0_7 = arith.constant 0 : index
    %5 = vector.load %arg1[%c2, %c0_6, %c0_7] : memref<33x16x33xbf16, #tpu.memory_space<vmem>>, vector<1x16x33xbf16>
    %6 = vector.shape_cast %5 : vector<1x16x33xbf16> to vector<16x33xbf16>
    %c3 = arith.constant 3 : index
    %c0_8 = arith.constant 0 : index
    %c0_9 = arith.constant 0 : index
    %7 = vector.load %arg1[%c3, %c0_8, %c0_9] : memref<33x16x33xbf16, #tpu.memory_space<vmem>>, vector<1x16x33xbf16>
    %8 = vector.shape_cast %7 : vector<1x16x33xbf16> to vector<16x33xbf16>
    %c4 = arith.constant 4 : index
    %c0_10 = arith.constant 0 : index
    %c0_11 = arith.constant 0 : index
    %9 = vector.load %arg1[%c4, %c0_10, %c0_11] : memref<33x16x33xbf16, #tpu.memory_space<vmem>>, vector<1x16x33xbf16>
    %10 = vector.shape_cast %9 : vector<1x16x33xbf16> to vector<16x33xbf16>
    %c5 = arith.constant 5 : index
    %c0_12 = arith.constant 0 : index
    %c0_13 = arith.constant 0 : index
    %11 = vector.load %arg1[%c5, %c0_12, %c0_13] : memref<33x16x33xbf16, #tpu.memory_space<vmem>>, vector<1x16x33xbf16>
    %12 = vector.shape_cast %11 : vector<1x16x33xbf16> to vector<16x33xbf16>
    %c6 = arith.constant 6 : index
    %c0_14 = arith.constant 0 : index
    %c0_15 = arith.constant 0 : index
    %13 = vector.load %arg1[%c6, %c0_14, %c0_15] : memref<33x16x33xbf16, #tpu.memory_space<vmem>>, vector<1x16x33xbf16>
    %14 = vector.shape_cast %13 : vector<1x16x33xbf16> to vector<16x33xbf16>
    %c7 = arith.constant 7 : index
    %c0_16 = arith.constant 0 : index
    %c0_17 = arith.constant 0 : index
    %15 = vector.load %arg1[%c7, %c0_16, %c0_17] : memref<33x16x33xbf16, #tpu.memory_space<vmem>>, vector<1x16x33xbf16>
    %16 = vector.shape_cast %15 : vector<1x16x33xbf16> to vector<16x33xbf16>
    %c8 = arith.constant 8 : index
    %c0_18 = arith.constant 0 : index
    %c0_19 = arith.constant 0 : index
    %17 = vector.load %arg1[%c8, %c0_18, %c0_19] : memref<33x16x33xbf16, #tpu.memory_space<vmem>>, vector<1x16x33xbf16>
    %18 = vector.shape_cast %17 : vector<1x16x33xbf16> to vector<16x33xbf16>
    %19 = vector.extract_strided_slice %2 {offsets = [0, 0], sizes = [16, 32], strides = [1, 1]} : vector<16x33xbf16> to vector<16x32xbf16>
    %20 = vector.extract_strided_slice %2 {offsets = [0, 1], sizes = [16, 32], strides = [1, 1]} : vector<16x33xbf16> to vector<16x32xbf16>
    %21 = vector.extract_strided_slice %4 {offsets = [0, 0], sizes = [16, 32], strides = [1, 1]} : vector<16x33xbf16> to vector<16x32xbf16>
    %22 = vector.extract_strided_slice %4 {offsets = [0, 1], sizes = [16, 32], strides = [1, 1]} : vector<16x33xbf16> to vector<16x32xbf16>
    %23 = vector.extract_strided_slice %6 {offsets = [0, 0], sizes = [16, 32], strides = [1, 1]} : vector<16x33xbf16> to vector<16x32xbf16>
    %24 = vector.extract_strided_slice %6 {offsets = [0, 1], sizes = [16, 32], strides = [1, 1]} : vector<16x33xbf16> to vector<16x32xbf16>
    %25 = vector.extract_strided_slice %8 {offsets = [0, 0], sizes = [16, 32], strides = [1, 1]} : vector<16x33xbf16> to vector<16x32xbf16>
    %26 = vector.extract_strided_slice %8 {offsets = [0, 1], sizes = [16, 32], strides = [1, 1]} : vector<16x33xbf16> to vector<16x32xbf16>
    %27 = vector.extract_strided_slice %10 {offsets = [0, 0], sizes = [16, 32], strides = [1, 1]} : vector<16x33xbf16> to vector<16x32xbf16>
    %28 = vector.extract_strided_slice %10 {offsets = [0, 1], sizes = [16, 32], strides = [1, 1]} : vector<16x33xbf16> to vector<16x32xbf16>
    %29 = vector.extract_strided_slice %12 {offsets = [0, 0], sizes = [16, 32], strides = [1, 1]} : vector<16x33xbf16> to vector<16x32xbf16>
    %30 = vector.extract_strided_slice %12 {offsets = [0, 1], sizes = [16, 32], strides = [1, 1]} : vector<16x33xbf16> to vector<16x32xbf16>
    %31 = vector.extract_strided_slice %14 {offsets = [0, 0], sizes = [16, 32], strides = [1, 1]} : vector<16x33xbf16> to vector<16x32xbf16>
    %32 = vector.extract_strided_slice %14 {offsets = [0, 1], sizes = [16, 32], strides = [1, 1]} : vector<16x33xbf16> to vector<16x32xbf16>
    %33 = vector.extract_strided_slice %16 {offsets = [0, 0], sizes = [16, 32], strides = [1, 1]} : vector<16x33xbf16> to vector<16x32xbf16>
    %34 = vector.extract_strided_slice %16 {offsets = [0, 1], sizes = [16, 32], strides = [1, 1]} : vector<16x33xbf16> to vector<16x32xbf16>
    %35 = vector.extract_strided_slice %18 {offsets = [0, 0], sizes = [16, 32], strides = [1, 1]} : vector<16x33xbf16> to vector<16x32xbf16>
    %36 = vector.extract_strided_slice %18 {offsets = [0, 1], sizes = [16, 32], strides = [1, 1]} : vector<16x33xbf16> to vector<16x32xbf16>
    %37 = tpu.concatenate %19, %20, %21, %22 in 0 : vector<16x32xbf16>, vector<16x32xbf16>, vector<16x32xbf16>, vector<16x32xbf16> -> vector<64x32xbf16>
    %38 = tpu.concatenate %21, %22, %23, %24 in 0 : vector<16x32xbf16>, vector<16x32xbf16>, vector<16x32xbf16>, vector<16x32xbf16> -> vector<64x32xbf16>
    %39 = tpu.concatenate %23, %24, %25, %26 in 0 : vector<16x32xbf16>, vector<16x32xbf16>, vector<16x32xbf16>, vector<16x32xbf16> -> vector<64x32xbf16>
    %40 = tpu.concatenate %25, %26, %27, %28 in 0 : vector<16x32xbf16>, vector<16x32xbf16>, vector<16x32xbf16>, vector<16x32xbf16> -> vector<64x32xbf16>
    %41 = tpu.concatenate %27, %28, %29, %30 in 0 : vector<16x32xbf16>, vector<16x32xbf16>, vector<16x32xbf16>, vector<16x32xbf16> -> vector<64x32xbf16>
    %42 = tpu.concatenate %29, %30, %31, %32 in 0 : vector<16x32xbf16>, vector<16x32xbf16>, vector<16x32xbf16>, vector<16x32xbf16> -> vector<64x32xbf16>
    %43 = tpu.concatenate %31, %32, %33, %34 in 0 : vector<16x32xbf16>, vector<16x32xbf16>, vector<16x32xbf16>, vector<16x32xbf16> -> vector<64x32xbf16>
    %44 = tpu.concatenate %33, %34, %35, %36 in 0 : vector<16x32xbf16>, vector<16x32xbf16>, vector<16x32xbf16>, vector<16x32xbf16> -> vector<64x32xbf16>
    %45 = tpu.concatenate %37, %38, %39, %40, %41, %42, %43, %44 in 1 : vector<64x32xbf16>, vector<64x32xbf16>, vector<64x32xbf16>, vector<64x32xbf16>, vector<64x32xbf16>, vector<64x32xbf16>, vector<64x32xbf16>, vector<64x32xbf16> -> vector<64x256xbf16>
    %cst = arith.constant dense<0.000000e+00> : vector<8x256xf32>
    %46 = tpu.matmul %0, %45, %cst {dimension_numbers = #tpu.dot_dimension_numbers<[1], [0], [0], [1], [0, 0, 1, 1], [], []>} : vector<8x64xbf16>, vector<64x256xbf16>, vector<8x256xf32> -> vector<8x256xf32>
    %c0_20 = arith.constant 0 : index
    %c0_21 = arith.constant 0 : index
    %47 = vector.load %arg3[%c0_20, %c0_21] : memref<8x1xf32, #tpu.memory_space<vmem>>, vector<8x1xf32>
    %48 = vector.broadcast %47 : vector<8x1xf32> to vector<8x256xf32>
    %49 = arith.addf %46, %48 : vector<8x256xf32>
    %cst_22 = arith.constant 0.000000e+00 : f32
    %50 = vector.broadcast %cst_22 : f32 to vector<8x256xf32>
    %51 = arith.cmpf ogt, %49, %50 : vector<8x256xf32>
    %cst_23 = arith.constant 2.000000e-01 : f32
    %52 = vector.broadcast %cst_23 : f32 to vector<8x256xf32>
    %53 = arith.mulf %52, %49 : vector<8x256xf32>
    %54 = arith.select %51, %49, %53 : vector<8x256xi1>, vector<8x256xf32>
    %55 = arith.truncf %54 : vector<8x256xf32> to vector<8x256xbf16>
    %c0_24 = arith.constant 0 : index
    %c0_25 = arith.constant 0 : index
    %c0_26 = arith.constant 0 : index
    %56 = vector.load %arg4[%c0_24, %c0_25, %c0_26] : memref<1x8x1024xbf16, #tpu.memory_space<vmem>>, vector<1x8x256xbf16>
    %57 = vector.shape_cast %56 : vector<1x8x256xbf16> to vector<8x256xbf16>
    %58 = vector.shape_cast %55 : vector<8x256xbf16> to vector<1x8x256xbf16>
    tpu.vector_store %arg4[%c0_24, %c0_25, %c0_26], %58 {strides = array<i32>} : memref<1x8x1024xbf16, #tpu.memory_space<vmem>>, vector<1x8x256xbf16>,
    %c8_27 = arith.constant 8 : index
    %c0_28 = arith.constant 0 : index
    %c0_29 = arith.constant 0 : index
    %59 = vector.load %arg1[%c8_27, %c0_28, %c0_29] : memref<33x16x33xbf16, #tpu.memory_space<vmem>>, vector<1x16x33xbf16>
    %60 = vector.shape_cast %59 : vector<1x16x33xbf16> to vector<16x33xbf16>
    %c9 = arith.constant 9 : index
    %c0_30 = arith.constant 0 : index
    %c0_31 = arith.constant 0 : index
    %61 = vector.load %arg1[%c9, %c0_30, %c0_31] : memref<33x16x33xbf16, #tpu.memory_space<vmem>>, vector<1x16x33xbf16>
    %62 = vector.shape_cast %61 : vector<1x16x33xbf16> to vector<16x33xbf16>
    %c10 = arith.constant 10 : index
    %c0_32 = arith.constant 0 : index
    %c0_33 = arith.constant 0 : index
    %63 = vector.load %arg1[%c10, %c0_32, %c0_33] : memref<33x16x33xbf16, #tpu.memory_space<vmem>>, vector<1x16x33xbf16>
    %64 = vector.shape_cast %63 : vector<1x16x33xbf16> to vector<16x33xbf16>
    %c11 = arith.constant 11 : index
    %c0_34 = arith.constant 0 : index
    %c0_35 = arith.constant 0 : index
    %65 = vector.load %arg1[%c11, %c0_34, %c0_35] : memref<33x16x33xbf16, #tpu.memory_space<vmem>>, vector<1x16x33xbf16>
    %66 = vector.shape_cast %65 : vector<1x16x33xbf16> to vector<16x33xbf16>
    %c12 = arith.constant 12 : index
    %c0_36 = arith.constant 0 : index
    %c0_37 = arith.constant 0 : index
    %67 = vector.load %arg1[%c12, %c0_36, %c0_37] : memref<33x16x33xbf16, #tpu.memory_space<vmem>>, vector<1x16x33xbf16>
    %68 = vector.shape_cast %67 : vector<1x16x33xbf16> to vector<16x33xbf16>
    %c13 = arith.constant 13 : index
    %c0_38 = arith.constant 0 : index
    %c0_39 = arith.constant 0 : index
    %69 = vector.load %arg1[%c13, %c0_38, %c0_39] : memref<33x16x33xbf16, #tpu.memory_space<vmem>>, vector<1x16x33xbf16>
    %70 = vector.shape_cast %69 : vector<1x16x33xbf16> to vector<16x33xbf16>
    %c14 = arith.constant 14 : index
    %c0_40 = arith.constant 0 : index
    %c0_41 = arith.constant 0 : index
    %71 = vector.load %arg1[%c14, %c0_40, %c0_41] : memref<33x16x33xbf16, #tpu.memory_space<vmem>>, vector<1x16x33xbf16>
    %72 = vector.shape_cast %71 : vector<1x16x33xbf16> to vector<16x33xbf16>
    %c15 = arith.constant 15 : index
    %c0_42 = arith.constant 0 : index
    %c0_43 = arith.constant 0 : index
    %73 = vector.load %arg1[%c15, %c0_42, %c0_43] : memref<33x16x33xbf16, #tpu.memory_space<vmem>>, vector<1x16x33xbf16>
    %74 = vector.shape_cast %73 : vector<1x16x33xbf16> to vector<16x33xbf16>
    %c16 = arith.constant 16 : index
    %c0_44 = arith.constant 0 : index
    %c0_45 = arith.constant 0 : index
    %75 = vector.load %arg1[%c16, %c0_44, %c0_45] : memref<33x16x33xbf16, #tpu.memory_space<vmem>>, vector<1x16x33xbf16>
    %76 = vector.shape_cast %75 : vector<1x16x33xbf16> to vector<16x33xbf16>
    %77 = vector.extract_strided_slice %60 {offsets = [0, 0], sizes = [16, 32], strides = [1, 1]} : vector<16x33xbf16> to vector<16x32xbf16>
    %78 = vector.extract_strided_slice %60 {offsets = [0, 1], sizes = [16, 32], strides = [1, 1]} : vector<16x33xbf16> to vector<16x32xbf16>
    %79 = vector.extract_strided_slice %62 {offsets = [0, 0], sizes = [16, 32], strides = [1, 1]} : vector<16x33xbf16> to vector<16x32xbf16>
    %80 = vector.extract_strided_slice %62 {offsets = [0, 1], sizes = [16, 32], strides = [1, 1]} : vector<16x33xbf16> to vector<16x32xbf16>
    %81 = vector.extract_strided_slice %64 {offsets = [0, 0], sizes = [16, 32], strides = [1, 1]} : vector<16x33xbf16> to vector<16x32xbf16>
    %82 = vector.extract_strided_slice %64 {offsets = [0, 1], sizes = [16, 32], strides = [1, 1]} : vector<16x33xbf16> to vector<16x32xbf16>
    %83 = vector.extract_strided_slice %66 {offsets = [0, 0], sizes = [16, 32], strides = [1, 1]} : vector<16x33xbf16> to vector<16x32xbf16>
    %84 = vector.extract_strided_slice %66 {offsets = [0, 1], sizes = [16, 32], strides = [1, 1]} : vector<16x33xbf16> to vector<16x32xbf16>
    %85 = vector.extract_strided_slice %68 {offsets = [0, 0], sizes = [16, 32], strides = [1, 1]} : vector<16x33xbf16> to vector<16x32xbf16>
    %86 = vector.extract_strided_slice %68 {offsets = [0, 1], sizes = [16, 32], strides = [1, 1]} : vector<16x33xbf16> to vector<16x32xbf16>
    %87 = vector.extract_strided_slice %70 {offsets = [0, 0], sizes = [16, 32], strides = [1, 1]} : vector<16x33xbf16> to vector<16x32xbf16>
    %88 = vector.extract_strided_slice %70 {offsets = [0, 1], sizes = [16, 32], strides = [1, 1]} : vector<16x33xbf16> to vector<16x32xbf16>
    %89 = vector.extract_strided_slice %72 {offsets = [0, 0], sizes = [16, 32], strides = [1, 1]} : vector<16x33xbf16> to vector<16x32xbf16>
    %90 = vector.extract_strided_slice %72 {offsets = [0, 1], sizes = [16, 32], strides = [1, 1]} : vector<16x33xbf16> to vector<16x32xbf16>
    %91 = vector.extract_strided_slice %74 {offsets = [0, 0], sizes = [16, 32], strides = [1, 1]} : vector<16x33xbf16> to vector<16x32xbf16>
    %92 = vector.extract_strided_slice %74 {offsets = [0, 1], sizes = [16, 32], strides = [1, 1]} : vector<16x33xbf16> to vector<16x32xbf16>
    %93 = vector.extract_strided_slice %76 {offsets = [0, 0], sizes = [16, 32], strides = [1, 1]} : vector<16x33xbf16> to vector<16x32xbf16>
    %94 = vector.extract_strided_slice %76 {offsets = [0, 1], sizes = [16, 32], strides = [1, 1]} : vector<16x33xbf16> to vector<16x32xbf16>
    %95 = tpu.concatenate %77, %78, %79, %80 in 0 : vector<16x32xbf16>, vector<16x32xbf16>, vector<16x32xbf16>, vector<16x32xbf16> -> vector<64x32xbf16>
    %96 = tpu.concatenate %79, %80, %81, %82 in 0 : vector<16x32xbf16>, vector<16x32xbf16>, vector<16x32xbf16>, vector<16x32xbf16> -> vector<64x32xbf16>
    %97 = tpu.concatenate %81, %82, %83, %84 in 0 : vector<16x32xbf16>, vector<16x32xbf16>, vector<16x32xbf16>, vector<16x32xbf16> -> vector<64x32xbf16>
    %98 = tpu.concatenate %83, %84, %85, %86 in 0 : vector<16x32xbf16>, vector<16x32xbf16>, vector<16x32xbf16>, vector<16x32xbf16> -> vector<64x32xbf16>
    %99 = tpu.concatenate %85, %86, %87, %88 in 0 : vector<16x32xbf16>, vector<16x32xbf16>, vector<16x32xbf16>, vector<16x32xbf16> -> vector<64x32xbf16>
    %100 = tpu.concatenate %87, %88, %89, %90 in 0 : vector<16x32xbf16>, vector<16x32xbf16>, vector<16x32xbf16>, vector<16x32xbf16> -> vector<64x32xbf16>
    %101 = tpu.concatenate %89, %90, %91, %92 in 0 : vector<16x32xbf16>, vector<16x32xbf16>, vector<16x32xbf16>, vector<16x32xbf16> -> vector<64x32xbf16>
    %102 = tpu.concatenate %91, %92, %93, %94 in 0 : vector<16x32xbf16>, vector<16x32xbf16>, vector<16x32xbf16>, vector<16x32xbf16> -> vector<64x32xbf16>
    %103 = tpu.concatenate %95, %96, %97, %98, %99, %100, %101, %102 in 1 : vector<64x32xbf16>, vector<64x32xbf16>, vector<64x32xbf16>, vector<64x32xbf16>, vector<64x32xbf16>, vector<64x32xbf16>, vector<64x32xbf16>, vector<64x32xbf16> -> vector<64x256xbf16>
    %cst_46 = arith.constant dense<0.000000e+00> : vector<8x256xf32>
    %104 = tpu.matmul %0, %103, %cst_46 {dimension_numbers = #tpu.dot_dimension_numbers<[1], [0], [0], [1], [0, 0, 1, 1], [], []>} : vector<8x64xbf16>, vector<64x256xbf16>, vector<8x256xf32> -> vector<8x256xf32>
    %c0_47 = arith.constant 0 : index
    %c0_48 = arith.constant 0 : index
    %105 = vector.load %arg3[%c0_47, %c0_48] : memref<8x1xf32, #tpu.memory_space<vmem>>, vector<8x1xf32>
    %106 = vector.broadcast %105 : vector<8x1xf32> to vector<8x256xf32>
    %107 = arith.addf %104, %106 : vector<8x256xf32>
    %cst_49 = arith.constant 0.000000e+00 : f32
    %108 = vector.broadcast %cst_49 : f32 to vector<8x256xf32>
    %109 = arith.cmpf ogt, %107, %108 : vector<8x256xf32>
    %cst_50 = arith.constant 2.000000e-01 : f32
    %110 = vector.broadcast %cst_50 : f32 to vector<8x256xf32>
    %111 = arith.mulf %110, %107 : vector<8x256xf32>
    %112 = arith.select %109, %107, %111 : vector<8x256xi1>, vector<8x256xf32>
    %113 = arith.truncf %112 : vector<8x256xf32> to vector<8x256xbf16>
    %c0_51 = arith.constant 0 : index
    %c0_52 = arith.constant 0 : index
    %c256 = arith.constant 256 : index
    %114 = vector.load %arg4[%c0_51, %c0_52, %c256] : memref<1x8x1024xbf16, #tpu.memory_space<vmem>>, vector<1x8x256xbf16>
    %115 = vector.shape_cast %114 : vector<1x8x256xbf16> to vector<8x256xbf16>
    %116 = vector.shape_cast %113 : vector<8x256xbf16> to vector<1x8x256xbf16>
    tpu.vector_store %arg4[%c0_51, %c0_52, %c256], %116 {strides = array<i32>} : memref<1x8x1024xbf16, #tpu.memory_space<vmem>>, vector<1x8x256xbf16>,
    %c16_53 = arith.constant 16 : index
    %c0_54 = arith.constant 0 : index
    %c0_55 = arith.constant 0 : index
    %117 = vector.load %arg1[%c16_53, %c0_54, %c0_55] : memref<33x16x33xbf16, #tpu.memory_space<vmem>>, vector<1x16x33xbf16>
    %118 = vector.shape_cast %117 : vector<1x16x33xbf16> to vector<16x33xbf16>
    %c17 = arith.constant 17 : index
    %c0_56 = arith.constant 0 : index
    %c0_57 = arith.constant 0 : index
    %119 = vector.load %arg1[%c17, %c0_56, %c0_57] : memref<33x16x33xbf16, #tpu.memory_space<vmem>>, vector<1x16x33xbf16>
    %120 = vector.shape_cast %119 : vector<1x16x33xbf16> to vector<16x33xbf16>
    %c18 = arith.constant 18 : index
    %c0_58 = arith.constant 0 : index
    %c0_59 = arith.constant 0 : index
    %121 = vector.load %arg1[%c18, %c0_58, %c0_59] : memref<33x16x33xbf16, #tpu.memory_space<vmem>>, vector<1x16x33xbf16>
    %122 = vector.shape_cast %121 : vector<1x16x33xbf16> to vector<16x33xbf16>
    %c19 = arith.constant 19 : index
    %c0_60 = arith.constant 0 : index
    %c0_61 = arith.constant 0 : index
    %123 = vector.load %arg1[%c19, %c0_60, %c0_61] : memref<33x16x33xbf16, #tpu.memory_space<vmem>>, vector<1x16x33xbf16>
    %124 = vector.shape_cast %123 : vector<1x16x33xbf16> to vector<16x33xbf16>
    %c20 = arith.constant 20 : index
    %c0_62 = arith.constant 0 : index
    %c0_63 = arith.constant 0 : index
    %125 = vector.load %arg1[%c20, %c0_62, %c0_63] : memref<33x16x33xbf16, #tpu.memory_space<vmem>>, vector<1x16x33xbf16>
    %126 = vector.shape_cast %125 : vector<1x16x33xbf16> to vector<16x33xbf16>
    %c21 = arith.constant 21 : index
    %c0_64 = arith.constant 0 : index
    %c0_65 = arith.constant 0 : index
    %127 = vector.load %arg1[%c21, %c0_64, %c0_65] : memref<33x16x33xbf16, #tpu.memory_space<vmem>>, vector<1x16x33xbf16>
    %128 = vector.shape_cast %127 : vector<1x16x33xbf16> to vector<16x33xbf16>
    %c22 = arith.constant 22 : index
    %c0_66 = arith.constant 0 : index
    %c0_67 = arith.constant 0 : index
    %129 = vector.load %arg1[%c22, %c0_66, %c0_67] : memref<33x16x33xbf16, #tpu.memory_space<vmem>>, vector<1x16x33xbf16>
    %130 = vector.shape_cast %129 : vector<1x16x33xbf16> to vector<16x33xbf16>
    %c23 = arith.constant 23 : index
    %c0_68 = arith.constant 0 : index
    %c0_69 = arith.constant 0 : index
    %131 = vector.load %arg1[%c23, %c0_68, %c0_69] : memref<33x16x33xbf16, #tpu.memory_space<vmem>>, vector<1x16x33xbf16>
    %132 = vector.shape_cast %131 : vector<1x16x33xbf16> to vector<16x33xbf16>
    %c24 = arith.constant 24 : index
    %c0_70 = arith.constant 0 : index
    %c0_71 = arith.constant 0 : index
    %133 = vector.load %arg1[%c24, %c0_70, %c0_71] : memref<33x16x33xbf16, #tpu.memory_space<vmem>>, vector<1x16x33xbf16>
    %134 = vector.shape_cast %133 : vector<1x16x33xbf16> to vector<16x33xbf16>
    %135 = vector.extract_strided_slice %118 {offsets = [0, 0], sizes = [16, 32], strides = [1, 1]} : vector<16x33xbf16> to vector<16x32xbf16>
    %136 = vector.extract_strided_slice %118 {offsets = [0, 1], sizes = [16, 32], strides = [1, 1]} : vector<16x33xbf16> to vector<16x32xbf16>
    %137 = vector.extract_strided_slice %120 {offsets = [0, 0], sizes = [16, 32], strides = [1, 1]} : vector<16x33xbf16> to vector<16x32xbf16>
    %138 = vector.extract_strided_slice %120 {offsets = [0, 1], sizes = [16, 32], strides = [1, 1]} : vector<16x33xbf16> to vector<16x32xbf16>
    %139 = vector.extract_strided_slice %122 {offsets = [0, 0], sizes = [16, 32], strides = [1, 1]} : vector<16x33xbf16> to vector<16x32xbf16>
    %140 = vector.extract_strided_slice %122 {offsets = [0, 1], sizes = [16, 32], strides = [1, 1]} : vector<16x33xbf16> to vector<16x32xbf16>
    %141 = vector.extract_strided_slice %124 {offsets = [0, 0], sizes = [16, 32], strides = [1, 1]} : vector<16x33xbf16> to vector<16x32xbf16>
    %142 = vector.extract_strided_slice %124 {offsets = [0, 1], sizes = [16, 32], strides = [1, 1]} : vector<16x33xbf16> to vector<16x32xbf16>
    %143 = vector.extract_strided_slice %126 {offsets = [0, 0], sizes = [16, 32], strides = [1, 1]} : vector<16x33xbf16> to vector<16x32xbf16>
    %144 = vector.extract_strided_slice %126 {offsets = [0, 1], sizes = [16, 32], strides = [1, 1]} : vector<16x33xbf16> to vector<16x32xbf16>
    %145 = vector.extract_strided_slice %128 {offsets = [0, 0], sizes = [16, 32], strides = [1, 1]} : vector<16x33xbf16> to vector<16x32xbf16>
    %146 = vector.extract_strided_slice %128 {offsets = [0, 1], sizes = [16, 32], strides = [1, 1]} : vector<16x33xbf16> to vector<16x32xbf16>
    %147 = vector.extract_strided_slice %130 {offsets = [0, 0], sizes = [16, 32], strides = [1, 1]} : vector<16x33xbf16> to vector<16x32xbf16>
    %148 = vector.extract_strided_slice %130 {offsets = [0, 1], sizes = [16, 32], strides = [1, 1]} : vector<16x33xbf16> to vector<16x32xbf16>
    %149 = vector.extract_strided_slice %132 {offsets = [0, 0], sizes = [16, 32], strides = [1, 1]} : vector<16x33xbf16> to vector<16x32xbf16>
    %150 = vector.extract_strided_slice %132 {offsets = [0, 1], sizes = [16, 32], strides = [1, 1]} : vector<16x33xbf16> to vector<16x32xbf16>
    %151 = vector.extract_strided_slice %134 {offsets = [0, 0], sizes = [16, 32], strides = [1, 1]} : vector<16x33xbf16> to vector<16x32xbf16>
    %152 = vector.extract_strided_slice %134 {offsets = [0, 1], sizes = [16, 32], strides = [1, 1]} : vector<16x33xbf16> to vector<16x32xbf16>
    %153 = tpu.concatenate %135, %136, %137, %138 in 0 : vector<16x32xbf16>, vector<16x32xbf16>, vector<16x32xbf16>, vector<16x32xbf16> -> vector<64x32xbf16>
    %154 = tpu.concatenate %137, %138, %139, %140 in 0 : vector<16x32xbf16>, vector<16x32xbf16>, vector<16x32xbf16>, vector<16x32xbf16> -> vector<64x32xbf16>
    %155 = tpu.concatenate %139, %140, %141, %142 in 0 : vector<16x32xbf16>, vector<16x32xbf16>, vector<16x32xbf16>, vector<16x32xbf16> -> vector<64x32xbf16>
    %156 = tpu.concatenate %141, %142, %143, %144 in 0 : vector<16x32xbf16>, vector<16x32xbf16>, vector<16x32xbf16>, vector<16x32xbf16> -> vector<64x32xbf16>
    %157 = tpu.concatenate %143, %144, %145, %146 in 0 : vector<16x32xbf16>, vector<16x32xbf16>, vector<16x32xbf16>, vector<16x32xbf16> -> vector<64x32xbf16>
    %158 = tpu.concatenate %145, %146, %147, %148 in 0 : vector<16x32xbf16>, vector<16x32xbf16>, vector<16x32xbf16>, vector<16x32xbf16> -> vector<64x32xbf16>
    %159 = tpu.concatenate %147, %148, %149, %150 in 0 : vector<16x32xbf16>, vector<16x32xbf16>, vector<16x32xbf16>, vector<16x32xbf16> -> vector<64x32xbf16>
    %160 = tpu.concatenate %149, %150, %151, %152 in 0 : vector<16x32xbf16>, vector<16x32xbf16>, vector<16x32xbf16>, vector<16x32xbf16> -> vector<64x32xbf16>
    %161 = tpu.concatenate %153, %154, %155, %156, %157, %158, %159, %160 in 1 : vector<64x32xbf16>, vector<64x32xbf16>, vector<64x32xbf16>, vector<64x32xbf16>, vector<64x32xbf16>, vector<64x32xbf16>, vector<64x32xbf16>, vector<64x32xbf16> -> vector<64x256xbf16>
    %cst_72 = arith.constant dense<0.000000e+00> : vector<8x256xf32>
    %162 = tpu.matmul %0, %161, %cst_72 {dimension_numbers = #tpu.dot_dimension_numbers<[1], [0], [0], [1], [0, 0, 1, 1], [], []>} : vector<8x64xbf16>, vector<64x256xbf16>, vector<8x256xf32> -> vector<8x256xf32>
    %c0_73 = arith.constant 0 : index
    %c0_74 = arith.constant 0 : index
    %163 = vector.load %arg3[%c0_73, %c0_74] : memref<8x1xf32, #tpu.memory_space<vmem>>, vector<8x1xf32>
    %164 = vector.broadcast %163 : vector<8x1xf32> to vector<8x256xf32>
    %165 = arith.addf %162, %164 : vector<8x256xf32>
    %cst_75 = arith.constant 0.000000e+00 : f32
    %166 = vector.broadcast %cst_75 : f32 to vector<8x256xf32>
    %167 = arith.cmpf ogt, %165, %166 : vector<8x256xf32>
    %cst_76 = arith.constant 2.000000e-01 : f32
    %168 = vector.broadcast %cst_76 : f32 to vector<8x256xf32>
    %169 = arith.mulf %168, %165 : vector<8x256xf32>
    %170 = arith.select %167, %165, %169 : vector<8x256xi1>, vector<8x256xf32>
    %171 = arith.truncf %170 : vector<8x256xf32> to vector<8x256xbf16>
    %c0_77 = arith.constant 0 : index
    %c0_78 = arith.constant 0 : index
    %c512 = arith.constant 512 : index
    %172 = vector.load %arg4[%c0_77, %c0_78, %c512] : memref<1x8x1024xbf16, #tpu.memory_space<vmem>>, vector<1x8x256xbf16>
    %173 = vector.shape_cast %172 : vector<1x8x256xbf16> to vector<8x256xbf16>
    %174 = vector.shape_cast %171 : vector<8x256xbf16> to vector<1x8x256xbf16>
    tpu.vector_store %arg4[%c0_77, %c0_78, %c512], %174 {strides = array<i32>} : memref<1x8x1024xbf16, #tpu.memory_space<vmem>>, vector<1x8x256xbf16>,
    %c24_79 = arith.constant 24 : index
    %c0_80 = arith.constant 0 : index
    %c0_81 = arith.constant 0 : index
    %175 = vector.load %arg1[%c24_79, %c0_80, %c0_81] : memref<33x16x33xbf16, #tpu.memory_space<vmem>>, vector<1x16x33xbf16>
    %176 = vector.shape_cast %175 : vector<1x16x33xbf16> to vector<16x33xbf16>
    %c25 = arith.constant 25 : index
    %c0_82 = arith.constant 0 : index
    %c0_83 = arith.constant 0 : index
    %177 = vector.load %arg1[%c25, %c0_82, %c0_83] : memref<33x16x33xbf16, #tpu.memory_space<vmem>>, vector<1x16x33xbf16>
    %178 = vector.shape_cast %177 : vector<1x16x33xbf16> to vector<16x33xbf16>
    %c26 = arith.constant 26 : index
    %c0_84 = arith.constant 0 : index
    %c0_85 = arith.constant 0 : index
    %179 = vector.load %arg1[%c26, %c0_84, %c0_85] : memref<33x16x33xbf16, #tpu.memory_space<vmem>>, vector<1x16x33xbf16>
    %180 = vector.shape_cast %179 : vector<1x16x33xbf16> to vector<16x33xbf16>
    %c27 = arith.constant 27 : index
    %c0_86 = arith.constant 0 : index
    %c0_87 = arith.constant 0 : index
    %181 = vector.load %arg1[%c27, %c0_86, %c0_87] : memref<33x16x33xbf16, #tpu.memory_space<vmem>>, vector<1x16x33xbf16>
    %182 = vector.shape_cast %181 : vector<1x16x33xbf16> to vector<16x33xbf16>
    %c28 = arith.constant 28 : index
    %c0_88 = arith.constant 0 : index
    %c0_89 = arith.constant 0 : index
    %183 = vector.load %arg1[%c28, %c0_88, %c0_89] : memref<33x16x33xbf16, #tpu.memory_space<vmem>>, vector<1x16x33xbf16>
    %184 = vector.shape_cast %183 : vector<1x16x33xbf16> to vector<16x33xbf16>
    %c29 = arith.constant 29 : index
    %c0_90 = arith.constant 0 : index
    %c0_91 = arith.constant 0 : index
    %185 = vector.load %arg1[%c29, %c0_90, %c0_91] : memref<33x16x33xbf16, #tpu.memory_space<vmem>>, vector<1x16x33xbf16>
    %186 = vector.shape_cast %185 : vector<1x16x33xbf16> to vector<16x33xbf16>
    %c30 = arith.constant 30 : index
    %c0_92 = arith.constant 0 : index
    %c0_93 = arith.constant 0 : index
    %187 = vector.load %arg1[%c30, %c0_92, %c0_93] : memref<33x16x33xbf16, #tpu.memory_space<vmem>>, vector<1x16x33xbf16>
    %188 = vector.shape_cast %187 : vector<1x16x33xbf16> to vector<16x33xbf16>
    %c31 = arith.constant 31 : index
    %c0_94 = arith.constant 0 : index
    %c0_95 = arith.constant 0 : index
    %189 = vector.load %arg1[%c31, %c0_94, %c0_95] : memref<33x16x33xbf16, #tpu.memory_space<vmem>>, vector<1x16x33xbf16>
    %190 = vector.shape_cast %189 : vector<1x16x33xbf16> to vector<16x33xbf16>
    %c32 = arith.constant 32 : index
    %c0_96 = arith.constant 0 : index
    %c0_97 = arith.constant 0 : index
    %191 = vector.load %arg1[%c32, %c0_96, %c0_97] : memref<33x16x33xbf16, #tpu.memory_space<vmem>>, vector<1x16x33xbf16>
    %192 = vector.shape_cast %191 : vector<1x16x33xbf16> to vector<16x33xbf16>
    %193 = vector.extract_strided_slice %176 {offsets = [0, 0], sizes = [16, 32], strides = [1, 1]} : vector<16x33xbf16> to vector<16x32xbf16>
    %194 = vector.extract_strided_slice %176 {offsets = [0, 1], sizes = [16, 32], strides = [1, 1]} : vector<16x33xbf16> to vector<16x32xbf16>
    %195 = vector.extract_strided_slice %178 {offsets = [0, 0], sizes = [16, 32], strides = [1, 1]} : vector<16x33xbf16> to vector<16x32xbf16>
    %196 = vector.extract_strided_slice %178 {offsets = [0, 1], sizes = [16, 32], strides = [1, 1]} : vector<16x33xbf16> to vector<16x32xbf16>
    %197 = vector.extract_strided_slice %180 {offsets = [0, 0], sizes = [16, 32], strides = [1, 1]} : vector<16x33xbf16> to vector<16x32xbf16>
    %198 = vector.extract_strided_slice %180 {offsets = [0, 1], sizes = [16, 32], strides = [1, 1]} : vector<16x33xbf16> to vector<16x32xbf16>
    %199 = vector.extract_strided_slice %182 {offsets = [0, 0], sizes = [16, 32], strides = [1, 1]} : vector<16x33xbf16> to vector<16x32xbf16>
    %200 = vector.extract_strided_slice %182 {offsets = [0, 1], sizes = [16, 32], strides = [1, 1]} : vector<16x33xbf16> to vector<16x32xbf16>
    %201 = vector.extract_strided_slice %184 {offsets = [0, 0], sizes = [16, 32], strides = [1, 1]} : vector<16x33xbf16> to vector<16x32xbf16>
    %202 = vector.extract_strided_slice %184 {offsets = [0, 1], sizes = [16, 32], strides = [1, 1]} : vector<16x33xbf16> to vector<16x32xbf16>
    %203 = vector.extract_strided_slice %186 {offsets = [0, 0], sizes = [16, 32], strides = [1, 1]} : vector<16x33xbf16> to vector<16x32xbf16>
    %204 = vector.extract_strided_slice %186 {offsets = [0, 1], sizes = [16, 32], strides = [1, 1]} : vector<16x33xbf16> to vector<16x32xbf16>
    %205 = vector.extract_strided_slice %188 {offsets = [0, 0], sizes = [16, 32], strides = [1, 1]} : vector<16x33xbf16> to vector<16x32xbf16>
    %206 = vector.extract_strided_slice %188 {offsets = [0, 1], sizes = [16, 32], strides = [1, 1]} : vector<16x33xbf16> to vector<16x32xbf16>
    %207 = vector.extract_strided_slice %190 {offsets = [0, 0], sizes = [16, 32], strides = [1, 1]} : vector<16x33xbf16> to vector<16x32xbf16>
    %208 = vector.extract_strided_slice %190 {offsets = [0, 1], sizes = [16, 32], strides = [1, 1]} : vector<16x33xbf16> to vector<16x32xbf16>
    %209 = vector.extract_strided_slice %192 {offsets = [0, 0], sizes = [16, 32], strides = [1, 1]} : vector<16x33xbf16> to vector<16x32xbf16>
    %210 = vector.extract_strided_slice %192 {offsets = [0, 1], sizes = [16, 32], strides = [1, 1]} : vector<16x33xbf16> to vector<16x32xbf16>
    %211 = tpu.concatenate %193, %194, %195, %196 in 0 : vector<16x32xbf16>, vector<16x32xbf16>, vector<16x32xbf16>, vector<16x32xbf16> -> vector<64x32xbf16>
    %212 = tpu.concatenate %195, %196, %197, %198 in 0 : vector<16x32xbf16>, vector<16x32xbf16>, vector<16x32xbf16>, vector<16x32xbf16> -> vector<64x32xbf16>
    %213 = tpu.concatenate %197, %198, %199, %200 in 0 : vector<16x32xbf16>, vector<16x32xbf16>, vector<16x32xbf16>, vector<16x32xbf16> -> vector<64x32xbf16>
    %214 = tpu.concatenate %199, %200, %201, %202 in 0 : vector<16x32xbf16>, vector<16x32xbf16>, vector<16x32xbf16>, vector<16x32xbf16> -> vector<64x32xbf16>
    %215 = tpu.concatenate %201, %202, %203, %204 in 0 : vector<16x32xbf16>, vector<16x32xbf16>, vector<16x32xbf16>, vector<16x32xbf16> -> vector<64x32xbf16>
    %216 = tpu.concatenate %203, %204, %205, %206 in 0 : vector<16x32xbf16>, vector<16x32xbf16>, vector<16x32xbf16>, vector<16x32xbf16> -> vector<64x32xbf16>
    %217 = tpu.concatenate %205, %206, %207, %208 in 0 : vector<16x32xbf16>, vector<16x32xbf16>, vector<16x32xbf16>, vector<16x32xbf16> -> vector<64x32xbf16>
    %218 = tpu.concatenate %207, %208, %209, %210 in 0 : vector<16x32xbf16>, vector<16x32xbf16>, vector<16x32xbf16>, vector<16x32xbf16> -> vector<64x32xbf16>
    %219 = tpu.concatenate %211, %212, %213, %214, %215, %216, %217, %218 in 1 : vector<64x32xbf16>, vector<64x32xbf16>, vector<64x32xbf16>, vector<64x32xbf16>, vector<64x32xbf16>, vector<64x32xbf16>, vector<64x32xbf16>, vector<64x32xbf16> -> vector<64x256xbf16>
    %cst_98 = arith.constant dense<0.000000e+00> : vector<8x256xf32>
    %220 = tpu.matmul %0, %219, %cst_98 {dimension_numbers = #tpu.dot_dimension_numbers<[1], [0], [0], [1], [0, 0, 1, 1], [], []>} : vector<8x64xbf16>, vector<64x256xbf16>, vector<8x256xf32> -> vector<8x256xf32>
    %c0_99 = arith.constant 0 : index
    %c0_100 = arith.constant 0 : index
    %221 = vector.load %arg3[%c0_99, %c0_100] : memref<8x1xf32, #tpu.memory_space<vmem>>, vector<8x1xf32>
    %222 = vector.broadcast %221 : vector<8x1xf32> to vector<8x256xf32>
    %223 = arith.addf %220, %222 : vector<8x256xf32>
    %cst_101 = arith.constant 0.000000e+00 : f32
    %224 = vector.broadcast %cst_101 : f32 to vector<8x256xf32>
    %225 = arith.cmpf ogt, %223, %224 : vector<8x256xf32>
    %cst_102 = arith.constant 2.000000e-01 : f32
    %226 = vector.broadcast %cst_102 : f32 to vector<8x256xf32>
    %227 = arith.mulf %226, %223 : vector<8x256xf32>
    %228 = arith.select %225, %223, %227 : vector<8x256xi1>, vector<8x256xf32>
    %229 = arith.truncf %228 : vector<8x256xf32> to vector<8x256xbf16>
    %c0_103 = arith.constant 0 : index
    %c0_104 = arith.constant 0 : index
    %c768 = arith.constant 768 : index
    %230 = vector.load %arg4[%c0_103, %c0_104, %c768] : memref<1x8x1024xbf16, #tpu.memory_space<vmem>>, vector<1x8x256xbf16>
    %231 = vector.shape_cast %230 : vector<1x8x256xbf16> to vector<8x256xbf16>
    %232 = vector.shape_cast %229 : vector<8x256xbf16> to vector<1x8x256xbf16>
    tpu.vector_store %arg4[%c0_103, %c0_104, %c768], %232 {strides = array<i32>} : memref<1x8x1024xbf16, #tpu.memory_space<vmem>>, vector<1x8x256xbf16>,
    return
  }
  func.func @transform_0(%arg0: i32) -> (i32, i32, i32) {
    %c0_i32 = arith.constant 0 : i32
    %c0_i32_0 = arith.constant 0 : i32
    %c0_i32_1 = arith.constant 0 : i32
    return %arg0, %c0_i32, %c0_i32_0 : i32, i32, i32
  }
  func.func @transform_1(%arg0: i32) -> (i32, i32) {
    %c0_i32 = arith.constant 0 : i32
    %c0_i32_0 = arith.constant 0 : i32
    %c0_i32_1 = arith.constant 0 : i32
    return %c0_i32, %c0_i32_0 : i32, i32
  }
  func.func @transform_2(%arg0: i32) -> (i32, i32) {
    %c0_i32 = arith.constant 0 : i32
    %c0_i32_0 = arith.constant 0 : i32
    %c0_i32_1 = arith.constant 0 : i32
    return %c0_i32, %c0_i32_0 : i32, i32
  }
  func.func @transform_3(%arg0: i32) -> (i32, i32, i32) {
    %c0_i32 = arith.constant 0 : i32
    %c0_i32_0 = arith.constant 0 : i32
    %c0_i32_1 = arith.constant 0 : i32
    return %arg0, %c0_i32, %c0_i32_0 : i32, i32, i32
  }
}

module attributes {stable_mosaic.version = 11 : i64} {
  func.func @kernel(%arg0: i32, %arg1: memref<17x32x17xbf16, #tpu.memory_space<vmem>>, %arg2: memref<16x128xbf16, #tpu.memory_space<vmem>>, %arg3: memref<1x16x256xbf16, #tpu.memory_space<vmem>>, %arg4: memref<1x16x2xf32, #tpu.memory_space<vmem>>) attributes {dimension_semantics = [#tpu.dimension_semantics<parallel>], iteration_bounds = array<i64: 2>, scalar_prefetch = 0 : i64, scratch_operands = 0 : i64, tpu.core_type = #tpu.core_type<tc>, window_params = [{transform_indices = @transform_0, window_bounds = array<i64: 17, 32, 17>}, {pipeline_mode = #tpu.pipeline_mode<synchronous>, transform_indices = @transform_1, window_bounds = array<i64: 16, 128>}, {transform_indices = @transform_2, window_bounds = array<i64: 1, 16, 256>}, {transform_indices = @transform_3, window_bounds = array<i64: 1, 16, 2>}]} {
    %c0 = arith.constant 0 : index
    %c0_0 = arith.constant 0 : index
    %0 = vector.load %arg2[%c0, %c0_0] : memref<16x128xbf16, #tpu.memory_space<vmem>>, vector<16x128xbf16>
    %c0_1 = arith.constant 0 : index
    %c0_2 = arith.constant 0 : index
    %c0_3 = arith.constant 0 : index
    %1 = vector.load %arg1[%c0_1, %c0_2, %c0_3] : memref<17x32x17xbf16, #tpu.memory_space<vmem>>, vector<1x32x17xbf16>
    %2 = vector.shape_cast %1 : vector<1x32x17xbf16> to vector<32x17xbf16>
    %c1 = arith.constant 1 : index
    %c0_4 = arith.constant 0 : index
    %c0_5 = arith.constant 0 : index
    %3 = vector.load %arg1[%c1, %c0_4, %c0_5] : memref<17x32x17xbf16, #tpu.memory_space<vmem>>, vector<1x32x17xbf16>
    %4 = vector.shape_cast %3 : vector<1x32x17xbf16> to vector<32x17xbf16>
    %c2 = arith.constant 2 : index
    %c0_6 = arith.constant 0 : index
    %c0_7 = arith.constant 0 : index
    %5 = vector.load %arg1[%c2, %c0_6, %c0_7] : memref<17x32x17xbf16, #tpu.memory_space<vmem>>, vector<1x32x17xbf16>
    %6 = vector.shape_cast %5 : vector<1x32x17xbf16> to vector<32x17xbf16>
    %c3 = arith.constant 3 : index
    %c0_8 = arith.constant 0 : index
    %c0_9 = arith.constant 0 : index
    %7 = vector.load %arg1[%c3, %c0_8, %c0_9] : memref<17x32x17xbf16, #tpu.memory_space<vmem>>, vector<1x32x17xbf16>
    %8 = vector.shape_cast %7 : vector<1x32x17xbf16> to vector<32x17xbf16>
    %c4 = arith.constant 4 : index
    %c0_10 = arith.constant 0 : index
    %c0_11 = arith.constant 0 : index
    %9 = vector.load %arg1[%c4, %c0_10, %c0_11] : memref<17x32x17xbf16, #tpu.memory_space<vmem>>, vector<1x32x17xbf16>
    %10 = vector.shape_cast %9 : vector<1x32x17xbf16> to vector<32x17xbf16>
    %c5 = arith.constant 5 : index
    %c0_12 = arith.constant 0 : index
    %c0_13 = arith.constant 0 : index
    %11 = vector.load %arg1[%c5, %c0_12, %c0_13] : memref<17x32x17xbf16, #tpu.memory_space<vmem>>, vector<1x32x17xbf16>
    %12 = vector.shape_cast %11 : vector<1x32x17xbf16> to vector<32x17xbf16>
    %c6 = arith.constant 6 : index
    %c0_14 = arith.constant 0 : index
    %c0_15 = arith.constant 0 : index
    %13 = vector.load %arg1[%c6, %c0_14, %c0_15] : memref<17x32x17xbf16, #tpu.memory_space<vmem>>, vector<1x32x17xbf16>
    %14 = vector.shape_cast %13 : vector<1x32x17xbf16> to vector<32x17xbf16>
    %c7 = arith.constant 7 : index
    %c0_16 = arith.constant 0 : index
    %c0_17 = arith.constant 0 : index
    %15 = vector.load %arg1[%c7, %c0_16, %c0_17] : memref<17x32x17xbf16, #tpu.memory_space<vmem>>, vector<1x32x17xbf16>
    %16 = vector.shape_cast %15 : vector<1x32x17xbf16> to vector<32x17xbf16>
    %c8 = arith.constant 8 : index
    %c0_18 = arith.constant 0 : index
    %c0_19 = arith.constant 0 : index
    %17 = vector.load %arg1[%c8, %c0_18, %c0_19] : memref<17x32x17xbf16, #tpu.memory_space<vmem>>, vector<1x32x17xbf16>
    %18 = vector.shape_cast %17 : vector<1x32x17xbf16> to vector<32x17xbf16>
    %c9 = arith.constant 9 : index
    %c0_20 = arith.constant 0 : index
    %c0_21 = arith.constant 0 : index
    %19 = vector.load %arg1[%c9, %c0_20, %c0_21] : memref<17x32x17xbf16, #tpu.memory_space<vmem>>, vector<1x32x17xbf16>
    %20 = vector.shape_cast %19 : vector<1x32x17xbf16> to vector<32x17xbf16>
    %c10 = arith.constant 10 : index
    %c0_22 = arith.constant 0 : index
    %c0_23 = arith.constant 0 : index
    %21 = vector.load %arg1[%c10, %c0_22, %c0_23] : memref<17x32x17xbf16, #tpu.memory_space<vmem>>, vector<1x32x17xbf16>
    %22 = vector.shape_cast %21 : vector<1x32x17xbf16> to vector<32x17xbf16>
    %c11 = arith.constant 11 : index
    %c0_24 = arith.constant 0 : index
    %c0_25 = arith.constant 0 : index
    %23 = vector.load %arg1[%c11, %c0_24, %c0_25] : memref<17x32x17xbf16, #tpu.memory_space<vmem>>, vector<1x32x17xbf16>
    %24 = vector.shape_cast %23 : vector<1x32x17xbf16> to vector<32x17xbf16>
    %c12 = arith.constant 12 : index
    %c0_26 = arith.constant 0 : index
    %c0_27 = arith.constant 0 : index
    %25 = vector.load %arg1[%c12, %c0_26, %c0_27] : memref<17x32x17xbf16, #tpu.memory_space<vmem>>, vector<1x32x17xbf16>
    %26 = vector.shape_cast %25 : vector<1x32x17xbf16> to vector<32x17xbf16>
    %c13 = arith.constant 13 : index
    %c0_28 = arith.constant 0 : index
    %c0_29 = arith.constant 0 : index
    %27 = vector.load %arg1[%c13, %c0_28, %c0_29] : memref<17x32x17xbf16, #tpu.memory_space<vmem>>, vector<1x32x17xbf16>
    %28 = vector.shape_cast %27 : vector<1x32x17xbf16> to vector<32x17xbf16>
    %c14 = arith.constant 14 : index
    %c0_30 = arith.constant 0 : index
    %c0_31 = arith.constant 0 : index
    %29 = vector.load %arg1[%c14, %c0_30, %c0_31] : memref<17x32x17xbf16, #tpu.memory_space<vmem>>, vector<1x32x17xbf16>
    %30 = vector.shape_cast %29 : vector<1x32x17xbf16> to vector<32x17xbf16>
    %c15 = arith.constant 15 : index
    %c0_32 = arith.constant 0 : index
    %c0_33 = arith.constant 0 : index
    %31 = vector.load %arg1[%c15, %c0_32, %c0_33] : memref<17x32x17xbf16, #tpu.memory_space<vmem>>, vector<1x32x17xbf16>
    %32 = vector.shape_cast %31 : vector<1x32x17xbf16> to vector<32x17xbf16>
    %c16 = arith.constant 16 : index
    %c0_34 = arith.constant 0 : index
    %c0_35 = arith.constant 0 : index
    %33 = vector.load %arg1[%c16, %c0_34, %c0_35] : memref<17x32x17xbf16, #tpu.memory_space<vmem>>, vector<1x32x17xbf16>
    %34 = vector.shape_cast %33 : vector<1x32x17xbf16> to vector<32x17xbf16>
    %35 = vector.extract_strided_slice %2 {offsets = [0, 0], sizes = [32, 16], strides = [1, 1]} : vector<32x17xbf16> to vector<32x16xbf16>
    %36 = vector.extract_strided_slice %2 {offsets = [0, 1], sizes = [32, 16], strides = [1, 1]} : vector<32x17xbf16> to vector<32x16xbf16>
    %37 = vector.extract_strided_slice %4 {offsets = [0, 0], sizes = [32, 16], strides = [1, 1]} : vector<32x17xbf16> to vector<32x16xbf16>
    %38 = vector.extract_strided_slice %4 {offsets = [0, 1], sizes = [32, 16], strides = [1, 1]} : vector<32x17xbf16> to vector<32x16xbf16>
    %39 = vector.extract_strided_slice %6 {offsets = [0, 0], sizes = [32, 16], strides = [1, 1]} : vector<32x17xbf16> to vector<32x16xbf16>
    %40 = vector.extract_strided_slice %6 {offsets = [0, 1], sizes = [32, 16], strides = [1, 1]} : vector<32x17xbf16> to vector<32x16xbf16>
    %41 = vector.extract_strided_slice %8 {offsets = [0, 0], sizes = [32, 16], strides = [1, 1]} : vector<32x17xbf16> to vector<32x16xbf16>
    %42 = vector.extract_strided_slice %8 {offsets = [0, 1], sizes = [32, 16], strides = [1, 1]} : vector<32x17xbf16> to vector<32x16xbf16>
    %43 = vector.extract_strided_slice %10 {offsets = [0, 0], sizes = [32, 16], strides = [1, 1]} : vector<32x17xbf16> to vector<32x16xbf16>
    %44 = vector.extract_strided_slice %10 {offsets = [0, 1], sizes = [32, 16], strides = [1, 1]} : vector<32x17xbf16> to vector<32x16xbf16>
    %45 = vector.extract_strided_slice %12 {offsets = [0, 0], sizes = [32, 16], strides = [1, 1]} : vector<32x17xbf16> to vector<32x16xbf16>
    %46 = vector.extract_strided_slice %12 {offsets = [0, 1], sizes = [32, 16], strides = [1, 1]} : vector<32x17xbf16> to vector<32x16xbf16>
    %47 = vector.extract_strided_slice %14 {offsets = [0, 0], sizes = [32, 16], strides = [1, 1]} : vector<32x17xbf16> to vector<32x16xbf16>
    %48 = vector.extract_strided_slice %14 {offsets = [0, 1], sizes = [32, 16], strides = [1, 1]} : vector<32x17xbf16> to vector<32x16xbf16>
    %49 = vector.extract_strided_slice %16 {offsets = [0, 0], sizes = [32, 16], strides = [1, 1]} : vector<32x17xbf16> to vector<32x16xbf16>
    %50 = vector.extract_strided_slice %16 {offsets = [0, 1], sizes = [32, 16], strides = [1, 1]} : vector<32x17xbf16> to vector<32x16xbf16>
    %51 = vector.extract_strided_slice %18 {offsets = [0, 0], sizes = [32, 16], strides = [1, 1]} : vector<32x17xbf16> to vector<32x16xbf16>
    %52 = vector.extract_strided_slice %18 {offsets = [0, 1], sizes = [32, 16], strides = [1, 1]} : vector<32x17xbf16> to vector<32x16xbf16>
    %53 = vector.extract_strided_slice %20 {offsets = [0, 0], sizes = [32, 16], strides = [1, 1]} : vector<32x17xbf16> to vector<32x16xbf16>
    %54 = vector.extract_strided_slice %20 {offsets = [0, 1], sizes = [32, 16], strides = [1, 1]} : vector<32x17xbf16> to vector<32x16xbf16>
    %55 = vector.extract_strided_slice %22 {offsets = [0, 0], sizes = [32, 16], strides = [1, 1]} : vector<32x17xbf16> to vector<32x16xbf16>
    %56 = vector.extract_strided_slice %22 {offsets = [0, 1], sizes = [32, 16], strides = [1, 1]} : vector<32x17xbf16> to vector<32x16xbf16>
    %57 = vector.extract_strided_slice %24 {offsets = [0, 0], sizes = [32, 16], strides = [1, 1]} : vector<32x17xbf16> to vector<32x16xbf16>
    %58 = vector.extract_strided_slice %24 {offsets = [0, 1], sizes = [32, 16], strides = [1, 1]} : vector<32x17xbf16> to vector<32x16xbf16>
    %59 = vector.extract_strided_slice %26 {offsets = [0, 0], sizes = [32, 16], strides = [1, 1]} : vector<32x17xbf16> to vector<32x16xbf16>
    %60 = vector.extract_strided_slice %26 {offsets = [0, 1], sizes = [32, 16], strides = [1, 1]} : vector<32x17xbf16> to vector<32x16xbf16>
    %61 = vector.extract_strided_slice %28 {offsets = [0, 0], sizes = [32, 16], strides = [1, 1]} : vector<32x17xbf16> to vector<32x16xbf16>
    %62 = vector.extract_strided_slice %28 {offsets = [0, 1], sizes = [32, 16], strides = [1, 1]} : vector<32x17xbf16> to vector<32x16xbf16>
    %63 = vector.extract_strided_slice %30 {offsets = [0, 0], sizes = [32, 16], strides = [1, 1]} : vector<32x17xbf16> to vector<32x16xbf16>
    %64 = vector.extract_strided_slice %30 {offsets = [0, 1], sizes = [32, 16], strides = [1, 1]} : vector<32x17xbf16> to vector<32x16xbf16>
    %65 = vector.extract_strided_slice %32 {offsets = [0, 0], sizes = [32, 16], strides = [1, 1]} : vector<32x17xbf16> to vector<32x16xbf16>
    %66 = vector.extract_strided_slice %32 {offsets = [0, 1], sizes = [32, 16], strides = [1, 1]} : vector<32x17xbf16> to vector<32x16xbf16>
    %67 = vector.extract_strided_slice %34 {offsets = [0, 0], sizes = [32, 16], strides = [1, 1]} : vector<32x17xbf16> to vector<32x16xbf16>
    %68 = vector.extract_strided_slice %34 {offsets = [0, 1], sizes = [32, 16], strides = [1, 1]} : vector<32x17xbf16> to vector<32x16xbf16>
    %69 = tpu.concatenate %35, %36, %37, %38 in 0 : vector<32x16xbf16>, vector<32x16xbf16>, vector<32x16xbf16>, vector<32x16xbf16> -> vector<128x16xbf16>
    %70 = tpu.concatenate %37, %38, %39, %40 in 0 : vector<32x16xbf16>, vector<32x16xbf16>, vector<32x16xbf16>, vector<32x16xbf16> -> vector<128x16xbf16>
    %71 = tpu.concatenate %39, %40, %41, %42 in 0 : vector<32x16xbf16>, vector<32x16xbf16>, vector<32x16xbf16>, vector<32x16xbf16> -> vector<128x16xbf16>
    %72 = tpu.concatenate %41, %42, %43, %44 in 0 : vector<32x16xbf16>, vector<32x16xbf16>, vector<32x16xbf16>, vector<32x16xbf16> -> vector<128x16xbf16>
    %73 = tpu.concatenate %43, %44, %45, %46 in 0 : vector<32x16xbf16>, vector<32x16xbf16>, vector<32x16xbf16>, vector<32x16xbf16> -> vector<128x16xbf16>
    %74 = tpu.concatenate %45, %46, %47, %48 in 0 : vector<32x16xbf16>, vector<32x16xbf16>, vector<32x16xbf16>, vector<32x16xbf16> -> vector<128x16xbf16>
    %75 = tpu.concatenate %47, %48, %49, %50 in 0 : vector<32x16xbf16>, vector<32x16xbf16>, vector<32x16xbf16>, vector<32x16xbf16> -> vector<128x16xbf16>
    %76 = tpu.concatenate %49, %50, %51, %52 in 0 : vector<32x16xbf16>, vector<32x16xbf16>, vector<32x16xbf16>, vector<32x16xbf16> -> vector<128x16xbf16>
    %77 = tpu.concatenate %51, %52, %53, %54 in 0 : vector<32x16xbf16>, vector<32x16xbf16>, vector<32x16xbf16>, vector<32x16xbf16> -> vector<128x16xbf16>
    %78 = tpu.concatenate %53, %54, %55, %56 in 0 : vector<32x16xbf16>, vector<32x16xbf16>, vector<32x16xbf16>, vector<32x16xbf16> -> vector<128x16xbf16>
    %79 = tpu.concatenate %55, %56, %57, %58 in 0 : vector<32x16xbf16>, vector<32x16xbf16>, vector<32x16xbf16>, vector<32x16xbf16> -> vector<128x16xbf16>
    %80 = tpu.concatenate %57, %58, %59, %60 in 0 : vector<32x16xbf16>, vector<32x16xbf16>, vector<32x16xbf16>, vector<32x16xbf16> -> vector<128x16xbf16>
    %81 = tpu.concatenate %59, %60, %61, %62 in 0 : vector<32x16xbf16>, vector<32x16xbf16>, vector<32x16xbf16>, vector<32x16xbf16> -> vector<128x16xbf16>
    %82 = tpu.concatenate %61, %62, %63, %64 in 0 : vector<32x16xbf16>, vector<32x16xbf16>, vector<32x16xbf16>, vector<32x16xbf16> -> vector<128x16xbf16>
    %83 = tpu.concatenate %63, %64, %65, %66 in 0 : vector<32x16xbf16>, vector<32x16xbf16>, vector<32x16xbf16>, vector<32x16xbf16> -> vector<128x16xbf16>
    %84 = tpu.concatenate %65, %66, %67, %68 in 0 : vector<32x16xbf16>, vector<32x16xbf16>, vector<32x16xbf16>, vector<32x16xbf16> -> vector<128x16xbf16>
    %85 = tpu.concatenate %69, %70, %71, %72, %73, %74, %75, %76, %77, %78, %79, %80, %81, %82, %83, %84 in 1 : vector<128x16xbf16>, vector<128x16xbf16>, vector<128x16xbf16>, vector<128x16xbf16>, vector<128x16xbf16>, vector<128x16xbf16>, vector<128x16xbf16>, vector<128x16xbf16>, vector<128x16xbf16>, vector<128x16xbf16>, vector<128x16xbf16>, vector<128x16xbf16>, vector<128x16xbf16>, vector<128x16xbf16>, vector<128x16xbf16>, vector<128x16xbf16> -> vector<128x256xbf16>
    %cst = arith.constant dense<0.000000e+00> : vector<16x256xf32>
    %86 = tpu.matmul %0, %85, %cst {dimension_numbers = #tpu.dot_dimension_numbers<[1], [0], [0], [1], [0, 0, 1, 1], [], []>} : vector<16x128xbf16>, vector<128x256xbf16>, vector<16x256xf32> -> vector<16x256xf32>
    %87 = arith.truncf %86 : vector<16x256xf32> to vector<16x256xbf16>
    %c0_36 = arith.constant 0 : index
    %c0_37 = arith.constant 0 : index
    %c0_38 = arith.constant 0 : index
    %88 = vector.load %arg3[%c0_36, %c0_37, %c0_38] : memref<1x16x256xbf16, #tpu.memory_space<vmem>>, vector<1x16x256xbf16>
    %89 = vector.shape_cast %88 : vector<1x16x256xbf16> to vector<16x256xbf16>
    %90 = vector.shape_cast %87 : vector<16x256xbf16> to vector<1x16x256xbf16>
    tpu.vector_store %arg3[%c0_36, %c0_37, %c0_38], %90 {strides = array<i32>} : memref<1x16x256xbf16, #tpu.memory_space<vmem>>, vector<1x16x256xbf16>,
    %cst_39 = arith.constant dense<0.000000e+00> : vector<16xf32>
    %91 = vector.multi_reduction <add>, %86, %cst_39 [1] : vector<16x256xf32> to vector<16xf32>
    %92 = vector.shape_cast %91 : vector<16xf32> to vector<16x1xf32>
    %93 = arith.mulf %86, %86 : vector<16x256xf32>
    %cst_40 = arith.constant dense<0.000000e+00> : vector<16xf32>
    %94 = vector.multi_reduction <add>, %93, %cst_40 [1] : vector<16x256xf32> to vector<16xf32>
    %95 = vector.shape_cast %94 : vector<16xf32> to vector<16x1xf32>
    %96 = tpu.concatenate %92, %95 in 1 : vector<16x1xf32>, vector<16x1xf32> -> vector<16x2xf32>
    %c0_41 = arith.constant 0 : index
    %c0_42 = arith.constant 0 : index
    %c0_43 = arith.constant 0 : index
    %97 = vector.load %arg4[%c0_41, %c0_42, %c0_43] : memref<1x16x2xf32, #tpu.memory_space<vmem>>, vector<1x16x2xf32>
    %98 = vector.shape_cast %97 : vector<1x16x2xf32> to vector<16x2xf32>
    %99 = vector.shape_cast %96 : vector<16x2xf32> to vector<1x16x2xf32>
    tpu.vector_store %arg4[%c0_41, %c0_42, %c0_43], %99 {strides = array<i32>} : memref<1x16x2xf32, #tpu.memory_space<vmem>>, vector<1x16x2xf32>,
    return
  }
  func.func @transform_0(%arg0: i32) -> (i32, i32, i32) {
    %c0_i32 = arith.constant 0 : i32
    %c0_i32_0 = arith.constant 0 : i32
    %c0_i32_1 = arith.constant 0 : i32
    return %arg0, %c0_i32, %c0_i32_0 : i32, i32, i32
  }
  func.func @transform_1(%arg0: i32) -> (i32, i32) {
    %c0_i32 = arith.constant 0 : i32
    %c0_i32_0 = arith.constant 0 : i32
    %c0_i32_1 = arith.constant 0 : i32
    return %c0_i32, %c0_i32_0 : i32, i32
  }
  func.func @transform_2(%arg0: i32) -> (i32, i32, i32) {
    %c0_i32 = arith.constant 0 : i32
    %c0_i32_0 = arith.constant 0 : i32
    %c0_i32_1 = arith.constant 0 : i32
    return %arg0, %c0_i32, %c0_i32_0 : i32, i32, i32
  }
  func.func @transform_3(%arg0: i32) -> (i32, i32, i32) {
    %c0_i32 = arith.constant 0 : i32
    %c0_i32_0 = arith.constant 0 : i32
    %c0_i32_1 = arith.constant 0 : i32
    return %arg0, %c0_i32, %c0_i32_0 : i32, i32, i32
  }
}

module attributes {stable_mosaic.version = 11 : i64} {
  func.func @kernel(%arg0: i32, %arg1: memref<9x64x9xbf16, #tpu.memory_space<vmem>>, %arg2: memref<32x256xbf16, #tpu.memory_space<vmem>>, %arg3: memref<1x32x64xbf16, #tpu.memory_space<vmem>>, %arg4: memref<1x32x2xf32, #tpu.memory_space<vmem>>) attributes {dimension_semantics = [#tpu.dimension_semantics<parallel>], iteration_bounds = array<i64: 2>, scalar_prefetch = 0 : i64, scratch_operands = 0 : i64, tpu.core_type = #tpu.core_type<tc>, window_params = [{transform_indices = @transform_0, window_bounds = array<i64: 9, 64, 9>}, {pipeline_mode = #tpu.pipeline_mode<synchronous>, transform_indices = @transform_1, window_bounds = array<i64: 32, 256>}, {transform_indices = @transform_2, window_bounds = array<i64: 1, 32, 64>}, {transform_indices = @transform_3, window_bounds = array<i64: 1, 32, 2>}]} {
    %c0 = arith.constant 0 : index
    %c0_0 = arith.constant 0 : index
    %0 = vector.load %arg2[%c0, %c0_0] : memref<32x256xbf16, #tpu.memory_space<vmem>>, vector<32x256xbf16>
    %c0_1 = arith.constant 0 : index
    %c0_2 = arith.constant 0 : index
    %c0_3 = arith.constant 0 : index
    %1 = vector.load %arg1[%c0_1, %c0_2, %c0_3] : memref<9x64x9xbf16, #tpu.memory_space<vmem>>, vector<1x64x9xbf16>
    %2 = vector.shape_cast %1 : vector<1x64x9xbf16> to vector<64x9xbf16>
    %c1 = arith.constant 1 : index
    %c0_4 = arith.constant 0 : index
    %c0_5 = arith.constant 0 : index
    %3 = vector.load %arg1[%c1, %c0_4, %c0_5] : memref<9x64x9xbf16, #tpu.memory_space<vmem>>, vector<1x64x9xbf16>
    %4 = vector.shape_cast %3 : vector<1x64x9xbf16> to vector<64x9xbf16>
    %c2 = arith.constant 2 : index
    %c0_6 = arith.constant 0 : index
    %c0_7 = arith.constant 0 : index
    %5 = vector.load %arg1[%c2, %c0_6, %c0_7] : memref<9x64x9xbf16, #tpu.memory_space<vmem>>, vector<1x64x9xbf16>
    %6 = vector.shape_cast %5 : vector<1x64x9xbf16> to vector<64x9xbf16>
    %c3 = arith.constant 3 : index
    %c0_8 = arith.constant 0 : index
    %c0_9 = arith.constant 0 : index
    %7 = vector.load %arg1[%c3, %c0_8, %c0_9] : memref<9x64x9xbf16, #tpu.memory_space<vmem>>, vector<1x64x9xbf16>
    %8 = vector.shape_cast %7 : vector<1x64x9xbf16> to vector<64x9xbf16>
    %c4 = arith.constant 4 : index
    %c0_10 = arith.constant 0 : index
    %c0_11 = arith.constant 0 : index
    %9 = vector.load %arg1[%c4, %c0_10, %c0_11] : memref<9x64x9xbf16, #tpu.memory_space<vmem>>, vector<1x64x9xbf16>
    %10 = vector.shape_cast %9 : vector<1x64x9xbf16> to vector<64x9xbf16>
    %c5 = arith.constant 5 : index
    %c0_12 = arith.constant 0 : index
    %c0_13 = arith.constant 0 : index
    %11 = vector.load %arg1[%c5, %c0_12, %c0_13] : memref<9x64x9xbf16, #tpu.memory_space<vmem>>, vector<1x64x9xbf16>
    %12 = vector.shape_cast %11 : vector<1x64x9xbf16> to vector<64x9xbf16>
    %c6 = arith.constant 6 : index
    %c0_14 = arith.constant 0 : index
    %c0_15 = arith.constant 0 : index
    %13 = vector.load %arg1[%c6, %c0_14, %c0_15] : memref<9x64x9xbf16, #tpu.memory_space<vmem>>, vector<1x64x9xbf16>
    %14 = vector.shape_cast %13 : vector<1x64x9xbf16> to vector<64x9xbf16>
    %c7 = arith.constant 7 : index
    %c0_16 = arith.constant 0 : index
    %c0_17 = arith.constant 0 : index
    %15 = vector.load %arg1[%c7, %c0_16, %c0_17] : memref<9x64x9xbf16, #tpu.memory_space<vmem>>, vector<1x64x9xbf16>
    %16 = vector.shape_cast %15 : vector<1x64x9xbf16> to vector<64x9xbf16>
    %c8 = arith.constant 8 : index
    %c0_18 = arith.constant 0 : index
    %c0_19 = arith.constant 0 : index
    %17 = vector.load %arg1[%c8, %c0_18, %c0_19] : memref<9x64x9xbf16, #tpu.memory_space<vmem>>, vector<1x64x9xbf16>
    %18 = vector.shape_cast %17 : vector<1x64x9xbf16> to vector<64x9xbf16>
    %19 = vector.extract_strided_slice %2 {offsets = [0, 0], sizes = [64, 8], strides = [1, 1]} : vector<64x9xbf16> to vector<64x8xbf16>
    %20 = vector.extract_strided_slice %2 {offsets = [0, 1], sizes = [64, 8], strides = [1, 1]} : vector<64x9xbf16> to vector<64x8xbf16>
    %21 = vector.extract_strided_slice %4 {offsets = [0, 0], sizes = [64, 8], strides = [1, 1]} : vector<64x9xbf16> to vector<64x8xbf16>
    %22 = vector.extract_strided_slice %4 {offsets = [0, 1], sizes = [64, 8], strides = [1, 1]} : vector<64x9xbf16> to vector<64x8xbf16>
    %23 = vector.extract_strided_slice %6 {offsets = [0, 0], sizes = [64, 8], strides = [1, 1]} : vector<64x9xbf16> to vector<64x8xbf16>
    %24 = vector.extract_strided_slice %6 {offsets = [0, 1], sizes = [64, 8], strides = [1, 1]} : vector<64x9xbf16> to vector<64x8xbf16>
    %25 = vector.extract_strided_slice %8 {offsets = [0, 0], sizes = [64, 8], strides = [1, 1]} : vector<64x9xbf16> to vector<64x8xbf16>
    %26 = vector.extract_strided_slice %8 {offsets = [0, 1], sizes = [64, 8], strides = [1, 1]} : vector<64x9xbf16> to vector<64x8xbf16>
    %27 = vector.extract_strided_slice %10 {offsets = [0, 0], sizes = [64, 8], strides = [1, 1]} : vector<64x9xbf16> to vector<64x8xbf16>
    %28 = vector.extract_strided_slice %10 {offsets = [0, 1], sizes = [64, 8], strides = [1, 1]} : vector<64x9xbf16> to vector<64x8xbf16>
    %29 = vector.extract_strided_slice %12 {offsets = [0, 0], sizes = [64, 8], strides = [1, 1]} : vector<64x9xbf16> to vector<64x8xbf16>
    %30 = vector.extract_strided_slice %12 {offsets = [0, 1], sizes = [64, 8], strides = [1, 1]} : vector<64x9xbf16> to vector<64x8xbf16>
    %31 = vector.extract_strided_slice %14 {offsets = [0, 0], sizes = [64, 8], strides = [1, 1]} : vector<64x9xbf16> to vector<64x8xbf16>
    %32 = vector.extract_strided_slice %14 {offsets = [0, 1], sizes = [64, 8], strides = [1, 1]} : vector<64x9xbf16> to vector<64x8xbf16>
    %33 = vector.extract_strided_slice %16 {offsets = [0, 0], sizes = [64, 8], strides = [1, 1]} : vector<64x9xbf16> to vector<64x8xbf16>
    %34 = vector.extract_strided_slice %16 {offsets = [0, 1], sizes = [64, 8], strides = [1, 1]} : vector<64x9xbf16> to vector<64x8xbf16>
    %35 = vector.extract_strided_slice %18 {offsets = [0, 0], sizes = [64, 8], strides = [1, 1]} : vector<64x9xbf16> to vector<64x8xbf16>
    %36 = vector.extract_strided_slice %18 {offsets = [0, 1], sizes = [64, 8], strides = [1, 1]} : vector<64x9xbf16> to vector<64x8xbf16>
    %37 = tpu.concatenate %19, %20, %21, %22 in 0 : vector<64x8xbf16>, vector<64x8xbf16>, vector<64x8xbf16>, vector<64x8xbf16> -> vector<256x8xbf16>
    %38 = tpu.concatenate %21, %22, %23, %24 in 0 : vector<64x8xbf16>, vector<64x8xbf16>, vector<64x8xbf16>, vector<64x8xbf16> -> vector<256x8xbf16>
    %39 = tpu.concatenate %23, %24, %25, %26 in 0 : vector<64x8xbf16>, vector<64x8xbf16>, vector<64x8xbf16>, vector<64x8xbf16> -> vector<256x8xbf16>
    %40 = tpu.concatenate %25, %26, %27, %28 in 0 : vector<64x8xbf16>, vector<64x8xbf16>, vector<64x8xbf16>, vector<64x8xbf16> -> vector<256x8xbf16>
    %41 = tpu.concatenate %27, %28, %29, %30 in 0 : vector<64x8xbf16>, vector<64x8xbf16>, vector<64x8xbf16>, vector<64x8xbf16> -> vector<256x8xbf16>
    %42 = tpu.concatenate %29, %30, %31, %32 in 0 : vector<64x8xbf16>, vector<64x8xbf16>, vector<64x8xbf16>, vector<64x8xbf16> -> vector<256x8xbf16>
    %43 = tpu.concatenate %31, %32, %33, %34 in 0 : vector<64x8xbf16>, vector<64x8xbf16>, vector<64x8xbf16>, vector<64x8xbf16> -> vector<256x8xbf16>
    %44 = tpu.concatenate %33, %34, %35, %36 in 0 : vector<64x8xbf16>, vector<64x8xbf16>, vector<64x8xbf16>, vector<64x8xbf16> -> vector<256x8xbf16>
    %45 = tpu.concatenate %37, %38, %39, %40, %41, %42, %43, %44 in 1 : vector<256x8xbf16>, vector<256x8xbf16>, vector<256x8xbf16>, vector<256x8xbf16>, vector<256x8xbf16>, vector<256x8xbf16>, vector<256x8xbf16>, vector<256x8xbf16> -> vector<256x64xbf16>
    %cst = arith.constant dense<0.000000e+00> : vector<32x64xf32>
    %46 = tpu.matmul %0, %45, %cst {dimension_numbers = #tpu.dot_dimension_numbers<[1], [0], [0], [1], [0, 0, 1, 1], [], []>} : vector<32x256xbf16>, vector<256x64xbf16>, vector<32x64xf32> -> vector<32x64xf32>
    %47 = arith.truncf %46 : vector<32x64xf32> to vector<32x64xbf16>
    %c0_20 = arith.constant 0 : index
    %c0_21 = arith.constant 0 : index
    %c0_22 = arith.constant 0 : index
    %48 = vector.load %arg3[%c0_20, %c0_21, %c0_22] : memref<1x32x64xbf16, #tpu.memory_space<vmem>>, vector<1x32x64xbf16>
    %49 = vector.shape_cast %48 : vector<1x32x64xbf16> to vector<32x64xbf16>
    %50 = vector.shape_cast %47 : vector<32x64xbf16> to vector<1x32x64xbf16>
    tpu.vector_store %arg3[%c0_20, %c0_21, %c0_22], %50 {strides = array<i32>} : memref<1x32x64xbf16, #tpu.memory_space<vmem>>, vector<1x32x64xbf16>,
    %cst_23 = arith.constant dense<0.000000e+00> : vector<32xf32>
    %51 = vector.multi_reduction <add>, %46, %cst_23 [1] : vector<32x64xf32> to vector<32xf32>
    %52 = vector.shape_cast %51 : vector<32xf32> to vector<32x1xf32>
    %53 = arith.mulf %46, %46 : vector<32x64xf32>
    %cst_24 = arith.constant dense<0.000000e+00> : vector<32xf32>
    %54 = vector.multi_reduction <add>, %53, %cst_24 [1] : vector<32x64xf32> to vector<32xf32>
    %55 = vector.shape_cast %54 : vector<32xf32> to vector<32x1xf32>
    %56 = tpu.concatenate %52, %55 in 1 : vector<32x1xf32>, vector<32x1xf32> -> vector<32x2xf32>
    %c0_25 = arith.constant 0 : index
    %c0_26 = arith.constant 0 : index
    %c0_27 = arith.constant 0 : index
    %57 = vector.load %arg4[%c0_25, %c0_26, %c0_27] : memref<1x32x2xf32, #tpu.memory_space<vmem>>, vector<1x32x2xf32>
    %58 = vector.shape_cast %57 : vector<1x32x2xf32> to vector<32x2xf32>
    %59 = vector.shape_cast %56 : vector<32x2xf32> to vector<1x32x2xf32>
    tpu.vector_store %arg4[%c0_25, %c0_26, %c0_27], %59 {strides = array<i32>} : memref<1x32x2xf32, #tpu.memory_space<vmem>>, vector<1x32x2xf32>,
    return
  }
  func.func @transform_0(%arg0: i32) -> (i32, i32, i32) {
    %c0_i32 = arith.constant 0 : i32
    %c0_i32_0 = arith.constant 0 : i32
    %c0_i32_1 = arith.constant 0 : i32
    return %arg0, %c0_i32, %c0_i32_0 : i32, i32, i32
  }
  func.func @transform_1(%arg0: i32) -> (i32, i32) {
    %c0_i32 = arith.constant 0 : i32
    %c0_i32_0 = arith.constant 0 : i32
    %c0_i32_1 = arith.constant 0 : i32
    return %c0_i32, %c0_i32_0 : i32, i32
  }
  func.func @transform_2(%arg0: i32) -> (i32, i32, i32) {
    %c0_i32 = arith.constant 0 : i32
    %c0_i32_0 = arith.constant 0 : i32
    %c0_i32_1 = arith.constant 0 : i32
    return %arg0, %c0_i32, %c0_i32_0 : i32, i32, i32
  }
  func.func @transform_3(%arg0: i32) -> (i32, i32, i32) {
    %c0_i32 = arith.constant 0 : i32
    %c0_i32_0 = arith.constant 0 : i32
    %c0_i32_1 = arith.constant 0 : i32
    return %arg0, %c0_i32, %c0_i32_0 : i32, i32, i32
  }
}

module attributes {stable_mosaic.version = 11 : i64} {
  func.func @kernel(%arg0: i32, %arg1: memref<10x32x10xbf16, #tpu.memory_space<vmem>>, %arg2: memref<64x512xbf16, #tpu.memory_space<vmem>>, %arg3: memref<1x64x49xbf16, #tpu.memory_space<vmem>>, %arg4: memref<1x64x2xf32, #tpu.memory_space<vmem>>) attributes {dimension_semantics = [#tpu.dimension_semantics<parallel>], iteration_bounds = array<i64: 2>, scalar_prefetch = 0 : i64, scratch_operands = 0 : i64, tpu.core_type = #tpu.core_type<tc>, window_params = [{transform_indices = @transform_0, window_bounds = array<i64: 10, 32, 10>}, {pipeline_mode = #tpu.pipeline_mode<synchronous>, transform_indices = @transform_1, window_bounds = array<i64: 64, 512>}, {transform_indices = @transform_2, window_bounds = array<i64: 1, 64, 49>}, {transform_indices = @transform_3, window_bounds = array<i64: 1, 64, 2>}]} {
    %c0 = arith.constant 0 : index
    %c0_0 = arith.constant 0 : index
    %0 = vector.load %arg2[%c0, %c0_0] : memref<64x512xbf16, #tpu.memory_space<vmem>>, vector<64x512xbf16>
    %c0_1 = arith.constant 0 : index
    %c0_2 = arith.constant 0 : index
    %c0_3 = arith.constant 0 : index
    %1 = vector.load %arg1[%c0_1, %c0_2, %c0_3] : memref<10x32x10xbf16, #tpu.memory_space<vmem>>, vector<1x32x10xbf16>
    %2 = vector.shape_cast %1 : vector<1x32x10xbf16> to vector<32x10xbf16>
    %c1 = arith.constant 1 : index
    %c0_4 = arith.constant 0 : index
    %c0_5 = arith.constant 0 : index
    %3 = vector.load %arg1[%c1, %c0_4, %c0_5] : memref<10x32x10xbf16, #tpu.memory_space<vmem>>, vector<1x32x10xbf16>
    %4 = vector.shape_cast %3 : vector<1x32x10xbf16> to vector<32x10xbf16>
    %c2 = arith.constant 2 : index
    %c0_6 = arith.constant 0 : index
    %c0_7 = arith.constant 0 : index
    %5 = vector.load %arg1[%c2, %c0_6, %c0_7] : memref<10x32x10xbf16, #tpu.memory_space<vmem>>, vector<1x32x10xbf16>
    %6 = vector.shape_cast %5 : vector<1x32x10xbf16> to vector<32x10xbf16>
    %c3 = arith.constant 3 : index
    %c0_8 = arith.constant 0 : index
    %c0_9 = arith.constant 0 : index
    %7 = vector.load %arg1[%c3, %c0_8, %c0_9] : memref<10x32x10xbf16, #tpu.memory_space<vmem>>, vector<1x32x10xbf16>
    %8 = vector.shape_cast %7 : vector<1x32x10xbf16> to vector<32x10xbf16>
    %c4 = arith.constant 4 : index
    %c0_10 = arith.constant 0 : index
    %c0_11 = arith.constant 0 : index
    %9 = vector.load %arg1[%c4, %c0_10, %c0_11] : memref<10x32x10xbf16, #tpu.memory_space<vmem>>, vector<1x32x10xbf16>
    %10 = vector.shape_cast %9 : vector<1x32x10xbf16> to vector<32x10xbf16>
    %c5 = arith.constant 5 : index
    %c0_12 = arith.constant 0 : index
    %c0_13 = arith.constant 0 : index
    %11 = vector.load %arg1[%c5, %c0_12, %c0_13] : memref<10x32x10xbf16, #tpu.memory_space<vmem>>, vector<1x32x10xbf16>
    %12 = vector.shape_cast %11 : vector<1x32x10xbf16> to vector<32x10xbf16>
    %c6 = arith.constant 6 : index
    %c0_14 = arith.constant 0 : index
    %c0_15 = arith.constant 0 : index
    %13 = vector.load %arg1[%c6, %c0_14, %c0_15] : memref<10x32x10xbf16, #tpu.memory_space<vmem>>, vector<1x32x10xbf16>
    %14 = vector.shape_cast %13 : vector<1x32x10xbf16> to vector<32x10xbf16>
    %c7 = arith.constant 7 : index
    %c0_16 = arith.constant 0 : index
    %c0_17 = arith.constant 0 : index
    %15 = vector.load %arg1[%c7, %c0_16, %c0_17] : memref<10x32x10xbf16, #tpu.memory_space<vmem>>, vector<1x32x10xbf16>
    %16 = vector.shape_cast %15 : vector<1x32x10xbf16> to vector<32x10xbf16>
    %c8 = arith.constant 8 : index
    %c0_18 = arith.constant 0 : index
    %c0_19 = arith.constant 0 : index
    %17 = vector.load %arg1[%c8, %c0_18, %c0_19] : memref<10x32x10xbf16, #tpu.memory_space<vmem>>, vector<1x32x10xbf16>
    %18 = vector.shape_cast %17 : vector<1x32x10xbf16> to vector<32x10xbf16>
    %c9 = arith.constant 9 : index
    %c0_20 = arith.constant 0 : index
    %c0_21 = arith.constant 0 : index
    %19 = vector.load %arg1[%c9, %c0_20, %c0_21] : memref<10x32x10xbf16, #tpu.memory_space<vmem>>, vector<1x32x10xbf16>
    %20 = vector.shape_cast %19 : vector<1x32x10xbf16> to vector<32x10xbf16>
    %21 = vector.extract_strided_slice %2 {offsets = [0, 0], sizes = [32, 7], strides = [1, 1]} : vector<32x10xbf16> to vector<32x7xbf16>
    %22 = vector.extract_strided_slice %2 {offsets = [0, 1], sizes = [32, 7], strides = [1, 1]} : vector<32x10xbf16> to vector<32x7xbf16>
    %23 = vector.extract_strided_slice %2 {offsets = [0, 2], sizes = [32, 7], strides = [1, 1]} : vector<32x10xbf16> to vector<32x7xbf16>
    %24 = vector.extract_strided_slice %2 {offsets = [0, 3], sizes = [32, 7], strides = [1, 1]} : vector<32x10xbf16> to vector<32x7xbf16>
    %25 = vector.extract_strided_slice %4 {offsets = [0, 0], sizes = [32, 7], strides = [1, 1]} : vector<32x10xbf16> to vector<32x7xbf16>
    %26 = vector.extract_strided_slice %4 {offsets = [0, 1], sizes = [32, 7], strides = [1, 1]} : vector<32x10xbf16> to vector<32x7xbf16>
    %27 = vector.extract_strided_slice %4 {offsets = [0, 2], sizes = [32, 7], strides = [1, 1]} : vector<32x10xbf16> to vector<32x7xbf16>
    %28 = vector.extract_strided_slice %4 {offsets = [0, 3], sizes = [32, 7], strides = [1, 1]} : vector<32x10xbf16> to vector<32x7xbf16>
    %29 = vector.extract_strided_slice %6 {offsets = [0, 0], sizes = [32, 7], strides = [1, 1]} : vector<32x10xbf16> to vector<32x7xbf16>
    %30 = vector.extract_strided_slice %6 {offsets = [0, 1], sizes = [32, 7], strides = [1, 1]} : vector<32x10xbf16> to vector<32x7xbf16>
    %31 = vector.extract_strided_slice %6 {offsets = [0, 2], sizes = [32, 7], strides = [1, 1]} : vector<32x10xbf16> to vector<32x7xbf16>
    %32 = vector.extract_strided_slice %6 {offsets = [0, 3], sizes = [32, 7], strides = [1, 1]} : vector<32x10xbf16> to vector<32x7xbf16>
    %33 = vector.extract_strided_slice %8 {offsets = [0, 0], sizes = [32, 7], strides = [1, 1]} : vector<32x10xbf16> to vector<32x7xbf16>
    %34 = vector.extract_strided_slice %8 {offsets = [0, 1], sizes = [32, 7], strides = [1, 1]} : vector<32x10xbf16> to vector<32x7xbf16>
    %35 = vector.extract_strided_slice %8 {offsets = [0, 2], sizes = [32, 7], strides = [1, 1]} : vector<32x10xbf16> to vector<32x7xbf16>
    %36 = vector.extract_strided_slice %8 {offsets = [0, 3], sizes = [32, 7], strides = [1, 1]} : vector<32x10xbf16> to vector<32x7xbf16>
    %37 = vector.extract_strided_slice %10 {offsets = [0, 0], sizes = [32, 7], strides = [1, 1]} : vector<32x10xbf16> to vector<32x7xbf16>
    %38 = vector.extract_strided_slice %10 {offsets = [0, 1], sizes = [32, 7], strides = [1, 1]} : vector<32x10xbf16> to vector<32x7xbf16>
    %39 = vector.extract_strided_slice %10 {offsets = [0, 2], sizes = [32, 7], strides = [1, 1]} : vector<32x10xbf16> to vector<32x7xbf16>
    %40 = vector.extract_strided_slice %10 {offsets = [0, 3], sizes = [32, 7], strides = [1, 1]} : vector<32x10xbf16> to vector<32x7xbf16>
    %41 = vector.extract_strided_slice %12 {offsets = [0, 0], sizes = [32, 7], strides = [1, 1]} : vector<32x10xbf16> to vector<32x7xbf16>
    %42 = vector.extract_strided_slice %12 {offsets = [0, 1], sizes = [32, 7], strides = [1, 1]} : vector<32x10xbf16> to vector<32x7xbf16>
    %43 = vector.extract_strided_slice %12 {offsets = [0, 2], sizes = [32, 7], strides = [1, 1]} : vector<32x10xbf16> to vector<32x7xbf16>
    %44 = vector.extract_strided_slice %12 {offsets = [0, 3], sizes = [32, 7], strides = [1, 1]} : vector<32x10xbf16> to vector<32x7xbf16>
    %45 = vector.extract_strided_slice %14 {offsets = [0, 0], sizes = [32, 7], strides = [1, 1]} : vector<32x10xbf16> to vector<32x7xbf16>
    %46 = vector.extract_strided_slice %14 {offsets = [0, 1], sizes = [32, 7], strides = [1, 1]} : vector<32x10xbf16> to vector<32x7xbf16>
    %47 = vector.extract_strided_slice %14 {offsets = [0, 2], sizes = [32, 7], strides = [1, 1]} : vector<32x10xbf16> to vector<32x7xbf16>
    %48 = vector.extract_strided_slice %14 {offsets = [0, 3], sizes = [32, 7], strides = [1, 1]} : vector<32x10xbf16> to vector<32x7xbf16>
    %49 = vector.extract_strided_slice %16 {offsets = [0, 0], sizes = [32, 7], strides = [1, 1]} : vector<32x10xbf16> to vector<32x7xbf16>
    %50 = vector.extract_strided_slice %16 {offsets = [0, 1], sizes = [32, 7], strides = [1, 1]} : vector<32x10xbf16> to vector<32x7xbf16>
    %51 = vector.extract_strided_slice %16 {offsets = [0, 2], sizes = [32, 7], strides = [1, 1]} : vector<32x10xbf16> to vector<32x7xbf16>
    %52 = vector.extract_strided_slice %16 {offsets = [0, 3], sizes = [32, 7], strides = [1, 1]} : vector<32x10xbf16> to vector<32x7xbf16>
    %53 = vector.extract_strided_slice %18 {offsets = [0, 0], sizes = [32, 7], strides = [1, 1]} : vector<32x10xbf16> to vector<32x7xbf16>
    %54 = vector.extract_strided_slice %18 {offsets = [0, 1], sizes = [32, 7], strides = [1, 1]} : vector<32x10xbf16> to vector<32x7xbf16>
    %55 = vector.extract_strided_slice %18 {offsets = [0, 2], sizes = [32, 7], strides = [1, 1]} : vector<32x10xbf16> to vector<32x7xbf16>
    %56 = vector.extract_strided_slice %18 {offsets = [0, 3], sizes = [32, 7], strides = [1, 1]} : vector<32x10xbf16> to vector<32x7xbf16>
    %57 = vector.extract_strided_slice %20 {offsets = [0, 0], sizes = [32, 7], strides = [1, 1]} : vector<32x10xbf16> to vector<32x7xbf16>
    %58 = vector.extract_strided_slice %20 {offsets = [0, 1], sizes = [32, 7], strides = [1, 1]} : vector<32x10xbf16> to vector<32x7xbf16>
    %59 = vector.extract_strided_slice %20 {offsets = [0, 2], sizes = [32, 7], strides = [1, 1]} : vector<32x10xbf16> to vector<32x7xbf16>
    %60 = vector.extract_strided_slice %20 {offsets = [0, 3], sizes = [32, 7], strides = [1, 1]} : vector<32x10xbf16> to vector<32x7xbf16>
    %61 = tpu.concatenate %21, %22, %23, %24, %25, %26, %27, %28, %29, %30, %31, %32, %33, %34, %35, %36 in 0 : vector<32x7xbf16>, vector<32x7xbf16>, vector<32x7xbf16>, vector<32x7xbf16>, vector<32x7xbf16>, vector<32x7xbf16>, vector<32x7xbf16>, vector<32x7xbf16>, vector<32x7xbf16>, vector<32x7xbf16>, vector<32x7xbf16>, vector<32x7xbf16>, vector<32x7xbf16>, vector<32x7xbf16>, vector<32x7xbf16>, vector<32x7xbf16> -> vector<512x7xbf16>
    %62 = tpu.concatenate %25, %26, %27, %28, %29, %30, %31, %32, %33, %34, %35, %36, %37, %38, %39, %40 in 0 : vector<32x7xbf16>, vector<32x7xbf16>, vector<32x7xbf16>, vector<32x7xbf16>, vector<32x7xbf16>, vector<32x7xbf16>, vector<32x7xbf16>, vector<32x7xbf16>, vector<32x7xbf16>, vector<32x7xbf16>, vector<32x7xbf16>, vector<32x7xbf16>, vector<32x7xbf16>, vector<32x7xbf16>, vector<32x7xbf16>, vector<32x7xbf16> -> vector<512x7xbf16>
    %63 = tpu.concatenate %29, %30, %31, %32, %33, %34, %35, %36, %37, %38, %39, %40, %41, %42, %43, %44 in 0 : vector<32x7xbf16>, vector<32x7xbf16>, vector<32x7xbf16>, vector<32x7xbf16>, vector<32x7xbf16>, vector<32x7xbf16>, vector<32x7xbf16>, vector<32x7xbf16>, vector<32x7xbf16>, vector<32x7xbf16>, vector<32x7xbf16>, vector<32x7xbf16>, vector<32x7xbf16>, vector<32x7xbf16>, vector<32x7xbf16>, vector<32x7xbf16> -> vector<512x7xbf16>
    %64 = tpu.concatenate %33, %34, %35, %36, %37, %38, %39, %40, %41, %42, %43, %44, %45, %46, %47, %48 in 0 : vector<32x7xbf16>, vector<32x7xbf16>, vector<32x7xbf16>, vector<32x7xbf16>, vector<32x7xbf16>, vector<32x7xbf16>, vector<32x7xbf16>, vector<32x7xbf16>, vector<32x7xbf16>, vector<32x7xbf16>, vector<32x7xbf16>, vector<32x7xbf16>, vector<32x7xbf16>, vector<32x7xbf16>, vector<32x7xbf16>, vector<32x7xbf16> -> vector<512x7xbf16>
    %65 = tpu.concatenate %37, %38, %39, %40, %41, %42, %43, %44, %45, %46, %47, %48, %49, %50, %51, %52 in 0 : vector<32x7xbf16>, vector<32x7xbf16>, vector<32x7xbf16>, vector<32x7xbf16>, vector<32x7xbf16>, vector<32x7xbf16>, vector<32x7xbf16>, vector<32x7xbf16>, vector<32x7xbf16>, vector<32x7xbf16>, vector<32x7xbf16>, vector<32x7xbf16>, vector<32x7xbf16>, vector<32x7xbf16>, vector<32x7xbf16>, vector<32x7xbf16> -> vector<512x7xbf16>
    %66 = tpu.concatenate %41, %42, %43, %44, %45, %46, %47, %48, %49, %50, %51, %52, %53, %54, %55, %56 in 0 : vector<32x7xbf16>, vector<32x7xbf16>, vector<32x7xbf16>, vector<32x7xbf16>, vector<32x7xbf16>, vector<32x7xbf16>, vector<32x7xbf16>, vector<32x7xbf16>, vector<32x7xbf16>, vector<32x7xbf16>, vector<32x7xbf16>, vector<32x7xbf16>, vector<32x7xbf16>, vector<32x7xbf16>, vector<32x7xbf16>, vector<32x7xbf16> -> vector<512x7xbf16>
    %67 = tpu.concatenate %45, %46, %47, %48, %49, %50, %51, %52, %53, %54, %55, %56, %57, %58, %59, %60 in 0 : vector<32x7xbf16>, vector<32x7xbf16>, vector<32x7xbf16>, vector<32x7xbf16>, vector<32x7xbf16>, vector<32x7xbf16>, vector<32x7xbf16>, vector<32x7xbf16>, vector<32x7xbf16>, vector<32x7xbf16>, vector<32x7xbf16>, vector<32x7xbf16>, vector<32x7xbf16>, vector<32x7xbf16>, vector<32x7xbf16>, vector<32x7xbf16> -> vector<512x7xbf16>
    %68 = tpu.concatenate %61, %62, %63, %64, %65, %66, %67 in 1 : vector<512x7xbf16>, vector<512x7xbf16>, vector<512x7xbf16>, vector<512x7xbf16>, vector<512x7xbf16>, vector<512x7xbf16>, vector<512x7xbf16> -> vector<512x49xbf16>
    %cst = arith.constant dense<0.000000e+00> : vector<64x49xf32>
    %69 = tpu.matmul %0, %68, %cst {dimension_numbers = #tpu.dot_dimension_numbers<[1], [0], [0], [1], [0, 0, 1, 1], [], []>} : vector<64x512xbf16>, vector<512x49xbf16>, vector<64x49xf32> -> vector<64x49xf32>
    %70 = arith.truncf %69 : vector<64x49xf32> to vector<64x49xbf16>
    %c0_22 = arith.constant 0 : index
    %c0_23 = arith.constant 0 : index
    %c0_24 = arith.constant 0 : index
    %71 = vector.load %arg3[%c0_22, %c0_23, %c0_24] : memref<1x64x49xbf16, #tpu.memory_space<vmem>>, vector<1x64x49xbf16>
    %72 = vector.shape_cast %71 : vector<1x64x49xbf16> to vector<64x49xbf16>
    %73 = vector.shape_cast %70 : vector<64x49xbf16> to vector<1x64x49xbf16>
    tpu.vector_store %arg3[%c0_22, %c0_23, %c0_24], %73 {strides = array<i32>} : memref<1x64x49xbf16, #tpu.memory_space<vmem>>, vector<1x64x49xbf16>,
    %cst_25 = arith.constant dense<0.000000e+00> : vector<64xf32>
    %74 = vector.multi_reduction <add>, %69, %cst_25 [1] : vector<64x49xf32> to vector<64xf32>
    %75 = vector.shape_cast %74 : vector<64xf32> to vector<64x1xf32>
    %76 = arith.mulf %69, %69 : vector<64x49xf32>
    %cst_26 = arith.constant dense<0.000000e+00> : vector<64xf32>
    %77 = vector.multi_reduction <add>, %76, %cst_26 [1] : vector<64x49xf32> to vector<64xf32>
    %78 = vector.shape_cast %77 : vector<64xf32> to vector<64x1xf32>
    %79 = tpu.concatenate %75, %78 in 1 : vector<64x1xf32>, vector<64x1xf32> -> vector<64x2xf32>
    %c0_27 = arith.constant 0 : index
    %c0_28 = arith.constant 0 : index
    %c0_29 = arith.constant 0 : index
    %80 = vector.load %arg4[%c0_27, %c0_28, %c0_29] : memref<1x64x2xf32, #tpu.memory_space<vmem>>, vector<1x64x2xf32>
    %81 = vector.shape_cast %80 : vector<1x64x2xf32> to vector<64x2xf32>
    %82 = vector.shape_cast %79 : vector<64x2xf32> to vector<1x64x2xf32>
    tpu.vector_store %arg4[%c0_27, %c0_28, %c0_29], %82 {strides = array<i32>} : memref<1x64x2xf32, #tpu.memory_space<vmem>>, vector<1x64x2xf32>,
    return
  }
  func.func @transform_0(%arg0: i32) -> (i32, i32, i32) {
    %c0_i32 = arith.constant 0 : i32
    %c0_i32_0 = arith.constant 0 : i32
    %c0_i32_1 = arith.constant 0 : i32
    return %arg0, %c0_i32, %c0_i32_0 : i32, i32, i32
  }
  func.func @transform_1(%arg0: i32) -> (i32, i32) {
    %c0_i32 = arith.constant 0 : i32
    %c0_i32_0 = arith.constant 0 : i32
    %c0_i32_1 = arith.constant 0 : i32
    return %c0_i32, %c0_i32_0 : i32, i32
  }
  func.func @transform_2(%arg0: i32) -> (i32, i32, i32) {
    %c0_i32 = arith.constant 0 : i32
    %c0_i32_0 = arith.constant 0 : i32
    %c0_i32_1 = arith.constant 0 : i32
    return %arg0, %c0_i32, %c0_i32_0 : i32, i32, i32
  }
  func.func @transform_3(%arg0: i32) -> (i32, i32, i32) {
    %c0_i32 = arith.constant 0 : i32
    %c0_i32_0 = arith.constant 0 : i32
    %c0_i32_1 = arith.constant 0 : i32
    return %arg0, %c0_i32, %c0_i32_0 : i32, i32, i32
  }
}

module attributes {stable_mosaic.version = 11 : i64} {
  func.func @kernel(%arg0: i32, %arg1: memref<9x64x9xbf16, #tpu.memory_space<vmem>>, %arg2: memref<8x1024xbf16, #tpu.memory_space<vmem>>, %arg3: memref<8x1xf32, #tpu.memory_space<vmem>>, %arg4: memref<1x8x36xf32, #tpu.memory_space<vmem>>) attributes {dimension_semantics = [#tpu.dimension_semantics<parallel>], iteration_bounds = array<i64: 2>, scalar_prefetch = 0 : i64, scratch_operands = 0 : i64, tpu.core_type = #tpu.core_type<tc>, window_params = [{transform_indices = @transform_0, window_bounds = array<i64: 9, 64, 9>}, {pipeline_mode = #tpu.pipeline_mode<synchronous>, transform_indices = @transform_1, window_bounds = array<i64: 8, 1024>}, {pipeline_mode = #tpu.pipeline_mode<synchronous>, transform_indices = @transform_2, window_bounds = array<i64: 8, 1>}, {transform_indices = @transform_3, window_bounds = array<i64: 1, 8, 36>}]} {
    %c0 = arith.constant 0 : index
    %c0_0 = arith.constant 0 : index
    %0 = vector.load %arg2[%c0, %c0_0] : memref<8x1024xbf16, #tpu.memory_space<vmem>>, vector<8x1024xbf16>
    %c0_1 = arith.constant 0 : index
    %c0_2 = arith.constant 0 : index
    %c0_3 = arith.constant 0 : index
    %1 = vector.load %arg1[%c0_1, %c0_2, %c0_3] : memref<9x64x9xbf16, #tpu.memory_space<vmem>>, vector<1x64x9xbf16>
    %2 = vector.shape_cast %1 : vector<1x64x9xbf16> to vector<64x9xbf16>
    %c1 = arith.constant 1 : index
    %c0_4 = arith.constant 0 : index
    %c0_5 = arith.constant 0 : index
    %3 = vector.load %arg1[%c1, %c0_4, %c0_5] : memref<9x64x9xbf16, #tpu.memory_space<vmem>>, vector<1x64x9xbf16>
    %4 = vector.shape_cast %3 : vector<1x64x9xbf16> to vector<64x9xbf16>
    %c2 = arith.constant 2 : index
    %c0_6 = arith.constant 0 : index
    %c0_7 = arith.constant 0 : index
    %5 = vector.load %arg1[%c2, %c0_6, %c0_7] : memref<9x64x9xbf16, #tpu.memory_space<vmem>>, vector<1x64x9xbf16>
    %6 = vector.shape_cast %5 : vector<1x64x9xbf16> to vector<64x9xbf16>
    %c3 = arith.constant 3 : index
    %c0_8 = arith.constant 0 : index
    %c0_9 = arith.constant 0 : index
    %7 = vector.load %arg1[%c3, %c0_8, %c0_9] : memref<9x64x9xbf16, #tpu.memory_space<vmem>>, vector<1x64x9xbf16>
    %8 = vector.shape_cast %7 : vector<1x64x9xbf16> to vector<64x9xbf16>
    %c4 = arith.constant 4 : index
    %c0_10 = arith.constant 0 : index
    %c0_11 = arith.constant 0 : index
    %9 = vector.load %arg1[%c4, %c0_10, %c0_11] : memref<9x64x9xbf16, #tpu.memory_space<vmem>>, vector<1x64x9xbf16>
    %10 = vector.shape_cast %9 : vector<1x64x9xbf16> to vector<64x9xbf16>
    %c5 = arith.constant 5 : index
    %c0_12 = arith.constant 0 : index
    %c0_13 = arith.constant 0 : index
    %11 = vector.load %arg1[%c5, %c0_12, %c0_13] : memref<9x64x9xbf16, #tpu.memory_space<vmem>>, vector<1x64x9xbf16>
    %12 = vector.shape_cast %11 : vector<1x64x9xbf16> to vector<64x9xbf16>
    %c6 = arith.constant 6 : index
    %c0_14 = arith.constant 0 : index
    %c0_15 = arith.constant 0 : index
    %13 = vector.load %arg1[%c6, %c0_14, %c0_15] : memref<9x64x9xbf16, #tpu.memory_space<vmem>>, vector<1x64x9xbf16>
    %14 = vector.shape_cast %13 : vector<1x64x9xbf16> to vector<64x9xbf16>
    %c7 = arith.constant 7 : index
    %c0_16 = arith.constant 0 : index
    %c0_17 = arith.constant 0 : index
    %15 = vector.load %arg1[%c7, %c0_16, %c0_17] : memref<9x64x9xbf16, #tpu.memory_space<vmem>>, vector<1x64x9xbf16>
    %16 = vector.shape_cast %15 : vector<1x64x9xbf16> to vector<64x9xbf16>
    %c8 = arith.constant 8 : index
    %c0_18 = arith.constant 0 : index
    %c0_19 = arith.constant 0 : index
    %17 = vector.load %arg1[%c8, %c0_18, %c0_19] : memref<9x64x9xbf16, #tpu.memory_space<vmem>>, vector<1x64x9xbf16>
    %18 = vector.shape_cast %17 : vector<1x64x9xbf16> to vector<64x9xbf16>
    %19 = vector.extract_strided_slice %2 {offsets = [0, 0], sizes = [64, 6], strides = [1, 1]} : vector<64x9xbf16> to vector<64x6xbf16>
    %20 = vector.extract_strided_slice %2 {offsets = [0, 1], sizes = [64, 6], strides = [1, 1]} : vector<64x9xbf16> to vector<64x6xbf16>
    %21 = vector.extract_strided_slice %2 {offsets = [0, 2], sizes = [64, 6], strides = [1, 1]} : vector<64x9xbf16> to vector<64x6xbf16>
    %22 = vector.extract_strided_slice %2 {offsets = [0, 3], sizes = [64, 6], strides = [1, 1]} : vector<64x9xbf16> to vector<64x6xbf16>
    %23 = vector.extract_strided_slice %4 {offsets = [0, 0], sizes = [64, 6], strides = [1, 1]} : vector<64x9xbf16> to vector<64x6xbf16>
    %24 = vector.extract_strided_slice %4 {offsets = [0, 1], sizes = [64, 6], strides = [1, 1]} : vector<64x9xbf16> to vector<64x6xbf16>
    %25 = vector.extract_strided_slice %4 {offsets = [0, 2], sizes = [64, 6], strides = [1, 1]} : vector<64x9xbf16> to vector<64x6xbf16>
    %26 = vector.extract_strided_slice %4 {offsets = [0, 3], sizes = [64, 6], strides = [1, 1]} : vector<64x9xbf16> to vector<64x6xbf16>
    %27 = vector.extract_strided_slice %6 {offsets = [0, 0], sizes = [64, 6], strides = [1, 1]} : vector<64x9xbf16> to vector<64x6xbf16>
    %28 = vector.extract_strided_slice %6 {offsets = [0, 1], sizes = [64, 6], strides = [1, 1]} : vector<64x9xbf16> to vector<64x6xbf16>
    %29 = vector.extract_strided_slice %6 {offsets = [0, 2], sizes = [64, 6], strides = [1, 1]} : vector<64x9xbf16> to vector<64x6xbf16>
    %30 = vector.extract_strided_slice %6 {offsets = [0, 3], sizes = [64, 6], strides = [1, 1]} : vector<64x9xbf16> to vector<64x6xbf16>
    %31 = vector.extract_strided_slice %8 {offsets = [0, 0], sizes = [64, 6], strides = [1, 1]} : vector<64x9xbf16> to vector<64x6xbf16>
    %32 = vector.extract_strided_slice %8 {offsets = [0, 1], sizes = [64, 6], strides = [1, 1]} : vector<64x9xbf16> to vector<64x6xbf16>
    %33 = vector.extract_strided_slice %8 {offsets = [0, 2], sizes = [64, 6], strides = [1, 1]} : vector<64x9xbf16> to vector<64x6xbf16>
    %34 = vector.extract_strided_slice %8 {offsets = [0, 3], sizes = [64, 6], strides = [1, 1]} : vector<64x9xbf16> to vector<64x6xbf16>
    %35 = vector.extract_strided_slice %10 {offsets = [0, 0], sizes = [64, 6], strides = [1, 1]} : vector<64x9xbf16> to vector<64x6xbf16>
    %36 = vector.extract_strided_slice %10 {offsets = [0, 1], sizes = [64, 6], strides = [1, 1]} : vector<64x9xbf16> to vector<64x6xbf16>
    %37 = vector.extract_strided_slice %10 {offsets = [0, 2], sizes = [64, 6], strides = [1, 1]} : vector<64x9xbf16> to vector<64x6xbf16>
    %38 = vector.extract_strided_slice %10 {offsets = [0, 3], sizes = [64, 6], strides = [1, 1]} : vector<64x9xbf16> to vector<64x6xbf16>
    %39 = vector.extract_strided_slice %12 {offsets = [0, 0], sizes = [64, 6], strides = [1, 1]} : vector<64x9xbf16> to vector<64x6xbf16>
    %40 = vector.extract_strided_slice %12 {offsets = [0, 1], sizes = [64, 6], strides = [1, 1]} : vector<64x9xbf16> to vector<64x6xbf16>
    %41 = vector.extract_strided_slice %12 {offsets = [0, 2], sizes = [64, 6], strides = [1, 1]} : vector<64x9xbf16> to vector<64x6xbf16>
    %42 = vector.extract_strided_slice %12 {offsets = [0, 3], sizes = [64, 6], strides = [1, 1]} : vector<64x9xbf16> to vector<64x6xbf16>
    %43 = vector.extract_strided_slice %14 {offsets = [0, 0], sizes = [64, 6], strides = [1, 1]} : vector<64x9xbf16> to vector<64x6xbf16>
    %44 = vector.extract_strided_slice %14 {offsets = [0, 1], sizes = [64, 6], strides = [1, 1]} : vector<64x9xbf16> to vector<64x6xbf16>
    %45 = vector.extract_strided_slice %14 {offsets = [0, 2], sizes = [64, 6], strides = [1, 1]} : vector<64x9xbf16> to vector<64x6xbf16>
    %46 = vector.extract_strided_slice %14 {offsets = [0, 3], sizes = [64, 6], strides = [1, 1]} : vector<64x9xbf16> to vector<64x6xbf16>
    %47 = vector.extract_strided_slice %16 {offsets = [0, 0], sizes = [64, 6], strides = [1, 1]} : vector<64x9xbf16> to vector<64x6xbf16>
    %48 = vector.extract_strided_slice %16 {offsets = [0, 1], sizes = [64, 6], strides = [1, 1]} : vector<64x9xbf16> to vector<64x6xbf16>
    %49 = vector.extract_strided_slice %16 {offsets = [0, 2], sizes = [64, 6], strides = [1, 1]} : vector<64x9xbf16> to vector<64x6xbf16>
    %50 = vector.extract_strided_slice %16 {offsets = [0, 3], sizes = [64, 6], strides = [1, 1]} : vector<64x9xbf16> to vector<64x6xbf16>
    %51 = vector.extract_strided_slice %18 {offsets = [0, 0], sizes = [64, 6], strides = [1, 1]} : vector<64x9xbf16> to vector<64x6xbf16>
    %52 = vector.extract_strided_slice %18 {offsets = [0, 1], sizes = [64, 6], strides = [1, 1]} : vector<64x9xbf16> to vector<64x6xbf16>
    %53 = vector.extract_strided_slice %18 {offsets = [0, 2], sizes = [64, 6], strides = [1, 1]} : vector<64x9xbf16> to vector<64x6xbf16>
    %54 = vector.extract_strided_slice %18 {offsets = [0, 3], sizes = [64, 6], strides = [1, 1]} : vector<64x9xbf16> to vector<64x6xbf16>
    %55 = tpu.concatenate %19, %20, %21, %22, %23, %24, %25, %26, %27, %28, %29, %30, %31, %32, %33, %34 in 0 : vector<64x6xbf16>, vector<64x6xbf16>, vector<64x6xbf16>, vector<64x6xbf16>, vector<64x6xbf16>, vector<64x6xbf16>, vector<64x6xbf16>, vector<64x6xbf16>, vector<64x6xbf16>, vector<64x6xbf16>, vector<64x6xbf16>, vector<64x6xbf16>, vector<64x6xbf16>, vector<64x6xbf16>, vector<64x6xbf16>, vector<64x6xbf16> -> vector<1024x6xbf16>
    %56 = tpu.concatenate %23, %24, %25, %26, %27, %28, %29, %30, %31, %32, %33, %34, %35, %36, %37, %38 in 0 : vector<64x6xbf16>, vector<64x6xbf16>, vector<64x6xbf16>, vector<64x6xbf16>, vector<64x6xbf16>, vector<64x6xbf16>, vector<64x6xbf16>, vector<64x6xbf16>, vector<64x6xbf16>, vector<64x6xbf16>, vector<64x6xbf16>, vector<64x6xbf16>, vector<64x6xbf16>, vector<64x6xbf16>, vector<64x6xbf16>, vector<64x6xbf16> -> vector<1024x6xbf16>
    %57 = tpu.concatenate %27, %28, %29, %30, %31, %32, %33, %34, %35, %36, %37, %38, %39, %40, %41, %42 in 0 : vector<64x6xbf16>, vector<64x6xbf16>, vector<64x6xbf16>, vector<64x6xbf16>, vector<64x6xbf16>, vector<64x6xbf16>, vector<64x6xbf16>, vector<64x6xbf16>, vector<64x6xbf16>, vector<64x6xbf16>, vector<64x6xbf16>, vector<64x6xbf16>, vector<64x6xbf16>, vector<64x6xbf16>, vector<64x6xbf16>, vector<64x6xbf16> -> vector<1024x6xbf16>
    %58 = tpu.concatenate %31, %32, %33, %34, %35, %36, %37, %38, %39, %40, %41, %42, %43, %44, %45, %46 in 0 : vector<64x6xbf16>, vector<64x6xbf16>, vector<64x6xbf16>, vector<64x6xbf16>, vector<64x6xbf16>, vector<64x6xbf16>, vector<64x6xbf16>, vector<64x6xbf16>, vector<64x6xbf16>, vector<64x6xbf16>, vector<64x6xbf16>, vector<64x6xbf16>, vector<64x6xbf16>, vector<64x6xbf16>, vector<64x6xbf16>, vector<64x6xbf16> -> vector<1024x6xbf16>
    %59 = tpu.concatenate %35, %36, %37, %38, %39, %40, %41, %42, %43, %44, %45, %46, %47, %48, %49, %50 in 0 : vector<64x6xbf16>, vector<64x6xbf16>, vector<64x6xbf16>, vector<64x6xbf16>, vector<64x6xbf16>, vector<64x6xbf16>, vector<64x6xbf16>, vector<64x6xbf16>, vector<64x6xbf16>, vector<64x6xbf16>, vector<64x6xbf16>, vector<64x6xbf16>, vector<64x6xbf16>, vector<64x6xbf16>, vector<64x6xbf16>, vector<64x6xbf16> -> vector<1024x6xbf16>
    %60 = tpu.concatenate %39, %40, %41, %42, %43, %44, %45, %46, %47, %48, %49, %50, %51, %52, %53, %54 in 0 : vector<64x6xbf16>, vector<64x6xbf16>, vector<64x6xbf16>, vector<64x6xbf16>, vector<64x6xbf16>, vector<64x6xbf16>, vector<64x6xbf16>, vector<64x6xbf16>, vector<64x6xbf16>, vector<64x6xbf16>, vector<64x6xbf16>, vector<64x6xbf16>, vector<64x6xbf16>, vector<64x6xbf16>, vector<64x6xbf16>, vector<64x6xbf16> -> vector<1024x6xbf16>
    %61 = tpu.concatenate %55, %56, %57, %58, %59, %60 in 1 : vector<1024x6xbf16>, vector<1024x6xbf16>, vector<1024x6xbf16>, vector<1024x6xbf16>, vector<1024x6xbf16>, vector<1024x6xbf16> -> vector<1024x36xbf16>
    %cst = arith.constant dense<0.000000e+00> : vector<8x36xf32>
    %62 = tpu.matmul %0, %61, %cst {dimension_numbers = #tpu.dot_dimension_numbers<[1], [0], [0], [1], [0, 0, 1, 1], [], []>} : vector<8x1024xbf16>, vector<1024x36xbf16>, vector<8x36xf32> -> vector<8x36xf32>
    %c0_20 = arith.constant 0 : index
    %c0_21 = arith.constant 0 : index
    %63 = vector.load %arg3[%c0_20, %c0_21] : memref<8x1xf32, #tpu.memory_space<vmem>>, vector<8x1xf32>
    %64 = vector.broadcast %63 : vector<8x1xf32> to vector<8x36xf32>
    %65 = arith.addf %62, %64 : vector<8x36xf32>
    %c0_22 = arith.constant 0 : index
    %c0_23 = arith.constant 0 : index
    %c0_24 = arith.constant 0 : index
    %66 = vector.load %arg4[%c0_22, %c0_23, %c0_24] : memref<1x8x36xf32, #tpu.memory_space<vmem>>, vector<1x8x36xf32>
    %67 = vector.shape_cast %66 : vector<1x8x36xf32> to vector<8x36xf32>
    %68 = vector.shape_cast %65 : vector<8x36xf32> to vector<1x8x36xf32>
    tpu.vector_store %arg4[%c0_22, %c0_23, %c0_24], %68 {strides = array<i32>} : memref<1x8x36xf32, #tpu.memory_space<vmem>>, vector<1x8x36xf32>,
    return
  }
  func.func @transform_0(%arg0: i32) -> (i32, i32, i32) {
    %c0_i32 = arith.constant 0 : i32
    %c0_i32_0 = arith.constant 0 : i32
    %c0_i32_1 = arith.constant 0 : i32
    return %arg0, %c0_i32, %c0_i32_0 : i32, i32, i32
  }
  func.func @transform_1(%arg0: i32) -> (i32, i32) {
    %c0_i32 = arith.constant 0 : i32
    %c0_i32_0 = arith.constant 0 : i32
    %c0_i32_1 = arith.constant 0 : i32
    return %c0_i32, %c0_i32_0 : i32, i32
  }
  func.func @transform_2(%arg0: i32) -> (i32, i32) {
    %c0_i32 = arith.constant 0 : i32
    %c0_i32_0 = arith.constant 0 : i32
    %c0_i32_1 = arith.constant 0 : i32
    return %c0_i32, %c0_i32_0 : i32, i32
  }
  func.func @transform_3(%arg0: i32) -> (i32, i32, i32) {
    %c0_i32 = arith.constant 0 : i32
    %c0_i32_0 = arith.constant 0 : i32
    %c0_i32_1 = arith.constant 0 : i32
    return %arg0, %c0_i32, %c0_i32_0 : i32, i32, i32
  }
}

</mosaic_0001>

<llo_original>
// kernel: pallas_forward.6
$region0: #{pallas_forward.6}
  #allocation0 [shape = 'u32[]', space=smem, size = 0x4, offset = 0x4, fixed_abs, tag = 'smem constant byte address 0x4 - core index']
  #allocation1 [shape = 'u32[72,128]{1,0:T(1,128)}', space=vmem, size = 0x9000, scoped, tag = 'internal scratch']
  %s0 = inlined_call_operand.vmem [shape: bf16[34,32,17], index: 0, kind: input, shape index: {}]
  %s1 = inlined_call_operand.vmem [shape: bf16[16,128], index: 1, kind: input, shape index: {}]
  %s2 = inlined_call_operand.vmem [shape: bf16[2,16,256], index: 2, kind: output, shape index: {0}]
  %s3 = inlined_call_operand.vmem [shape: f32[2,16,2], index: 3, kind: output, shape index: {1}]
  %4 = xla_tuple %s2, %s3
  %s5 = sld [smem:[#allocation0]]
  $region49: #{pallas_forward.6} parent=0
    _
  %s7 = ssub.s32 1, %s5
  %s8 = scalar_select 0, %s7, %s5
  loop: start=0, step=1, limit=4
  $region2: #{pallas_forward.6} parent=0 // loop_pre_header
    _
  $region3: #{pallas_forward.6} parent=0 // loop_header
    %s10 = sphi 0, %s14
    %p11 = scmp.ge.s32.totalorder %s10, 4
    %s20 = sphi 0, %s22
    %s23 = sphi 0, %s20
    %s24 = sphi 0, %s23
    %s40 = sphi 0, %s24
    %s44 = sphi 0, %s44
    %s46 = sphi 0, %s44
    %s47 = sphi 0, %s46
    %s61 = sphi 0, %s47
    %s67 = sphi 0, %s69
    %s70 = sphi 0, %s67
    %s71 = sphi 0, %s70
    %s87 = sphi 0, %s71
    %s93 = sphi 0, %s95
    %s96 = sphi 0, %s93
    %s97 = sphi 0, %s96
    %s113 = sphi 0, %s97
  $region4: #{pallas_forward.6} parent=0 // loop_header_branch
    %13 = sbr.rel (%p11) target = $region8
  $region5: #{pallas_forward.6} parent=0 // loop_body
    %s15 = ssub.s32 %s10, 1
    %s16 = ssub.s32 %s10, 2
    %s17 = sadd.s32 %s10, 1
    %s18 = ssub.s32 %s10, %s17
    %p19 = scmp.eq.s32.totalorder %s18, 0
    %s21 = sadd.s32 %s20, 1
    %s22 = scalar_select %p19, %s20, %s21
    %p25 = pneg %p19
    %p26 = scmp.eq.s32.totalorder %s10, 1
    %p27 = por %p25, %p26
    %p28 = scmp.ne.s32.totalorder %s20, %s23
    %p29 = scmp.eq.s32.totalorder %s10, 0
    %p30 = por %p28, %p29
    %p31 = scmp.ne.s32.totalorder %s20, %s23
    %p32 = scmp.eq.s32.totalorder %s15, 1
    %p33 = por %p31, %p32
    %p34 = scmp.ne.s32.totalorder %s23, %s24
    %p35 = scmp.eq.s32.totalorder %s15, 0
    %p36 = por %p34, %p35
    %p37 = scmp.ne.s32.totalorder %s23, %s24
    %p38 = scmp.eq.s32.totalorder %s16, 1
    %p39 = por %p37, %p38
    %p41 = scmp.ne.s32.totalorder %s24, %s40
    %p42 = scmp.eq.s32.totalorder %s16, 0
    %p43 = por %p41, %p42
    %s45 = sadd.s32 %s44, 1
    %p48 = scmp.eq.s32.totalorder %s10, 1
    %p49 = scmp.ne.s32.totalorder %s44, %s46
    %p50 = scmp.eq.s32.totalorder %s10, 0
    %p51 = por %p49, %p50
    %p52 = scmp.ne.s32.totalorder %s44, %s46
    %p53 = scmp.eq.s32.totalorder %s15, 1
    %p54 = por %p52, %p53
    %p55 = scmp.ne.s32.totalorder %s46, %s47
    %p56 = scmp.eq.s32.totalorder %s15, 0
    %p57 = por %p55, %p56
    %p58 = scmp.ne.s32.totalorder %s46, %s47
    %p59 = scmp.eq.s32.totalorder %s16, 1
    %p60 = por %p58, %p59
    %p62 = scmp.ne.s32.totalorder %s47, %s61
    %p63 = scmp.eq.s32.totalorder %s16, 0
    %p64 = por %p62, %p63
    %s65 = ssub.s32 %s10, %s17
    %p66 = scmp.eq.s32.totalorder %s65, 0
    %s68 = sadd.s32 %s67, 1
    %s69 = scalar_select %p66, %s67, %s68
    %p72 = pneg %p66
    %p73 = scmp.eq.s32.totalorder %s10, 1
    %p74 = por %p72, %p73
    %p75 = scmp.ne.s32.totalorder %s67, %s70
    %p76 = scmp.eq.s32.totalorder %s10, 0
    %p77 = por %p75, %p76
    %p78 = scmp.ne.s32.totalorder %s67, %s70
    %p79 = scmp.eq.s32.totalorder %s15, 1
    %p80 = por %p78, %p79
    %p81 = scmp.ne.s32.totalorder %s70, %s71
    %p82 = scmp.eq.s32.totalorder %s15, 0
    %p83 = por %p81, %p82
    %p84 = scmp.ne.s32.totalorder %s70, %s71
    %p85 = scmp.eq.s32.totalorder %s16, 1
    %p86 = por %p84, %p85
    %p88 = scmp.ne.s32.totalorder %s71, %s87
    %p89 = scmp.eq.s32.totalorder %s16, 0
    %p90 = por %p88, %p89
    %s91 = ssub.s32 %s10, %s17
    %p92 = scmp.eq.s32.totalorder %s91, 0
    %s94 = sadd.s32 %s93, 1
    %s95 = scalar_select %p92, %s93, %s94
    %p98 = pneg %p92
    %p99 = scmp.eq.s32.totalorder %s10, 1
    %p100 = por %p98, %p99
    %p101 = scmp.ne.s32.totalorder %s93, %s96
    %p102 = scmp.eq.s32.totalorder %s10, 0
    %p103 = por %p101, %p102
    %p104 = scmp.ne.s32.totalorder %s93, %s96
    %p105 = scmp.eq.s32.totalorder %s15, 1
    %p106 = por %p104, %p105
    %p107 = scmp.ne.s32.totalorder %s96, %s97
    %p108 = scmp.eq.s32.totalorder %s15, 0
    %p109 = por %p107, %p108
    %p110 = scmp.ne.s32.totalorder %s96, %s97
    %p111 = scmp.eq.s32.totalorder %s16, 1
    %p112 = por %p110, %p111
    %p114 = scmp.ne.s32.totalorder %s97, %s113
    %p115 = scmp.eq.s32.totalorder %s16, 0
    %p116 = por %p114, %p115
    %p117 = scmp.le.s32.totalorder 1, %s10
    %p118 = scmp.lt.s32.totalorder %s10, 3
    %p119 = pnand %p117, %p118
    %p120 = pneg %p119
    // Predicated region
    $region9: #{pallas_forward.6} parent=5 // pred_check
      _
    $region10: #{pallas_forward.6} parent=5 // pred_check_branch
      %122 = sbr.rel (%p119) target = $region12
    $region11: #{pallas_forward.6} parent=5 // pred_region
      %s123 = ssub.s32 %s10, 1
      // Predicated region
      $region13: #{pallas_forward.6} parent=11 // pred_check
        %p124 = pneg %p57
      $region14: #{pallas_forward.6} parent=11 // pred_check_branch
        %126 = sbr.rel (%p124) target = $region16
      $region15: #{pallas_forward.6} parent=11 // pred_region
        _
      $region16: #{pallas_forward.6} parent=11 // pred_fallthru
        _
    $region12: #{pallas_forward.6} parent=5 // pred_fallthru
      _
    %p127 = scmp.lt.s32.totalorder %s10, 2
    // Predicated region
    $region17: #{pallas_forward.6} parent=5 // pred_check
      %p128 = pneg %p127
    $region18: #{pallas_forward.6} parent=5 // pred_check_branch
      %130 = sbr.rel (%p128) target = $region20
    $region19: #{pallas_forward.6} parent=5 // pred_region
      // Predicated region
      $region21: #{pallas_forward.6} parent=19 // pred_check
        %p131 = pneg %p30
      $region22: #{pallas_forward.6} parent=19 // pred_check_branch
        %133 = sbr.rel (%p131) target = $region24
      $region23: #{pallas_forward.6} parent=19 // pred_region
        %s134 = smul.u32 17, %s10
        %p135 = scmp.lt.s32.totalorder %s134, 33
        %s136 = scalar_select %p135, %s134, 33
        %s137 = smul.addr %s136, 4
        %s138 = smul.addr %s137, 4
        %s139 = scalar_lea.vmem %s0, %s138
        %s140 = smul.u32 17, %s10
      $region24: #{pallas_forward.6} parent=19 // pred_fallthru
        _
    $region20: #{pallas_forward.6} parent=5 // pred_fallthru
      _
    %p141 = scmp.le.s32.totalorder 1, %s10
    %p142 = scmp.lt.s32.totalorder %s10, 3
    %p143 = pnand %p141, %p142
    %p144 = pneg %p143
    // Predicated region
    $region25: #{pallas_forward.6} parent=5 // pred_check
      _
    $region26: #{pallas_forward.6} parent=5 // pred_check_branch
      %146 = sbr.rel (%p143) target = $region28
    $region27: #{pallas_forward.6} parent=5 // pred_region
      %s147 = ssub.s32 %s10, 1
      %s148 = smul.u32 17, %s15
      %p149 = scmp.lt.s32.totalorder %s148, 33
      %s150 = scalar_select %p149, %s148, 33
      %s151 = smul.addr %s150, 4
      %s152 = smul.addr %s151, 4
      %s153 = scalar_lea.vmem %s0, %s152
      %p154 = pneg %p36
      %p155 = pneg %p33
      %p156 = pneg %p57
      %p157 = pneg %p54
      %p158 = pneg %p83
      %p159 = pneg %p80
      %p160 = scmp.lt.s32.totalorder %s15, 1
      %s161 = scalar_select %p160, %s15, 1
      %s162 = smul.addr %s161, 4
      %s163 = smul.addr %s162, 4
      %s164 = scalar_lea.vmem %s2, %s163
      %p165 = pneg %p109
      %p166 = pneg %p106
      %p167 = scmp.lt.s32.totalorder %s15, 1
      %s168 = scalar_select %p167, %s15, 1
      %s169 = smul.addr %s168, 2
      %s170 = smul.addr %s169, 8
      %s171 = scalar_lea.vmem %s3, %s170
      %s172 = smul.u32 17, %s15
      %p173 = scmp.lt.s32.totalorder %s172, 33
      %s174 = scalar_select %p173, %s172, 33
      %s175 = smul.addr %s174, 4
      %s176 = smul.addr %s175, 4
      %s177 = scalar_lea.vmem %s0, %s176
      %s178 = smul.u32 17, %s15
      %p179 = scmp.lt.s32.totalorder %s15, 1
      %s180 = scalar_select %p179, %s15, 1
      %s181 = smul.addr %s180, 4
      %s182 = smul.addr %s181, 4
      %s183 = scalar_lea.vmem %s2, %s182
      %p184 = scmp.lt.s32.totalorder %s15, 1
      %s185 = scalar_select %p184, %s15, 1
      %s186 = smul.addr %s185, 2
      %s187 = smul.addr %s186, 8
      %s188 = scalar_lea.vmem %s3, %s187
      %v189 = vld [vmem:[%s1] sm:$0xf]
      %v190 = vld [vmem:[%s1 + $0x4] sm:$0xf]
      %v191 = vld [vmem:[%s177] sm:$0xf]
      %v192 = vld [vmem:[%s177 + $0x4] sm:$0xf]
      %v193 = vld [vmem:[%s177 + $0x8] sm:$0xf]
      %v194 = vld [vmem:[%s177 + $0xc] sm:$0xf]
      %s195 = scalar_lea.vmem %s177, 16
      %v196 = vld [vmem:[%s195] sm:$0xf]
      %v197 = vld [vmem:[%s195 + $0x4] sm:$0xf]
      %v198 = vld [vmem:[%s195 + $0x8] sm:$0xf]
      %v199 = vld [vmem:[%s195 + $0xc] sm:$0xf]
      %s200 = scalar_lea.vmem %s177, 32
      %v201 = vld [vmem:[%s200] sm:$0xf]
      %v202 = vld [vmem:[%s200 + $0x4] sm:$0xf]
      %v203 = vld [vmem:[%s200 + $0x8] sm:$0xf]
      %v204 = vld [vmem:[%s200 + $0xc] sm:$0xf]
      %s205 = scalar_lea.vmem %s177, 48
      %v206 = vld [vmem:[%s205] sm:$0xf]
      %v207 = vld [vmem:[%s205 + $0x4] sm:$0xf]
      %v208 = vld [vmem:[%s205 + $0x8] sm:$0xf]
      %v209 = vld [vmem:[%s205 + $0xc] sm:$0xf]
      %s210 = scalar_lea.vmem %s177, 64
      %v211 = vld [vmem:[%s210] sm:$0xf]
      %v212 = vld [vmem:[%s210 + $0x4] sm:$0xf]
      %v213 = vld [vmem:[%s210 + $0x8] sm:$0xf]
      %v214 = vld [vmem:[%s210 + $0xc] sm:$0xf]
      %s215 = scalar_lea.vmem %s177, 80
      %v216 = vld [vmem:[%s215] sm:$0xf]
      %v217 = vld [vmem:[%s215 + $0x4] sm:$0xf]
      %v218 = vld [vmem:[%s215 + $0x8] sm:$0xf]
      %v219 = vld [vmem:[%s215 + $0xc] sm:$0xf]
      %s220 = scalar_lea.vmem %s177, 96
      %v221 = vld [vmem:[%s220] sm:$0xf]
      %v222 = vld [vmem:[%s220 + $0x4] sm:$0xf]
      %v223 = vld [vmem:[%s220 + $0x8] sm:$0xf]
      %v224 = vld [vmem:[%s220 + $0xc] sm:$0xf]
      %s225 = scalar_lea.vmem %s177, 112
      %v226 = vld [vmem:[%s225] sm:$0xf]
      %v227 = vld [vmem:[%s225 + $0x4] sm:$0xf]
      %v228 = vld [vmem:[%s225 + $0x8] sm:$0xf]
      %v229 = vld [vmem:[%s225 + $0xc] sm:$0xf]
      %s230 = scalar_lea.vmem %s177, 128
      %v231 = vld [vmem:[%s230] sm:$0xf]
      %v232 = vld [vmem:[%s230 + $0x4] sm:$0xf]
      %v233 = vld [vmem:[%s230 + $0x8] sm:$0xf]
      %v234 = vld [vmem:[%s230 + $0xc] sm:$0xf]
      %s235 = scalar_lea.vmem %s177, 144
      %v236 = vld [vmem:[%s235] sm:$0xf]
      %v237 = vld [vmem:[%s235 + $0x4] sm:$0xf]
      %v238 = vld [vmem:[%s235 + $0x8] sm:$0xf]
      %v239 = vld [vmem:[%s235 + $0xc] sm:$0xf]
      %s240 = scalar_lea.vmem %s177, 160
      %v241 = vld [vmem:[%s240] sm:$0xf]
      %v242 = vld [vmem:[%s240 + $0x4] sm:$0xf]
      %v243 = vld [vmem:[%s240 + $0x8] sm:$0xf]
      %v244 = vld [vmem:[%s240 + $0xc] sm:$0xf]
      %s245 = scalar_lea.vmem %s177, 176
      %v246 = vld [vmem:[%s245] sm:$0xf]
      %v247 = vld [vmem:[%s245 + $0x4] sm:$0xf]
      %v248 = vld [vmem:[%s245 + $0x8] sm:$0xf]
      %v249 = vld [vmem:[%s245 + $0xc] sm:$0xf]
      %s250 = scalar_lea.vmem %s177, 192
      %v251 = vld [vmem:[%s250] sm:$0xf]
      %v252 = vld [vmem:[%s250 + $0x4] sm:$0xf]
      %v253 = vld [vmem:[%s250 + $0x8] sm:$0xf]
      %v254 = vld [vmem:[%s250 + $0xc] sm:$0xf]
      %s255 = scalar_lea.vmem %s177, 208
      %v256 = vld [vmem:[%s255] sm:$0xf]
      %v257 = vld [vmem:[%s255 + $0x4] sm:$0xf]
      %v258 = vld [vmem:[%s255 + $0x8] sm:$0xf]
      %v259 = vld [vmem:[%s255 + $0xc] sm:$0xf]
      %s260 = scalar_lea.vmem %s177, 224
      %v261 = vld [vmem:[%s260] sm:$0xf]
      %v262 = vld [vmem:[%s260 + $0x4] sm:$0xf]
      %v263 = vld [vmem:[%s260 + $0x8] sm:$0xf]
      %v264 = vld [vmem:[%s260 + $0xc] sm:$0xf]
      %s265 = scalar_lea.vmem %s177, 240
      %v266 = vld [vmem:[%s265] sm:$0xf]
      %v267 = vld [vmem:[%s265 + $0x4] sm:$0xf]
      %v268 = vld [vmem:[%s265 + $0x8] sm:$0xf]
      %v269 = vld [vmem:[%s265 + $0xc] sm:$0xf]
      %s270 = scalar_lea.vmem %s177, 256
      %v271 = vld [vmem:[%s270] sm:$0xf]
      %v272 = vld [vmem:[%s270 + $0x4] sm:$0xf]
      %v273 = vld [vmem:[%s270 + $0x8] sm:$0xf]
      %v274 = vld [vmem:[%s270 + $0xc] sm:$0xf]
      %v279 = vunpack.c.l.b16 %v191
      %v280 = vunpack.c.l.b16 %v192
      %v281 = vunpack.c.l.b16 %v193
      %v282 = vunpack.c.l.b16 %v194
      %v283 = vpack.c.b16 %v280, %v279
      %v284 = vpack.c.b16 %v282, %v281
      %285 = vrot.lane.b32.xlu0 %v283, 127
      %v286 = vpop.permute.xlu0 %285
      %287 = vrot.lane.b32.xlu0 %v284, 127
      %v288 = vpop.permute.xlu0 %287
      %v293 = vunpack.c.l.b16 %v196
      %v294 = vunpack.c.l.b16 %v197
      %v295 = vunpack.c.l.b16 %v198
      %v296 = vunpack.c.l.b16 %v199
      %v297 = vpack.c.b16 %v294, %v293
      %v298 = vpack.c.b16 %v296, %v295
      %299 = vrot.lane.b32.xlu0 %v297, 127
      %v300 = vpop.permute.xlu0 %299
      %301 = vrot.lane.b32.xlu0 %v298, 127
      %v302 = vpop.permute.xlu0 %301
      %v307 = vunpack.c.l.b16 %v201
      %v308 = vunpack.c.l.b16 %v202
      %v309 = vunpack.c.l.b16 %v203
      %v310 = vunpack.c.l.b16 %v204
      %v311 = vpack.c.b16 %v308, %v307
      %v312 = vpack.c.b16 %v310, %v309
      %313 = vrot.lane.b32.xlu0 %v311, 127
      %v314 = vpop.permute.xlu0 %313
      %315 = vrot.lane.b32.xlu0 %v312, 127
      %v316 = vpop.permute.xlu0 %315
      %v321 = vunpack.c.l.b16 %v206
      %v322 = vunpack.c.l.b16 %v207
      %v323 = vunpack.c.l.b16 %v208
      %v324 = vunpack.c.l.b16 %v209
      %v325 = vpack.c.b16 %v322, %v321
      %v326 = vpack.c.b16 %v324, %v323
      %327 = vrot.lane.b32.xlu0 %v325, 127
      %v328 = vpop.permute.xlu0 %327
      %329 = vrot.lane.b32.xlu0 %v326, 127
      %v330 = vpop.permute.xlu0 %329
      %v335 = vunpack.c.l.b16 %v211
      %v336 = vunpack.c.l.b16 %v212
      %v337 = vunpack.c.l.b16 %v213
      %v338 = vunpack.c.l.b16 %v214
      %v339 = vpack.c.b16 %v336, %v335
      %v340 = vpack.c.b16 %v338, %v337
      %341 = vrot.lane.b32.xlu0 %v339, 127
      %v342 = vpop.permute.xlu0 %341
      %343 = vrot.lane.b32.xlu0 %v340, 127
      %v344 = vpop.permute.xlu0 %343
      %v349 = vunpack.c.l.b16 %v216
      %v350 = vunpack.c.l.b16 %v217
      %v351 = vunpack.c.l.b16 %v218
      %v352 = vunpack.c.l.b16 %v219
      %v353 = vpack.c.b16 %v350, %v349
      %v354 = vpack.c.b16 %v352, %v351
      %355 = vrot.lane.b32.xlu0 %v353, 127
      %v356 = vpop.permute.xlu0 %355
      %357 = vrot.lane.b32.xlu0 %v354, 127
      %v358 = vpop.permute.xlu0 %357
      %v363 = vunpack.c.l.b16 %v221
      %v364 = vunpack.c.l.b16 %v222
      %v365 = vunpack.c.l.b16 %v223
      %v366 = vunpack.c.l.b16 %v224
      %v367 = vpack.c.b16 %v364, %v363
      %v368 = vpack.c.b16 %v366, %v365
      %369 = vrot.lane.b32.xlu0 %v367, 127
      %v370 = vpop.permute.xlu0 %369
      %371 = vrot.lane.b32.xlu0 %v368, 127
      %v372 = vpop.permute.xlu0 %371
      %v377 = vunpack.c.l.b16 %v226
      %v378 = vunpack.c.l.b16 %v227
      %v379 = vunpack.c.l.b16 %v228
      %v380 = vunpack.c.l.b16 %v229
      %v381 = vpack.c.b16 %v378, %v377
      %v382 = vpack.c.b16 %v380, %v379
      %383 = vrot.lane.b32.xlu0 %v381, 127
      %v384 = vpop.permute.xlu0 %383
      %385 = vrot.lane.b32.xlu0 %v382, 127
      %v386 = vpop.permute.xlu0 %385
      %v391 = vunpack.c.l.b16 %v231
      %v392 = vunpack.c.l.b16 %v232
      %v393 = vunpack.c.l.b16 %v233
      %v394 = vunpack.c.l.b16 %v234
      %v395 = vpack.c.b16 %v392, %v391
      %v396 = vpack.c.b16 %v394, %v393
      %397 = vrot.lane.b32.xlu0 %v395, 127
      %v398 = vpop.permute.xlu0 %397
      %399 = vrot.lane.b32.xlu0 %v396, 127
      %v400 = vpop.permute.xlu0 %399
      %v405 = vunpack.c.l.b16 %v236
      %v406 = vunpack.c.l.b16 %v237
      %v407 = vunpack.c.l.b16 %v238
      %v408 = vunpack.c.l.b16 %v239
      %v409 = vpack.c.b16 %v406, %v405
      %v410 = vpack.c.b16 %v408, %v407
      %411 = vrot.lane.b32.xlu0 %v409, 127
      %v412 = vpop.permute.xlu0 %411
      %413 = vrot.lane.b32.xlu0 %v410, 127
      %v414 = vpop.permute.xlu0 %413
      %v419 = vunpack.c.l.b16 %v241
      %v420 = vunpack.c.l.b16 %v242
      %v421 = vunpack.c.l.b16 %v243
      %v422 = vunpack.c.l.b16 %v244
      %v423 = vpack.c.b16 %v420, %v419
      %v424 = vpack.c.b16 %v422, %v421
      %425 = vrot.lane.b32.xlu0 %v423, 127
      %v426 = vpop.permute.xlu0 %425
      %427 = vrot.lane.b32.xlu0 %v424, 127
      %v428 = vpop.permute.xlu0 %427
      %v433 = vunpack.c.l.b16 %v246
      %v434 = vunpack.c.l.b16 %v247
      %v435 = vunpack.c.l.b16 %v248
      %v436 = vunpack.c.l.b16 %v249
      %v437 = vpack.c.b16 %v434, %v433
      %v438 = vpack.c.b16 %v436, %v435
      %439 = vrot.lane.b32.xlu0 %v437, 127
      %v440 = vpop.permute.xlu0 %439
      %441 = vrot.lane.b32.xlu0 %v438, 127
      %v442 = vpop.permute.xlu0 %441
      %v447 = vunpack.c.l.b16 %v251
      %v448 = vunpack.c.l.b16 %v252
      %v449 = vunpack.c.l.b16 %v253
      %v450 = vunpack.c.l.b16 %v254
      %v451 = vpack.c.b16 %v448, %v447
      %v452 = vpack.c.b16 %v450, %v449
      %453 = vrot.lane.b32.xlu0 %v451, 127
      %v454 = vpop.permute.xlu0 %453
      %455 = vrot.lane.b32.xlu0 %v452, 127
      %v456 = vpop.permute.xlu0 %455
      %v461 = vunpack.c.l.b16 %v256
      %v462 = vunpack.c.l.b16 %v257
      %v463 = vunpack.c.l.b16 %v258
      %v464 = vunpack.c.l.b16 %v259
      %v465 = vpack.c.b16 %v462, %v461
      %v466 = vpack.c.b16 %v464, %v463
      %467 = vrot.lane.b32.xlu0 %v465, 127
      %v468 = vpop.permute.xlu0 %467
      %469 = vrot.lane.b32.xlu0 %v466, 127
      %v470 = vpop.permute.xlu0 %469
      %v475 = vunpack.c.l.b16 %v261
      %v476 = vunpack.c.l.b16 %v262
      %v477 = vunpack.c.l.b16 %v263
      %v478 = vunpack.c.l.b16 %v264
      %v479 = vpack.c.b16 %v476, %v475
      %v480 = vpack.c.b16 %v478, %v477
      %481 = vrot.lane.b32.xlu0 %v479, 127
      %v482 = vpop.permute.xlu0 %481
      %483 = vrot.lane.b32.xlu0 %v480, 127
      %v484 = vpop.permute.xlu0 %483
      %v489 = vunpack.c.l.b16 %v266
      %v490 = vunpack.c.l.b16 %v267
      %v491 = vunpack.c.l.b16 %v268
      %v492 = vunpack.c.l.b16 %v269
      %v493 = vpack.c.b16 %v490, %v489
      %v494 = vpack.c.b16 %v492, %v491
      %495 = vrot.lane.b32.xlu0 %v493, 127
      %v496 = vpop.permute.xlu0 %495
      %497 = vrot.lane.b32.xlu0 %v494, 127
      %v498 = vpop.permute.xlu0 %497
      %v503 = vunpack.c.l.b16 %v271
      %v504 = vunpack.c.l.b16 %v272
      %v505 = vunpack.c.l.b16 %v273
      %v506 = vunpack.c.l.b16 %v274
      %v507 = vpack.c.b16 %v504, %v503
      %v508 = vpack.c.b16 %v506, %v505
      %509 = vrot.lane.b32.xlu0 %v507, 127
      %v510 = vpop.permute.xlu0 %509
      %511 = vrot.lane.b32.xlu0 %v508, 127
      %v512 = vpop.permute.xlu0 %511
      %513 = vrot.lane.b32.xlu0 %v297, 16
      %v514 = vpop.permute.xlu0 %513
      %515 = vrot.lane.b32.xlu0 %v298, 16
      %v516 = vpop.permute.xlu0 %515
      %517 = vrot.lane.b32.xlu0 %v300, 16
      %v518 = vpop.permute.xlu0 %517
      %519 = vrot.lane.b32.xlu0 %v302, 16
      %v520 = vpop.permute.xlu0 %519
      %521 = vrot.lane.b32.xlu0 %v311, 16
      %v522 = vpop.permute.xlu0 %521
      %523 = vrot.lane.b32.xlu0 %v312, 16
      %v524 = vpop.permute.xlu0 %523
      %525 = vrot.lane.b32.xlu0 %v314, 16
      %v526 = vpop.permute.xlu0 %525
      %527 = vrot.lane.b32.xlu0 %v316, 16
      %v528 = vpop.permute.xlu0 %527
      %529 = vrot.lane.b32.xlu0 %v311, 32
      %v530 = vpop.permute.xlu0 %529
      %531 = vrot.lane.b32.xlu0 %v312, 32
      %v532 = vpop.permute.xlu0 %531
      %533 = vrot.lane.b32.xlu0 %v314, 32
      %v534 = vpop.permute.xlu0 %533
      %535 = vrot.lane.b32.xlu0 %v316, 32
      %v536 = vpop.permute.xlu0 %535
      %537 = vrot.lane.b32.xlu0 %v325, 32
      %v538 = vpop.permute.xlu0 %537
      %539 = vrot.lane.b32.xlu0 %v326, 32
      %v540 = vpop.permute.xlu0 %539
      %541 = vrot.lane.b32.xlu0 %v328, 32
      %v542 = vpop.permute.xlu0 %541
      %543 = vrot.lane.b32.xlu0 %v330, 32
      %v544 = vpop.permute.xlu0 %543
      %545 = vrot.lane.b32.xlu0 %v325, 48
      %v546 = vpop.permute.xlu0 %545
      %547 = vrot.lane.b32.xlu0 %v326, 48
      %v548 = vpop.permute.xlu0 %547
      %549 = vrot.lane.b32.xlu0 %v328, 48
      %v550 = vpop.permute.xlu0 %549
      %551 = vrot.lane.b32.xlu0 %v330, 48
      %v552 = vpop.permute.xlu0 %551
      %553 = vrot.lane.b32.xlu0 %v339, 48
      %v554 = vpop.permute.xlu0 %553
      %555 = vrot.lane.b32.xlu0 %v340, 48
      %v556 = vpop.permute.xlu0 %555
      %557 = vrot.lane.b32.xlu0 %v342, 48
      %v558 = vpop.permute.xlu0 %557
      %559 = vrot.lane.b32.xlu0 %v344, 48
      %v560 = vpop.permute.xlu0 %559
      %561 = vrot.lane.b32.xlu0 %v339, 64
      %v562 = vpop.permute.xlu0 %561
      %563 = vrot.lane.b32.xlu0 %v340, 64
      %v564 = vpop.permute.xlu0 %563
      %565 = vrot.lane.b32.xlu0 %v342, 64
      %v566 = vpop.permute.xlu0 %565
      %567 = vrot.lane.b32.xlu0 %v344, 64
      %v568 = vpop.permute.xlu0 %567
      %569 = vrot.lane.b32.xlu0 %v353, 64
      %v570 = vpop.permute.xlu0 %569
      %571 = vrot.lane.b32.xlu0 %v354, 64
      %v572 = vpop.permute.xlu0 %571
      %573 = vrot.lane.b32.xlu0 %v356, 64
      %v574 = vpop.permute.xlu0 %573
      %575 = vrot.lane.b32.xlu0 %v358, 64
      %v576 = vpop.permute.xlu0 %575
      %577 = vrot.lane.b32.xlu0 %v353, 80
      %v578 = vpop.permute.xlu0 %577
      %579 = vrot.lane.b32.xlu0 %v354, 80
      %v580 = vpop.permute.xlu0 %579
      %581 = vrot.lane.b32.xlu0 %v356, 80
      %v582 = vpop.permute.xlu0 %581
      %583 = vrot.lane.b32.xlu0 %v358, 80
      %v584 = vpop.permute.xlu0 %583
      %585 = vrot.lane.b32.xlu0 %v367, 80
      %v586 = vpop.permute.xlu0 %585
      %587 = vrot.lane.b32.xlu0 %v368, 80
      %v588 = vpop.permute.xlu0 %587
      %589 = vrot.lane.b32.xlu0 %v370, 80
      %v590 = vpop.permute.xlu0 %589
      %591 = vrot.lane.b32.xlu0 %v372, 80
      %v592 = vpop.permute.xlu0 %591
      %593 = vrot.lane.b32.xlu0 %v367, 96
      %v594 = vpop.permute.xlu0 %593
      %595 = vrot.lane.b32.xlu0 %v368, 96
      %v596 = vpop.permute.xlu0 %595
      %597 = vrot.lane.b32.xlu0 %v370, 96
      %v598 = vpop.permute.xlu0 %597
      %599 = vrot.lane.b32.xlu0 %v372, 96
      %v600 = vpop.permute.xlu0 %599
      %601 = vrot.lane.b32.xlu0 %v381, 96
      %v602 = vpop.permute.xlu0 %601
      %603 = vrot.lane.b32.xlu0 %v382, 96
      %v604 = vpop.permute.xlu0 %603
      %605 = vrot.lane.b32.xlu0 %v384, 96
      %v606 = vpop.permute.xlu0 %605
      %607 = vrot.lane.b32.xlu0 %v386, 96
      %v608 = vpop.permute.xlu0 %607
      %609 = vrot.lane.b32.xlu0 %v381, 112
      %v610 = vpop.permute.xlu0 %609
      %611 = vrot.lane.b32.xlu0 %v382, 112
      %v612 = vpop.permute.xlu0 %611
      %613 = vrot.lane.b32.xlu0 %v384, 112
      %v614 = vpop.permute.xlu0 %613
      %615 = vrot.lane.b32.xlu0 %v386, 112
      %v616 = vpop.permute.xlu0 %615
      %617 = vrot.lane.b32.xlu0 %v395, 112
      %v618 = vpop.permute.xlu0 %617
      %619 = vrot.lane.b32.xlu0 %v396, 112
      %v620 = vpop.permute.xlu0 %619
      %621 = vrot.lane.b32.xlu0 %v398, 112
      %v622 = vpop.permute.xlu0 %621
      %623 = vrot.lane.b32.xlu0 %v400, 112
      %v624 = vpop.permute.xlu0 %623
      %625 = vrot.lane.b32.xlu0 %v409, 16
      %v626 = vpop.permute.xlu0 %625
      %627 = vrot.lane.b32.xlu0 %v410, 16
      %v628 = vpop.permute.xlu0 %627
      %629 = vrot.lane.b32.xlu0 %v412, 16
      %v630 = vpop.permute.xlu0 %629
      %631 = vrot.lane.b32.xlu0 %v414, 16
      %v632 = vpop.permute.xlu0 %631
      %633 = vrot.lane.b32.xlu0 %v423, 16
      %v634 = vpop.permute.xlu0 %633
      %635 = vrot.lane.b32.xlu0 %v424, 16
      %v636 = vpop.permute.xlu0 %635
      %637 = vrot.lane.b32.xlu0 %v426, 16
      %v638 = vpop.permute.xlu0 %637
      %639 = vrot.lane.b32.xlu0 %v428, 16
      %v640 = vpop.permute.xlu0 %639
      %641 = vrot.lane.b32.xlu0 %v423, 32
      %v642 = vpop.permute.xlu0 %641
      %643 = vrot.lane.b32.xlu0 %v424, 32
      %v644 = vpop.permute.xlu0 %643
      %645 = vrot.lane.b32.xlu0 %v426, 32
      %v646 = vpop.permute.xlu0 %645
      %647 = vrot.lane.b32.xlu0 %v428, 32
      %v648 = vpop.permute.xlu0 %647
      %649 = vrot.lane.b32.xlu0 %v437, 32
      %v650 = vpop.permute.xlu0 %649
      %651 = vrot.lane.b32.xlu0 %v438, 32
      %v652 = vpop.permute.xlu0 %651
      %653 = vrot.lane.b32.xlu0 %v440, 32
      %v654 = vpop.permute.xlu0 %653
      %655 = vrot.lane.b32.xlu0 %v442, 32
      %v656 = vpop.permute.xlu0 %655
      %657 = vrot.lane.b32.xlu0 %v437, 48
      %v658 = vpop.permute.xlu0 %657
      %659 = vrot.lane.b32.xlu0 %v438, 48
      %v660 = vpop.permute.xlu0 %659
      %661 = vrot.lane.b32.xlu0 %v440, 48
      %v662 = vpop.permute.xlu0 %661
      %663 = vrot.lane.b32.xlu0 %v442, 48
      %v664 = vpop.permute.xlu0 %663
      %665 = vrot.lane.b32.xlu0 %v451, 48
      %v666 = vpop.permute.xlu0 %665
      %667 = vrot.lane.b32.xlu0 %v452, 48
      %v668 = vpop.permute.xlu0 %667
      %669 = vrot.lane.b32.xlu0 %v454, 48
      %v670 = vpop.permute.xlu0 %669
      %671 = vrot.lane.b32.xlu0 %v456, 48
      %v672 = vpop.permute.xlu0 %671
      %673 = vrot.lane.b32.xlu0 %v451, 64
      %v674 = vpop.permute.xlu0 %673
      %675 = vrot.lane.b32.xlu0 %v452, 64
      %v676 = vpop.permute.xlu0 %675
      %677 = vrot.lane.b32.xlu0 %v454, 64
      %v678 = vpop.permute.xlu0 %677
      %679 = vrot.lane.b32.xlu0 %v456, 64
      %v680 = vpop.permute.xlu0 %679
      %681 = vrot.lane.b32.xlu0 %v465, 64
      %v682 = vpop.permute.xlu0 %681
      %683 = vrot.lane.b32.xlu0 %v466, 64
      %v684 = vpop.permute.xlu0 %683
      %685 = vrot.lane.b32.xlu0 %v468, 64
      %v686 = vpop.permute.xlu0 %685
      %687 = vrot.lane.b32.xlu0 %v470, 64
      %v688 = vpop.permute.xlu0 %687
      %689 = vrot.lane.b32.xlu0 %v465, 80
      %v690 = vpop.permute.xlu0 %689
      %691 = vrot.lane.b32.xlu0 %v466, 80
      %v692 = vpop.permute.xlu0 %691
      %693 = vrot.lane.b32.xlu0 %v468, 80
      %v694 = vpop.permute.xlu0 %693
      %695 = vrot.lane.b32.xlu0 %v470, 80
      %v696 = vpop.permute.xlu0 %695
      %697 = vrot.lane.b32.xlu0 %v479, 80
      %v698 = vpop.permute.xlu0 %697
      %699 = vrot.lane.b32.xlu0 %v480, 80
      %v700 = vpop.permute.xlu0 %699
      %701 = vrot.lane.b32.xlu0 %v482, 80
      %v702 = vpop.permute.xlu0 %701
      %703 = vrot.lane.b32.xlu0 %v484, 80
      %v704 = vpop.permute.xlu0 %703
      %705 = vrot.lane.b32.xlu0 %v479, 96
      %v706 = vpop.permute.xlu0 %705
      %707 = vrot.lane.b32.xlu0 %v480, 96
      %v708 = vpop.permute.xlu0 %707
      %709 = vrot.lane.b32.xlu0 %v482, 96
      %v710 = vpop.permute.xlu0 %709
      %711 = vrot.lane.b32.xlu0 %v484, 96
      %v712 = vpop.permute.xlu0 %711
      %713 = vrot.lane.b32.xlu0 %v493, 96
      %v714 = vpop.permute.xlu0 %713
      %715 = vrot.lane.b32.xlu0 %v494, 96
      %v716 = vpop.permute.xlu0 %715
      %717 = vrot.lane.b32.xlu0 %v496, 96
      %v718 = vpop.permute.xlu0 %717
      %719 = vrot.lane.b32.xlu0 %v498, 96
      %v720 = vpop.permute.xlu0 %719
      %721 = vrot.lane.b32.xlu0 %v493, 112
      %v722 = vpop.permute.xlu0 %721
      %723 = vrot.lane.b32.xlu0 %v494, 112
      %v724 = vpop.permute.xlu0 %723
      %725 = vrot.lane.b32.xlu0 %v496, 112
      %v726 = vpop.permute.xlu0 %725
      %727 = vrot.lane.b32.xlu0 %v498, 112
      %v728 = vpop.permute.xlu0 %727
      %729 = vrot.lane.b32.xlu0 %v507, 112
      %v730 = vpop.permute.xlu0 %729
      %731 = vrot.lane.b32.xlu0 %v508, 112
      %v732 = vpop.permute.xlu0 %731
      %733 = vrot.lane.b32.xlu0 %v510, 112
      %v734 = vpop.permute.xlu0 %733
      %735 = vrot.lane.b32.xlu0 %v512, 112
      %v736 = vpop.permute.xlu0 %735
      %vm737 = vcmask 130048
      %v740 = vsel %vm737, %v283, %v514
      %v743 = vsel %vm737, %v284, %v516
      %v746 = vsel %vm737, %v286, %v518
      %v749 = vsel %vm737, %v288, %v520
      %v752 = vsel %vm737, %v297, %v522
      %v755 = vsel %vm737, %v298, %v524
      %v758 = vsel %vm737, %v300, %v526
      %v761 = vsel %vm737, %v302, %v528
      %vm762 = vcmask 261120
      %v764 = vsel %vm762, %v740, %v530
      %v766 = vsel %vm762, %v743, %v532
      %v768 = vsel %vm762, %v746, %v534
      %v770 = vsel %vm762, %v749, %v536
      %v772 = vsel %vm762, %v752, %v538
      %v774 = vsel %vm762, %v755, %v540
      %v776 = vsel %vm762, %v758, %v542
      %v778 = vsel %vm762, %v761, %v544
      %vm779 = vcmask 392192
      %v781 = vsel %vm779, %v764, %v546
      %v783 = vsel %vm779, %v766, %v548
      %v785 = vsel %vm779, %v768, %v550
      %v787 = vsel %vm779, %v770, %v552
      %v789 = vsel %vm779, %v772, %v554
      %v791 = vsel %vm779, %v774, %v556
      %v793 = vsel %vm779, %v776, %v558
      %v795 = vsel %vm779, %v778, %v560
      %vm796 = vcmask 523264
      %v798 = vsel %vm796, %v781, %v562
      %v800 = vsel %vm796, %v783, %v564
      %v802 = vsel %vm796, %v785, %v566
      %v804 = vsel %vm796, %v787, %v568
      %v806 = vsel %vm796, %v789, %v570
      %v808 = vsel %vm796, %v791, %v572
      %v810 = vsel %vm796, %v793, %v574
      %v812 = vsel %vm796, %v795, %v576
      %vm813 = vcmask 654336
      %v815 = vsel %vm813, %v798, %v578
      %v817 = vsel %vm813, %v800, %v580
      %v819 = vsel %vm813, %v802, %v582
      %v821 = vsel %vm813, %v804, %v584
      %v823 = vsel %vm813, %v806, %v586
      %v825 = vsel %vm813, %v808, %v588
      %v827 = vsel %vm813, %v810, %v590
      %v829 = vsel %vm813, %v812, %v592
      %vm830 = vcmask 785408
      %v832 = vsel %vm830, %v815, %v594
      %v834 = vsel %vm830, %v817, %v596
      %v836 = vsel %vm830, %v819, %v598
      %v838 = vsel %vm830, %v821, %v600
      %v840 = vsel %vm830, %v823, %v602
      %v842 = vsel %vm830, %v825, %v604
      %v844 = vsel %vm830, %v827, %v606
      %v846 = vsel %vm830, %v829, %v608
      %vm847 = vcmask 916480
      %v849 = vsel %vm847, %v832, %v610
      %v852 = vsel %vm847, %v834, %v612
      %v855 = vsel %vm847, %v836, %v614
      %v858 = vsel %vm847, %v838, %v616
      %v861 = vsel %vm847, %v840, %v618
      %v864 = vsel %vm847, %v842, %v620
      %v867 = vsel %vm847, %v844, %v622
      %v870 = vsel %vm847, %v846, %v624
      %v874 = vsel %vm737, %v395, %v626
      %v877 = vsel %vm737, %v396, %v628
      %v880 = vsel %vm737, %v398, %v630
      %v883 = vsel %vm737, %v400, %v632
      %v886 = vsel %vm737, %v409, %v634
      %v889 = vsel %vm737, %v410, %v636
      %v892 = vsel %vm737, %v412, %v638
      %v895 = vsel %vm737, %v414, %v640
      %v897 = vsel %vm762, %v874, %v642
      %v899 = vsel %vm762, %v877, %v644
      %v901 = vsel %vm762, %v880, %v646
      %v903 = vsel %vm762, %v883, %v648
      %v905 = vsel %vm762, %v886, %v650
      %v907 = vsel %vm762, %v889, %v652
      %v909 = vsel %vm762, %v892, %v654
      %v911 = vsel %vm762, %v895, %v656
      %v913 = vsel %vm779, %v897, %v658
      %v915 = vsel %vm779, %v899, %v660
      %v917 = vsel %vm779, %v901, %v662
      %v919 = vsel %vm779, %v903, %v664
      %v921 = vsel %vm779, %v905, %v666
      %v923 = vsel %vm779, %v907, %v668
      %v925 = vsel %vm779, %v909, %v670
      %v927 = vsel %vm779, %v911, %v672
      %v929 = vsel %vm796, %v913, %v674
      %v931 = vsel %vm796, %v915, %v676
      %v933 = vsel %vm796, %v917, %v678
      %v935 = vsel %vm796, %v919, %v680
      %v937 = vsel %vm796, %v921, %v682
      %v939 = vsel %vm796, %v923, %v684
      %v941 = vsel %vm796, %v925, %v686
      %v943 = vsel %vm796, %v927, %v688
      %v945 = vsel %vm813, %v929, %v690
      %v947 = vsel %vm813, %v931, %v692
      %v949 = vsel %vm813, %v933, %v694
      %v951 = vsel %vm813, %v935, %v696
      %v953 = vsel %vm813, %v937, %v698
      %v955 = vsel %vm813, %v939, %v700
      %v957 = vsel %vm813, %v941, %v702
      %v959 = vsel %vm813, %v943, %v704
      %v961 = vsel %vm830, %v945, %v706
      %v963 = vsel %vm830, %v947, %v708
      %v965 = vsel %vm830, %v949, %v710
      %v967 = vsel %vm830, %v951, %v712
      %v969 = vsel %vm830, %v953, %v714
      %v971 = vsel %vm830, %v955, %v716
      %v973 = vsel %vm830, %v957, %v718
      %v975 = vsel %vm830, %v959, %v720
      %v977 = vsel %vm847, %v961, %v722
      %v980 = vsel %vm847, %v963, %v724
      %v983 = vsel %vm847, %v965, %v726
      %v986 = vsel %vm847, %v967, %v728
      %v989 = vsel %vm847, %v969, %v730
      %v992 = vsel %vm847, %v971, %v732
      %v995 = vsel %vm847, %v973, %v734
      %v998 = vsel %vm847, %v975, %v736
      %v1002 = vunpack.c.l.b16 %v189
      %v1003 = vunpack.c.l.b16 %v190
      %v1004 = vpack.c.b16 %v1003, %v1002
      %1006 = vmatpush.bf16.msra.mxu0 %v870
      %1007 = vmatpush.bf16.msra.mxu0 %v867
      %1008 = vmatpush.bf16.msra.mxu0 %v864
      %1009 = vmatpush.bf16.msra.mxu0 %v861
      %1010 = vmatpush.bf16.msra.mxu0 %v858
      %1011 = vmatpush.bf16.msra.mxu0 %v855
      %1012 = vmatpush.bf16.msra.mxu0 %v852
      %1013 = vmatpush.bf16.msra.mxu0 %v849
      %1014 = vmatmul.bf16.gmra.mxu0 %v1004
      %v1015 = vpop.f32.mrf.mxu0
      %v1016 = vadd.f32 0.0, %v1015
      %v1017 = vpop.f32.mrf.mxu0
      %v1018 = vadd.f32 0.0, %v1017
      %1019 = vdwg.mxu0
      %1020 = vmatpush.bf16.msra.mxu0 %v998
      %1021 = vmatpush.bf16.msra.mxu0 %v995
      %1022 = vmatpush.bf16.msra.mxu0 %v992
      %1023 = vmatpush.bf16.msra.mxu0 %v989
      %1024 = vmatpush.bf16.msra.mxu0 %v986
      %1025 = vmatpush.bf16.msra.mxu0 %v983
      %1026 = vmatpush.bf16.msra.mxu0 %v980
      %1027 = vmatpush.bf16.msra.mxu0 %v977
      %1028 = vmatmul.bf16.gmra.mxu0 %v1004
      %v1029 = vpop.f32.mrf.mxu0
      %v1030 = vadd.f32 0.0, %v1029
      %v1031 = vpop.f32.mrf.mxu0
      %v1032 = vadd.f32 0.0, %v1031
      %1033 = vdwg.mxu0
      %v1034 = vpack.c.bf16 %v1030, %v1016
      %v1035 = vpack.c.bf16 %v1032, %v1018
      %1036 = vst [vmem:[%s183] sm:$0xff] %v1034
      %1037 = vst [vmem:[%s183 + $0x8] sm:$0xff] %v1035
      %v1038 = vadd.f32 %v1016, %v1030
      %1039 = vadd.xlane.f32.xlu0 %v1038
      %v1040 = vpop.xlane.xlu0 %1039
      %v1041 = vadd.f32 %v1018, %v1032
      %1042 = vadd.xlane.f32.xlu0 %v1041
      %v1043 = vpop.xlane.xlu0 %1042
      %v1044 = vmul.f32 %v1016, %v1016
      %v1045 = vmul.f32 %v1030, %v1030
      %v1046 = vmul.f32 %v1018, %v1018
      %v1047 = vmul.f32 %v1032, %v1032
      %v1048 = vadd.f32 %v1044, %v1045
      %1049 = vadd.xlane.f32.xlu0 %v1048
      %v1050 = vpop.xlane.xlu0 %1049
      %v1051 = vadd.f32 %v1046, %v1047
      %1052 = vadd.xlane.f32.xlu0 %v1051
      %v1053 = vpop.xlane.xlu0 %1052
      %vm1054 = vcmask 7168
      %v1055 = vsel %vm1054, %v1040, %v1050
      %v1056 = vsel %vm1054, %v1043, %v1053
      %vm1057 = vcmask 15360
      %1058 = vst.msk [vmem:[%s188] sm:$0xff] %vm1057, %v1055
      %1059 = vst.msk [vmem:[%s188 + $0x8] sm:$0xff] %vm1057, %v1056
      %p1060 = scmp.lt.s32.totalorder %s15, 1
      %s1061 = scalar_select %p1060, %s15, 1
      %s1062 = smul.addr %s1061, 4
      %s1063 = smul.addr %s1062, 4
      %s1064 = scalar_lea.vmem %s2, %s1063
      %p1065 = scmp.lt.s32.totalorder %s15, 1
      %s1066 = scalar_select %p1065, %s15, 1
      %s1067 = smul.addr %s1066, 2
      %s1068 = smul.addr %s1067, 8
      %s1069 = scalar_lea.vmem %s3, %s1068
      // Predicated region
      $region29: #{pallas_forward.6} parent=27 // pred_check
        %p1070 = pneg %p80
      $region30: #{pallas_forward.6} parent=27 // pred_check_branch
        %1072 = sbr.rel (%p1070) target = $region32
      $region31: #{pallas_forward.6} parent=27 // pred_region
        _
      $region32: #{pallas_forward.6} parent=27 // pred_fallthru
        _
      // Predicated region
      $region33: #{pallas_forward.6} parent=27 // pred_check
        %p1073 = pneg %p106
      $region34: #{pallas_forward.6} parent=27 // pred_check_branch
        %1075 = sbr.rel (%p1073) target = $region36
      $region35: #{pallas_forward.6} parent=27 // pred_region
        _
      $region36: #{pallas_forward.6} parent=27 // pred_fallthru
        _
    $region28: #{pallas_forward.6} parent=5 // pred_fallthru
      _
    %p1076 = scmp.le.s32.totalorder 2, %s10
    // Predicated region
    $region37: #{pallas_forward.6} parent=5 // pred_check
      %p1077 = pneg %p1076
    $region38: #{pallas_forward.6} parent=5 // pred_check_branch
      %1079 = sbr.rel (%p1077) target = $region40
    $region39: #{pallas_forward.6} parent=5 // pred_region
      %s1080 = ssub.s32 %s10, 2
      // Predicated region
      $region41: #{pallas_forward.6} parent=39 // pred_check
        %p1081 = pneg %p86
      $region42: #{pallas_forward.6} parent=39 // pred_check_branch
        %1083 = sbr.rel (%p1081) target = $region44
      $region43: #{pallas_forward.6} parent=39 // pred_region
        %p1084 = scmp.lt.s32.totalorder %s16, 1
        %s1085 = scalar_select %p1084, %s16, 1
        %s1086 = smul.addr %s1085, 4
        %s1087 = smul.addr %s1086, 4
        %s1088 = scalar_lea.vmem %s2, %s1087
      $region44: #{pallas_forward.6} parent=39 // pred_fallthru
        _
      // Predicated region
      $region45: #{pallas_forward.6} parent=39 // pred_check
        %p1089 = pneg %p112
      $region46: #{pallas_forward.6} parent=39 // pred_check_branch
        %1091 = sbr.rel (%p1089) target = $region48
      $region47: #{pallas_forward.6} parent=39 // pred_region
        %p1092 = scmp.lt.s32.totalorder %s16, 1
        %s1093 = scalar_select %p1092, %s16, 1
        %s1094 = smul.addr %s1093, 2
        %s1095 = smul.addr %s1094, 8
        %s1096 = scalar_lea.vmem %s3, %s1095
      $region48: #{pallas_forward.6} parent=39 // pred_fallthru
        _
    $region40: #{pallas_forward.6} parent=5 // pred_fallthru
      _
  $region6: #{pallas_forward.6} parent=0 // loop_footer
    %s14 = sadd.s32 1, %s10
  $region7: #{pallas_forward.6} parent=0 // loop_footer_branch
    %9 = sbr.rel target = $region3
  $region8: #{pallas_forward.6} parent=0 // loop_exit
    _

// kernel: pallas_forward.5
$region0: #{pallas_forward.5}
  #allocation0 [shape = 'u32[]', space=smem, size = 0x4, offset = 0x4, fixed_abs, tag = 'smem constant byte address 0x4 - core index']
  #allocation1 [shape = 'u32[72,128]{1,0:T(1,128)}', space=vmem, size = 0x9000, scoped, tag = 'internal scratch']
  %s0 = inlined_call_operand.vmem [shape: bf16[66,16,33], index: 0, kind: input, shape index: {}]
  %s1 = inlined_call_operand.vmem [shape: bf16[8,64], index: 1, kind: input, shape index: {}]
  %s2 = inlined_call_operand.vmem [shape: f32[8,1], index: 2, kind: input, shape index: {}]
  %s3 = inlined_call_operand.vmem [shape: bf16[2,8,1024], index: 3, kind: output, shape index: {}]
  %s4 = sld [smem:[#allocation0]]
  $region45: #{pallas_forward.5} parent=0
    _
  %s6 = ssub.s32 1, %s4
  %s7 = scalar_select 0, %s6, %s4
  loop: start=0, step=1, limit=4
  $region2: #{pallas_forward.5} parent=0 // loop_pre_header
    _
  $region3: #{pallas_forward.5} parent=0 // loop_header
    %s9 = sphi 0, %s13
    %p10 = scmp.ge.s32.totalorder %s9, 4
    %s19 = sphi 0, %s21
    %s22 = sphi 0, %s19
    %s23 = sphi 0, %s22
    %s39 = sphi 0, %s23
    %s43 = sphi 0, %s43
    %s45 = sphi 0, %s43
    %s46 = sphi 0, %s45
    %s60 = sphi 0, %s46
    %s64 = sphi 0, %s64
    %s66 = sphi 0, %s64
    %s67 = sphi 0, %s66
    %s81 = sphi 0, %s67
    %s87 = sphi 0, %s89
    %s90 = sphi 0, %s87
    %s91 = sphi 0, %s90
    %s107 = sphi 0, %s91
  $region4: #{pallas_forward.5} parent=0 // loop_header_branch
    %12 = sbr.rel (%p10) target = $region8
  $region5: #{pallas_forward.5} parent=0 // loop_body
    %s14 = ssub.s32 %s9, 1
    %s15 = ssub.s32 %s9, 2
    %s16 = sadd.s32 %s9, 1
    %s17 = ssub.s32 %s9, %s16
    %p18 = scmp.eq.s32.totalorder %s17, 0
    %s20 = sadd.s32 %s19, 1
    %s21 = scalar_select %p18, %s19, %s20
    %p24 = pneg %p18
    %p25 = scmp.eq.s32.totalorder %s9, 1
    %p26 = por %p24, %p25
    %p27 = scmp.ne.s32.totalorder %s19, %s22
    %p28 = scmp.eq.s32.totalorder %s9, 0
    %p29 = por %p27, %p28
    %p30 = scmp.ne.s32.totalorder %s19, %s22
    %p31 = scmp.eq.s32.totalorder %s14, 1
    %p32 = por %p30, %p31
    %p33 = scmp.ne.s32.totalorder %s22, %s23
    %p34 = scmp.eq.s32.totalorder %s14, 0
    %p35 = por %p33, %p34
    %p36 = scmp.ne.s32.totalorder %s22, %s23
    %p37 = scmp.eq.s32.totalorder %s15, 1
    %p38 = por %p36, %p37
    %p40 = scmp.ne.s32.totalorder %s23, %s39
    %p41 = scmp.eq.s32.totalorder %s15, 0
    %p42 = por %p40, %p41
    %s44 = sadd.s32 %s43, 1
    %p47 = scmp.eq.s32.totalorder %s9, 1
    %p48 = scmp.ne.s32.totalorder %s43, %s45
    %p49 = scmp.eq.s32.totalorder %s9, 0
    %p50 = por %p48, %p49
    %p51 = scmp.ne.s32.totalorder %s43, %s45
    %p52 = scmp.eq.s32.totalorder %s14, 1
    %p53 = por %p51, %p52
    %p54 = scmp.ne.s32.totalorder %s45, %s46
    %p55 = scmp.eq.s32.totalorder %s14, 0
    %p56 = por %p54, %p55
    %p57 = scmp.ne.s32.totalorder %s45, %s46
    %p58 = scmp.eq.s32.totalorder %s15, 1
    %p59 = por %p57, %p58
    %p61 = scmp.ne.s32.totalorder %s46, %s60
    %p62 = scmp.eq.s32.totalorder %s15, 0
    %p63 = por %p61, %p62
    %s65 = sadd.s32 %s64, 1
    %p68 = scmp.eq.s32.totalorder %s9, 1
    %p69 = scmp.ne.s32.totalorder %s64, %s66
    %p70 = scmp.eq.s32.totalorder %s9, 0
    %p71 = por %p69, %p70
    %p72 = scmp.ne.s32.totalorder %s64, %s66
    %p73 = scmp.eq.s32.totalorder %s14, 1
    %p74 = por %p72, %p73
    %p75 = scmp.ne.s32.totalorder %s66, %s67
    %p76 = scmp.eq.s32.totalorder %s14, 0
    %p77 = por %p75, %p76
    %p78 = scmp.ne.s32.totalorder %s66, %s67
    %p79 = scmp.eq.s32.totalorder %s15, 1
    %p80 = por %p78, %p79
    %p82 = scmp.ne.s32.totalorder %s67, %s81
    %p83 = scmp.eq.s32.totalorder %s15, 0
    %p84 = por %p82, %p83
    %s85 = ssub.s32 %s9, %s16
    %p86 = scmp.eq.s32.totalorder %s85, 0
    %s88 = sadd.s32 %s87, 1
    %s89 = scalar_select %p86, %s87, %s88
    %p92 = pneg %p86
    %p93 = scmp.eq.s32.totalorder %s9, 1
    %p94 = por %p92, %p93
    %p95 = scmp.ne.s32.totalorder %s87, %s90
    %p96 = scmp.eq.s32.totalorder %s9, 0
    %p97 = por %p95, %p96
    %p98 = scmp.ne.s32.totalorder %s87, %s90
    %p99 = scmp.eq.s32.totalorder %s14, 1
    %p100 = por %p98, %p99
    %p101 = scmp.ne.s32.totalorder %s90, %s91
    %p102 = scmp.eq.s32.totalorder %s14, 0
    %p103 = por %p101, %p102
    %p104 = scmp.ne.s32.totalorder %s90, %s91
    %p105 = scmp.eq.s32.totalorder %s15, 1
    %p106 = por %p104, %p105
    %p108 = scmp.ne.s32.totalorder %s91, %s107
    %p109 = scmp.eq.s32.totalorder %s15, 0
    %p110 = por %p108, %p109
    %p111 = scmp.le.s32.totalorder 1, %s9
    %p112 = scmp.lt.s32.totalorder %s9, 3
    %p113 = pnand %p111, %p112
    %p114 = pneg %p113
    // Predicated region
    $region9: #{pallas_forward.5} parent=5 // pred_check
      _
    $region10: #{pallas_forward.5} parent=5 // pred_check_branch
      %116 = sbr.rel (%p113) target = $region12
    $region11: #{pallas_forward.5} parent=5 // pred_region
      %s117 = ssub.s32 %s9, 1
      // Predicated region
      $region13: #{pallas_forward.5} parent=11 // pred_check
        %p118 = pneg %p56
      $region14: #{pallas_forward.5} parent=11 // pred_check_branch
        %120 = sbr.rel (%p118) target = $region16
      $region15: #{pallas_forward.5} parent=11 // pred_region
        _
      $region16: #{pallas_forward.5} parent=11 // pred_fallthru
        _
      // Predicated region
      $region17: #{pallas_forward.5} parent=11 // pred_check
        %p121 = pneg %p77
      $region18: #{pallas_forward.5} parent=11 // pred_check_branch
        %123 = sbr.rel (%p121) target = $region20
      $region19: #{pallas_forward.5} parent=11 // pred_region
        _
      $region20: #{pallas_forward.5} parent=11 // pred_fallthru
        _
    $region12: #{pallas_forward.5} parent=5 // pred_fallthru
      _
    %p124 = scmp.lt.s32.totalorder %s9, 2
    // Predicated region
    $region21: #{pallas_forward.5} parent=5 // pred_check
      %p125 = pneg %p124
    $region22: #{pallas_forward.5} parent=5 // pred_check_branch
      %127 = sbr.rel (%p125) target = $region24
    $region23: #{pallas_forward.5} parent=5 // pred_region
      // Predicated region
      $region25: #{pallas_forward.5} parent=23 // pred_check
        %p128 = pneg %p29
      $region26: #{pallas_forward.5} parent=23 // pred_check_branch
        %130 = sbr.rel (%p128) target = $region28
      $region27: #{pallas_forward.5} parent=23 // pred_region
        %s131 = smul.u32 33, %s9
        %p132 = scmp.lt.s32.totalorder %s131, 65
        %s133 = scalar_select %p132, %s131, 65
        %s134 = smul.addr %s133, 2
        %s135 = smul.addr %s134, 4
        %s136 = scalar_lea.vmem %s0, %s135
        %s137 = smul.u32 33, %s9
      $region28: #{pallas_forward.5} parent=23 // pred_fallthru
        _
    $region24: #{pallas_forward.5} parent=5 // pred_fallthru
      _
    %p138 = scmp.le.s32.totalorder 1, %s9
    %p139 = scmp.lt.s32.totalorder %s9, 3
    %p140 = pnand %p138, %p139
    %p141 = pneg %p140
    // Predicated region
    $region29: #{pallas_forward.5} parent=5 // pred_check
      _
    $region30: #{pallas_forward.5} parent=5 // pred_check_branch
      %143 = sbr.rel (%p140) target = $region32
    $region31: #{pallas_forward.5} parent=5 // pred_region
      %s144 = ssub.s32 %s9, 1
      %s145 = smul.u32 33, %s14
      %p146 = scmp.lt.s32.totalorder %s145, 65
      %s147 = scalar_select %p146, %s145, 65
      %s148 = smul.addr %s147, 2
      %s149 = smul.addr %s148, 4
      %s150 = scalar_lea.vmem %s0, %s149
      %p151 = pneg %p35
      %p152 = pneg %p32
      %p153 = pneg %p56
      %p154 = pneg %p53
      %p155 = pneg %p77
      %p156 = pneg %p74
      %p157 = pneg %p103
      %p158 = pneg %p100
      %p159 = scmp.lt.s32.totalorder %s14, 1
      %s160 = scalar_select %p159, %s14, 1
      %s161 = smul.addr %s160, 8
      %s162 = smul.addr %s161, 4
      %s163 = scalar_lea.vmem %s3, %s162
      %s164 = smul.u32 33, %s14
      %p165 = scmp.lt.s32.totalorder %s164, 65
      %s166 = scalar_select %p165, %s164, 65
      %s167 = smul.addr %s166, 2
      %s168 = smul.addr %s167, 4
      %s169 = scalar_lea.vmem %s0, %s168
      %s170 = smul.u32 33, %s14
      %p171 = scmp.lt.s32.totalorder %s14, 1
      %s172 = scalar_select %p171, %s14, 1
      %s173 = smul.addr %s172, 8
      %s174 = smul.addr %s173, 4
      %s175 = scalar_lea.vmem %s3, %s174
      %v177 = vld [vmem:[%s1] sm:$0xf]
      %v178 = vld [vmem:[%s169] sm:$0xf]
      %v179 = vld [vmem:[%s169 + $0x4] sm:$0xf]
      %s180 = scalar_lea.vmem %s169, 8
      %v181 = vld [vmem:[%s180] sm:$0xf]
      %v182 = vld [vmem:[%s180 + $0x4] sm:$0xf]
      %s183 = scalar_lea.vmem %s169, 16
      %v184 = vld [vmem:[%s183] sm:$0xf]
      %v185 = vld [vmem:[%s183 + $0x4] sm:$0xf]
      %s186 = scalar_lea.vmem %s169, 24
      %v187 = vld [vmem:[%s186] sm:$0xf]
      %v188 = vld [vmem:[%s186 + $0x4] sm:$0xf]
      %s189 = scalar_lea.vmem %s169, 32
      %v190 = vld [vmem:[%s189] sm:$0xf]
      %v191 = vld [vmem:[%s189 + $0x4] sm:$0xf]
      %s192 = scalar_lea.vmem %s169, 40
      %v193 = vld [vmem:[%s192] sm:$0xf]
      %v194 = vld [vmem:[%s192 + $0x4] sm:$0xf]
      %s195 = scalar_lea.vmem %s169, 48
      %v196 = vld [vmem:[%s195] sm:$0xf]
      %v197 = vld [vmem:[%s195 + $0x4] sm:$0xf]
      %s198 = scalar_lea.vmem %s169, 56
      %v199 = vld [vmem:[%s198] sm:$0xf]
      %v200 = vld [vmem:[%s198 + $0x4] sm:$0xf]
      %s201 = scalar_lea.vmem %s169, 64
      %v202 = vld [vmem:[%s201] sm:$0xf]
      %v203 = vld [vmem:[%s201 + $0x4] sm:$0xf]
      %v206 = vunpack.c.l.b16 %v178
      %v207 = vunpack.c.l.b16 %v179
      %v208 = vpack.c.b16 %v207, %v206
      %209 = vrot.lane.b32.xlu0 %v208, 127
      %v210 = vpop.permute.xlu0 %209
      %v213 = vunpack.c.l.b16 %v181
      %v214 = vunpack.c.l.b16 %v182
      %v215 = vpack.c.b16 %v214, %v213
      %216 = vrot.lane.b32.xlu0 %v215, 127
      %v217 = vpop.permute.xlu0 %216
      %v220 = vunpack.c.l.b16 %v184
      %v221 = vunpack.c.l.b16 %v185
      %v222 = vpack.c.b16 %v221, %v220
      %223 = vrot.lane.b32.xlu0 %v222, 127
      %v224 = vpop.permute.xlu0 %223
      %v227 = vunpack.c.l.b16 %v187
      %v228 = vunpack.c.l.b16 %v188
      %v229 = vpack.c.b16 %v228, %v227
      %230 = vrot.lane.b32.xlu0 %v229, 127
      %v231 = vpop.permute.xlu0 %230
      %v234 = vunpack.c.l.b16 %v190
      %v235 = vunpack.c.l.b16 %v191
      %v236 = vpack.c.b16 %v235, %v234
      %237 = vrot.lane.b32.xlu0 %v236, 127
      %v238 = vpop.permute.xlu0 %237
      %v241 = vunpack.c.l.b16 %v193
      %v242 = vunpack.c.l.b16 %v194
      %v243 = vpack.c.b16 %v242, %v241
      %244 = vrot.lane.b32.xlu0 %v243, 127
      %v245 = vpop.permute.xlu0 %244
      %v248 = vunpack.c.l.b16 %v196
      %v249 = vunpack.c.l.b16 %v197
      %v250 = vpack.c.b16 %v249, %v248
      %251 = vrot.lane.b32.xlu0 %v250, 127
      %v252 = vpop.permute.xlu0 %251
      %v255 = vunpack.c.l.b16 %v199
      %v256 = vunpack.c.l.b16 %v200
      %v257 = vpack.c.b16 %v256, %v255
      %258 = vrot.lane.b32.xlu0 %v257, 127
      %v259 = vpop.permute.xlu0 %258
      %v262 = vunpack.c.l.b16 %v202
      %v263 = vunpack.c.l.b16 %v203
      %v264 = vpack.c.b16 %v263, %v262
      %265 = vrot.lane.b32.xlu0 %v264, 127
      %v266 = vpop.permute.xlu0 %265
      %267 = vrot.lane.b32.xlu0 %v215, 32
      %v268 = vpop.permute.xlu0 %267
      %269 = vrot.lane.b32.xlu0 %v217, 32
      %v270 = vpop.permute.xlu0 %269
      %271 = vrot.lane.b32.xlu0 %v222, 32
      %v272 = vpop.permute.xlu0 %271
      %273 = vrot.lane.b32.xlu0 %v224, 32
      %v274 = vpop.permute.xlu0 %273
      %275 = vrot.lane.b32.xlu0 %v222, 64
      %v276 = vpop.permute.xlu0 %275
      %277 = vrot.lane.b32.xlu0 %v224, 64
      %v278 = vpop.permute.xlu0 %277
      %279 = vrot.lane.b32.xlu0 %v229, 64
      %v280 = vpop.permute.xlu0 %279
      %281 = vrot.lane.b32.xlu0 %v231, 64
      %v282 = vpop.permute.xlu0 %281
      %283 = vrot.lane.b32.xlu0 %v229, 96
      %v284 = vpop.permute.xlu0 %283
      %285 = vrot.lane.b32.xlu0 %v231, 96
      %v286 = vpop.permute.xlu0 %285
      %287 = vrot.lane.b32.xlu0 %v236, 96
      %v288 = vpop.permute.xlu0 %287
      %289 = vrot.lane.b32.xlu0 %v238, 96
      %v290 = vpop.permute.xlu0 %289
      %291 = vrot.lane.b32.xlu0 %v243, 32
      %v292 = vpop.permute.xlu0 %291
      %293 = vrot.lane.b32.xlu0 %v245, 32
      %v294 = vpop.permute.xlu0 %293
      %295 = vrot.lane.b32.xlu0 %v250, 32
      %v296 = vpop.permute.xlu0 %295
      %297 = vrot.lane.b32.xlu0 %v252, 32
      %v298 = vpop.permute.xlu0 %297
      %299 = vrot.lane.b32.xlu0 %v250, 64
      %v300 = vpop.permute.xlu0 %299
      %301 = vrot.lane.b32.xlu0 %v252, 64
      %v302 = vpop.permute.xlu0 %301
      %303 = vrot.lane.b32.xlu0 %v257, 64
      %v304 = vpop.permute.xlu0 %303
      %305 = vrot.lane.b32.xlu0 %v259, 64
      %v306 = vpop.permute.xlu0 %305
      %307 = vrot.lane.b32.xlu0 %v257, 96
      %v308 = vpop.permute.xlu0 %307
      %309 = vrot.lane.b32.xlu0 %v259, 96
      %v310 = vpop.permute.xlu0 %309
      %311 = vrot.lane.b32.xlu0 %v264, 96
      %v312 = vpop.permute.xlu0 %311
      %313 = vrot.lane.b32.xlu0 %v266, 96
      %v314 = vpop.permute.xlu0 %313
      %vm315 = vcmask 261120
      %v318 = vsel %vm315, %v208, %v268
      %v321 = vsel %vm315, %v210, %v270
      %v324 = vsel %vm315, %v215, %v272
      %v327 = vsel %vm315, %v217, %v274
      %vm328 = vcmask 523264
      %v330 = vsel %vm328, %v318, %v276
      %v332 = vsel %vm328, %v321, %v278
      %v334 = vsel %vm328, %v324, %v280
      %v336 = vsel %vm328, %v327, %v282
      %vm337 = vcmask 785408
      %v339 = vsel %vm337, %v330, %v284
      %v342 = vsel %vm337, %v332, %v286
      %v345 = vsel %vm337, %v334, %v288
      %v348 = vsel %vm337, %v336, %v290
      %v352 = vsel %vm315, %v236, %v292
      %v355 = vsel %vm315, %v238, %v294
      %v358 = vsel %vm315, %v243, %v296
      %v361 = vsel %vm315, %v245, %v298
      %v363 = vsel %vm328, %v352, %v300
      %v365 = vsel %vm328, %v355, %v302
      %v367 = vsel %vm328, %v358, %v304
      %v369 = vsel %vm328, %v361, %v306
      %v371 = vsel %vm337, %v363, %v308
      %v374 = vsel %vm337, %v365, %v310
      %v377 = vsel %vm337, %v367, %v312
      %v380 = vsel %vm337, %v369, %v314
      %v382 = vld [vmem:[%s2] sm:$0xff]
      %384 = vset.pattern.permute.xlu0 0
      %385 = vperm.xlu0 %384, %v382
      %v386 = vpop.permute.xlu0 %385
      %v389 = vsel %vm328, %v177, 0
      %391 = vmatpush.bf16.msra.mxu0 0
      %392 = vmatpush.bf16.msra.mxu0 0
      %393 = vmatpush.bf16.msra.mxu0 0
      %394 = vmatpush.bf16.msra.mxu0 0
      %395 = vmatpush.bf16.msra.mxu0 %v348
      %396 = vmatpush.bf16.msra.mxu0 %v345
      %397 = vmatpush.bf16.msra.mxu0 %v342
      %398 = vmatpush.bf16.msra.mxu0 %v339
      %399 = vmatmul.bf16.gmra.mxu0 %v389
      %v400 = vpop.f32.mrf.mxu0
      %v401 = vadd.f32 %v386, %v400
      %v402 = vpop.f32.mrf.mxu0
      %403 = vdwg.mxu0
      %404 = vmatpush.bf16.msra.mxu0 0
      %405 = vmatpush.bf16.msra.mxu0 0
      %406 = vmatpush.bf16.msra.mxu0 0
      %407 = vmatpush.bf16.msra.mxu0 0
      %408 = vmatpush.bf16.msra.mxu0 %v380
      %409 = vmatpush.bf16.msra.mxu0 %v377
      %410 = vmatpush.bf16.msra.mxu0 %v374
      %411 = vmatpush.bf16.msra.mxu0 %v371
      %412 = vmatmul.bf16.gmra.mxu0 %v389
      %v413 = vpop.f32.mrf.mxu0
      %v414 = vadd.f32 %v386, %v413
      %v415 = vpop.f32.mrf.mxu0
      %416 = vdwg.mxu0
      %vm417 = vcmp.gt.f32.partialorder %v401, 0.0
      %vm418 = vcmp.gt.f32.partialorder %v414, 0.0
      %v419 = vmul.f32 %v401, 0.2
      %v420 = vmul.f32 %v414, 0.2
      %v421 = vsel %vm417, %v401, %v419
      %v422 = vsel %vm418, %v414, %v420
      %v423 = vpack.c.bf16 %v422, %v421
      %424 = vst [vmem:[%s175] sm:$0xff] %v423
      %v425 = vld [vmem:[%s201] sm:$0xf]
      %v426 = vld [vmem:[%s201 + $0x4] sm:$0xf]
      %s427 = scalar_lea.vmem %s169, 72
      %v428 = vld [vmem:[%s427] sm:$0xf]
      %v429 = vld [vmem:[%s427 + $0x4] sm:$0xf]
      %s430 = scalar_lea.vmem %s169, 80
      %v431 = vld [vmem:[%s430] sm:$0xf]
      %v432 = vld [vmem:[%s430 + $0x4] sm:$0xf]
      %s433 = scalar_lea.vmem %s169, 88
      %v434 = vld [vmem:[%s433] sm:$0xf]
      %v435 = vld [vmem:[%s433 + $0x4] sm:$0xf]
      %s436 = scalar_lea.vmem %s169, 96
      %v437 = vld [vmem:[%s436] sm:$0xf]
      %v438 = vld [vmem:[%s436 + $0x4] sm:$0xf]
      %s439 = scalar_lea.vmem %s169, 104
      %v440 = vld [vmem:[%s439] sm:$0xf]
      %v441 = vld [vmem:[%s439 + $0x4] sm:$0xf]
      %s442 = scalar_lea.vmem %s169, 112
      %v443 = vld [vmem:[%s442] sm:$0xf]
      %v444 = vld [vmem:[%s442 + $0x4] sm:$0xf]
      %s445 = scalar_lea.vmem %s169, 120
      %v446 = vld [vmem:[%s445] sm:$0xf]
      %v447 = vld [vmem:[%s445 + $0x4] sm:$0xf]
      %s448 = scalar_lea.vmem %s169, 128
      %v449 = vld [vmem:[%s448] sm:$0xf]
      %v450 = vld [vmem:[%s448 + $0x4] sm:$0xf]
      %v453 = vunpack.c.l.b16 %v425
      %v454 = vunpack.c.l.b16 %v426
      %v455 = vpack.c.b16 %v454, %v453
      %456 = vrot.lane.b32.xlu0 %v455, 127
      %v457 = vpop.permute.xlu0 %456
      %v460 = vunpack.c.l.b16 %v428
      %v461 = vunpack.c.l.b16 %v429
      %v462 = vpack.c.b16 %v461, %v460
      %463 = vrot.lane.b32.xlu0 %v462, 127
      %v464 = vpop.permute.xlu0 %463
      %v467 = vunpack.c.l.b16 %v431
      %v468 = vunpack.c.l.b16 %v432
      %v469 = vpack.c.b16 %v468, %v467
      %470 = vrot.lane.b32.xlu0 %v469, 127
      %v471 = vpop.permute.xlu0 %470
      %v474 = vunpack.c.l.b16 %v434
      %v475 = vunpack.c.l.b16 %v435
      %v476 = vpack.c.b16 %v475, %v474
      %477 = vrot.lane.b32.xlu0 %v476, 127
      %v478 = vpop.permute.xlu0 %477
      %v481 = vunpack.c.l.b16 %v437
      %v482 = vunpack.c.l.b16 %v438
      %v483 = vpack.c.b16 %v482, %v481
      %484 = vrot.lane.b32.xlu0 %v483, 127
      %v485 = vpop.permute.xlu0 %484
      %v488 = vunpack.c.l.b16 %v440
      %v489 = vunpack.c.l.b16 %v441
      %v490 = vpack.c.b16 %v489, %v488
      %491 = vrot.lane.b32.xlu0 %v490, 127
      %v492 = vpop.permute.xlu0 %491
      %v495 = vunpack.c.l.b16 %v443
      %v496 = vunpack.c.l.b16 %v444
      %v497 = vpack.c.b16 %v496, %v495
      %498 = vrot.lane.b32.xlu0 %v497, 127
      %v499 = vpop.permute.xlu0 %498
      %v502 = vunpack.c.l.b16 %v446
      %v503 = vunpack.c.l.b16 %v447
      %v504 = vpack.c.b16 %v503, %v502
      %505 = vrot.lane.b32.xlu0 %v504, 127
      %v506 = vpop.permute.xlu0 %505
      %v509 = vunpack.c.l.b16 %v449
      %v510 = vunpack.c.l.b16 %v450
      %v511 = vpack.c.b16 %v510, %v509
      %512 = vrot.lane.b32.xlu0 %v511, 127
      %v513 = vpop.permute.xlu0 %512
      %514 = vrot.lane.b32.xlu0 %v462, 32
      %v515 = vpop.permute.xlu0 %514
      %516 = vrot.lane.b32.xlu0 %v464, 32
      %v517 = vpop.permute.xlu0 %516
      %518 = vrot.lane.b32.xlu0 %v469, 32
      %v519 = vpop.permute.xlu0 %518
      %520 = vrot.lane.b32.xlu0 %v471, 32
      %v521 = vpop.permute.xlu0 %520
      %522 = vrot.lane.b32.xlu0 %v469, 64
      %v523 = vpop.permute.xlu0 %522
      %524 = vrot.lane.b32.xlu0 %v471, 64
      %v525 = vpop.permute.xlu0 %524
      %526 = vrot.lane.b32.xlu0 %v476, 64
      %v527 = vpop.permute.xlu0 %526
      %528 = vrot.lane.b32.xlu0 %v478, 64
      %v529 = vpop.permute.xlu0 %528
      %530 = vrot.lane.b32.xlu0 %v476, 96
      %v531 = vpop.permute.xlu0 %530
      %532 = vrot.lane.b32.xlu0 %v478, 96
      %v533 = vpop.permute.xlu0 %532
      %534 = vrot.lane.b32.xlu0 %v483, 96
      %v535 = vpop.permute.xlu0 %534
      %536 = vrot.lane.b32.xlu0 %v485, 96
      %v537 = vpop.permute.xlu0 %536
      %538 = vrot.lane.b32.xlu0 %v490, 32
      %v539 = vpop.permute.xlu0 %538
      %540 = vrot.lane.b32.xlu0 %v492, 32
      %v541 = vpop.permute.xlu0 %540
      %542 = vrot.lane.b32.xlu0 %v497, 32
      %v543 = vpop.permute.xlu0 %542
      %544 = vrot.lane.b32.xlu0 %v499, 32
      %v545 = vpop.permute.xlu0 %544
      %546 = vrot.lane.b32.xlu0 %v497, 64
      %v547 = vpop.permute.xlu0 %546
      %548 = vrot.lane.b32.xlu0 %v499, 64
      %v549 = vpop.permute.xlu0 %548
      %550 = vrot.lane.b32.xlu0 %v504, 64
      %v551 = vpop.permute.xlu0 %550
      %552 = vrot.lane.b32.xlu0 %v506, 64
      %v553 = vpop.permute.xlu0 %552
      %554 = vrot.lane.b32.xlu0 %v504, 96
      %v555 = vpop.permute.xlu0 %554
      %556 = vrot.lane.b32.xlu0 %v506, 96
      %v557 = vpop.permute.xlu0 %556
      %558 = vrot.lane.b32.xlu0 %v511, 96
      %v559 = vpop.permute.xlu0 %558
      %560 = vrot.lane.b32.xlu0 %v513, 96
      %v561 = vpop.permute.xlu0 %560
      %v564 = vsel %vm315, %v455, %v515
      %v567 = vsel %vm315, %v457, %v517
      %v570 = vsel %vm315, %v462, %v519
      %v573 = vsel %vm315, %v464, %v521
      %v575 = vsel %vm328, %v564, %v523
      %v577 = vsel %vm328, %v567, %v525
      %v579 = vsel %vm328, %v570, %v527
      %v581 = vsel %vm328, %v573, %v529
      %v583 = vsel %vm337, %v575, %v531
      %v586 = vsel %vm337, %v577, %v533
      %v589 = vsel %vm337, %v579, %v535
      %v592 = vsel %vm337, %v581, %v537
      %v596 = vsel %vm315, %v483, %v539
      %v599 = vsel %vm315, %v485, %v541
      %v602 = vsel %vm315, %v490, %v543
      %v605 = vsel %vm315, %v492, %v545
      %v607 = vsel %vm328, %v596, %v547
      %v609 = vsel %vm328, %v599, %v549
      %v611 = vsel %vm328, %v602, %v551
      %v613 = vsel %vm328, %v605, %v553
      %v615 = vsel %vm337, %v607, %v555
      %v618 = vsel %vm337, %v609, %v557
      %v621 = vsel %vm337, %v611, %v559
      %v624 = vsel %vm337, %v613, %v561
      %v626 = vld [vmem:[%s2] sm:$0xff]
      %628 = vset.pattern.permute.xlu0 0
      %629 = vperm.xlu0 %628, %v626
      %v630 = vpop.permute.xlu0 %629
      %632 = vmatpush.bf16.msra.mxu0 0
      %633 = vmatpush.bf16.msra.mxu0 0
      %634 = vmatpush.bf16.msra.mxu0 0
      %635 = vmatpush.bf16.msra.mxu0 0
      %636 = vmatpush.bf16.msra.mxu0 %v592
      %637 = vmatpush.bf16.msra.mxu0 %v589
      %638 = vmatpush.bf16.msra.mxu0 %v586
      %639 = vmatpush.bf16.msra.mxu0 %v583
      %640 = vmatmul.bf16.gmra.mxu0 %v389
      %v641 = vpop.f32.mrf.mxu0
      %v642 = vadd.f32 %v630, %v641
      %v643 = vpop.f32.mrf.mxu0
      %644 = vdwg.mxu0
      %645 = vmatpush.bf16.msra.mxu0 0
      %646 = vmatpush.bf16.msra.mxu0 0
      %647 = vmatpush.bf16.msra.mxu0 0
      %648 = vmatpush.bf16.msra.mxu0 0
      %649 = vmatpush.bf16.msra.mxu0 %v624
      %650 = vmatpush.bf16.msra.mxu0 %v621
      %651 = vmatpush.bf16.msra.mxu0 %v618
      %652 = vmatpush.bf16.msra.mxu0 %v615
      %653 = vmatmul.bf16.gmra.mxu0 %v389
      %v654 = vpop.f32.mrf.mxu0
      %v655 = vadd.f32 %v630, %v654
      %v656 = vpop.f32.mrf.mxu0
      %657 = vdwg.mxu0
      %vm658 = vcmp.gt.f32.partialorder %v642, 0.0
      %vm659 = vcmp.gt.f32.partialorder %v655, 0.0
      %v660 = vmul.f32 %v642, 0.2
      %v661 = vmul.f32 %v655, 0.2
      %v662 = vsel %vm658, %v642, %v660
      %v663 = vsel %vm659, %v655, %v661
      %v664 = vpack.c.bf16 %v663, %v662
      %665 = vst [vmem:[%s175 + $0x8] sm:$0xff] %v664
      %v666 = vld [vmem:[%s448] sm:$0xf]
      %v667 = vld [vmem:[%s448 + $0x4] sm:$0xf]
      %s668 = scalar_lea.vmem %s169, 136
      %v669 = vld [vmem:[%s668] sm:$0xf]
      %v670 = vld [vmem:[%s668 + $0x4] sm:$0xf]
      %s671 = scalar_lea.vmem %s169, 144
      %v672 = vld [vmem:[%s671] sm:$0xf]
      %v673 = vld [vmem:[%s671 + $0x4] sm:$0xf]
      %s674 = scalar_lea.vmem %s169, 152
      %v675 = vld [vmem:[%s674] sm:$0xf]
      %v676 = vld [vmem:[%s674 + $0x4] sm:$0xf]
      %s677 = scalar_lea.vmem %s169, 160
      %v678 = vld [vmem:[%s677] sm:$0xf]
      %v679 = vld [vmem:[%s677 + $0x4] sm:$0xf]
      %s680 = scalar_lea.vmem %s169, 168
      %v681 = vld [vmem:[%s680] sm:$0xf]
      %v682 = vld [vmem:[%s680 + $0x4] sm:$0xf]
      %s683 = scalar_lea.vmem %s169, 176
      %v684 = vld [vmem:[%s683] sm:$0xf]
      %v685 = vld [vmem:[%s683 + $0x4] sm:$0xf]
      %s686 = scalar_lea.vmem %s169, 184
      %v687 = vld [vmem:[%s686] sm:$0xf]
      %v688 = vld [vmem:[%s686 + $0x4] sm:$0xf]
      %s689 = scalar_lea.vmem %s169, 192
      %v690 = vld [vmem:[%s689] sm:$0xf]
      %v691 = vld [vmem:[%s689 + $0x4] sm:$0xf]
      %v694 = vunpack.c.l.b16 %v666
      %v695 = vunpack.c.l.b16 %v667
      %v696 = vpack.c.b16 %v695, %v694
      %697 = vrot.lane.b32.xlu0 %v696, 127
      %v698 = vpop.permute.xlu0 %697
      %v701 = vunpack.c.l.b16 %v669
      %v702 = vunpack.c.l.b16 %v670
      %v703 = vpack.c.b16 %v702, %v701
      %704 = vrot.lane.b32.xlu0 %v703, 127
      %v705 = vpop.permute.xlu0 %704
      %v708 = vunpack.c.l.b16 %v672
      %v709 = vunpack.c.l.b16 %v673
      %v710 = vpack.c.b16 %v709, %v708
      %711 = vrot.lane.b32.xlu0 %v710, 127
      %v712 = vpop.permute.xlu0 %711
      %v715 = vunpack.c.l.b16 %v675
      %v716 = vunpack.c.l.b16 %v676
      %v717 = vpack.c.b16 %v716, %v715
      %718 = vrot.lane.b32.xlu0 %v717, 127
      %v719 = vpop.permute.xlu0 %718
      %v722 = vunpack.c.l.b16 %v678
      %v723 = vunpack.c.l.b16 %v679
      %v724 = vpack.c.b16 %v723, %v722
      %725 = vrot.lane.b32.xlu0 %v724, 127
      %v726 = vpop.permute.xlu0 %725
      %v729 = vunpack.c.l.b16 %v681
      %v730 = vunpack.c.l.b16 %v682
      %v731 = vpack.c.b16 %v730, %v729
      %732 = vrot.lane.b32.xlu0 %v731, 127
      %v733 = vpop.permute.xlu0 %732
      %v736 = vunpack.c.l.b16 %v684
      %v737 = vunpack.c.l.b16 %v685
      %v738 = vpack.c.b16 %v737, %v736
      %739 = vrot.lane.b32.xlu0 %v738, 127
      %v740 = vpop.permute.xlu0 %739
      %v743 = vunpack.c.l.b16 %v687
      %v744 = vunpack.c.l.b16 %v688
      %v745 = vpack.c.b16 %v744, %v743
      %746 = vrot.lane.b32.xlu0 %v745, 127
      %v747 = vpop.permute.xlu0 %746
      %v750 = vunpack.c.l.b16 %v690
      %v751 = vunpack.c.l.b16 %v691
      %v752 = vpack.c.b16 %v751, %v750
      %753 = vrot.lane.b32.xlu0 %v752, 127
      %v754 = vpop.permute.xlu0 %753
      %755 = vrot.lane.b32.xlu0 %v703, 32
      %v756 = vpop.permute.xlu0 %755
      %757 = vrot.lane.b32.xlu0 %v705, 32
      %v758 = vpop.permute.xlu0 %757
      %759 = vrot.lane.b32.xlu0 %v710, 32
      %v760 = vpop.permute.xlu0 %759
      %761 = vrot.lane.b32.xlu0 %v712, 32
      %v762 = vpop.permute.xlu0 %761
      %763 = vrot.lane.b32.xlu0 %v710, 64
      %v764 = vpop.permute.xlu0 %763
      %765 = vrot.lane.b32.xlu0 %v712, 64
      %v766 = vpop.permute.xlu0 %765
      %767 = vrot.lane.b32.xlu0 %v717, 64
      %v768 = vpop.permute.xlu0 %767
      %769 = vrot.lane.b32.xlu0 %v719, 64
      %v770 = vpop.permute.xlu0 %769
      %771 = vrot.lane.b32.xlu0 %v717, 96
      %v772 = vpop.permute.xlu0 %771
      %773 = vrot.lane.b32.xlu0 %v719, 96
      %v774 = vpop.permute.xlu0 %773
      %775 = vrot.lane.b32.xlu0 %v724, 96
      %v776 = vpop.permute.xlu0 %775
      %777 = vrot.lane.b32.xlu0 %v726, 96
      %v778 = vpop.permute.xlu0 %777
      %779 = vrot.lane.b32.xlu0 %v731, 32
      %v780 = vpop.permute.xlu0 %779
      %781 = vrot.lane.b32.xlu0 %v733, 32
      %v782 = vpop.permute.xlu0 %781
      %783 = vrot.lane.b32.xlu0 %v738, 32
      %v784 = vpop.permute.xlu0 %783
      %785 = vrot.lane.b32.xlu0 %v740, 32
      %v786 = vpop.permute.xlu0 %785
      %787 = vrot.lane.b32.xlu0 %v738, 64
      %v788 = vpop.permute.xlu0 %787
      %789 = vrot.lane.b32.xlu0 %v740, 64
      %v790 = vpop.permute.xlu0 %789
      %791 = vrot.lane.b32.xlu0 %v745, 64
      %v792 = vpop.permute.xlu0 %791
      %793 = vrot.lane.b32.xlu0 %v747, 64
      %v794 = vpop.permute.xlu0 %793
      %795 = vrot.lane.b32.xlu0 %v745, 96
      %v796 = vpop.permute.xlu0 %795
      %797 = vrot.lane.b32.xlu0 %v747, 96
      %v798 = vpop.permute.xlu0 %797
      %799 = vrot.lane.b32.xlu0 %v752, 96
      %v800 = vpop.permute.xlu0 %799
      %801 = vrot.lane.b32.xlu0 %v754, 96
      %v802 = vpop.permute.xlu0 %801
      %v805 = vsel %vm315, %v696, %v756
      %v808 = vsel %vm315, %v698, %v758
      %v811 = vsel %vm315, %v703, %v760
      %v814 = vsel %vm315, %v705, %v762
      %v816 = vsel %vm328, %v805, %v764
      %v818 = vsel %vm328, %v808, %v766
      %v820 = vsel %vm328, %v811, %v768
      %v822 = vsel %vm328, %v814, %v770
      %v824 = vsel %vm337, %v816, %v772
      %v827 = vsel %vm337, %v818, %v774
      %v830 = vsel %vm337, %v820, %v776
      %v833 = vsel %vm337, %v822, %v778
      %v837 = vsel %vm315, %v724, %v780
      %v840 = vsel %vm315, %v726, %v782
      %v843 = vsel %vm315, %v731, %v784
      %v846 = vsel %vm315, %v733, %v786
      %v848 = vsel %vm328, %v837, %v788
      %v850 = vsel %vm328, %v840, %v790
      %v852 = vsel %vm328, %v843, %v792
      %v854 = vsel %vm328, %v846, %v794
      %v856 = vsel %vm337, %v848, %v796
      %v859 = vsel %vm337, %v850, %v798
      %v862 = vsel %vm337, %v852, %v800
      %v865 = vsel %vm337, %v854, %v802
      %v867 = vld [vmem:[%s2] sm:$0xff]
      %869 = vset.pattern.permute.xlu0 0
      %870 = vperm.xlu0 %869, %v867
      %v871 = vpop.permute.xlu0 %870
      %873 = vmatpush.bf16.msra.mxu0 0
      %874 = vmatpush.bf16.msra.mxu0 0
      %875 = vmatpush.bf16.msra.mxu0 0
      %876 = vmatpush.bf16.msra.mxu0 0
      %877 = vmatpush.bf16.msra.mxu0 %v833
      %878 = vmatpush.bf16.msra.mxu0 %v830
      %879 = vmatpush.bf16.msra.mxu0 %v827
      %880 = vmatpush.bf16.msra.mxu0 %v824
      %881 = vmatmul.bf16.gmra.mxu0 %v389
      %v882 = vpop.f32.mrf.mxu0
      %v883 = vadd.f32 %v871, %v882
      %v884 = vpop.f32.mrf.mxu0
      %885 = vdwg.mxu0
      %886 = vmatpush.bf16.msra.mxu0 0
      %887 = vmatpush.bf16.msra.mxu0 0
      %888 = vmatpush.bf16.msra.mxu0 0
      %889 = vmatpush.bf16.msra.mxu0 0
      %890 = vmatpush.bf16.msra.mxu0 %v865
      %891 = vmatpush.bf16.msra.mxu0 %v862
      %892 = vmatpush.bf16.msra.mxu0 %v859
      %893 = vmatpush.bf16.msra.mxu0 %v856
      %894 = vmatmul.bf16.gmra.mxu0 %v389
      %v895 = vpop.f32.mrf.mxu0
      %v896 = vadd.f32 %v871, %v895
      %v897 = vpop.f32.mrf.mxu0
      %898 = vdwg.mxu0
      %vm899 = vcmp.gt.f32.partialorder %v883, 0.0
      %vm900 = vcmp.gt.f32.partialorder %v896, 0.0
      %v901 = vmul.f32 %v883, 0.2
      %v902 = vmul.f32 %v896, 0.2
      %v903 = vsel %vm899, %v883, %v901
      %v904 = vsel %vm900, %v896, %v902
      %v905 = vpack.c.bf16 %v904, %v903
      %906 = vst [vmem:[%s175 + $0x10] sm:$0xff] %v905
      %v907 = vld [vmem:[%s689] sm:$0xf]
      %v908 = vld [vmem:[%s689 + $0x4] sm:$0xf]
      %s909 = scalar_lea.vmem %s169, 200
      %v910 = vld [vmem:[%s909] sm:$0xf]
      %v911 = vld [vmem:[%s909 + $0x4] sm:$0xf]
      %s912 = scalar_lea.vmem %s169, 208
      %v913 = vld [vmem:[%s912] sm:$0xf]
      %v914 = vld [vmem:[%s912 + $0x4] sm:$0xf]
      %s915 = scalar_lea.vmem %s169, 216
      %v916 = vld [vmem:[%s915] sm:$0xf]
      %v917 = vld [vmem:[%s915 + $0x4] sm:$0xf]
      %s918 = scalar_lea.vmem %s169, 224
      %v919 = vld [vmem:[%s918] sm:$0xf]
      %v920 = vld [vmem:[%s918 + $0x4] sm:$0xf]
      %s921 = scalar_lea.vmem %s169, 232
      %v922 = vld [vmem:[%s921] sm:$0xf]
      %v923 = vld [vmem:[%s921 + $0x4] sm:$0xf]
      %s924 = scalar_lea.vmem %s169, 240
      %v925 = vld [vmem:[%s924] sm:$0xf]
      %v926 = vld [vmem:[%s924 + $0x4] sm:$0xf]
      %s927 = scalar_lea.vmem %s169, 248
      %v928 = vld [vmem:[%s927] sm:$0xf]
      %v929 = vld [vmem:[%s927 + $0x4] sm:$0xf]
      %s930 = scalar_lea.vmem %s169, 256
      %v931 = vld [vmem:[%s930] sm:$0xf]
      %v932 = vld [vmem:[%s930 + $0x4] sm:$0xf]
      %v935 = vunpack.c.l.b16 %v907
      %v936 = vunpack.c.l.b16 %v908
      %v937 = vpack.c.b16 %v936, %v935
      %938 = vrot.lane.b32.xlu0 %v937, 127
      %v939 = vpop.permute.xlu0 %938
      %v942 = vunpack.c.l.b16 %v910
      %v943 = vunpack.c.l.b16 %v911
      %v944 = vpack.c.b16 %v943, %v942
      %945 = vrot.lane.b32.xlu0 %v944, 127
      %v946 = vpop.permute.xlu0 %945
      %v949 = vunpack.c.l.b16 %v913
      %v950 = vunpack.c.l.b16 %v914
      %v951 = vpack.c.b16 %v950, %v949
      %952 = vrot.lane.b32.xlu0 %v951, 127
      %v953 = vpop.permute.xlu0 %952
      %v956 = vunpack.c.l.b16 %v916
      %v957 = vunpack.c.l.b16 %v917
      %v958 = vpack.c.b16 %v957, %v956
      %959 = vrot.lane.b32.xlu0 %v958, 127
      %v960 = vpop.permute.xlu0 %959
      %v963 = vunpack.c.l.b16 %v919
      %v964 = vunpack.c.l.b16 %v920
      %v965 = vpack.c.b16 %v964, %v963
      %966 = vrot.lane.b32.xlu0 %v965, 127
      %v967 = vpop.permute.xlu0 %966
      %v970 = vunpack.c.l.b16 %v922
      %v971 = vunpack.c.l.b16 %v923
      %v972 = vpack.c.b16 %v971, %v970
      %973 = vrot.lane.b32.xlu0 %v972, 127
      %v974 = vpop.permute.xlu0 %973
      %v977 = vunpack.c.l.b16 %v925
      %v978 = vunpack.c.l.b16 %v926
      %v979 = vpack.c.b16 %v978, %v977
      %980 = vrot.lane.b32.xlu0 %v979, 127
      %v981 = vpop.permute.xlu0 %980
      %v984 = vunpack.c.l.b16 %v928
      %v985 = vunpack.c.l.b16 %v929
      %v986 = vpack.c.b16 %v985, %v984
      %987 = vrot.lane.b32.xlu0 %v986, 127
      %v988 = vpop.permute.xlu0 %987
      %v991 = vunpack.c.l.b16 %v931
      %v992 = vunpack.c.l.b16 %v932
      %v993 = vpack.c.b16 %v992, %v991
      %994 = vrot.lane.b32.xlu0 %v993, 127
      %v995 = vpop.permute.xlu0 %994
      %996 = vrot.lane.b32.xlu0 %v944, 32
      %v997 = vpop.permute.xlu0 %996
      %998 = vrot.lane.b32.xlu0 %v946, 32
      %v999 = vpop.permute.xlu0 %998
      %1000 = vrot.lane.b32.xlu0 %v951, 32
      %v1001 = vpop.permute.xlu0 %1000
      %1002 = vrot.lane.b32.xlu0 %v953, 32
      %v1003 = vpop.permute.xlu0 %1002
      %1004 = vrot.lane.b32.xlu0 %v951, 64
      %v1005 = vpop.permute.xlu0 %1004
      %1006 = vrot.lane.b32.xlu0 %v953, 64
      %v1007 = vpop.permute.xlu0 %1006
      %1008 = vrot.lane.b32.xlu0 %v958, 64
      %v1009 = vpop.permute.xlu0 %1008
      %1010 = vrot.lane.b32.xlu0 %v960, 64
      %v1011 = vpop.permute.xlu0 %1010
      %1012 = vrot.lane.b32.xlu0 %v958, 96
      %v1013 = vpop.permute.xlu0 %1012
      %1014 = vrot.lane.b32.xlu0 %v960, 96
      %v1015 = vpop.permute.xlu0 %1014
      %1016 = vrot.lane.b32.xlu0 %v965, 96
      %v1017 = vpop.permute.xlu0 %1016
      %1018 = vrot.lane.b32.xlu0 %v967, 96
      %v1019 = vpop.permute.xlu0 %1018
      %1020 = vrot.lane.b32.xlu0 %v972, 32
      %v1021 = vpop.permute.xlu0 %1020
      %1022 = vrot.lane.b32.xlu0 %v974, 32
      %v1023 = vpop.permute.xlu0 %1022
      %1024 = vrot.lane.b32.xlu0 %v979, 32
      %v1025 = vpop.permute.xlu0 %1024
      %1026 = vrot.lane.b32.xlu0 %v981, 32
      %v1027 = vpop.permute.xlu0 %1026
      %1028 = vrot.lane.b32.xlu0 %v979, 64
      %v1029 = vpop.permute.xlu0 %1028
      %1030 = vrot.lane.b32.xlu0 %v981, 64
      %v1031 = vpop.permute.xlu0 %1030
      %1032 = vrot.lane.b32.xlu0 %v986, 64
      %v1033 = vpop.permute.xlu0 %1032
      %1034 = vrot.lane.b32.xlu0 %v988, 64
      %v1035 = vpop.permute.xlu0 %1034
      %1036 = vrot.lane.b32.xlu0 %v986, 96
      %v1037 = vpop.permute.xlu0 %1036
      %1038 = vrot.lane.b32.xlu0 %v988, 96
      %v1039 = vpop.permute.xlu0 %1038
      %1040 = vrot.lane.b32.xlu0 %v993, 96
      %v1041 = vpop.permute.xlu0 %1040
      %1042 = vrot.lane.b32.xlu0 %v995, 96
      %v1043 = vpop.permute.xlu0 %1042
      %v1046 = vsel %vm315, %v937, %v997
      %v1049 = vsel %vm315, %v939, %v999
      %v1052 = vsel %vm315, %v944, %v1001
      %v1055 = vsel %vm315, %v946, %v1003
      %v1057 = vsel %vm328, %v1046, %v1005
      %v1059 = vsel %vm328, %v1049, %v1007
      %v1061 = vsel %vm328, %v1052, %v1009
      %v1063 = vsel %vm328, %v1055, %v1011
      %v1065 = vsel %vm337, %v1057, %v1013
      %v1068 = vsel %vm337, %v1059, %v1015
      %v1071 = vsel %vm337, %v1061, %v1017
      %v1074 = vsel %vm337, %v1063, %v1019
      %v1078 = vsel %vm315, %v965, %v1021
      %v1081 = vsel %vm315, %v967, %v1023
      %v1084 = vsel %vm315, %v972, %v1025
      %v1087 = vsel %vm315, %v974, %v1027
      %v1089 = vsel %vm328, %v1078, %v1029
      %v1091 = vsel %vm328, %v1081, %v1031
      %v1093 = vsel %vm328, %v1084, %v1033
      %v1095 = vsel %vm328, %v1087, %v1035
      %v1097 = vsel %vm337, %v1089, %v1037
      %v1100 = vsel %vm337, %v1091, %v1039
      %v1103 = vsel %vm337, %v1093, %v1041
      %v1106 = vsel %vm337, %v1095, %v1043
      %v1108 = vld [vmem:[%s2] sm:$0xff]
      %1110 = vset.pattern.permute.xlu0 0
      %1111 = vperm.xlu0 %1110, %v1108
      %v1112 = vpop.permute.xlu0 %1111
      %1114 = vmatpush.bf16.msra.mxu0 0
      %1115 = vmatpush.bf16.msra.mxu0 0
      %1116 = vmatpush.bf16.msra.mxu0 0
      %1117 = vmatpush.bf16.msra.mxu0 0
      %1118 = vmatpush.bf16.msra.mxu0 %v1074
      %1119 = vmatpush.bf16.msra.mxu0 %v1071
      %1120 = vmatpush.bf16.msra.mxu0 %v1068
      %1121 = vmatpush.bf16.msra.mxu0 %v1065
      %1122 = vmatmul.bf16.gmra.mxu0 %v389
      %v1123 = vpop.f32.mrf.mxu0
      %v1124 = vadd.f32 %v1112, %v1123
      %v1125 = vpop.f32.mrf.mxu0
      %1126 = vdwg.mxu0
      %1127 = vmatpush.bf16.msra.mxu0 0
      %1128 = vmatpush.bf16.msra.mxu0 0
      %1129 = vmatpush.bf16.msra.mxu0 0
      %1130 = vmatpush.bf16.msra.mxu0 0
      %1131 = vmatpush.bf16.msra.mxu0 %v1106
      %1132 = vmatpush.bf16.msra.mxu0 %v1103
      %1133 = vmatpush.bf16.msra.mxu0 %v1100
      %1134 = vmatpush.bf16.msra.mxu0 %v1097
      %1135 = vmatmul.bf16.gmra.mxu0 %v389
      %v1136 = vpop.f32.mrf.mxu0
      %v1137 = vadd.f32 %v1112, %v1136
      %v1138 = vpop.f32.mrf.mxu0
      %1139 = vdwg.mxu0
      %vm1140 = vcmp.gt.f32.partialorder %v1124, 0.0
      %vm1141 = vcmp.gt.f32.partialorder %v1137, 0.0
      %v1142 = vmul.f32 %v1124, 0.2
      %v1143 = vmul.f32 %v1137, 0.2
      %v1144 = vsel %vm1140, %v1124, %v1142
      %v1145 = vsel %vm1141, %v1137, %v1143
      %v1146 = vpack.c.bf16 %v1145, %v1144
      %1147 = vst [vmem:[%s175 + $0x18] sm:$0xff] %v1146
      %p1148 = scmp.lt.s32.totalorder %s14, 1
      %s1149 = scalar_select %p1148, %s14, 1
      %s1150 = smul.addr %s1149, 8
      %s1151 = smul.addr %s1150, 4
      %s1152 = scalar_lea.vmem %s3, %s1151
      // Predicated region
      $region33: #{pallas_forward.5} parent=31 // pred_check
        %p1153 = pneg %p100
      $region34: #{pallas_forward.5} parent=31 // pred_check_branch
        %1155 = sbr.rel (%p1153) target = $region36
      $region35: #{pallas_forward.5} parent=31 // pred_region
        _
      $region36: #{pallas_forward.5} parent=31 // pred_fallthru
        _
    $region32: #{pallas_forward.5} parent=5 // pred_fallthru
      _
    %p1156 = scmp.le.s32.totalorder 2, %s9
    // Predicated region
    $region37: #{pallas_forward.5} parent=5 // pred_check
      %p1157 = pneg %p1156
    $region38: #{pallas_forward.5} parent=5 // pred_check_branch
      %1159 = sbr.rel (%p1157) target = $region40
    $region39: #{pallas_forward.5} parent=5 // pred_region
      %s1160 = ssub.s32 %s9, 2
      // Predicated region
      $region41: #{pallas_forward.5} parent=39 // pred_check
        %p1161 = pneg %p106
      $region42: #{pallas_forward.5} parent=39 // pred_check_branch
        %1163 = sbr.rel (%p1161) target = $region44
      $region43: #{pallas_forward.5} parent=39 // pred_region
        %p1164 = scmp.lt.s32.totalorder %s15, 1
        %s1165 = scalar_select %p1164, %s15, 1
        %s1166 = smul.addr %s1165, 8
        %s1167 = smul.addr %s1166, 4
        %s1168 = scalar_lea.vmem %s3, %s1167
      $region44: #{pallas_forward.5} parent=39 // pred_fallthru
        _
    $region40: #{pallas_forward.5} parent=5 // pred_fallthru
      _
  $region6: #{pallas_forward.5} parent=0 // loop_footer
    %s13 = sadd.s32 1, %s9
  $region7: #{pallas_forward.5} parent=0 // loop_footer_branch
    %8 = sbr.rel target = $region3
  $region8: #{pallas_forward.5} parent=0 // loop_exit
    _

// kernel: pallas_forward.7
$region0: #{pallas_forward.7}
  #allocation0 [shape = 'u32[]', space=smem, size = 0x4, offset = 0x4, fixed_abs, tag = 'smem constant byte address 0x4 - core index']
  #allocation1 [shape = 'u32[72,128]{1,0:T(1,128)}', space=vmem, size = 0x9000, scoped, tag = 'internal scratch']
  %s0 = inlined_call_operand.vmem [shape: bf16[18,64,9], index: 0, kind: input, shape index: {}]
  %s1 = inlined_call_operand.vmem [shape: bf16[32,256], index: 1, kind: input, shape index: {}]
  %s2 = inlined_call_operand.vmem [shape: bf16[2,32,64], index: 2, kind: output, shape index: {0}]
  %s3 = inlined_call_operand.vmem [shape: f32[2,32,2], index: 3, kind: output, shape index: {1}]
  %4 = xla_tuple %s2, %s3
  %s5 = sld [smem:[#allocation0]]
  $region49: #{pallas_forward.7} parent=0
    _
  %s7 = ssub.s32 1, %s5
  %s8 = scalar_select 0, %s7, %s5
  loop: start=0, step=1, limit=4
  $region2: #{pallas_forward.7} parent=0 // loop_pre_header
    _
  $region3: #{pallas_forward.7} parent=0 // loop_header
    %s10 = sphi 0, %s14
    %p11 = scmp.ge.s32.totalorder %s10, 4
    %s20 = sphi 0, %s22
    %s23 = sphi 0, %s20
    %s24 = sphi 0, %s23
    %s40 = sphi 0, %s24
    %s44 = sphi 0, %s44
    %s46 = sphi 0, %s44
    %s47 = sphi 0, %s46
    %s61 = sphi 0, %s47
    %s67 = sphi 0, %s69
    %s70 = sphi 0, %s67
    %s71 = sphi 0, %s70
    %s87 = sphi 0, %s71
    %s93 = sphi 0, %s95
    %s96 = sphi 0, %s93
    %s97 = sphi 0, %s96
    %s113 = sphi 0, %s97
  $region4: #{pallas_forward.7} parent=0 // loop_header_branch
    %13 = sbr.rel (%p11) target = $region8
  $region5: #{pallas_forward.7} parent=0 // loop_body
    %s15 = ssub.s32 %s10, 1
    %s16 = ssub.s32 %s10, 2
    %s17 = sadd.s32 %s10, 1
    %s18 = ssub.s32 %s10, %s17
    %p19 = scmp.eq.s32.totalorder %s18, 0
    %s21 = sadd.s32 %s20, 1
    %s22 = scalar_select %p19, %s20, %s21
    %p25 = pneg %p19
    %p26 = scmp.eq.s32.totalorder %s10, 1
    %p27 = por %p25, %p26
    %p28 = scmp.ne.s32.totalorder %s20, %s23
    %p29 = scmp.eq.s32.totalorder %s10, 0
    %p30 = por %p28, %p29
    %p31 = scmp.ne.s32.totalorder %s20, %s23
    %p32 = scmp.eq.s32.totalorder %s15, 1
    %p33 = por %p31, %p32
    %p34 = scmp.ne.s32.totalorder %s23, %s24
    %p35 = scmp.eq.s32.totalorder %s15, 0
    %p36 = por %p34, %p35
    %p37 = scmp.ne.s32.totalorder %s23, %s24
    %p38 = scmp.eq.s32.totalorder %s16, 1
    %p39 = por %p37, %p38
    %p41 = scmp.ne.s32.totalorder %s24, %s40
    %p42 = scmp.eq.s32.totalorder %s16, 0
    %p43 = por %p41, %p42
    %s45 = sadd.s32 %s44, 1
    %p48 = scmp.eq.s32.totalorder %s10, 1
    %p49 = scmp.ne.s32.totalorder %s44, %s46
    %p50 = scmp.eq.s32.totalorder %s10, 0
    %p51 = por %p49, %p50
    %p52 = scmp.ne.s32.totalorder %s44, %s46
    %p53 = scmp.eq.s32.totalorder %s15, 1
    %p54 = por %p52, %p53
    %p55 = scmp.ne.s32.totalorder %s46, %s47
    %p56 = scmp.eq.s32.totalorder %s15, 0
    %p57 = por %p55, %p56
    %p58 = scmp.ne.s32.totalorder %s46, %s47
    %p59 = scmp.eq.s32.totalorder %s16, 1
    %p60 = por %p58, %p59
    %p62 = scmp.ne.s32.totalorder %s47, %s61
    %p63 = scmp.eq.s32.totalorder %s16, 0
    %p64 = por %p62, %p63
    %s65 = ssub.s32 %s10, %s17
    %p66 = scmp.eq.s32.totalorder %s65, 0
    %s68 = sadd.s32 %s67, 1
    %s69 = scalar_select %p66, %s67, %s68
    %p72 = pneg %p66
    %p73 = scmp.eq.s32.totalorder %s10, 1
    %p74 = por %p72, %p73
    %p75 = scmp.ne.s32.totalorder %s67, %s70
    %p76 = scmp.eq.s32.totalorder %s10, 0
    %p77 = por %p75, %p76
    %p78 = scmp.ne.s32.totalorder %s67, %s70
    %p79 = scmp.eq.s32.totalorder %s15, 1
    %p80 = por %p78, %p79
    %p81 = scmp.ne.s32.totalorder %s70, %s71
    %p82 = scmp.eq.s32.totalorder %s15, 0
    %p83 = por %p81, %p82
    %p84 = scmp.ne.s32.totalorder %s70, %s71
    %p85 = scmp.eq.s32.totalorder %s16, 1
    %p86 = por %p84, %p85
    %p88 = scmp.ne.s32.totalorder %s71, %s87
    %p89 = scmp.eq.s32.totalorder %s16, 0
    %p90 = por %p88, %p89
    %s91 = ssub.s32 %s10, %s17
    %p92 = scmp.eq.s32.totalorder %s91, 0
    %s94 = sadd.s32 %s93, 1
    %s95 = scalar_select %p92, %s93, %s94
    %p98 = pneg %p92
    %p99 = scmp.eq.s32.totalorder %s10, 1
    %p100 = por %p98, %p99
    %p101 = scmp.ne.s32.totalorder %s93, %s96
    %p102 = scmp.eq.s32.totalorder %s10, 0
    %p103 = por %p101, %p102
    %p104 = scmp.ne.s32.totalorder %s93, %s96
    %p105 = scmp.eq.s32.totalorder %s15, 1
    %p106 = por %p104, %p105
    %p107 = scmp.ne.s32.totalorder %s96, %s97
    %p108 = scmp.eq.s32.totalorder %s15, 0
    %p109 = por %p107, %p108
    %p110 = scmp.ne.s32.totalorder %s96, %s97
    %p111 = scmp.eq.s32.totalorder %s16, 1
    %p112 = por %p110, %p111
    %p114 = scmp.ne.s32.totalorder %s97, %s113
    %p115 = scmp.eq.s32.totalorder %s16, 0
    %p116 = por %p114, %p115
    %p117 = scmp.le.s32.totalorder 1, %s10
    %p118 = scmp.lt.s32.totalorder %s10, 3
    %p119 = pnand %p117, %p118
    %p120 = pneg %p119
    // Predicated region
    $region9: #{pallas_forward.7} parent=5 // pred_check
      _
    $region10: #{pallas_forward.7} parent=5 // pred_check_branch
      %122 = sbr.rel (%p119) target = $region12
    $region11: #{pallas_forward.7} parent=5 // pred_region
      %s123 = ssub.s32 %s10, 1
      // Predicated region
      $region13: #{pallas_forward.7} parent=11 // pred_check
        %p124 = pneg %p57
      $region14: #{pallas_forward.7} parent=11 // pred_check_branch
        %126 = sbr.rel (%p124) target = $region16
      $region15: #{pallas_forward.7} parent=11 // pred_region
        _
      $region16: #{pallas_forward.7} parent=11 // pred_fallthru
        _
    $region12: #{pallas_forward.7} parent=5 // pred_fallthru
      _
    %p127 = scmp.lt.s32.totalorder %s10, 2
    // Predicated region
    $region17: #{pallas_forward.7} parent=5 // pred_check
      %p128 = pneg %p127
    $region18: #{pallas_forward.7} parent=5 // pred_check_branch
      %130 = sbr.rel (%p128) target = $region20
    $region19: #{pallas_forward.7} parent=5 // pred_region
      // Predicated region
      $region21: #{pallas_forward.7} parent=19 // pred_check
        %p131 = pneg %p30
      $region22: #{pallas_forward.7} parent=19 // pred_check_branch
        %133 = sbr.rel (%p131) target = $region24
      $region23: #{pallas_forward.7} parent=19 // pred_region
        %s134 = smul.u32 9, %s10
        %p135 = scmp.lt.s32.totalorder %s134, 17
        %s136 = scalar_select %p135, %s134, 17
        %s137 = smul.addr %s136, 8
        %s138 = smul.addr %s137, 4
        %s139 = scalar_lea.vmem %s0, %s138
        %s140 = smul.u32 9, %s10
      $region24: #{pallas_forward.7} parent=19 // pred_fallthru
        _
    $region20: #{pallas_forward.7} parent=5 // pred_fallthru
      _
    %p141 = scmp.le.s32.totalorder 1, %s10
    %p142 = scmp.lt.s32.totalorder %s10, 3
    %p143 = pnand %p141, %p142
    %p144 = pneg %p143
    // Predicated region
    $region25: #{pallas_forward.7} parent=5 // pred_check
      _
    $region26: #{pallas_forward.7} parent=5 // pred_check_branch
      %146 = sbr.rel (%p143) target = $region28
    $region27: #{pallas_forward.7} parent=5 // pred_region
      %s147 = ssub.s32 %s10, 1
      %s148 = smul.u32 9, %s15
      %p149 = scmp.lt.s32.totalorder %s148, 17
      %s150 = scalar_select %p149, %s148, 17
      %s151 = smul.addr %s150, 8
      %s152 = smul.addr %s151, 4
      %s153 = scalar_lea.vmem %s0, %s152
      %p154 = pneg %p36
      %p155 = pneg %p33
      %p156 = pneg %p57
      %p157 = pneg %p54
      %p158 = pneg %p83
      %p159 = pneg %p80
      %p160 = scmp.lt.s32.totalorder %s15, 1
      %s161 = scalar_select %p160, %s15, 1
      %s162 = smul.addr %s161, 4
      %s163 = smul.addr %s162, 4
      %s164 = scalar_lea.vmem %s2, %s163
      %p165 = pneg %p109
      %p166 = pneg %p106
      %p167 = scmp.lt.s32.totalorder %s15, 1
      %s168 = scalar_select %p167, %s15, 1
      %s169 = smul.addr %s168, 4
      %s170 = smul.addr %s169, 8
      %s171 = scalar_lea.vmem %s3, %s170
      %s172 = smul.u32 9, %s15
      %p173 = scmp.lt.s32.totalorder %s172, 17
      %s174 = scalar_select %p173, %s172, 17
      %s175 = smul.addr %s174, 8
      %s176 = smul.addr %s175, 4
      %s177 = scalar_lea.vmem %s0, %s176
      %s178 = smul.u32 9, %s15
      %p179 = scmp.lt.s32.totalorder %s15, 1
      %s180 = scalar_select %p179, %s15, 1
      %s181 = smul.addr %s180, 4
      %s182 = smul.addr %s181, 4
      %s183 = scalar_lea.vmem %s2, %s182
      %p184 = scmp.lt.s32.totalorder %s15, 1
      %s185 = scalar_select %p184, %s15, 1
      %s186 = smul.addr %s185, 4
      %s187 = smul.addr %s186, 8
      %s188 = scalar_lea.vmem %s3, %s187
      %v189 = vld [vmem:[%s1] sm:$0xff]
      %v190 = vld [vmem:[%s1 + $0x8] sm:$0xff]
      %v191 = vld [vmem:[%s1 + $0x10] sm:$0xff]
      %v192 = vld [vmem:[%s1 + $0x18] sm:$0xff]
      %v193 = vld [vmem:[%s177] sm:$0xf]
      %v194 = vld [vmem:[%s177 + $0x4] sm:$0xf]
      %v195 = vld [vmem:[%s177 + $0x8] sm:$0xf]
      %v196 = vld [vmem:[%s177 + $0xc] sm:$0xf]
      %v197 = vld [vmem:[%s177 + $0x10] sm:$0xf]
      %v198 = vld [vmem:[%s177 + $0x14] sm:$0xf]
      %v199 = vld [vmem:[%s177 + $0x18] sm:$0xf]
      %v200 = vld [vmem:[%s177 + $0x1c] sm:$0xf]
      %s201 = scalar_lea.vmem %s177, 32
      %v202 = vld [vmem:[%s201] sm:$0xf]
      %v203 = vld [vmem:[%s201 + $0x4] sm:$0xf]
      %v204 = vld [vmem:[%s201 + $0x8] sm:$0xf]
      %v205 = vld [vmem:[%s201 + $0xc] sm:$0xf]
      %v206 = vld [vmem:[%s201 + $0x10] sm:$0xf]
      %v207 = vld [vmem:[%s201 + $0x14] sm:$0xf]
      %v208 = vld [vmem:[%s201 + $0x18] sm:$0xf]
      %v209 = vld [vmem:[%s201 + $0x1c] sm:$0xf]
      %s210 = scalar_lea.vmem %s177, 64
      %v211 = vld [vmem:[%s210] sm:$0xf]
      %v212 = vld [vmem:[%s210 + $0x4] sm:$0xf]
      %v213 = vld [vmem:[%s210 + $0x8] sm:$0xf]
      %v214 = vld [vmem:[%s210 + $0xc] sm:$0xf]
      %v215 = vld [vmem:[%s210 + $0x10] sm:$0xf]
      %v216 = vld [vmem:[%s210 + $0x14] sm:$0xf]
      %v217 = vld [vmem:[%s210 + $0x18] sm:$0xf]
      %v218 = vld [vmem:[%s210 + $0x1c] sm:$0xf]
      %s219 = scalar_lea.vmem %s177, 96
      %v220 = vld [vmem:[%s219] sm:$0xf]
      %v221 = vld [vmem:[%s219 + $0x4] sm:$0xf]
      %v222 = vld [vmem:[%s219 + $0x8] sm:$0xf]
      %v223 = vld [vmem:[%s219 + $0xc] sm:$0xf]
      %v224 = vld [vmem:[%s219 + $0x10] sm:$0xf]
      %v225 = vld [vmem:[%s219 + $0x14] sm:$0xf]
      %v226 = vld [vmem:[%s219 + $0x18] sm:$0xf]
      %v227 = vld [vmem:[%s219 + $0x1c] sm:$0xf]
      %s228 = scalar_lea.vmem %s177, 128
      %v229 = vld [vmem:[%s228] sm:$0xf]
      %v230 = vld [vmem:[%s228 + $0x4] sm:$0xf]
      %v231 = vld [vmem:[%s228 + $0x8] sm:$0xf]
      %v232 = vld [vmem:[%s228 + $0xc] sm:$0xf]
      %v233 = vld [vmem:[%s228 + $0x10] sm:$0xf]
      %v234 = vld [vmem:[%s228 + $0x14] sm:$0xf]
      %v235 = vld [vmem:[%s228 + $0x18] sm:$0xf]
      %v236 = vld [vmem:[%s228 + $0x1c] sm:$0xf]
      %s237 = scalar_lea.vmem %s177, 160
      %v238 = vld [vmem:[%s237] sm:$0xf]
      %v239 = vld [vmem:[%s237 + $0x4] sm:$0xf]
      %v240 = vld [vmem:[%s237 + $0x8] sm:$0xf]
      %v241 = vld [vmem:[%s237 + $0xc] sm:$0xf]
      %v242 = vld [vmem:[%s237 + $0x10] sm:$0xf]
      %v243 = vld [vmem:[%s237 + $0x14] sm:$0xf]
      %v244 = vld [vmem:[%s237 + $0x18] sm:$0xf]
      %v245 = vld [vmem:[%s237 + $0x1c] sm:$0xf]
      %s246 = scalar_lea.vmem %s177, 192
      %v247 = vld [vmem:[%s246] sm:$0xf]
      %v248 = vld [vmem:[%s246 + $0x4] sm:$0xf]
      %v249 = vld [vmem:[%s246 + $0x8] sm:$0xf]
      %v250 = vld [vmem:[%s246 + $0xc] sm:$0xf]
      %v251 = vld [vmem:[%s246 + $0x10] sm:$0xf]
      %v252 = vld [vmem:[%s246 + $0x14] sm:$0xf]
      %v253 = vld [vmem:[%s246 + $0x18] sm:$0xf]
      %v254 = vld [vmem:[%s246 + $0x1c] sm:$0xf]
      %s255 = scalar_lea.vmem %s177, 224
      %v256 = vld [vmem:[%s255] sm:$0xf]
      %v257 = vld [vmem:[%s255 + $0x4] sm:$0xf]
      %v258 = vld [vmem:[%s255 + $0x8] sm:$0xf]
      %v259 = vld [vmem:[%s255 + $0xc] sm:$0xf]
      %v260 = vld [vmem:[%s255 + $0x10] sm:$0xf]
      %v261 = vld [vmem:[%s255 + $0x14] sm:$0xf]
      %v262 = vld [vmem:[%s255 + $0x18] sm:$0xf]
      %v263 = vld [vmem:[%s255 + $0x1c] sm:$0xf]
      %s264 = scalar_lea.vmem %s177, 256
      %v265 = vld [vmem:[%s264] sm:$0xf]
      %v266 = vld [vmem:[%s264 + $0x4] sm:$0xf]
      %v267 = vld [vmem:[%s264 + $0x8] sm:$0xf]
      %v268 = vld [vmem:[%s264 + $0xc] sm:$0xf]
      %v269 = vld [vmem:[%s264 + $0x10] sm:$0xf]
      %v270 = vld [vmem:[%s264 + $0x14] sm:$0xf]
      %v271 = vld [vmem:[%s264 + $0x18] sm:$0xf]
      %v272 = vld [vmem:[%s264 + $0x1c] sm:$0xf]
      %v281 = vunpack.c.l.b16 %v193
      %v282 = vunpack.c.l.b16 %v194
      %v283 = vunpack.c.l.b16 %v195
      %v284 = vunpack.c.l.b16 %v196
      %v285 = vunpack.c.l.b16 %v197
      %v286 = vunpack.c.l.b16 %v198
      %v287 = vunpack.c.l.b16 %v199
      %v288 = vunpack.c.l.b16 %v200
      %v289 = vpack.c.b16 %v282, %v281
      %v290 = vpack.c.b16 %v284, %v283
      %v291 = vpack.c.b16 %v286, %v285
      %v292 = vpack.c.b16 %v288, %v287
      %293 = vrot.lane.b32.xlu0 %v289, 127
      %v294 = vpop.permute.xlu0 %293
      %295 = vrot.lane.b32.xlu0 %v290, 127
      %v296 = vpop.permute.xlu0 %295
      %297 = vrot.lane.b32.xlu0 %v291, 127
      %v298 = vpop.permute.xlu0 %297
      %299 = vrot.lane.b32.xlu0 %v292, 127
      %v300 = vpop.permute.xlu0 %299
      %v309 = vunpack.c.l.b16 %v202
      %v310 = vunpack.c.l.b16 %v203
      %v311 = vunpack.c.l.b16 %v204
      %v312 = vunpack.c.l.b16 %v205
      %v313 = vunpack.c.l.b16 %v206
      %v314 = vunpack.c.l.b16 %v207
      %v315 = vunpack.c.l.b16 %v208
      %v316 = vunpack.c.l.b16 %v209
      %v317 = vpack.c.b16 %v310, %v309
      %v318 = vpack.c.b16 %v312, %v311
      %v319 = vpack.c.b16 %v314, %v313
      %v320 = vpack.c.b16 %v316, %v315
      %321 = vrot.lane.b32.xlu0 %v317, 127
      %v322 = vpop.permute.xlu0 %321
      %323 = vrot.lane.b32.xlu0 %v318, 127
      %v324 = vpop.permute.xlu0 %323
      %325 = vrot.lane.b32.xlu0 %v319, 127
      %v326 = vpop.permute.xlu0 %325
      %327 = vrot.lane.b32.xlu0 %v320, 127
      %v328 = vpop.permute.xlu0 %327
      %v337 = vunpack.c.l.b16 %v211
      %v338 = vunpack.c.l.b16 %v212
      %v339 = vunpack.c.l.b16 %v213
      %v340 = vunpack.c.l.b16 %v214
      %v341 = vunpack.c.l.b16 %v215
      %v342 = vunpack.c.l.b16 %v216
      %v343 = vunpack.c.l.b16 %v217
      %v344 = vunpack.c.l.b16 %v218
      %v345 = vpack.c.b16 %v338, %v337
      %v346 = vpack.c.b16 %v340, %v339
      %v347 = vpack.c.b16 %v342, %v341
      %v348 = vpack.c.b16 %v344, %v343
      %349 = vrot.lane.b32.xlu0 %v345, 127
      %v350 = vpop.permute.xlu0 %349
      %351 = vrot.lane.b32.xlu0 %v346, 127
      %v352 = vpop.permute.xlu0 %351
      %353 = vrot.lane.b32.xlu0 %v347, 127
      %v354 = vpop.permute.xlu0 %353
      %355 = vrot.lane.b32.xlu0 %v348, 127
      %v356 = vpop.permute.xlu0 %355
      %v365 = vunpack.c.l.b16 %v220
      %v366 = vunpack.c.l.b16 %v221
      %v367 = vunpack.c.l.b16 %v222
      %v368 = vunpack.c.l.b16 %v223
      %v369 = vunpack.c.l.b16 %v224
      %v370 = vunpack.c.l.b16 %v225
      %v371 = vunpack.c.l.b16 %v226
      %v372 = vunpack.c.l.b16 %v227
      %v373 = vpack.c.b16 %v366, %v365
      %v374 = vpack.c.b16 %v368, %v367
      %v375 = vpack.c.b16 %v370, %v369
      %v376 = vpack.c.b16 %v372, %v371
      %377 = vrot.lane.b32.xlu0 %v373, 127
      %v378 = vpop.permute.xlu0 %377
      %379 = vrot.lane.b32.xlu0 %v374, 127
      %v380 = vpop.permute.xlu0 %379
      %381 = vrot.lane.b32.xlu0 %v375, 127
      %v382 = vpop.permute.xlu0 %381
      %383 = vrot.lane.b32.xlu0 %v376, 127
      %v384 = vpop.permute.xlu0 %383
      %v393 = vunpack.c.l.b16 %v229
      %v394 = vunpack.c.l.b16 %v230
      %v395 = vunpack.c.l.b16 %v231
      %v396 = vunpack.c.l.b16 %v232
      %v397 = vunpack.c.l.b16 %v233
      %v398 = vunpack.c.l.b16 %v234
      %v399 = vunpack.c.l.b16 %v235
      %v400 = vunpack.c.l.b16 %v236
      %v401 = vpack.c.b16 %v394, %v393
      %v402 = vpack.c.b16 %v396, %v395
      %v403 = vpack.c.b16 %v398, %v397
      %v404 = vpack.c.b16 %v400, %v399
      %405 = vrot.lane.b32.xlu0 %v401, 127
      %v406 = vpop.permute.xlu0 %405
      %407 = vrot.lane.b32.xlu0 %v402, 127
      %v408 = vpop.permute.xlu0 %407
      %409 = vrot.lane.b32.xlu0 %v403, 127
      %v410 = vpop.permute.xlu0 %409
      %411 = vrot.lane.b32.xlu0 %v404, 127
      %v412 = vpop.permute.xlu0 %411
      %v421 = vunpack.c.l.b16 %v238
      %v422 = vunpack.c.l.b16 %v239
      %v423 = vunpack.c.l.b16 %v240
      %v424 = vunpack.c.l.b16 %v241
      %v425 = vunpack.c.l.b16 %v242
      %v426 = vunpack.c.l.b16 %v243
      %v427 = vunpack.c.l.b16 %v244
      %v428 = vunpack.c.l.b16 %v245
      %v429 = vpack.c.b16 %v422, %v421
      %v430 = vpack.c.b16 %v424, %v423
      %v431 = vpack.c.b16 %v426, %v425
      %v432 = vpack.c.b16 %v428, %v427
      %433 = vrot.lane.b32.xlu0 %v429, 127
      %v434 = vpop.permute.xlu0 %433
      %435 = vrot.lane.b32.xlu0 %v430, 127
      %v436 = vpop.permute.xlu0 %435
      %437 = vrot.lane.b32.xlu0 %v431, 127
      %v438 = vpop.permute.xlu0 %437
      %439 = vrot.lane.b32.xlu0 %v432, 127
      %v440 = vpop.permute.xlu0 %439
      %v449 = vunpack.c.l.b16 %v247
      %v450 = vunpack.c.l.b16 %v248
      %v451 = vunpack.c.l.b16 %v249
      %v452 = vunpack.c.l.b16 %v250
      %v453 = vunpack.c.l.b16 %v251
      %v454 = vunpack.c.l.b16 %v252
      %v455 = vunpack.c.l.b16 %v253
      %v456 = vunpack.c.l.b16 %v254
      %v457 = vpack.c.b16 %v450, %v449
      %v458 = vpack.c.b16 %v452, %v451
      %v459 = vpack.c.b16 %v454, %v453
      %v460 = vpack.c.b16 %v456, %v455
      %461 = vrot.lane.b32.xlu0 %v457, 127
      %v462 = vpop.permute.xlu0 %461
      %463 = vrot.lane.b32.xlu0 %v458, 127
      %v464 = vpop.permute.xlu0 %463
      %465 = vrot.lane.b32.xlu0 %v459, 127
      %v466 = vpop.permute.xlu0 %465
      %467 = vrot.lane.b32.xlu0 %v460, 127
      %v468 = vpop.permute.xlu0 %467
      %v477 = vunpack.c.l.b16 %v256
      %v478 = vunpack.c.l.b16 %v257
      %v479 = vunpack.c.l.b16 %v258
      %v480 = vunpack.c.l.b16 %v259
      %v481 = vunpack.c.l.b16 %v260
      %v482 = vunpack.c.l.b16 %v261
      %v483 = vunpack.c.l.b16 %v262
      %v484 = vunpack.c.l.b16 %v263
      %v485 = vpack.c.b16 %v478, %v477
      %v486 = vpack.c.b16 %v480, %v479
      %v487 = vpack.c.b16 %v482, %v481
      %v488 = vpack.c.b16 %v484, %v483
      %489 = vrot.lane.b32.xlu0 %v485, 127
      %v490 = vpop.permute.xlu0 %489
      %491 = vrot.lane.b32.xlu0 %v486, 127
      %v492 = vpop.permute.xlu0 %491
      %493 = vrot.lane.b32.xlu0 %v487, 127
      %v494 = vpop.permute.xlu0 %493
      %495 = vrot.lane.b32.xlu0 %v488, 127
      %v496 = vpop.permute.xlu0 %495
      %v505 = vunpack.c.l.b16 %v265
      %v506 = vunpack.c.l.b16 %v266
      %v507 = vunpack.c.l.b16 %v267
      %v508 = vunpack.c.l.b16 %v268
      %v509 = vunpack.c.l.b16 %v269
      %v510 = vunpack.c.l.b16 %v270
      %v511 = vunpack.c.l.b16 %v271
      %v512 = vunpack.c.l.b16 %v272
      %v513 = vpack.c.b16 %v506, %v505
      %v514 = vpack.c.b16 %v508, %v507
      %v515 = vpack.c.b16 %v510, %v509
      %v516 = vpack.c.b16 %v512, %v511
      %517 = vrot.lane.b32.xlu0 %v513, 127
      %v518 = vpop.permute.xlu0 %517
      %519 = vrot.lane.b32.xlu0 %v514, 127
      %v520 = vpop.permute.xlu0 %519
      %521 = vrot.lane.b32.xlu0 %v515, 127
      %v522 = vpop.permute.xlu0 %521
      %523 = vrot.lane.b32.xlu0 %v516, 127
      %v524 = vpop.permute.xlu0 %523
      %525 = vrot.lane.b32.xlu0 %v317, 8
      %v526 = vpop.permute.xlu0 %525
      %527 = vrot.lane.b32.xlu0 %v318, 8
      %v528 = vpop.permute.xlu0 %527
      %529 = vrot.lane.b32.xlu0 %v319, 8
      %v530 = vpop.permute.xlu0 %529
      %531 = vrot.lane.b32.xlu0 %v320, 8
      %v532 = vpop.permute.xlu0 %531
      %533 = vrot.lane.b32.xlu0 %v322, 8
      %v534 = vpop.permute.xlu0 %533
      %535 = vrot.lane.b32.xlu0 %v324, 8
      %v536 = vpop.permute.xlu0 %535
      %537 = vrot.lane.b32.xlu0 %v326, 8
      %v538 = vpop.permute.xlu0 %537
      %539 = vrot.lane.b32.xlu0 %v328, 8
      %v540 = vpop.permute.xlu0 %539
      %541 = vrot.lane.b32.xlu0 %v345, 8
      %v542 = vpop.permute.xlu0 %541
      %543 = vrot.lane.b32.xlu0 %v346, 8
      %v544 = vpop.permute.xlu0 %543
      %545 = vrot.lane.b32.xlu0 %v347, 8
      %v546 = vpop.permute.xlu0 %545
      %547 = vrot.lane.b32.xlu0 %v348, 8
      %v548 = vpop.permute.xlu0 %547
      %549 = vrot.lane.b32.xlu0 %v350, 8
      %v550 = vpop.permute.xlu0 %549
      %551 = vrot.lane.b32.xlu0 %v352, 8
      %v552 = vpop.permute.xlu0 %551
      %553 = vrot.lane.b32.xlu0 %v354, 8
      %v554 = vpop.permute.xlu0 %553
      %555 = vrot.lane.b32.xlu0 %v356, 8
      %v556 = vpop.permute.xlu0 %555
      %557 = vrot.lane.b32.xlu0 %v345, 16
      %v558 = vpop.permute.xlu0 %557
      %559 = vrot.lane.b32.xlu0 %v346, 16
      %v560 = vpop.permute.xlu0 %559
      %561 = vrot.lane.b32.xlu0 %v347, 16
      %v562 = vpop.permute.xlu0 %561
      %563 = vrot.lane.b32.xlu0 %v348, 16
      %v564 = vpop.permute.xlu0 %563
      %565 = vrot.lane.b32.xlu0 %v350, 16
      %v566 = vpop.permute.xlu0 %565
      %567 = vrot.lane.b32.xlu0 %v352, 16
      %v568 = vpop.permute.xlu0 %567
      %569 = vrot.lane.b32.xlu0 %v354, 16
      %v570 = vpop.permute.xlu0 %569
      %571 = vrot.lane.b32.xlu0 %v356, 16
      %v572 = vpop.permute.xlu0 %571
      %573 = vrot.lane.b32.xlu0 %v373, 16
      %v574 = vpop.permute.xlu0 %573
      %575 = vrot.lane.b32.xlu0 %v374, 16
      %v576 = vpop.permute.xlu0 %575
      %577 = vrot.lane.b32.xlu0 %v375, 16
      %v578 = vpop.permute.xlu0 %577
      %579 = vrot.lane.b32.xlu0 %v376, 16
      %v580 = vpop.permute.xlu0 %579
      %581 = vrot.lane.b32.xlu0 %v378, 16
      %v582 = vpop.permute.xlu0 %581
      %583 = vrot.lane.b32.xlu0 %v380, 16
      %v584 = vpop.permute.xlu0 %583
      %585 = vrot.lane.b32.xlu0 %v382, 16
      %v586 = vpop.permute.xlu0 %585
      %587 = vrot.lane.b32.xlu0 %v384, 16
      %v588 = vpop.permute.xlu0 %587
      %589 = vrot.lane.b32.xlu0 %v373, 24
      %v590 = vpop.permute.xlu0 %589
      %591 = vrot.lane.b32.xlu0 %v374, 24
      %v592 = vpop.permute.xlu0 %591
      %593 = vrot.lane.b32.xlu0 %v375, 24
      %v594 = vpop.permute.xlu0 %593
      %595 = vrot.lane.b32.xlu0 %v376, 24
      %v596 = vpop.permute.xlu0 %595
      %597 = vrot.lane.b32.xlu0 %v378, 24
      %v598 = vpop.permute.xlu0 %597
      %599 = vrot.lane.b32.xlu0 %v380, 24
      %v600 = vpop.permute.xlu0 %599
      %601 = vrot.lane.b32.xlu0 %v382, 24
      %v602 = vpop.permute.xlu0 %601
      %603 = vrot.lane.b32.xlu0 %v384, 24
      %v604 = vpop.permute.xlu0 %603
      %605 = vrot.lane.b32.xlu0 %v401, 24
      %v606 = vpop.permute.xlu0 %605
      %607 = vrot.lane.b32.xlu0 %v402, 24
      %v608 = vpop.permute.xlu0 %607
      %609 = vrot.lane.b32.xlu0 %v403, 24
      %v610 = vpop.permute.xlu0 %609
      %611 = vrot.lane.b32.xlu0 %v404, 24
      %v612 = vpop.permute.xlu0 %611
      %613 = vrot.lane.b32.xlu0 %v406, 24
      %v614 = vpop.permute.xlu0 %613
      %615 = vrot.lane.b32.xlu0 %v408, 24
      %v616 = vpop.permute.xlu0 %615
      %617 = vrot.lane.b32.xlu0 %v410, 24
      %v618 = vpop.permute.xlu0 %617
      %619 = vrot.lane.b32.xlu0 %v412, 24
      %v620 = vpop.permute.xlu0 %619
      %621 = vrot.lane.b32.xlu0 %v401, 32
      %v622 = vpop.permute.xlu0 %621
      %623 = vrot.lane.b32.xlu0 %v402, 32
      %v624 = vpop.permute.xlu0 %623
      %625 = vrot.lane.b32.xlu0 %v403, 32
      %v626 = vpop.permute.xlu0 %625
      %627 = vrot.lane.b32.xlu0 %v404, 32
      %v628 = vpop.permute.xlu0 %627
      %629 = vrot.lane.b32.xlu0 %v406, 32
      %v630 = vpop.permute.xlu0 %629
      %631 = vrot.lane.b32.xlu0 %v408, 32
      %v632 = vpop.permute.xlu0 %631
      %633 = vrot.lane.b32.xlu0 %v410, 32
      %v634 = vpop.permute.xlu0 %633
      %635 = vrot.lane.b32.xlu0 %v412, 32
      %v636 = vpop.permute.xlu0 %635
      %637 = vrot.lane.b32.xlu0 %v429, 32
      %v638 = vpop.permute.xlu0 %637
      %639 = vrot.lane.b32.xlu0 %v430, 32
      %v640 = vpop.permute.xlu0 %639
      %641 = vrot.lane.b32.xlu0 %v431, 32
      %v642 = vpop.permute.xlu0 %641
      %643 = vrot.lane.b32.xlu0 %v432, 32
      %v644 = vpop.permute.xlu0 %643
      %645 = vrot.lane.b32.xlu0 %v434, 32
      %v646 = vpop.permute.xlu0 %645
      %647 = vrot.lane.b32.xlu0 %v436, 32
      %v648 = vpop.permute.xlu0 %647
      %649 = vrot.lane.b32.xlu0 %v438, 32
      %v650 = vpop.permute.xlu0 %649
      %651 = vrot.lane.b32.xlu0 %v440, 32
      %v652 = vpop.permute.xlu0 %651
      %653 = vrot.lane.b32.xlu0 %v429, 40
      %v654 = vpop.permute.xlu0 %653
      %655 = vrot.lane.b32.xlu0 %v430, 40
      %v656 = vpop.permute.xlu0 %655
      %657 = vrot.lane.b32.xlu0 %v431, 40
      %v658 = vpop.permute.xlu0 %657
      %659 = vrot.lane.b32.xlu0 %v432, 40
      %v660 = vpop.permute.xlu0 %659
      %661 = vrot.lane.b32.xlu0 %v434, 40
      %v662 = vpop.permute.xlu0 %661
      %663 = vrot.lane.b32.xlu0 %v436, 40
      %v664 = vpop.permute.xlu0 %663
      %665 = vrot.lane.b32.xlu0 %v438, 40
      %v666 = vpop.permute.xlu0 %665
      %667 = vrot.lane.b32.xlu0 %v440, 40
      %v668 = vpop.permute.xlu0 %667
      %669 = vrot.lane.b32.xlu0 %v457, 40
      %v670 = vpop.permute.xlu0 %669
      %671 = vrot.lane.b32.xlu0 %v458, 40
      %v672 = vpop.permute.xlu0 %671
      %673 = vrot.lane.b32.xlu0 %v459, 40
      %v674 = vpop.permute.xlu0 %673
      %675 = vrot.lane.b32.xlu0 %v460, 40
      %v676 = vpop.permute.xlu0 %675
      %677 = vrot.lane.b32.xlu0 %v462, 40
      %v678 = vpop.permute.xlu0 %677
      %679 = vrot.lane.b32.xlu0 %v464, 40
      %v680 = vpop.permute.xlu0 %679
      %681 = vrot.lane.b32.xlu0 %v466, 40
      %v682 = vpop.permute.xlu0 %681
      %683 = vrot.lane.b32.xlu0 %v468, 40
      %v684 = vpop.permute.xlu0 %683
      %685 = vrot.lane.b32.xlu0 %v457, 48
      %v686 = vpop.permute.xlu0 %685
      %687 = vrot.lane.b32.xlu0 %v458, 48
      %v688 = vpop.permute.xlu0 %687
      %689 = vrot.lane.b32.xlu0 %v459, 48
      %v690 = vpop.permute.xlu0 %689
      %691 = vrot.lane.b32.xlu0 %v460, 48
      %v692 = vpop.permute.xlu0 %691
      %693 = vrot.lane.b32.xlu0 %v462, 48
      %v694 = vpop.permute.xlu0 %693
      %695 = vrot.lane.b32.xlu0 %v464, 48
      %v696 = vpop.permute.xlu0 %695
      %697 = vrot.lane.b32.xlu0 %v466, 48
      %v698 = vpop.permute.xlu0 %697
      %699 = vrot.lane.b32.xlu0 %v468, 48
      %v700 = vpop.permute.xlu0 %699
      %701 = vrot.lane.b32.xlu0 %v485, 48
      %v702 = vpop.permute.xlu0 %701
      %703 = vrot.lane.b32.xlu0 %v486, 48
      %v704 = vpop.permute.xlu0 %703
      %705 = vrot.lane.b32.xlu0 %v487, 48
      %v706 = vpop.permute.xlu0 %705
      %707 = vrot.lane.b32.xlu0 %v488, 48
      %v708 = vpop.permute.xlu0 %707
      %709 = vrot.lane.b32.xlu0 %v490, 48
      %v710 = vpop.permute.xlu0 %709
      %711 = vrot.lane.b32.xlu0 %v492, 48
      %v712 = vpop.permute.xlu0 %711
      %713 = vrot.lane.b32.xlu0 %v494, 48
      %v714 = vpop.permute.xlu0 %713
      %715 = vrot.lane.b32.xlu0 %v496, 48
      %v716 = vpop.permute.xlu0 %715
      %717 = vrot.lane.b32.xlu0 %v485, 56
      %v718 = vpop.permute.xlu0 %717
      %719 = vrot.lane.b32.xlu0 %v486, 56
      %v720 = vpop.permute.xlu0 %719
      %721 = vrot.lane.b32.xlu0 %v487, 56
      %v722 = vpop.permute.xlu0 %721
      %723 = vrot.lane.b32.xlu0 %v488, 56
      %v724 = vpop.permute.xlu0 %723
      %725 = vrot.lane.b32.xlu0 %v490, 56
      %v726 = vpop.permute.xlu0 %725
      %727 = vrot.lane.b32.xlu0 %v492, 56
      %v728 = vpop.permute.xlu0 %727
      %729 = vrot.lane.b32.xlu0 %v494, 56
      %v730 = vpop.permute.xlu0 %729
      %731 = vrot.lane.b32.xlu0 %v496, 56
      %v732 = vpop.permute.xlu0 %731
      %733 = vrot.lane.b32.xlu0 %v513, 56
      %v734 = vpop.permute.xlu0 %733
      %735 = vrot.lane.b32.xlu0 %v514, 56
      %v736 = vpop.permute.xlu0 %735
      %737 = vrot.lane.b32.xlu0 %v515, 56
      %v738 = vpop.permute.xlu0 %737
      %739 = vrot.lane.b32.xlu0 %v516, 56
      %v740 = vpop.permute.xlu0 %739
      %741 = vrot.lane.b32.xlu0 %v518, 56
      %v742 = vpop.permute.xlu0 %741
      %743 = vrot.lane.b32.xlu0 %v520, 56
      %v744 = vpop.permute.xlu0 %743
      %745 = vrot.lane.b32.xlu0 %v522, 56
      %v746 = vpop.permute.xlu0 %745
      %747 = vrot.lane.b32.xlu0 %v524, 56
      %v748 = vpop.permute.xlu0 %747
      %vm749 = vcmask 64512
      %v752 = vsel %vm749, %v289, %v526
      %v755 = vsel %vm749, %v290, %v528
      %v758 = vsel %vm749, %v291, %v530
      %v761 = vsel %vm749, %v292, %v532
      %v764 = vsel %vm749, %v294, %v534
      %v767 = vsel %vm749, %v296, %v536
      %v770 = vsel %vm749, %v298, %v538
      %v773 = vsel %vm749, %v300, %v540
      %v776 = vsel %vm749, %v317, %v542
      %v779 = vsel %vm749, %v318, %v544
      %v782 = vsel %vm749, %v319, %v546
      %v785 = vsel %vm749, %v320, %v548
      %v788 = vsel %vm749, %v322, %v550
      %v791 = vsel %vm749, %v324, %v552
      %v794 = vsel %vm749, %v326, %v554
      %v797 = vsel %vm749, %v328, %v556
      %vm798 = vcmask 130048
      %v800 = vsel %vm798, %v752, %v558
      %v802 = vsel %vm798, %v755, %v560
      %v804 = vsel %vm798, %v758, %v562
      %v806 = vsel %vm798, %v761, %v564
      %v808 = vsel %vm798, %v764, %v566
      %v810 = vsel %vm798, %v767, %v568
      %v812 = vsel %vm798, %v770, %v570
      %v814 = vsel %vm798, %v773, %v572
      %v816 = vsel %vm798, %v776, %v574
      %v818 = vsel %vm798, %v779, %v576
      %v820 = vsel %vm798, %v782, %v578
      %v822 = vsel %vm798, %v785, %v580
      %v824 = vsel %vm798, %v788, %v582
      %v826 = vsel %vm798, %v791, %v584
      %v828 = vsel %vm798, %v794, %v586
      %v830 = vsel %vm798, %v797, %v588
      %vm831 = vcmask 195584
      %v833 = vsel %vm831, %v800, %v590
      %v835 = vsel %vm831, %v802, %v592
      %v837 = vsel %vm831, %v804, %v594
      %v839 = vsel %vm831, %v806, %v596
      %v841 = vsel %vm831, %v808, %v598
      %v843 = vsel %vm831, %v810, %v600
      %v845 = vsel %vm831, %v812, %v602
      %v847 = vsel %vm831, %v814, %v604
      %v849 = vsel %vm831, %v816, %v606
      %v851 = vsel %vm831, %v818, %v608
      %v853 = vsel %vm831, %v820, %v610
      %v855 = vsel %vm831, %v822, %v612
      %v857 = vsel %vm831, %v824, %v614
      %v859 = vsel %vm831, %v826, %v616
      %v861 = vsel %vm831, %v828, %v618
      %v863 = vsel %vm831, %v830, %v620
      %vm864 = vcmask 261120
      %v866 = vsel %vm864, %v833, %v622
      %v868 = vsel %vm864, %v835, %v624
      %v870 = vsel %vm864, %v837, %v626
      %v872 = vsel %vm864, %v839, %v628
      %v874 = vsel %vm864, %v841, %v630
      %v876 = vsel %vm864, %v843, %v632
      %v878 = vsel %vm864, %v845, %v634
      %v880 = vsel %vm864, %v847, %v636
      %v882 = vsel %vm864, %v849, %v638
      %v884 = vsel %vm864, %v851, %v640
      %v886 = vsel %vm864, %v853, %v642
      %v888 = vsel %vm864, %v855, %v644
      %v890 = vsel %vm864, %v857, %v646
      %v892 = vsel %vm864, %v859, %v648
      %v894 = vsel %vm864, %v861, %v650
      %v896 = vsel %vm864, %v863, %v652
      %vm897 = vcmask 326656
      %v899 = vsel %vm897, %v866, %v654
      %v901 = vsel %vm897, %v868, %v656
      %v903 = vsel %vm897, %v870, %v658
      %v905 = vsel %vm897, %v872, %v660
      %v907 = vsel %vm897, %v874, %v662
      %v909 = vsel %vm897, %v876, %v664
      %v911 = vsel %vm897, %v878, %v666
      %v913 = vsel %vm897, %v880, %v668
      %v915 = vsel %vm897, %v882, %v670
      %v917 = vsel %vm897, %v884, %v672
      %v919 = vsel %vm897, %v886, %v674
      %v921 = vsel %vm897, %v888, %v676
      %v923 = vsel %vm897, %v890, %v678
      %v925 = vsel %vm897, %v892, %v680
      %v927 = vsel %vm897, %v894, %v682
      %v929 = vsel %vm897, %v896, %v684
      %vm930 = vcmask 392192
      %v932 = vsel %vm930, %v899, %v686
      %v934 = vsel %vm930, %v901, %v688
      %v936 = vsel %vm930, %v903, %v690
      %v938 = vsel %vm930, %v905, %v692
      %v940 = vsel %vm930, %v907, %v694
      %v942 = vsel %vm930, %v909, %v696
      %v944 = vsel %vm930, %v911, %v698
      %v946 = vsel %vm930, %v913, %v700
      %v948 = vsel %vm930, %v915, %v702
      %v950 = vsel %vm930, %v917, %v704
      %v952 = vsel %vm930, %v919, %v706
      %v954 = vsel %vm930, %v921, %v708
      %v956 = vsel %vm930, %v923, %v710
      %v958 = vsel %vm930, %v925, %v712
      %v960 = vsel %vm930, %v927, %v714
      %v962 = vsel %vm930, %v929, %v716
      %vm963 = vcmask 457728
      %v965 = vsel %vm963, %v932, %v718
      %v968 = vsel %vm963, %v934, %v720
      %v971 = vsel %vm963, %v936, %v722
      %v974 = vsel %vm963, %v938, %v724
      %v977 = vsel %vm963, %v940, %v726
      %v980 = vsel %vm963, %v942, %v728
      %v983 = vsel %vm963, %v944, %v730
      %v986 = vsel %vm963, %v946, %v732
      %v989 = vsel %vm963, %v948, %v734
      %v992 = vsel %vm963, %v950, %v736
      %v995 = vsel %vm963, %v952, %v738
      %v998 = vsel %vm963, %v954, %v740
      %v1001 = vsel %vm963, %v956, %v742
      %v1004 = vsel %vm963, %v958, %v744
      %v1007 = vsel %vm963, %v960, %v746
      %v1010 = vsel %vm963, %v962, %v748
      %v1016 = vunpack.c.l.b16 %v189
      %v1017 = vunpack.c.h.b16 %v189
      %v1018 = vunpack.c.l.b16 %v190
      %v1019 = vunpack.c.h.b16 %v190
      %v1020 = vunpack.c.l.b16 %v191
      %v1021 = vunpack.c.h.b16 %v191
      %v1022 = vunpack.c.l.b16 %v192
      %v1023 = vunpack.c.h.b16 %v192
      %v1024 = vpack.c.b16 %v1018, %v1016
      %v1025 = vpack.c.b16 %v1019, %v1017
      %v1026 = vpack.c.b16 %v1022, %v1020
      %v1027 = vpack.c.b16 %v1023, %v1021
      %1032 = vmatpush.bf16.msra.mxu0 %v986
      %1033 = vmatpush.bf16.msra.mxu0 %v983
      %1034 = vmatpush.bf16.msra.mxu0 %v980
      %1035 = vmatpush.bf16.msra.mxu0 %v977
      %1036 = vmatpush.bf16.msra.mxu0 %v974
      %1037 = vmatpush.bf16.msra.mxu0 %v971
      %1038 = vmatpush.bf16.msra.mxu0 %v968
      %1039 = vmatpush.bf16.msra.mxu0 %v965
      %1040 = vmatmul.bf16.gmra.mxu0 %v1024
      %v1041 = vpop.f32.mrf.mxu0
      %v1042 = vadd.f32 0.0, %v1041
      %v1043 = vpop.f32.mrf.mxu0
      %v1044 = vadd.f32 0.0, %v1043
      %1045 = vmatmul.bf16.gmra.mxu0 %v1026
      %v1046 = vpop.f32.mrf.mxu0
      %v1047 = vadd.f32 0.0, %v1046
      %v1048 = vpop.f32.mrf.mxu0
      %v1049 = vadd.f32 0.0, %v1048
      %1050 = vdwg.mxu0
      %1051 = vmatpush.bf16.msra.mxu0 %v1010
      %1052 = vmatpush.bf16.msra.mxu0 %v1007
      %1053 = vmatpush.bf16.msra.mxu0 %v1004
      %1054 = vmatpush.bf16.msra.mxu0 %v1001
      %1055 = vmatpush.bf16.msra.mxu0 %v998
      %1056 = vmatpush.bf16.msra.mxu0 %v995
      %1057 = vmatpush.bf16.msra.mxu0 %v992
      %1058 = vmatpush.bf16.msra.mxu0 %v989
      %1059 = vmatmul.bf16.gmra.mxu0 %v1025
      %v1060 = vpop.f32.mrf.mxu0
      %v1061 = vadd.f32 %v1042, %v1060
      %v1062 = vpop.f32.mrf.mxu0
      %v1063 = vadd.f32 %v1044, %v1062
      %1064 = vmatmul.bf16.gmra.mxu0 %v1027
      %v1065 = vpop.f32.mrf.mxu0
      %v1066 = vadd.f32 %v1047, %v1065
      %v1067 = vpop.f32.mrf.mxu0
      %v1068 = vadd.f32 %v1049, %v1067
      %1069 = vdwg.mxu0
      %v1070 = vpack.c.bf16 %v1061, %v1061
      %v1071 = vpack.c.bf16 %v1063, %v1063
      %v1072 = vpack.c.bf16 %v1066, %v1066
      %v1073 = vpack.c.bf16 %v1068, %v1068
      %vm1074 = vcmask 519168
      %1075 = vst.msk [vmem:[%s183] sm:$0xf] %vm1074, %v1070
      %1076 = vst.msk [vmem:[%s183 + $0x4] sm:$0xf] %vm1074, %v1071
      %1077 = vst.msk [vmem:[%s183 + $0x8] sm:$0xf] %vm1074, %v1072
      %1078 = vst.msk [vmem:[%s183 + $0xc] sm:$0xf] %vm1074, %v1073
      %vm1079 = vcmask 523264
      %v1080 = vsel %vm1079, %v1061, 0.0
      %1081 = vadd.xlane.f32.xlu0 %v1080
      %v1082 = vpop.xlane.xlu0 %1081
      %v1083 = vsel %vm1079, %v1063, 0.0
      %1084 = vadd.xlane.f32.xlu0 %v1083
      %v1085 = vpop.xlane.xlu0 %1084
      %v1086 = vsel %vm1079, %v1066, 0.0
      %1087 = vadd.xlane.f32.xlu0 %v1086
      %v1088 = vpop.xlane.xlu0 %1087
      %v1089 = vsel %vm1079, %v1068, 0.0
      %1090 = vadd.xlane.f32.xlu0 %v1089
      %v1091 = vpop.xlane.xlu0 %1090
      %v1092 = vmul.f32 %v1061, %v1061
      %v1093 = vmul.f32 %v1063, %v1063
      %v1094 = vmul.f32 %v1066, %v1066
      %v1095 = vmul.f32 %v1068, %v1068
      %v1096 = vsel %vm1079, %v1092, 0.0
      %1097 = vadd.xlane.f32.xlu0 %v1096
      %v1098 = vpop.xlane.xlu0 %1097
      %v1099 = vsel %vm1079, %v1093, 0.0
      %1100 = vadd.xlane.f32.xlu0 %v1099
      %v1101 = vpop.xlane.xlu0 %1100
      %v1102 = vsel %vm1079, %v1094, 0.0
      %1103 = vadd.xlane.f32.xlu0 %v1102
      %v1104 = vpop.xlane.xlu0 %1103
      %v1105 = vsel %vm1079, %v1095, 0.0
      %1106 = vadd.xlane.f32.xlu0 %v1105
      %v1107 = vpop.xlane.xlu0 %1106
      %vm1108 = vcmask 7168
      %v1109 = vsel %vm1108, %v1082, %v1098
      %v1110 = vsel %vm1108, %v1085, %v1101
      %v1111 = vsel %vm1108, %v1088, %v1104
      %v1112 = vsel %vm1108, %v1091, %v1107
      %vm1113 = vcmask 15360
      %1114 = vst.msk [vmem:[%s188] sm:$0xff] %vm1113, %v1109
      %1115 = vst.msk [vmem:[%s188 + $0x8] sm:$0xff] %vm1113, %v1110
      %1116 = vst.msk [vmem:[%s188 + $0x10] sm:$0xff] %vm1113, %v1111
      %1117 = vst.msk [vmem:[%s188 + $0x18] sm:$0xff] %vm1113, %v1112
      %p1118 = scmp.lt.s32.totalorder %s15, 1
      %s1119 = scalar_select %p1118, %s15, 1
      %s1120 = smul.addr %s1119, 4
      %s1121 = smul.addr %s1120, 4
      %s1122 = scalar_lea.vmem %s2, %s1121
      %p1123 = scmp.lt.s32.totalorder %s15, 1
      %s1124 = scalar_select %p1123, %s15, 1
      %s1125 = smul.addr %s1124, 4
      %s1126 = smul.addr %s1125, 8
      %s1127 = scalar_lea.vmem %s3, %s1126
      // Predicated region
      $region29: #{pallas_forward.7} parent=27 // pred_check
        %p1128 = pneg %p80
      $region30: #{pallas_forward.7} parent=27 // pred_check_branch
        %1130 = sbr.rel (%p1128) target = $region32
      $region31: #{pallas_forward.7} parent=27 // pred_region
        _
      $region32: #{pallas_forward.7} parent=27 // pred_fallthru
        _
      // Predicated region
      $region33: #{pallas_forward.7} parent=27 // pred_check
        %p1131 = pneg %p106
      $region34: #{pallas_forward.7} parent=27 // pred_check_branch
        %1133 = sbr.rel (%p1131) target = $region36
      $region35: #{pallas_forward.7} parent=27 // pred_region
        _
      $region36: #{pallas_forward.7} parent=27 // pred_fallthru
        _
    $region28: #{pallas_forward.7} parent=5 // pred_fallthru
      _
    %p1134 = scmp.le.s32.totalorder 2, %s10
    // Predicated region
    $region37: #{pallas_forward.7} parent=5 // pred_check
      %p1135 = pneg %p1134
    $region38: #{pallas_forward.7} parent=5 // pred_check_branch
      %1137 = sbr.rel (%p1135) target = $region40
    $region39: #{pallas_forward.7} parent=5 // pred_region
      %s1138 = ssub.s32 %s10, 2
      // Predicated region
      $region41: #{pallas_forward.7} parent=39 // pred_check
        %p1139 = pneg %p86
      $region42: #{pallas_forward.7} parent=39 // pred_check_branch
        %1141 = sbr.rel (%p1139) target = $region44
      $region43: #{pallas_forward.7} parent=39 // pred_region
        %p1142 = scmp.lt.s32.totalorder %s16, 1
        %s1143 = scalar_select %p1142, %s16, 1
        %s1144 = smul.addr %s1143, 4
        %s1145 = smul.addr %s1144, 4
        %s1146 = scalar_lea.vmem %s2, %s1145
      $region44: #{pallas_forward.7} parent=39 // pred_fallthru
        _
      // Predicated region
      $region45: #{pallas_forward.7} parent=39 // pred_check
        %p1147 = pneg %p112
      $region46: #{pallas_forward.7} parent=39 // pred_check_branch
        %1149 = sbr.rel (%p1147) target = $region48
      $region47: #{pallas_forward.7} parent=39 // pred_region
        %p1150 = scmp.lt.s32.totalorder %s16, 1
        %s1151 = scalar_select %p1150, %s16, 1
        %s1152 = smul.addr %s1151, 4
        %s1153 = smul.addr %s1152, 8
        %s1154 = scalar_lea.vmem %s3, %s1153
      $region48: #{pallas_forward.7} parent=39 // pred_fallthru
        _
    $region40: #{pallas_forward.7} parent=5 // pred_fallthru
      _
  $region6: #{pallas_forward.7} parent=0 // loop_footer
    %s14 = sadd.s32 1, %s10
  $region7: #{pallas_forward.7} parent=0 // loop_footer_branch
    %9 = sbr.rel target = $region3
  $region8: #{pallas_forward.7} parent=0 // loop_exit
    _

// kernel: pallas_forward.8
$region0: #{pallas_forward.8}
  #allocation0 [shape = 'u32[]', space=smem, size = 0x4, offset = 0x4, fixed_abs, tag = 'smem constant byte address 0x4 - core index']
  #allocation1 [shape = 'u32[72,128]{1,0:T(1,128)}', space=vmem, size = 0x9000, scoped, tag = 'internal scratch']
  %s0 = inlined_call_operand.vmem [shape: bf16[20,32,10], index: 0, kind: input, shape index: {}]
  %s1 = inlined_call_operand.vmem [shape: bf16[64,512], index: 1, kind: input, shape index: {}]
  %s2 = inlined_call_operand.vmem [shape: bf16[2,64,49], index: 2, kind: output, shape index: {0}]
  %s3 = inlined_call_operand.vmem [shape: f32[2,64,2], index: 3, kind: output, shape index: {1}]
  %4 = xla_tuple %s2, %s3
  %s5 = sld [smem:[#allocation0]]
  $region49: #{pallas_forward.8} parent=0
    _
  %s7 = ssub.s32 1, %s5
  %s8 = scalar_select 0, %s7, %s5
  loop: start=0, step=1, limit=4
  $region2: #{pallas_forward.8} parent=0 // loop_pre_header
    _
  $region3: #{pallas_forward.8} parent=0 // loop_header
    %s10 = sphi 0, %s14
    %p11 = scmp.ge.s32.totalorder %s10, 4
    %s20 = sphi 0, %s22
    %s23 = sphi 0, %s20
    %s24 = sphi 0, %s23
    %s40 = sphi 0, %s24
    %s44 = sphi 0, %s44
    %s46 = sphi 0, %s44
    %s47 = sphi 0, %s46
    %s61 = sphi 0, %s47
    %s67 = sphi 0, %s69
    %s70 = sphi 0, %s67
    %s71 = sphi 0, %s70
    %s87 = sphi 0, %s71
    %s93 = sphi 0, %s95
    %s96 = sphi 0, %s93
    %s97 = sphi 0, %s96
    %s113 = sphi 0, %s97
  $region4: #{pallas_forward.8} parent=0 // loop_header_branch
    %13 = sbr.rel (%p11) target = $region8
  $region5: #{pallas_forward.8} parent=0 // loop_body
    %s15 = ssub.s32 %s10, 1
    %s16 = ssub.s32 %s10, 2
    %s17 = sadd.s32 %s10, 1
    %s18 = ssub.s32 %s10, %s17
    %p19 = scmp.eq.s32.totalorder %s18, 0
    %s21 = sadd.s32 %s20, 1
    %s22 = scalar_select %p19, %s20, %s21
    %p25 = pneg %p19
    %p26 = scmp.eq.s32.totalorder %s10, 1
    %p27 = por %p25, %p26
    %p28 = scmp.ne.s32.totalorder %s20, %s23
    %p29 = scmp.eq.s32.totalorder %s10, 0
    %p30 = por %p28, %p29
    %p31 = scmp.ne.s32.totalorder %s20, %s23
    %p32 = scmp.eq.s32.totalorder %s15, 1
    %p33 = por %p31, %p32
    %p34 = scmp.ne.s32.totalorder %s23, %s24
    %p35 = scmp.eq.s32.totalorder %s15, 0
    %p36 = por %p34, %p35
    %p37 = scmp.ne.s32.totalorder %s23, %s24
    %p38 = scmp.eq.s32.totalorder %s16, 1
    %p39 = por %p37, %p38
    %p41 = scmp.ne.s32.totalorder %s24, %s40
    %p42 = scmp.eq.s32.totalorder %s16, 0
    %p43 = por %p41, %p42
    %s45 = sadd.s32 %s44, 1
    %p48 = scmp.eq.s32.totalorder %s10, 1
    %p49 = scmp.ne.s32.totalorder %s44, %s46
    %p50 = scmp.eq.s32.totalorder %s10, 0
    %p51 = por %p49, %p50
    %p52 = scmp.ne.s32.totalorder %s44, %s46
    %p53 = scmp.eq.s32.totalorder %s15, 1
    %p54 = por %p52, %p53
    %p55 = scmp.ne.s32.totalorder %s46, %s47
    %p56 = scmp.eq.s32.totalorder %s15, 0
    %p57 = por %p55, %p56
    %p58 = scmp.ne.s32.totalorder %s46, %s47
    %p59 = scmp.eq.s32.totalorder %s16, 1
    %p60 = por %p58, %p59
    %p62 = scmp.ne.s32.totalorder %s47, %s61
    %p63 = scmp.eq.s32.totalorder %s16, 0
    %p64 = por %p62, %p63
    %s65 = ssub.s32 %s10, %s17
    %p66 = scmp.eq.s32.totalorder %s65, 0
    %s68 = sadd.s32 %s67, 1
    %s69 = scalar_select %p66, %s67, %s68
    %p72 = pneg %p66
    %p73 = scmp.eq.s32.totalorder %s10, 1
    %p74 = por %p72, %p73
    %p75 = scmp.ne.s32.totalorder %s67, %s70
    %p76 = scmp.eq.s32.totalorder %s10, 0
    %p77 = por %p75, %p76
    %p78 = scmp.ne.s32.totalorder %s67, %s70
    %p79 = scmp.eq.s32.totalorder %s15, 1
    %p80 = por %p78, %p79
    %p81 = scmp.ne.s32.totalorder %s70, %s71
    %p82 = scmp.eq.s32.totalorder %s15, 0
    %p83 = por %p81, %p82
    %p84 = scmp.ne.s32.totalorder %s70, %s71
    %p85 = scmp.eq.s32.totalorder %s16, 1
    %p86 = por %p84, %p85
    %p88 = scmp.ne.s32.totalorder %s71, %s87
    %p89 = scmp.eq.s32.totalorder %s16, 0
    %p90 = por %p88, %p89
    %s91 = ssub.s32 %s10, %s17
    %p92 = scmp.eq.s32.totalorder %s91, 0
    %s94 = sadd.s32 %s93, 1
    %s95 = scalar_select %p92, %s93, %s94
    %p98 = pneg %p92
    %p99 = scmp.eq.s32.totalorder %s10, 1
    %p100 = por %p98, %p99
    %p101 = scmp.ne.s32.totalorder %s93, %s96
    %p102 = scmp.eq.s32.totalorder %s10, 0
    %p103 = por %p101, %p102
    %p104 = scmp.ne.s32.totalorder %s93, %s96
    %p105 = scmp.eq.s32.totalorder %s15, 1
    %p106 = por %p104, %p105
    %p107 = scmp.ne.s32.totalorder %s96, %s97
    %p108 = scmp.eq.s32.totalorder %s15, 0
    %p109 = por %p107, %p108
    %p110 = scmp.ne.s32.totalorder %s96, %s97
    %p111 = scmp.eq.s32.totalorder %s16, 1
    %p112 = por %p110, %p111
    %p114 = scmp.ne.s32.totalorder %s97, %s113
    %p115 = scmp.eq.s32.totalorder %s16, 0
    %p116 = por %p114, %p115
    %p117 = scmp.le.s32.totalorder 1, %s10
    %p118 = scmp.lt.s32.totalorder %s10, 3
    %p119 = pnand %p117, %p118
    %p120 = pneg %p119
    // Predicated region
    $region9: #{pallas_forward.8} parent=5 // pred_check
      _
    $region10: #{pallas_forward.8} parent=5 // pred_check_branch
      %122 = sbr.rel (%p119) target = $region12
    $region11: #{pallas_forward.8} parent=5 // pred_region
      %s123 = ssub.s32 %s10, 1
      // Predicated region
      $region13: #{pallas_forward.8} parent=11 // pred_check
        %p124 = pneg %p57
      $region14: #{pallas_forward.8} parent=11 // pred_check_branch
        %126 = sbr.rel (%p124) target = $region16
      $region15: #{pallas_forward.8} parent=11 // pred_region
        _
      $region16: #{pallas_forward.8} parent=11 // pred_fallthru
        _
    $region12: #{pallas_forward.8} parent=5 // pred_fallthru
      _
    %p127 = scmp.lt.s32.totalorder %s10, 2
    // Predicated region
    $region17: #{pallas_forward.8} parent=5 // pred_check
      %p128 = pneg %p127
    $region18: #{pallas_forward.8} parent=5 // pred_check_branch
      %130 = sbr.rel (%p128) target = $region20
    $region19: #{pallas_forward.8} parent=5 // pred_region
      // Predicated region
      $region21: #{pallas_forward.8} parent=19 // pred_check
        %p131 = pneg %p30
      $region22: #{pallas_forward.8} parent=19 // pred_check_branch
        %133 = sbr.rel (%p131) target = $region24
      $region23: #{pallas_forward.8} parent=19 // pred_region
        %s134 = smul.u32 10, %s10
        %p135 = scmp.lt.s32.totalorder %s134, 19
        %s136 = scalar_select %p135, %s134, 19
        %s137 = smul.addr %s136, 4
        %s138 = smul.addr %s137, 4
        %s139 = scalar_lea.vmem %s0, %s138
        %s140 = smul.u32 10, %s10
      $region24: #{pallas_forward.8} parent=19 // pred_fallthru
        _
    $region20: #{pallas_forward.8} parent=5 // pred_fallthru
      _
    %p141 = scmp.le.s32.totalorder 1, %s10
    %p142 = scmp.lt.s32.totalorder %s10, 3
    %p143 = pnand %p141, %p142
    %p144 = pneg %p143
    // Predicated region
    $region25: #{pallas_forward.8} parent=5 // pred_check
      _
    $region26: #{pallas_forward.8} parent=5 // pred_check_branch
      %146 = sbr.rel (%p143) target = $region28
    $region27: #{pallas_forward.8} parent=5 // pred_region
      %s147 = ssub.s32 %s10, 1
      %s148 = smul.u32 10, %s15
      %p149 = scmp.lt.s32.totalorder %s148, 19
      %s150 = scalar_select %p149, %s148, 19
      %s151 = smul.addr %s150, 4
      %s152 = smul.addr %s151, 4
      %s153 = scalar_lea.vmem %s0, %s152
      %p154 = pneg %p36
      %p155 = pneg %p33
      %p156 = pneg %p57
      %p157 = pneg %p54
      %p158 = pneg %p83
      %p159 = pneg %p80
      %p160 = scmp.lt.s32.totalorder %s15, 1
      %s161 = scalar_select %p160, %s15, 1
      %s162 = smul.addr %s161, 8
      %s163 = smul.addr %s162, 4
      %s164 = scalar_lea.vmem %s2, %s163
      %p165 = pneg %p109
      %p166 = pneg %p106
      %p167 = scmp.lt.s32.totalorder %s15, 1
      %s168 = scalar_select %p167, %s15, 1
      %s169 = smul.addr %s168, 8
      %s170 = smul.addr %s169, 8
      %s171 = scalar_lea.vmem %s3, %s170
      %s172 = smul.u32 10, %s15
      %p173 = scmp.lt.s32.totalorder %s172, 19
      %s174 = scalar_select %p173, %s172, 19
      %s175 = smul.addr %s174, 4
      %s176 = smul.addr %s175, 4
      %s177 = scalar_lea.vmem %s0, %s176
      %s178 = smul.u32 10, %s15
      %p179 = scmp.lt.s32.totalorder %s15, 1
      %s180 = scalar_select %p179, %s15, 1
      %s181 = smul.addr %s180, 8
      %s182 = smul.addr %s181, 4
      %s183 = scalar_lea.vmem %s2, %s182
      %p184 = scmp.lt.s32.totalorder %s15, 1
      %s185 = scalar_select %p184, %s15, 1
      %s186 = smul.addr %s185, 8
      %s187 = smul.addr %s186, 8
      %s188 = scalar_lea.vmem %s3, %s187
      %v189 = vld [vmem:[%s1] sm:$0xff]
      %v190 = vld [vmem:[%s1 + $0x8] sm:$0xff]
      %v191 = vld [vmem:[%s1 + $0x10] sm:$0xff]
      %v192 = vld [vmem:[%s1 + $0x18] sm:$0xff]
      %v193 = vld [vmem:[%s1 + $0x20] sm:$0xff]
      %v194 = vld [vmem:[%s1 + $0x28] sm:$0xff]
      %v195 = vld [vmem:[%s1 + $0x30] sm:$0xff]
      %v196 = vld [vmem:[%s1 + $0x38] sm:$0xff]
      %v197 = vld [vmem:[%s1 + $0x40] sm:$0xff]
      %v198 = vld [vmem:[%s1 + $0x48] sm:$0xff]
      %v199 = vld [vmem:[%s1 + $0x50] sm:$0xff]
      %v200 = vld [vmem:[%s1 + $0x58] sm:$0xff]
      %v201 = vld [vmem:[%s1 + $0x60] sm:$0xff]
      %v202 = vld [vmem:[%s1 + $0x68] sm:$0xff]
      %v203 = vld [vmem:[%s1 + $0x70] sm:$0xff]
      %v204 = vld [vmem:[%s1 + $0x78] sm:$0xff]
      %v205 = vld [vmem:[%s177] sm:$0xf]
      %v206 = vld [vmem:[%s177 + $0x4] sm:$0xf]
      %v207 = vld [vmem:[%s177 + $0x8] sm:$0xf]
      %v208 = vld [vmem:[%s177 + $0xc] sm:$0xf]
      %s209 = scalar_lea.vmem %s177, 16
      %v210 = vld [vmem:[%s209] sm:$0xf]
      %v211 = vld [vmem:[%s209 + $0x4] sm:$0xf]
      %v212 = vld [vmem:[%s209 + $0x8] sm:$0xf]
      %v213 = vld [vmem:[%s209 + $0xc] sm:$0xf]
      %s214 = scalar_lea.vmem %s177, 32
      %v215 = vld [vmem:[%s214] sm:$0xf]
      %v216 = vld [vmem:[%s214 + $0x4] sm:$0xf]
      %v217 = vld [vmem:[%s214 + $0x8] sm:$0xf]
      %v218 = vld [vmem:[%s214 + $0xc] sm:$0xf]
      %s219 = scalar_lea.vmem %s177, 48
      %v220 = vld [vmem:[%s219] sm:$0xf]
      %v221 = vld [vmem:[%s219 + $0x4] sm:$0xf]
      %v222 = vld [vmem:[%s219 + $0x8] sm:$0xf]
      %v223 = vld [vmem:[%s219 + $0xc] sm:$0xf]
      %s224 = scalar_lea.vmem %s177, 64
      %v225 = vld [vmem:[%s224] sm:$0xf]
      %v226 = vld [vmem:[%s224 + $0x4] sm:$0xf]
      %v227 = vld [vmem:[%s224 + $0x8] sm:$0xf]
      %v228 = vld [vmem:[%s224 + $0xc] sm:$0xf]
      %s229 = scalar_lea.vmem %s177, 80
      %v230 = vld [vmem:[%s229] sm:$0xf]
      %v231 = vld [vmem:[%s229 + $0x4] sm:$0xf]
      %v232 = vld [vmem:[%s229 + $0x8] sm:$0xf]
      %v233 = vld [vmem:[%s229 + $0xc] sm:$0xf]
      %s234 = scalar_lea.vmem %s177, 96
      %v235 = vld [vmem:[%s234] sm:$0xf]
      %v236 = vld [vmem:[%s234 + $0x4] sm:$0xf]
      %v237 = vld [vmem:[%s234 + $0x8] sm:$0xf]
      %v238 = vld [vmem:[%s234 + $0xc] sm:$0xf]
      %s239 = scalar_lea.vmem %s177, 112
      %v240 = vld [vmem:[%s239] sm:$0xf]
      %v241 = vld [vmem:[%s239 + $0x4] sm:$0xf]
      %v242 = vld [vmem:[%s239 + $0x8] sm:$0xf]
      %v243 = vld [vmem:[%s239 + $0xc] sm:$0xf]
      %s244 = scalar_lea.vmem %s177, 128
      %v245 = vld [vmem:[%s244] sm:$0xf]
      %v246 = vld [vmem:[%s244 + $0x4] sm:$0xf]
      %v247 = vld [vmem:[%s244 + $0x8] sm:$0xf]
      %v248 = vld [vmem:[%s244 + $0xc] sm:$0xf]
      %s249 = scalar_lea.vmem %s177, 144
      %v250 = vld [vmem:[%s249] sm:$0xf]
      %v251 = vld [vmem:[%s249 + $0x4] sm:$0xf]
      %v252 = vld [vmem:[%s249 + $0x8] sm:$0xf]
      %v253 = vld [vmem:[%s249 + $0xc] sm:$0xf]
      %v258 = vunpack.c.l.b16 %v205
      %v259 = vunpack.c.l.b16 %v206
      %v260 = vunpack.c.l.b16 %v207
      %v261 = vunpack.c.l.b16 %v208
      %v262 = vpack.c.b16 %v259, %v258
      %v263 = vpack.c.b16 %v261, %v260
      %264 = vrot.lane.b32.xlu0 %v262, 127
      %v265 = vpop.permute.xlu0 %264
      %266 = vrot.lane.b32.xlu0 %v263, 127
      %v267 = vpop.permute.xlu0 %266
      %268 = vrot.lane.b32.xlu0 %v262, 126
      %v269 = vpop.permute.xlu0 %268
      %270 = vrot.lane.b32.xlu0 %v263, 126
      %v271 = vpop.permute.xlu0 %270
      %272 = vrot.lane.b32.xlu0 %v262, 125
      %v273 = vpop.permute.xlu0 %272
      %274 = vrot.lane.b32.xlu0 %v263, 125
      %v275 = vpop.permute.xlu0 %274
      %v280 = vunpack.c.l.b16 %v210
      %v281 = vunpack.c.l.b16 %v211
      %v282 = vunpack.c.l.b16 %v212
      %v283 = vunpack.c.l.b16 %v213
      %v284 = vpack.c.b16 %v281, %v280
      %v285 = vpack.c.b16 %v283, %v282
      %286 = vrot.lane.b32.xlu0 %v284, 127
      %v287 = vpop.permute.xlu0 %286
      %288 = vrot.lane.b32.xlu0 %v285, 127
      %v289 = vpop.permute.xlu0 %288
      %290 = vrot.lane.b32.xlu0 %v284, 126
      %v291 = vpop.permute.xlu0 %290
      %292 = vrot.lane.b32.xlu0 %v285, 126
      %v293 = vpop.permute.xlu0 %292
      %294 = vrot.lane.b32.xlu0 %v284, 125
      %v295 = vpop.permute.xlu0 %294
      %296 = vrot.lane.b32.xlu0 %v285, 125
      %v297 = vpop.permute.xlu0 %296
      %v302 = vunpack.c.l.b16 %v215
      %v303 = vunpack.c.l.b16 %v216
      %v304 = vunpack.c.l.b16 %v217
      %v305 = vunpack.c.l.b16 %v218
      %v306 = vpack.c.b16 %v303, %v302
      %v307 = vpack.c.b16 %v305, %v304
      %308 = vrot.lane.b32.xlu0 %v306, 127
      %v309 = vpop.permute.xlu0 %308
      %310 = vrot.lane.b32.xlu0 %v307, 127
      %v311 = vpop.permute.xlu0 %310
      %312 = vrot.lane.b32.xlu0 %v306, 126
      %v313 = vpop.permute.xlu0 %312
      %314 = vrot.lane.b32.xlu0 %v307, 126
      %v315 = vpop.permute.xlu0 %314
      %316 = vrot.lane.b32.xlu0 %v306, 125
      %v317 = vpop.permute.xlu0 %316
      %318 = vrot.lane.b32.xlu0 %v307, 125
      %v319 = vpop.permute.xlu0 %318
      %v324 = vunpack.c.l.b16 %v220
      %v325 = vunpack.c.l.b16 %v221
      %v326 = vunpack.c.l.b16 %v222
      %v327 = vunpack.c.l.b16 %v223
      %v328 = vpack.c.b16 %v325, %v324
      %v329 = vpack.c.b16 %v327, %v326
      %330 = vrot.lane.b32.xlu0 %v328, 127
      %v331 = vpop.permute.xlu0 %330
      %332 = vrot.lane.b32.xlu0 %v329, 127
      %v333 = vpop.permute.xlu0 %332
      %334 = vrot.lane.b32.xlu0 %v328, 126
      %v335 = vpop.permute.xlu0 %334
      %336 = vrot.lane.b32.xlu0 %v329, 126
      %v337 = vpop.permute.xlu0 %336
      %338 = vrot.lane.b32.xlu0 %v328, 125
      %v339 = vpop.permute.xlu0 %338
      %340 = vrot.lane.b32.xlu0 %v329, 125
      %v341 = vpop.permute.xlu0 %340
      %v346 = vunpack.c.l.b16 %v225
      %v347 = vunpack.c.l.b16 %v226
      %v348 = vunpack.c.l.b16 %v227
      %v349 = vunpack.c.l.b16 %v228
      %v350 = vpack.c.b16 %v347, %v346
      %v351 = vpack.c.b16 %v349, %v348
      %352 = vrot.lane.b32.xlu0 %v350, 127
      %v353 = vpop.permute.xlu0 %352
      %354 = vrot.lane.b32.xlu0 %v351, 127
      %v355 = vpop.permute.xlu0 %354
      %356 = vrot.lane.b32.xlu0 %v350, 126
      %v357 = vpop.permute.xlu0 %356
      %358 = vrot.lane.b32.xlu0 %v351, 126
      %v359 = vpop.permute.xlu0 %358
      %360 = vrot.lane.b32.xlu0 %v350, 125
      %v361 = vpop.permute.xlu0 %360
      %362 = vrot.lane.b32.xlu0 %v351, 125
      %v363 = vpop.permute.xlu0 %362
      %v368 = vunpack.c.l.b16 %v230
      %v369 = vunpack.c.l.b16 %v231
      %v370 = vunpack.c.l.b16 %v232
      %v371 = vunpack.c.l.b16 %v233
      %v372 = vpack.c.b16 %v369, %v368
      %v373 = vpack.c.b16 %v371, %v370
      %374 = vrot.lane.b32.xlu0 %v372, 127
      %v375 = vpop.permute.xlu0 %374
      %376 = vrot.lane.b32.xlu0 %v373, 127
      %v377 = vpop.permute.xlu0 %376
      %378 = vrot.lane.b32.xlu0 %v372, 126
      %v379 = vpop.permute.xlu0 %378
      %380 = vrot.lane.b32.xlu0 %v373, 126
      %v381 = vpop.permute.xlu0 %380
      %382 = vrot.lane.b32.xlu0 %v372, 125
      %v383 = vpop.permute.xlu0 %382
      %384 = vrot.lane.b32.xlu0 %v373, 125
      %v385 = vpop.permute.xlu0 %384
      %v390 = vunpack.c.l.b16 %v235
      %v391 = vunpack.c.l.b16 %v236
      %v392 = vunpack.c.l.b16 %v237
      %v393 = vunpack.c.l.b16 %v238
      %v394 = vpack.c.b16 %v391, %v390
      %v395 = vpack.c.b16 %v393, %v392
      %396 = vrot.lane.b32.xlu0 %v394, 127
      %v397 = vpop.permute.xlu0 %396
      %398 = vrot.lane.b32.xlu0 %v395, 127
      %v399 = vpop.permute.xlu0 %398
      %400 = vrot.lane.b32.xlu0 %v394, 126
      %v401 = vpop.permute.xlu0 %400
      %402 = vrot.lane.b32.xlu0 %v395, 126
      %v403 = vpop.permute.xlu0 %402
      %404 = vrot.lane.b32.xlu0 %v394, 125
      %v405 = vpop.permute.xlu0 %404
      %406 = vrot.lane.b32.xlu0 %v395, 125
      %v407 = vpop.permute.xlu0 %406
      %v412 = vunpack.c.l.b16 %v240
      %v413 = vunpack.c.l.b16 %v241
      %v414 = vunpack.c.l.b16 %v242
      %v415 = vunpack.c.l.b16 %v243
      %v416 = vpack.c.b16 %v413, %v412
      %v417 = vpack.c.b16 %v415, %v414
      %418 = vrot.lane.b32.xlu0 %v416, 127
      %v419 = vpop.permute.xlu0 %418
      %420 = vrot.lane.b32.xlu0 %v417, 127
      %v421 = vpop.permute.xlu0 %420
      %422 = vrot.lane.b32.xlu0 %v416, 126
      %v423 = vpop.permute.xlu0 %422
      %424 = vrot.lane.b32.xlu0 %v417, 126
      %v425 = vpop.permute.xlu0 %424
      %426 = vrot.lane.b32.xlu0 %v416, 125
      %v427 = vpop.permute.xlu0 %426
      %428 = vrot.lane.b32.xlu0 %v417, 125
      %v429 = vpop.permute.xlu0 %428
      %v434 = vunpack.c.l.b16 %v245
      %v435 = vunpack.c.l.b16 %v246
      %v436 = vunpack.c.l.b16 %v247
      %v437 = vunpack.c.l.b16 %v248
      %v438 = vpack.c.b16 %v435, %v434
      %v439 = vpack.c.b16 %v437, %v436
      %440 = vrot.lane.b32.xlu0 %v438, 127
      %v441 = vpop.permute.xlu0 %440
      %442 = vrot.lane.b32.xlu0 %v439, 127
      %v443 = vpop.permute.xlu0 %442
      %444 = vrot.lane.b32.xlu0 %v438, 126
      %v445 = vpop.permute.xlu0 %444
      %446 = vrot.lane.b32.xlu0 %v439, 126
      %v447 = vpop.permute.xlu0 %446
      %448 = vrot.lane.b32.xlu0 %v438, 125
      %v449 = vpop.permute.xlu0 %448
      %450 = vrot.lane.b32.xlu0 %v439, 125
      %v451 = vpop.permute.xlu0 %450
      %v456 = vunpack.c.l.b16 %v250
      %v457 = vunpack.c.l.b16 %v251
      %v458 = vunpack.c.l.b16 %v252
      %v459 = vunpack.c.l.b16 %v253
      %v460 = vpack.c.b16 %v457, %v456
      %v461 = vpack.c.b16 %v459, %v458
      %462 = vrot.lane.b32.xlu0 %v460, 127
      %v463 = vpop.permute.xlu0 %462
      %464 = vrot.lane.b32.xlu0 %v461, 127
      %v465 = vpop.permute.xlu0 %464
      %466 = vrot.lane.b32.xlu0 %v460, 126
      %v467 = vpop.permute.xlu0 %466
      %468 = vrot.lane.b32.xlu0 %v461, 126
      %v469 = vpop.permute.xlu0 %468
      %470 = vrot.lane.b32.xlu0 %v460, 125
      %v471 = vpop.permute.xlu0 %470
      %472 = vrot.lane.b32.xlu0 %v461, 125
      %v473 = vpop.permute.xlu0 %472
      %474 = vrot.lane.b32.xlu0 %v284, 7
      %v475 = vpop.permute.xlu0 %474
      %476 = vrot.lane.b32.xlu0 %v285, 7
      %v477 = vpop.permute.xlu0 %476
      %478 = vrot.lane.b32.xlu0 %v287, 7
      %v479 = vpop.permute.xlu0 %478
      %480 = vrot.lane.b32.xlu0 %v289, 7
      %v481 = vpop.permute.xlu0 %480
      %482 = vrot.lane.b32.xlu0 %v291, 7
      %v483 = vpop.permute.xlu0 %482
      %484 = vrot.lane.b32.xlu0 %v293, 7
      %v485 = vpop.permute.xlu0 %484
      %486 = vrot.lane.b32.xlu0 %v295, 7
      %v487 = vpop.permute.xlu0 %486
      %488 = vrot.lane.b32.xlu0 %v297, 7
      %v489 = vpop.permute.xlu0 %488
      %490 = vrot.lane.b32.xlu0 %v306, 7
      %v491 = vpop.permute.xlu0 %490
      %492 = vrot.lane.b32.xlu0 %v307, 7
      %v493 = vpop.permute.xlu0 %492
      %494 = vrot.lane.b32.xlu0 %v309, 7
      %v495 = vpop.permute.xlu0 %494
      %496 = vrot.lane.b32.xlu0 %v311, 7
      %v497 = vpop.permute.xlu0 %496
      %498 = vrot.lane.b32.xlu0 %v313, 7
      %v499 = vpop.permute.xlu0 %498
      %500 = vrot.lane.b32.xlu0 %v315, 7
      %v501 = vpop.permute.xlu0 %500
      %502 = vrot.lane.b32.xlu0 %v317, 7
      %v503 = vpop.permute.xlu0 %502
      %504 = vrot.lane.b32.xlu0 %v319, 7
      %v505 = vpop.permute.xlu0 %504
      %506 = vrot.lane.b32.xlu0 %v328, 7
      %v507 = vpop.permute.xlu0 %506
      %508 = vrot.lane.b32.xlu0 %v329, 7
      %v509 = vpop.permute.xlu0 %508
      %510 = vrot.lane.b32.xlu0 %v331, 7
      %v511 = vpop.permute.xlu0 %510
      %512 = vrot.lane.b32.xlu0 %v333, 7
      %v513 = vpop.permute.xlu0 %512
      %514 = vrot.lane.b32.xlu0 %v335, 7
      %v515 = vpop.permute.xlu0 %514
      %516 = vrot.lane.b32.xlu0 %v337, 7
      %v517 = vpop.permute.xlu0 %516
      %518 = vrot.lane.b32.xlu0 %v339, 7
      %v519 = vpop.permute.xlu0 %518
      %520 = vrot.lane.b32.xlu0 %v341, 7
      %v521 = vpop.permute.xlu0 %520
      %522 = vrot.lane.b32.xlu0 %v350, 7
      %v523 = vpop.permute.xlu0 %522
      %524 = vrot.lane.b32.xlu0 %v351, 7
      %v525 = vpop.permute.xlu0 %524
      %526 = vrot.lane.b32.xlu0 %v353, 7
      %v527 = vpop.permute.xlu0 %526
      %528 = vrot.lane.b32.xlu0 %v355, 7
      %v529 = vpop.permute.xlu0 %528
      %530 = vrot.lane.b32.xlu0 %v357, 7
      %v531 = vpop.permute.xlu0 %530
      %532 = vrot.lane.b32.xlu0 %v359, 7
      %v533 = vpop.permute.xlu0 %532
      %534 = vrot.lane.b32.xlu0 %v361, 7
      %v535 = vpop.permute.xlu0 %534
      %536 = vrot.lane.b32.xlu0 %v363, 7
      %v537 = vpop.permute.xlu0 %536
      %538 = vrot.lane.b32.xlu0 %v306, 14
      %v539 = vpop.permute.xlu0 %538
      %540 = vrot.lane.b32.xlu0 %v307, 14
      %v541 = vpop.permute.xlu0 %540
      %542 = vrot.lane.b32.xlu0 %v309, 14
      %v543 = vpop.permute.xlu0 %542
      %544 = vrot.lane.b32.xlu0 %v311, 14
      %v545 = vpop.permute.xlu0 %544
      %546 = vrot.lane.b32.xlu0 %v313, 14
      %v547 = vpop.permute.xlu0 %546
      %548 = vrot.lane.b32.xlu0 %v315, 14
      %v549 = vpop.permute.xlu0 %548
      %550 = vrot.lane.b32.xlu0 %v317, 14
      %v551 = vpop.permute.xlu0 %550
      %552 = vrot.lane.b32.xlu0 %v319, 14
      %v553 = vpop.permute.xlu0 %552
      %554 = vrot.lane.b32.xlu0 %v328, 14
      %v555 = vpop.permute.xlu0 %554
      %556 = vrot.lane.b32.xlu0 %v329, 14
      %v557 = vpop.permute.xlu0 %556
      %558 = vrot.lane.b32.xlu0 %v331, 14
      %v559 = vpop.permute.xlu0 %558
      %560 = vrot.lane.b32.xlu0 %v333, 14
      %v561 = vpop.permute.xlu0 %560
      %562 = vrot.lane.b32.xlu0 %v335, 14
      %v563 = vpop.permute.xlu0 %562
      %564 = vrot.lane.b32.xlu0 %v337, 14
      %v565 = vpop.permute.xlu0 %564
      %566 = vrot.lane.b32.xlu0 %v339, 14
      %v567 = vpop.permute.xlu0 %566
      %568 = vrot.lane.b32.xlu0 %v341, 14
      %v569 = vpop.permute.xlu0 %568
      %570 = vrot.lane.b32.xlu0 %v350, 14
      %v571 = vpop.permute.xlu0 %570
      %572 = vrot.lane.b32.xlu0 %v351, 14
      %v573 = vpop.permute.xlu0 %572
      %574 = vrot.lane.b32.xlu0 %v353, 14
      %v575 = vpop.permute.xlu0 %574
      %576 = vrot.lane.b32.xlu0 %v355, 14
      %v577 = vpop.permute.xlu0 %576
      %578 = vrot.lane.b32.xlu0 %v357, 14
      %v579 = vpop.permute.xlu0 %578
      %580 = vrot.lane.b32.xlu0 %v359, 14
      %v581 = vpop.permute.xlu0 %580
      %582 = vrot.lane.b32.xlu0 %v361, 14
      %v583 = vpop.permute.xlu0 %582
      %584 = vrot.lane.b32.xlu0 %v363, 14
      %v585 = vpop.permute.xlu0 %584
      %586 = vrot.lane.b32.xlu0 %v372, 14
      %v587 = vpop.permute.xlu0 %586
      %588 = vrot.lane.b32.xlu0 %v373, 14
      %v589 = vpop.permute.xlu0 %588
      %590 = vrot.lane.b32.xlu0 %v375, 14
      %v591 = vpop.permute.xlu0 %590
      %592 = vrot.lane.b32.xlu0 %v377, 14
      %v593 = vpop.permute.xlu0 %592
      %594 = vrot.lane.b32.xlu0 %v379, 14
      %v595 = vpop.permute.xlu0 %594
      %596 = vrot.lane.b32.xlu0 %v381, 14
      %v597 = vpop.permute.xlu0 %596
      %598 = vrot.lane.b32.xlu0 %v383, 14
      %v599 = vpop.permute.xlu0 %598
      %600 = vrot.lane.b32.xlu0 %v385, 14
      %v601 = vpop.permute.xlu0 %600
      %602 = vrot.lane.b32.xlu0 %v328, 21
      %v603 = vpop.permute.xlu0 %602
      %604 = vrot.lane.b32.xlu0 %v329, 21
      %v605 = vpop.permute.xlu0 %604
      %606 = vrot.lane.b32.xlu0 %v331, 21
      %v607 = vpop.permute.xlu0 %606
      %608 = vrot.lane.b32.xlu0 %v333, 21
      %v609 = vpop.permute.xlu0 %608
      %610 = vrot.lane.b32.xlu0 %v335, 21
      %v611 = vpop.permute.xlu0 %610
      %612 = vrot.lane.b32.xlu0 %v337, 21
      %v613 = vpop.permute.xlu0 %612
      %614 = vrot.lane.b32.xlu0 %v339, 21
      %v615 = vpop.permute.xlu0 %614
      %616 = vrot.lane.b32.xlu0 %v341, 21
      %v617 = vpop.permute.xlu0 %616
      %618 = vrot.lane.b32.xlu0 %v350, 21
      %v619 = vpop.permute.xlu0 %618
      %620 = vrot.lane.b32.xlu0 %v351, 21
      %v621 = vpop.permute.xlu0 %620
      %622 = vrot.lane.b32.xlu0 %v353, 21
      %v623 = vpop.permute.xlu0 %622
      %624 = vrot.lane.b32.xlu0 %v355, 21
      %v625 = vpop.permute.xlu0 %624
      %626 = vrot.lane.b32.xlu0 %v357, 21
      %v627 = vpop.permute.xlu0 %626
      %628 = vrot.lane.b32.xlu0 %v359, 21
      %v629 = vpop.permute.xlu0 %628
      %630 = vrot.lane.b32.xlu0 %v361, 21
      %v631 = vpop.permute.xlu0 %630
      %632 = vrot.lane.b32.xlu0 %v363, 21
      %v633 = vpop.permute.xlu0 %632
      %634 = vrot.lane.b32.xlu0 %v372, 21
      %v635 = vpop.permute.xlu0 %634
      %636 = vrot.lane.b32.xlu0 %v373, 21
      %v637 = vpop.permute.xlu0 %636
      %638 = vrot.lane.b32.xlu0 %v375, 21
      %v639 = vpop.permute.xlu0 %638
      %640 = vrot.lane.b32.xlu0 %v377, 21
      %v641 = vpop.permute.xlu0 %640
      %642 = vrot.lane.b32.xlu0 %v379, 21
      %v643 = vpop.permute.xlu0 %642
      %644 = vrot.lane.b32.xlu0 %v381, 21
      %v645 = vpop.permute.xlu0 %644
      %646 = vrot.lane.b32.xlu0 %v383, 21
      %v647 = vpop.permute.xlu0 %646
      %648 = vrot.lane.b32.xlu0 %v385, 21
      %v649 = vpop.permute.xlu0 %648
      %650 = vrot.lane.b32.xlu0 %v394, 21
      %v651 = vpop.permute.xlu0 %650
      %652 = vrot.lane.b32.xlu0 %v395, 21
      %v653 = vpop.permute.xlu0 %652
      %654 = vrot.lane.b32.xlu0 %v397, 21
      %v655 = vpop.permute.xlu0 %654
      %656 = vrot.lane.b32.xlu0 %v399, 21
      %v657 = vpop.permute.xlu0 %656
      %658 = vrot.lane.b32.xlu0 %v401, 21
      %v659 = vpop.permute.xlu0 %658
      %660 = vrot.lane.b32.xlu0 %v403, 21
      %v661 = vpop.permute.xlu0 %660
      %662 = vrot.lane.b32.xlu0 %v405, 21
      %v663 = vpop.permute.xlu0 %662
      %664 = vrot.lane.b32.xlu0 %v407, 21
      %v665 = vpop.permute.xlu0 %664
      %666 = vrot.lane.b32.xlu0 %v350, 28
      %v667 = vpop.permute.xlu0 %666
      %668 = vrot.lane.b32.xlu0 %v351, 28
      %v669 = vpop.permute.xlu0 %668
      %670 = vrot.lane.b32.xlu0 %v353, 28
      %v671 = vpop.permute.xlu0 %670
      %672 = vrot.lane.b32.xlu0 %v355, 28
      %v673 = vpop.permute.xlu0 %672
      %674 = vrot.lane.b32.xlu0 %v357, 28
      %v675 = vpop.permute.xlu0 %674
      %676 = vrot.lane.b32.xlu0 %v359, 28
      %v677 = vpop.permute.xlu0 %676
      %678 = vrot.lane.b32.xlu0 %v361, 28
      %v679 = vpop.permute.xlu0 %678
      %680 = vrot.lane.b32.xlu0 %v363, 28
      %v681 = vpop.permute.xlu0 %680
      %682 = vrot.lane.b32.xlu0 %v372, 28
      %v683 = vpop.permute.xlu0 %682
      %684 = vrot.lane.b32.xlu0 %v373, 28
      %v685 = vpop.permute.xlu0 %684
      %686 = vrot.lane.b32.xlu0 %v375, 28
      %v687 = vpop.permute.xlu0 %686
      %688 = vrot.lane.b32.xlu0 %v377, 28
      %v689 = vpop.permute.xlu0 %688
      %690 = vrot.lane.b32.xlu0 %v379, 28
      %v691 = vpop.permute.xlu0 %690
      %692 = vrot.lane.b32.xlu0 %v381, 28
      %v693 = vpop.permute.xlu0 %692
      %694 = vrot.lane.b32.xlu0 %v383, 28
      %v695 = vpop.permute.xlu0 %694
      %696 = vrot.lane.b32.xlu0 %v385, 28
      %v697 = vpop.permute.xlu0 %696
      %698 = vrot.lane.b32.xlu0 %v394, 28
      %v699 = vpop.permute.xlu0 %698
      %700 = vrot.lane.b32.xlu0 %v395, 28
      %v701 = vpop.permute.xlu0 %700
      %702 = vrot.lane.b32.xlu0 %v397, 28
      %v703 = vpop.permute.xlu0 %702
      %704 = vrot.lane.b32.xlu0 %v399, 28
      %v705 = vpop.permute.xlu0 %704
      %706 = vrot.lane.b32.xlu0 %v401, 28
      %v707 = vpop.permute.xlu0 %706
      %708 = vrot.lane.b32.xlu0 %v403, 28
      %v709 = vpop.permute.xlu0 %708
      %710 = vrot.lane.b32.xlu0 %v405, 28
      %v711 = vpop.permute.xlu0 %710
      %712 = vrot.lane.b32.xlu0 %v407, 28
      %v713 = vpop.permute.xlu0 %712
      %714 = vrot.lane.b32.xlu0 %v416, 28
      %v715 = vpop.permute.xlu0 %714
      %716 = vrot.lane.b32.xlu0 %v417, 28
      %v717 = vpop.permute.xlu0 %716
      %718 = vrot.lane.b32.xlu0 %v419, 28
      %v719 = vpop.permute.xlu0 %718
      %720 = vrot.lane.b32.xlu0 %v421, 28
      %v721 = vpop.permute.xlu0 %720
      %722 = vrot.lane.b32.xlu0 %v423, 28
      %v723 = vpop.permute.xlu0 %722
      %724 = vrot.lane.b32.xlu0 %v425, 28
      %v725 = vpop.permute.xlu0 %724
      %726 = vrot.lane.b32.xlu0 %v427, 28
      %v727 = vpop.permute.xlu0 %726
      %728 = vrot.lane.b32.xlu0 %v429, 28
      %v729 = vpop.permute.xlu0 %728
      %730 = vrot.lane.b32.xlu0 %v372, 35
      %v731 = vpop.permute.xlu0 %730
      %732 = vrot.lane.b32.xlu0 %v373, 35
      %v733 = vpop.permute.xlu0 %732
      %734 = vrot.lane.b32.xlu0 %v375, 35
      %v735 = vpop.permute.xlu0 %734
      %736 = vrot.lane.b32.xlu0 %v377, 35
      %v737 = vpop.permute.xlu0 %736
      %738 = vrot.lane.b32.xlu0 %v379, 35
      %v739 = vpop.permute.xlu0 %738
      %740 = vrot.lane.b32.xlu0 %v381, 35
      %v741 = vpop.permute.xlu0 %740
      %742 = vrot.lane.b32.xlu0 %v383, 35
      %v743 = vpop.permute.xlu0 %742
      %744 = vrot.lane.b32.xlu0 %v385, 35
      %v745 = vpop.permute.xlu0 %744
      %746 = vrot.lane.b32.xlu0 %v394, 35
      %v747 = vpop.permute.xlu0 %746
      %748 = vrot.lane.b32.xlu0 %v395, 35
      %v749 = vpop.permute.xlu0 %748
      %750 = vrot.lane.b32.xlu0 %v397, 35
      %v751 = vpop.permute.xlu0 %750
      %752 = vrot.lane.b32.xlu0 %v399, 35
      %v753 = vpop.permute.xlu0 %752
      %754 = vrot.lane.b32.xlu0 %v401, 35
      %v755 = vpop.permute.xlu0 %754
      %756 = vrot.lane.b32.xlu0 %v403, 35
      %v757 = vpop.permute.xlu0 %756
      %758 = vrot.lane.b32.xlu0 %v405, 35
      %v759 = vpop.permute.xlu0 %758
      %760 = vrot.lane.b32.xlu0 %v407, 35
      %v761 = vpop.permute.xlu0 %760
      %762 = vrot.lane.b32.xlu0 %v416, 35
      %v763 = vpop.permute.xlu0 %762
      %764 = vrot.lane.b32.xlu0 %v417, 35
      %v765 = vpop.permute.xlu0 %764
      %766 = vrot.lane.b32.xlu0 %v419, 35
      %v767 = vpop.permute.xlu0 %766
      %768 = vrot.lane.b32.xlu0 %v421, 35
      %v769 = vpop.permute.xlu0 %768
      %770 = vrot.lane.b32.xlu0 %v423, 35
      %v771 = vpop.permute.xlu0 %770
      %772 = vrot.lane.b32.xlu0 %v425, 35
      %v773 = vpop.permute.xlu0 %772
      %774 = vrot.lane.b32.xlu0 %v427, 35
      %v775 = vpop.permute.xlu0 %774
      %776 = vrot.lane.b32.xlu0 %v429, 35
      %v777 = vpop.permute.xlu0 %776
      %778 = vrot.lane.b32.xlu0 %v438, 35
      %v779 = vpop.permute.xlu0 %778
      %780 = vrot.lane.b32.xlu0 %v439, 35
      %v781 = vpop.permute.xlu0 %780
      %782 = vrot.lane.b32.xlu0 %v441, 35
      %v783 = vpop.permute.xlu0 %782
      %784 = vrot.lane.b32.xlu0 %v443, 35
      %v785 = vpop.permute.xlu0 %784
      %786 = vrot.lane.b32.xlu0 %v445, 35
      %v787 = vpop.permute.xlu0 %786
      %788 = vrot.lane.b32.xlu0 %v447, 35
      %v789 = vpop.permute.xlu0 %788
      %790 = vrot.lane.b32.xlu0 %v449, 35
      %v791 = vpop.permute.xlu0 %790
      %792 = vrot.lane.b32.xlu0 %v451, 35
      %v793 = vpop.permute.xlu0 %792
      %794 = vrot.lane.b32.xlu0 %v394, 42
      %v795 = vpop.permute.xlu0 %794
      %796 = vrot.lane.b32.xlu0 %v395, 42
      %v797 = vpop.permute.xlu0 %796
      %798 = vrot.lane.b32.xlu0 %v397, 42
      %v799 = vpop.permute.xlu0 %798
      %800 = vrot.lane.b32.xlu0 %v399, 42
      %v801 = vpop.permute.xlu0 %800
      %802 = vrot.lane.b32.xlu0 %v401, 42
      %v803 = vpop.permute.xlu0 %802
      %804 = vrot.lane.b32.xlu0 %v403, 42
      %v805 = vpop.permute.xlu0 %804
      %806 = vrot.lane.b32.xlu0 %v405, 42
      %v807 = vpop.permute.xlu0 %806
      %808 = vrot.lane.b32.xlu0 %v407, 42
      %v809 = vpop.permute.xlu0 %808
      %810 = vrot.lane.b32.xlu0 %v416, 42
      %v811 = vpop.permute.xlu0 %810
      %812 = vrot.lane.b32.xlu0 %v417, 42
      %v813 = vpop.permute.xlu0 %812
      %814 = vrot.lane.b32.xlu0 %v419, 42
      %v815 = vpop.permute.xlu0 %814
      %816 = vrot.lane.b32.xlu0 %v421, 42
      %v817 = vpop.permute.xlu0 %816
      %818 = vrot.lane.b32.xlu0 %v423, 42
      %v819 = vpop.permute.xlu0 %818
      %820 = vrot.lane.b32.xlu0 %v425, 42
      %v821 = vpop.permute.xlu0 %820
      %822 = vrot.lane.b32.xlu0 %v427, 42
      %v823 = vpop.permute.xlu0 %822
      %824 = vrot.lane.b32.xlu0 %v429, 42
      %v825 = vpop.permute.xlu0 %824
      %826 = vrot.lane.b32.xlu0 %v438, 42
      %v827 = vpop.permute.xlu0 %826
      %828 = vrot.lane.b32.xlu0 %v439, 42
      %v829 = vpop.permute.xlu0 %828
      %830 = vrot.lane.b32.xlu0 %v441, 42
      %v831 = vpop.permute.xlu0 %830
      %832 = vrot.lane.b32.xlu0 %v443, 42
      %v833 = vpop.permute.xlu0 %832
      %834 = vrot.lane.b32.xlu0 %v445, 42
      %v835 = vpop.permute.xlu0 %834
      %836 = vrot.lane.b32.xlu0 %v447, 42
      %v837 = vpop.permute.xlu0 %836
      %838 = vrot.lane.b32.xlu0 %v449, 42
      %v839 = vpop.permute.xlu0 %838
      %840 = vrot.lane.b32.xlu0 %v451, 42
      %v841 = vpop.permute.xlu0 %840
      %842 = vrot.lane.b32.xlu0 %v460, 42
      %v843 = vpop.permute.xlu0 %842
      %844 = vrot.lane.b32.xlu0 %v461, 42
      %v845 = vpop.permute.xlu0 %844
      %846 = vrot.lane.b32.xlu0 %v463, 42
      %v847 = vpop.permute.xlu0 %846
      %848 = vrot.lane.b32.xlu0 %v465, 42
      %v849 = vpop.permute.xlu0 %848
      %850 = vrot.lane.b32.xlu0 %v467, 42
      %v851 = vpop.permute.xlu0 %850
      %852 = vrot.lane.b32.xlu0 %v469, 42
      %v853 = vpop.permute.xlu0 %852
      %854 = vrot.lane.b32.xlu0 %v471, 42
      %v855 = vpop.permute.xlu0 %854
      %856 = vrot.lane.b32.xlu0 %v473, 42
      %v857 = vpop.permute.xlu0 %856
      %vm858 = vcmask 56320
      %v861 = vsel %vm858, %v262, %v475
      %v864 = vsel %vm858, %v263, %v477
      %v867 = vsel %vm858, %v265, %v479
      %v870 = vsel %vm858, %v267, %v481
      %v873 = vsel %vm858, %v269, %v483
      %v876 = vsel %vm858, %v271, %v485
      %v879 = vsel %vm858, %v273, %v487
      %v882 = vsel %vm858, %v275, %v489
      %v885 = vsel %vm858, %v284, %v491
      %v888 = vsel %vm858, %v285, %v493
      %v891 = vsel %vm858, %v287, %v495
      %v894 = vsel %vm858, %v289, %v497
      %v897 = vsel %vm858, %v291, %v499
      %v900 = vsel %vm858, %v293, %v501
      %v903 = vsel %vm858, %v295, %v503
      %v906 = vsel %vm858, %v297, %v505
      %v909 = vsel %vm858, %v306, %v507
      %v912 = vsel %vm858, %v307, %v509
      %v915 = vsel %vm858, %v309, %v511
      %v918 = vsel %vm858, %v311, %v513
      %v921 = vsel %vm858, %v313, %v515
      %v924 = vsel %vm858, %v315, %v517
      %v927 = vsel %vm858, %v317, %v519
      %v930 = vsel %vm858, %v319, %v521
      %v933 = vsel %vm858, %v328, %v523
      %v936 = vsel %vm858, %v329, %v525
      %v939 = vsel %vm858, %v331, %v527
      %v942 = vsel %vm858, %v333, %v529
      %v945 = vsel %vm858, %v335, %v531
      %v948 = vsel %vm858, %v337, %v533
      %v951 = vsel %vm858, %v339, %v535
      %v954 = vsel %vm858, %v341, %v537
      %vm955 = vcmask 113664
      %v957 = vsel %vm955, %v861, %v539
      %v959 = vsel %vm955, %v864, %v541
      %v961 = vsel %vm955, %v867, %v543
      %v963 = vsel %vm955, %v870, %v545
      %v965 = vsel %vm955, %v873, %v547
      %v967 = vsel %vm955, %v876, %v549
      %v969 = vsel %vm955, %v879, %v551
      %v971 = vsel %vm955, %v882, %v553
      %v973 = vsel %vm955, %v885, %v555
      %v975 = vsel %vm955, %v888, %v557
      %v977 = vsel %vm955, %v891, %v559
      %v979 = vsel %vm955, %v894, %v561
      %v981 = vsel %vm955, %v897, %v563
      %v983 = vsel %vm955, %v900, %v565
      %v985 = vsel %vm955, %v903, %v567
      %v987 = vsel %vm955, %v906, %v569
      %v989 = vsel %vm955, %v909, %v571
      %v991 = vsel %vm955, %v912, %v573
      %v993 = vsel %vm955, %v915, %v575
      %v995 = vsel %vm955, %v918, %v577
      %v997 = vsel %vm955, %v921, %v579
      %v999 = vsel %vm955, %v924, %v581
      %v1001 = vsel %vm955, %v927, %v583
      %v1003 = vsel %vm955, %v930, %v585
      %v1005 = vsel %vm955, %v933, %v587
      %v1007 = vsel %vm955, %v936, %v589
      %v1009 = vsel %vm955, %v939, %v591
      %v1011 = vsel %vm955, %v942, %v593
      %v1013 = vsel %vm955, %v945, %v595
      %v1015 = vsel %vm955, %v948, %v597
      %v1017 = vsel %vm955, %v951, %v599
      %v1019 = vsel %vm955, %v954, %v601
      %vm1020 = vcmask 171008
      %v1022 = vsel %vm1020, %v957, %v603
      %v1024 = vsel %vm1020, %v959, %v605
      %v1026 = vsel %vm1020, %v961, %v607
      %v1028 = vsel %vm1020, %v963, %v609
      %v1030 = vsel %vm1020, %v965, %v611
      %v1032 = vsel %vm1020, %v967, %v613
      %v1034 = vsel %vm1020, %v969, %v615
      %v1036 = vsel %vm1020, %v971, %v617
      %v1038 = vsel %vm1020, %v973, %v619
      %v1040 = vsel %vm1020, %v975, %v621
      %v1042 = vsel %vm1020, %v977, %v623
      %v1044 = vsel %vm1020, %v979, %v625
      %v1046 = vsel %vm1020, %v981, %v627
      %v1048 = vsel %vm1020, %v983, %v629
      %v1050 = vsel %vm1020, %v985, %v631
      %v1052 = vsel %vm1020, %v987, %v633
      %v1054 = vsel %vm1020, %v989, %v635
      %v1056 = vsel %vm1020, %v991, %v637
      %v1058 = vsel %vm1020, %v993, %v639
      %v1060 = vsel %vm1020, %v995, %v641
      %v1062 = vsel %vm1020, %v997, %v643
      %v1064 = vsel %vm1020, %v999, %v645
      %v1066 = vsel %vm1020, %v1001, %v647
      %v1068 = vsel %vm1020, %v1003, %v649
      %v1070 = vsel %vm1020, %v1005, %v651
      %v1072 = vsel %vm1020, %v1007, %v653
      %v1074 = vsel %vm1020, %v1009, %v655
      %v1076 = vsel %vm1020, %v1011, %v657
      %v1078 = vsel %vm1020, %v1013, %v659
      %v1080 = vsel %vm1020, %v1015, %v661
      %v1082 = vsel %vm1020, %v1017, %v663
      %v1084 = vsel %vm1020, %v1019, %v665
      %vm1085 = vcmask 228352
      %v1087 = vsel %vm1085, %v1022, %v667
      %v1089 = vsel %vm1085, %v1024, %v669
      %v1091 = vsel %vm1085, %v1026, %v671
      %v1093 = vsel %vm1085, %v1028, %v673
      %v1095 = vsel %vm1085, %v1030, %v675
      %v1097 = vsel %vm1085, %v1032, %v677
      %v1099 = vsel %vm1085, %v1034, %v679
      %v1101 = vsel %vm1085, %v1036, %v681
      %v1103 = vsel %vm1085, %v1038, %v683
      %v1105 = vsel %vm1085, %v1040, %v685
      %v1107 = vsel %vm1085, %v1042, %v687
      %v1109 = vsel %vm1085, %v1044, %v689
      %v1111 = vsel %vm1085, %v1046, %v691
      %v1113 = vsel %vm1085, %v1048, %v693
      %v1115 = vsel %vm1085, %v1050, %v695
      %v1117 = vsel %vm1085, %v1052, %v697
      %v1119 = vsel %vm1085, %v1054, %v699
      %v1121 = vsel %vm1085, %v1056, %v701
      %v1123 = vsel %vm1085, %v1058, %v703
      %v1125 = vsel %vm1085, %v1060, %v705
      %v1127 = vsel %vm1085, %v1062, %v707
      %v1129 = vsel %vm1085, %v1064, %v709
      %v1131 = vsel %vm1085, %v1066, %v711
      %v1133 = vsel %vm1085, %v1068, %v713
      %v1135 = vsel %vm1085, %v1070, %v715
      %v1137 = vsel %vm1085, %v1072, %v717
      %v1139 = vsel %vm1085, %v1074, %v719
      %v1141 = vsel %vm1085, %v1076, %v721
      %v1143 = vsel %vm1085, %v1078, %v723
      %v1145 = vsel %vm1085, %v1080, %v725
      %v1147 = vsel %vm1085, %v1082, %v727
      %v1149 = vsel %vm1085, %v1084, %v729
      %vm1150 = vcmask 285696
      %v1152 = vsel %vm1150, %v1087, %v731
      %v1154 = vsel %vm1150, %v1089, %v733
      %v1156 = vsel %vm1150, %v1091, %v735
      %v1158 = vsel %vm1150, %v1093, %v737
      %v1160 = vsel %vm1150, %v1095, %v739
      %v1162 = vsel %vm1150, %v1097, %v741
      %v1164 = vsel %vm1150, %v1099, %v743
      %v1166 = vsel %vm1150, %v1101, %v745
      %v1168 = vsel %vm1150, %v1103, %v747
      %v1170 = vsel %vm1150, %v1105, %v749
      %v1172 = vsel %vm1150, %v1107, %v751
      %v1174 = vsel %vm1150, %v1109, %v753
      %v1176 = vsel %vm1150, %v1111, %v755
      %v1178 = vsel %vm1150, %v1113, %v757
      %v1180 = vsel %vm1150, %v1115, %v759
      %v1182 = vsel %vm1150, %v1117, %v761
      %v1184 = vsel %vm1150, %v1119, %v763
      %v1186 = vsel %vm1150, %v1121, %v765
      %v1188 = vsel %vm1150, %v1123, %v767
      %v1190 = vsel %vm1150, %v1125, %v769
      %v1192 = vsel %vm1150, %v1127, %v771
      %v1194 = vsel %vm1150, %v1129, %v773
      %v1196 = vsel %vm1150, %v1131, %v775
      %v1198 = vsel %vm1150, %v1133, %v777
      %v1200 = vsel %vm1150, %v1135, %v779
      %v1202 = vsel %vm1150, %v1137, %v781
      %v1204 = vsel %vm1150, %v1139, %v783
      %v1206 = vsel %vm1150, %v1141, %v785
      %v1208 = vsel %vm1150, %v1143, %v787
      %v1210 = vsel %vm1150, %v1145, %v789
      %v1212 = vsel %vm1150, %v1147, %v791
      %v1214 = vsel %vm1150, %v1149, %v793
      %vm1215 = vcmask 343040
      %v1217 = vsel %vm1215, %v1152, %v795
      %v1220 = vsel %vm1215, %v1154, %v797
      %v1223 = vsel %vm1215, %v1156, %v799
      %v1226 = vsel %vm1215, %v1158, %v801
      %v1229 = vsel %vm1215, %v1160, %v803
      %v1232 = vsel %vm1215, %v1162, %v805
      %v1235 = vsel %vm1215, %v1164, %v807
      %v1238 = vsel %vm1215, %v1166, %v809
      %v1241 = vsel %vm1215, %v1168, %v811
      %v1244 = vsel %vm1215, %v1170, %v813
      %v1247 = vsel %vm1215, %v1172, %v815
      %v1250 = vsel %vm1215, %v1174, %v817
      %v1253 = vsel %vm1215, %v1176, %v819
      %v1256 = vsel %vm1215, %v1178, %v821
      %v1259 = vsel %vm1215, %v1180, %v823
      %v1262 = vsel %vm1215, %v1182, %v825
      %v1265 = vsel %vm1215, %v1184, %v827
      %v1268 = vsel %vm1215, %v1186, %v829
      %v1271 = vsel %vm1215, %v1188, %v831
      %v1274 = vsel %vm1215, %v1190, %v833
      %v1277 = vsel %vm1215, %v1192, %v835
      %v1280 = vsel %vm1215, %v1194, %v837
      %v1283 = vsel %vm1215, %v1196, %v839
      %v1286 = vsel %vm1215, %v1198, %v841
      %v1289 = vsel %vm1215, %v1200, %v843
      %v1292 = vsel %vm1215, %v1202, %v845
      %v1295 = vsel %vm1215, %v1204, %v847
      %v1298 = vsel %vm1215, %v1206, %v849
      %v1301 = vsel %vm1215, %v1208, %v851
      %v1304 = vsel %vm1215, %v1210, %v853
      %v1307 = vsel %vm1215, %v1212, %v855
      %v1310 = vsel %vm1215, %v1214, %v857
      %v1328 = vunpack.c.l.b16 %v189
      %v1329 = vunpack.c.h.b16 %v189
      %v1330 = vunpack.c.l.b16 %v190
      %v1331 = vunpack.c.h.b16 %v190
      %v1332 = vunpack.c.l.b16 %v191
      %v1333 = vunpack.c.h.b16 %v191
      %v1334 = vunpack.c.l.b16 %v192
      %v1335 = vunpack.c.h.b16 %v192
      %v1336 = vunpack.c.l.b16 %v193
      %v1337 = vunpack.c.h.b16 %v193
      %v1338 = vunpack.c.l.b16 %v194
      %v1339 = vunpack.c.h.b16 %v194
      %v1340 = vunpack.c.l.b16 %v195
      %v1341 = vunpack.c.h.b16 %v195
      %v1342 = vunpack.c.l.b16 %v196
      %v1343 = vunpack.c.h.b16 %v196
      %v1344 = vunpack.c.l.b16 %v197
      %v1345 = vunpack.c.h.b16 %v197
      %v1346 = vunpack.c.l.b16 %v198
      %v1347 = vunpack.c.h.b16 %v198
      %v1348 = vunpack.c.l.b16 %v199
      %v1349 = vunpack.c.h.b16 %v199
      %v1350 = vunpack.c.l.b16 %v200
      %v1351 = vunpack.c.h.b16 %v200
      %v1352 = vunpack.c.l.b16 %v201
      %v1353 = vunpack.c.h.b16 %v201
      %v1354 = vunpack.c.l.b16 %v202
      %v1355 = vunpack.c.h.b16 %v202
      %v1356 = vunpack.c.l.b16 %v203
      %v1357 = vunpack.c.h.b16 %v203
      %v1358 = vunpack.c.l.b16 %v204
      %v1359 = vunpack.c.h.b16 %v204
      %v1360 = vpack.c.b16 %v1332, %v1328
      %v1361 = vpack.c.b16 %v1333, %v1329
      %v1362 = vpack.c.b16 %v1334, %v1330
      %v1363 = vpack.c.b16 %v1335, %v1331
      %v1364 = vpack.c.b16 %v1340, %v1336
      %v1365 = vpack.c.b16 %v1341, %v1337
      %v1366 = vpack.c.b16 %v1342, %v1338
      %v1367 = vpack.c.b16 %v1343, %v1339
      %v1368 = vpack.c.b16 %v1348, %v1344
      %v1369 = vpack.c.b16 %v1349, %v1345
      %v1370 = vpack.c.b16 %v1350, %v1346
      %v1371 = vpack.c.b16 %v1351, %v1347
      %v1372 = vpack.c.b16 %v1356, %v1352
      %v1373 = vpack.c.b16 %v1357, %v1353
      %v1374 = vpack.c.b16 %v1358, %v1354
      %v1375 = vpack.c.b16 %v1359, %v1355
      %1392 = vmatpush.bf16.msra.mxu0 %v1238
      %1393 = vmatpush.bf16.msra.mxu0 %v1235
      %1394 = vmatpush.bf16.msra.mxu0 %v1232
      %1395 = vmatpush.bf16.msra.mxu0 %v1229
      %1396 = vmatpush.bf16.msra.mxu0 %v1226
      %1397 = vmatpush.bf16.msra.mxu0 %v1223
      %1398 = vmatpush.bf16.msra.mxu0 %v1220
      %1399 = vmatpush.bf16.msra.mxu0 %v1217
      %1400 = vmatmul.bf16.gmra.mxu0 %v1360
      %v1401 = vpop.f32.mrf.mxu0
      %v1402 = vadd.f32 0.0, %v1401
      %v1403 = vpop.f32.mrf.mxu0
      %v1404 = vadd.f32 0.0, %v1403
      %1405 = vmatmul.bf16.gmra.mxu0 %v1364
      %v1406 = vpop.f32.mrf.mxu0
      %v1407 = vadd.f32 0.0, %v1406
      %v1408 = vpop.f32.mrf.mxu0
      %v1409 = vadd.f32 0.0, %v1408
      %1410 = vmatmul.bf16.gmra.mxu0 %v1368
      %v1411 = vpop.f32.mrf.mxu0
      %v1412 = vadd.f32 0.0, %v1411
      %v1413 = vpop.f32.mrf.mxu0
      %v1414 = vadd.f32 0.0, %v1413
      %1415 = vmatmul.bf16.gmra.mxu0 %v1372
      %v1416 = vpop.f32.mrf.mxu0
      %v1417 = vadd.f32 0.0, %v1416
      %v1418 = vpop.f32.mrf.mxu0
      %v1419 = vadd.f32 0.0, %v1418
      %1420 = vdwg.mxu0
      %1421 = vmatpush.bf16.msra.mxu0 %v1262
      %1422 = vmatpush.bf16.msra.mxu0 %v1259
      %1423 = vmatpush.bf16.msra.mxu0 %v1256
      %1424 = vmatpush.bf16.msra.mxu0 %v1253
      %1425 = vmatpush.bf16.msra.mxu0 %v1250
      %1426 = vmatpush.bf16.msra.mxu0 %v1247
      %1427 = vmatpush.bf16.msra.mxu0 %v1244
      %1428 = vmatpush.bf16.msra.mxu0 %v1241
      %1429 = vmatmul.bf16.gmra.mxu0 %v1361
      %v1430 = vpop.f32.mrf.mxu0
      %v1431 = vadd.f32 %v1402, %v1430
      %v1432 = vpop.f32.mrf.mxu0
      %v1433 = vadd.f32 %v1404, %v1432
      %1434 = vmatmul.bf16.gmra.mxu0 %v1365
      %v1435 = vpop.f32.mrf.mxu0
      %v1436 = vadd.f32 %v1407, %v1435
      %v1437 = vpop.f32.mrf.mxu0
      %v1438 = vadd.f32 %v1409, %v1437
      %1439 = vmatmul.bf16.gmra.mxu0 %v1369
      %v1440 = vpop.f32.mrf.mxu0
      %v1441 = vadd.f32 %v1412, %v1440
      %v1442 = vpop.f32.mrf.mxu0
      %v1443 = vadd.f32 %v1414, %v1442
      %1444 = vmatmul.bf16.gmra.mxu0 %v1373
      %v1445 = vpop.f32.mrf.mxu0
      %v1446 = vadd.f32 %v1417, %v1445
      %v1447 = vpop.f32.mrf.mxu0
      %v1448 = vadd.f32 %v1419, %v1447
      %1449 = vdwg.mxu0
      %1450 = vmatpush.bf16.msra.mxu0 %v1286
      %1451 = vmatpush.bf16.msra.mxu0 %v1283
      %1452 = vmatpush.bf16.msra.mxu0 %v1280
      %1453 = vmatpush.bf16.msra.mxu0 %v1277
      %1454 = vmatpush.bf16.msra.mxu0 %v1274
      %1455 = vmatpush.bf16.msra.mxu0 %v1271
      %1456 = vmatpush.bf16.msra.mxu0 %v1268
      %1457 = vmatpush.bf16.msra.mxu0 %v1265
      %1458 = vmatmul.bf16.gmra.mxu0 %v1362
      %v1459 = vpop.f32.mrf.mxu0
      %v1460 = vadd.f32 %v1431, %v1459
      %v1461 = vpop.f32.mrf.mxu0
      %v1462 = vadd.f32 %v1433, %v1461
      %1463 = vmatmul.bf16.gmra.mxu0 %v1366
      %v1464 = vpop.f32.mrf.mxu0
      %v1465 = vadd.f32 %v1436, %v1464
      %v1466 = vpop.f32.mrf.mxu0
      %v1467 = vadd.f32 %v1438, %v1466
      %1468 = vmatmul.bf16.gmra.mxu0 %v1370
      %v1469 = vpop.f32.mrf.mxu0
      %v1470 = vadd.f32 %v1441, %v1469
      %v1471 = vpop.f32.mrf.mxu0
      %v1472 = vadd.f32 %v1443, %v1471
      %1473 = vmatmul.bf16.gmra.mxu0 %v1374
      %v1474 = vpop.f32.mrf.mxu0
      %v1475 = vadd.f32 %v1446, %v1474
      %v1476 = vpop.f32.mrf.mxu0
      %v1477 = vadd.f32 %v1448, %v1476
      %1478 = vdwg.mxu0
      %1479 = vmatpush.bf16.msra.mxu0 %v1310
      %1480 = vmatpush.bf16.msra.mxu0 %v1307
      %1481 = vmatpush.bf16.msra.mxu0 %v1304
      %1482 = vmatpush.bf16.msra.mxu0 %v1301
      %1483 = vmatpush.bf16.msra.mxu0 %v1298
      %1484 = vmatpush.bf16.msra.mxu0 %v1295
      %1485 = vmatpush.bf16.msra.mxu0 %v1292
      %1486 = vmatpush.bf16.msra.mxu0 %v1289
      %1487 = vmatmul.bf16.gmra.mxu0 %v1363
      %v1488 = vpop.f32.mrf.mxu0
      %v1489 = vadd.f32 %v1460, %v1488
      %v1490 = vpop.f32.mrf.mxu0
      %v1491 = vadd.f32 %v1462, %v1490
      %1492 = vmatmul.bf16.gmra.mxu0 %v1367
      %v1493 = vpop.f32.mrf.mxu0
      %v1494 = vadd.f32 %v1465, %v1493
      %v1495 = vpop.f32.mrf.mxu0
      %v1496 = vadd.f32 %v1467, %v1495
      %1497 = vmatmul.bf16.gmra.mxu0 %v1371
      %v1498 = vpop.f32.mrf.mxu0
      %v1499 = vadd.f32 %v1470, %v1498
      %v1500 = vpop.f32.mrf.mxu0
      %v1501 = vadd.f32 %v1472, %v1500
      %1502 = vmatmul.bf16.gmra.mxu0 %v1375
      %v1503 = vpop.f32.mrf.mxu0
      %v1504 = vadd.f32 %v1475, %v1503
      %v1505 = vpop.f32.mrf.mxu0
      %v1506 = vadd.f32 %v1477, %v1505
      %1507 = vdwg.mxu0
      %v1508 = vpack.c.bf16 %v1489, %v1489
      %v1509 = vpack.c.bf16 %v1491, %v1491
      %v1510 = vpack.c.bf16 %v1494, %v1494
      %v1511 = vpack.c.bf16 %v1496, %v1496
      %v1512 = vpack.c.bf16 %v1499, %v1499
      %v1513 = vpack.c.bf16 %v1501, %v1501
      %v1514 = vpack.c.bf16 %v1504, %v1504
      %v1515 = vpack.c.bf16 %v1506, %v1506
      %vm1516 = vcmask 396288
      %1517 = vst.msk [vmem:[%s183] sm:$0xf] %vm1516, %v1508
      %1518 = vst.msk [vmem:[%s183 + $0x4] sm:$0xf] %vm1516, %v1509
      %1519 = vst.msk [vmem:[%s183 + $0x8] sm:$0xf] %vm1516, %v1510
      %1520 = vst.msk [vmem:[%s183 + $0xc] sm:$0xf] %vm1516, %v1511
      %1521 = vst.msk [vmem:[%s183 + $0x10] sm:$0xf] %vm1516, %v1512
      %1522 = vst.msk [vmem:[%s183 + $0x14] sm:$0xf] %vm1516, %v1513
      %1523 = vst.msk [vmem:[%s183 + $0x18] sm:$0xf] %vm1516, %v1514
      %1524 = vst.msk [vmem:[%s183 + $0x1c] sm:$0xf] %vm1516, %v1515
      %vm1525 = vcmask 400384
      %v1526 = vsel %vm1525, %v1489, 0.0
      %1527 = vadd.xlane.f32.xlu0 %v1526
      %v1528 = vpop.xlane.xlu0 %1527
      %v1529 = vsel %vm1525, %v1491, 0.0
      %1530 = vadd.xlane.f32.xlu0 %v1529
      %v1531 = vpop.xlane.xlu0 %1530
      %v1532 = vsel %vm1525, %v1494, 0.0
      %1533 = vadd.xlane.f32.xlu0 %v1532
      %v1534 = vpop.xlane.xlu0 %1533
      %v1535 = vsel %vm1525, %v1496, 0.0
      %1536 = vadd.xlane.f32.xlu0 %v1535
      %v1537 = vpop.xlane.xlu0 %1536
      %v1538 = vsel %vm1525, %v1499, 0.0
      %1539 = vadd.xlane.f32.xlu0 %v1538
      %v1540 = vpop.xlane.xlu0 %1539
      %v1541 = vsel %vm1525, %v1501, 0.0
      %1542 = vadd.xlane.f32.xlu0 %v1541
      %v1543 = vpop.xlane.xlu0 %1542
      %v1544 = vsel %vm1525, %v1504, 0.0
      %1545 = vadd.xlane.f32.xlu0 %v1544
      %v1546 = vpop.xlane.xlu0 %1545
      %v1547 = vsel %vm1525, %v1506, 0.0
      %1548 = vadd.xlane.f32.xlu0 %v1547
      %v1549 = vpop.xlane.xlu0 %1548
      %v1550 = vmul.f32 %v1489, %v1489
      %v1551 = vmul.f32 %v1491, %v1491
      %v1552 = vmul.f32 %v1494, %v1494
      %v1553 = vmul.f32 %v1496, %v1496
      %v1554 = vmul.f32 %v1499, %v1499
      %v1555 = vmul.f32 %v1501, %v1501
      %v1556 = vmul.f32 %v1504, %v1504
      %v1557 = vmul.f32 %v1506, %v1506
      %v1558 = vsel %vm1525, %v1550, 0.0
      %1559 = vadd.xlane.f32.xlu0 %v1558
      %v1560 = vpop.xlane.xlu0 %1559
      %v1561 = vsel %vm1525, %v1551, 0.0
      %1562 = vadd.xlane.f32.xlu0 %v1561
      %v1563 = vpop.xlane.xlu0 %1562
      %v1564 = vsel %vm1525, %v1552, 0.0
      %1565 = vadd.xlane.f32.xlu0 %v1564
      %v1566 = vpop.xlane.xlu0 %1565
      %v1567 = vsel %vm1525, %v1553, 0.0
      %1568 = vadd.xlane.f32.xlu0 %v1567
      %v1569 = vpop.xlane.xlu0 %1568
      %v1570 = vsel %vm1525, %v1554, 0.0
      %1571 = vadd.xlane.f32.xlu0 %v1570
      %v1572 = vpop.xlane.xlu0 %1571
      %v1573 = vsel %vm1525, %v1555, 0.0
      %1574 = vadd.xlane.f32.xlu0 %v1573
      %v1575 = vpop.xlane.xlu0 %1574
      %v1576 = vsel %vm1525, %v1556, 0.0
      %1577 = vadd.xlane.f32.xlu0 %v1576
      %v1578 = vpop.xlane.xlu0 %1577
      %v1579 = vsel %vm1525, %v1557, 0.0
      %1580 = vadd.xlane.f32.xlu0 %v1579
      %v1581 = vpop.xlane.xlu0 %1580
      %vm1582 = vcmask 7168
      %v1583 = vsel %vm1582, %v1528, %v1560
      %v1584 = vsel %vm1582, %v1531, %v1563
      %v1585 = vsel %vm1582, %v1534, %v1566
      %v1586 = vsel %vm1582, %v1537, %v1569
      %v1587 = vsel %vm1582, %v1540, %v1572
      %v1588 = vsel %vm1582, %v1543, %v1575
      %v1589 = vsel %vm1582, %v1546, %v1578
      %v1590 = vsel %vm1582, %v1549, %v1581
      %vm1591 = vcmask 15360
      %1592 = vst.msk [vmem:[%s188] sm:$0xff] %vm1591, %v1583
      %1593 = vst.msk [vmem:[%s188 + $0x8] sm:$0xff] %vm1591, %v1584
      %1594 = vst.msk [vmem:[%s188 + $0x10] sm:$0xff] %vm1591, %v1585
      %1595 = vst.msk [vmem:[%s188 + $0x18] sm:$0xff] %vm1591, %v1586
      %1596 = vst.msk [vmem:[%s188 + $0x20] sm:$0xff] %vm1591, %v1587
      %1597 = vst.msk [vmem:[%s188 + $0x28] sm:$0xff] %vm1591, %v1588
      %1598 = vst.msk [vmem:[%s188 + $0x30] sm:$0xff] %vm1591, %v1589
      %1599 = vst.msk [vmem:[%s188 + $0x38] sm:$0xff] %vm1591, %v1590
      %p1600 = scmp.lt.s32.totalorder %s15, 1
      %s1601 = scalar_select %p1600, %s15, 1
      %s1602 = smul.addr %s1601, 8
      %s1603 = smul.addr %s1602, 4
      %s1604 = scalar_lea.vmem %s2, %s1603
      %p1605 = scmp.lt.s32.totalorder %s15, 1
      %s1606 = scalar_select %p1605, %s15, 1
      %s1607 = smul.addr %s1606, 8
      %s1608 = smul.addr %s1607, 8
      %s1609 = scalar_lea.vmem %s3, %s1608
      // Predicated region
      $region29: #{pallas_forward.8} parent=27 // pred_check
        %p1610 = pneg %p80
      $region30: #{pallas_forward.8} parent=27 // pred_check_branch
        %1612 = sbr.rel (%p1610) target = $region32
      $region31: #{pallas_forward.8} parent=27 // pred_region
        _
      $region32: #{pallas_forward.8} parent=27 // pred_fallthru
        _
      // Predicated region
      $region33: #{pallas_forward.8} parent=27 // pred_check
        %p1613 = pneg %p106
      $region34: #{pallas_forward.8} parent=27 // pred_check_branch
        %1615 = sbr.rel (%p1613) target = $region36
      $region35: #{pallas_forward.8} parent=27 // pred_region
        _
      $region36: #{pallas_forward.8} parent=27 // pred_fallthru
        _
    $region28: #{pallas_forward.8} parent=5 // pred_fallthru
      _
    %p1616 = scmp.le.s32.totalorder 2, %s10
    // Predicated region
    $region37: #{pallas_forward.8} parent=5 // pred_check
      %p1617 = pneg %p1616
    $region38: #{pallas_forward.8} parent=5 // pred_check_branch
      %1619 = sbr.rel (%p1617) target = $region40
    $region39: #{pallas_forward.8} parent=5 // pred_region
      %s1620 = ssub.s32 %s10, 2
      // Predicated region
      $region41: #{pallas_forward.8} parent=39 // pred_check
        %p1621 = pneg %p86
      $region42: #{pallas_forward.8} parent=39 // pred_check_branch
        %1623 = sbr.rel (%p1621) target = $region44
      $region43: #{pallas_forward.8} parent=39 // pred_region
        %p1624 = scmp.lt.s32.totalorder %s16, 1
        %s1625 = scalar_select %p1624, %s16, 1
        %s1626 = smul.addr %s1625, 8
        %s1627 = smul.addr %s1626, 4
        %s1628 = scalar_lea.vmem %s2, %s1627
      $region44: #{pallas_forward.8} parent=39 // pred_fallthru
        _
      // Predicated region
      $region45: #{pallas_forward.8} parent=39 // pred_check
        %p1629 = pneg %p112
      $region46: #{pallas_forward.8} parent=39 // pred_check_branch
        %1631 = sbr.rel (%p1629) target = $region48
      $region47: #{pallas_forward.8} parent=39 // pred_region
        %p1632 = scmp.lt.s32.totalorder %s16, 1
        %s1633 = scalar_select %p1632, %s16, 1
        %s1634 = smul.addr %s1633, 8
        %s1635 = smul.addr %s1634, 8
        %s1636 = scalar_lea.vmem %s3, %s1635
      $region48: #{pallas_forward.8} parent=39 // pred_fallthru
        _
    $region40: #{pallas_forward.8} parent=5 // pred_fallthru
      _
  $region6: #{pallas_forward.8} parent=0 // loop_footer
    %s14 = sadd.s32 1, %s10
  $region7: #{pallas_forward.8} parent=0 // loop_footer_branch
    %9 = sbr.rel target = $region3
  $region8: #{pallas_forward.8} parent=0 // loop_exit
    _

// kernel: pallas_forward.9
$region0: #{pallas_forward.9}
  #allocation0 [shape = 'u32[]', space=smem, size = 0x4, offset = 0x4, fixed_abs, tag = 'smem constant byte address 0x4 - core index']
  #allocation1 [shape = 'u32[72,128]{1,0:T(1,128)}', space=vmem, size = 0x9000, scoped, tag = 'internal scratch']
  %s0 = inlined_call_operand.vmem [shape: bf16[18,64,9], index: 0, kind: input, shape index: {}]
  %s1 = inlined_call_operand.vmem [shape: bf16[8,1024], index: 1, kind: input, shape index: {}]
  %s2 = inlined_call_operand.vmem [shape: f32[8,1], index: 2, kind: input, shape index: {}]
  %s3 = inlined_call_operand.vmem [shape: f32[2,8,36], index: 3, kind: output, shape index: {}]
  %s4 = sld [smem:[#allocation0]]
  $region45: #{pallas_forward.9} parent=0
    _
  %s6 = ssub.s32 1, %s4
  %s7 = scalar_select 0, %s6, %s4
  loop: start=0, step=1, limit=4
  $region2: #{pallas_forward.9} parent=0 // loop_pre_header
    _
  $region3: #{pallas_forward.9} parent=0 // loop_header
    %s9 = sphi 0, %s13
    %p10 = scmp.ge.s32.totalorder %s9, 4
    %s19 = sphi 0, %s21
    %s22 = sphi 0, %s19
    %s23 = sphi 0, %s22
    %s39 = sphi 0, %s23
    %s43 = sphi 0, %s43
    %s45 = sphi 0, %s43
    %s46 = sphi 0, %s45
    %s60 = sphi 0, %s46
    %s64 = sphi 0, %s64
    %s66 = sphi 0, %s64
    %s67 = sphi 0, %s66
    %s81 = sphi 0, %s67
    %s87 = sphi 0, %s89
    %s90 = sphi 0, %s87
    %s91 = sphi 0, %s90
    %s107 = sphi 0, %s91
  $region4: #{pallas_forward.9} parent=0 // loop_header_branch
    %12 = sbr.rel (%p10) target = $region8
  $region5: #{pallas_forward.9} parent=0 // loop_body
    %s14 = ssub.s32 %s9, 1
    %s15 = ssub.s32 %s9, 2
    %s16 = sadd.s32 %s9, 1
    %s17 = ssub.s32 %s9, %s16
    %p18 = scmp.eq.s32.totalorder %s17, 0
    %s20 = sadd.s32 %s19, 1
    %s21 = scalar_select %p18, %s19, %s20
    %p24 = pneg %p18
    %p25 = scmp.eq.s32.totalorder %s9, 1
    %p26 = por %p24, %p25
    %p27 = scmp.ne.s32.totalorder %s19, %s22
    %p28 = scmp.eq.s32.totalorder %s9, 0
    %p29 = por %p27, %p28
    %p30 = scmp.ne.s32.totalorder %s19, %s22
    %p31 = scmp.eq.s32.totalorder %s14, 1
    %p32 = por %p30, %p31
    %p33 = scmp.ne.s32.totalorder %s22, %s23
    %p34 = scmp.eq.s32.totalorder %s14, 0
    %p35 = por %p33, %p34
    %p36 = scmp.ne.s32.totalorder %s22, %s23
    %p37 = scmp.eq.s32.totalorder %s15, 1
    %p38 = por %p36, %p37
    %p40 = scmp.ne.s32.totalorder %s23, %s39
    %p41 = scmp.eq.s32.totalorder %s15, 0
    %p42 = por %p40, %p41
    %s44 = sadd.s32 %s43, 1
    %p47 = scmp.eq.s32.totalorder %s9, 1
    %p48 = scmp.ne.s32.totalorder %s43, %s45
    %p49 = scmp.eq.s32.totalorder %s9, 0
    %p50 = por %p48, %p49
    %p51 = scmp.ne.s32.totalorder %s43, %s45
    %p52 = scmp.eq.s32.totalorder %s14, 1
    %p53 = por %p51, %p52
    %p54 = scmp.ne.s32.totalorder %s45, %s46
    %p55 = scmp.eq.s32.totalorder %s14, 0
    %p56 = por %p54, %p55
    %p57 = scmp.ne.s32.totalorder %s45, %s46
    %p58 = scmp.eq.s32.totalorder %s15, 1
    %p59 = por %p57, %p58
    %p61 = scmp.ne.s32.totalorder %s46, %s60
    %p62 = scmp.eq.s32.totalorder %s15, 0
    %p63 = por %p61, %p62
    %s65 = sadd.s32 %s64, 1
    %p68 = scmp.eq.s32.totalorder %s9, 1
    %p69 = scmp.ne.s32.totalorder %s64, %s66
    %p70 = scmp.eq.s32.totalorder %s9, 0
    %p71 = por %p69, %p70
    %p72 = scmp.ne.s32.totalorder %s64, %s66
    %p73 = scmp.eq.s32.totalorder %s14, 1
    %p74 = por %p72, %p73
    %p75 = scmp.ne.s32.totalorder %s66, %s67
    %p76 = scmp.eq.s32.totalorder %s14, 0
    %p77 = por %p75, %p76
    %p78 = scmp.ne.s32.totalorder %s66, %s67
    %p79 = scmp.eq.s32.totalorder %s15, 1
    %p80 = por %p78, %p79
    %p82 = scmp.ne.s32.totalorder %s67, %s81
    %p83 = scmp.eq.s32.totalorder %s15, 0
    %p84 = por %p82, %p83
    %s85 = ssub.s32 %s9, %s16
    %p86 = scmp.eq.s32.totalorder %s85, 0
    %s88 = sadd.s32 %s87, 1
    %s89 = scalar_select %p86, %s87, %s88
    %p92 = pneg %p86
    %p93 = scmp.eq.s32.totalorder %s9, 1
    %p94 = por %p92, %p93
    %p95 = scmp.ne.s32.totalorder %s87, %s90
    %p96 = scmp.eq.s32.totalorder %s9, 0
    %p97 = por %p95, %p96
    %p98 = scmp.ne.s32.totalorder %s87, %s90
    %p99 = scmp.eq.s32.totalorder %s14, 1
    %p100 = por %p98, %p99
    %p101 = scmp.ne.s32.totalorder %s90, %s91
    %p102 = scmp.eq.s32.totalorder %s14, 0
    %p103 = por %p101, %p102
    %p104 = scmp.ne.s32.totalorder %s90, %s91
    %p105 = scmp.eq.s32.totalorder %s15, 1
    %p106 = por %p104, %p105
    %p108 = scmp.ne.s32.totalorder %s91, %s107
    %p109 = scmp.eq.s32.totalorder %s15, 0
    %p110 = por %p108, %p109
    %p111 = scmp.le.s32.totalorder 1, %s9
    %p112 = scmp.lt.s32.totalorder %s9, 3
    %p113 = pnand %p111, %p112
    %p114 = pneg %p113
    // Predicated region
    $region9: #{pallas_forward.9} parent=5 // pred_check
      _
    $region10: #{pallas_forward.9} parent=5 // pred_check_branch
      %116 = sbr.rel (%p113) target = $region12
    $region11: #{pallas_forward.9} parent=5 // pred_region
      %s117 = ssub.s32 %s9, 1
      // Predicated region
      $region13: #{pallas_forward.9} parent=11 // pred_check
        %p118 = pneg %p56
      $region14: #{pallas_forward.9} parent=11 // pred_check_branch
        %120 = sbr.rel (%p118) target = $region16
      $region15: #{pallas_forward.9} parent=11 // pred_region
        _
      $region16: #{pallas_forward.9} parent=11 // pred_fallthru
        _
      // Predicated region
      $region17: #{pallas_forward.9} parent=11 // pred_check
        %p121 = pneg %p77
      $region18: #{pallas_forward.9} parent=11 // pred_check_branch
        %123 = sbr.rel (%p121) target = $region20
      $region19: #{pallas_forward.9} parent=11 // pred_region
        _
      $region20: #{pallas_forward.9} parent=11 // pred_fallthru
        _
    $region12: #{pallas_forward.9} parent=5 // pred_fallthru
      _
    %p124 = scmp.lt.s32.totalorder %s9, 2
    // Predicated region
    $region21: #{pallas_forward.9} parent=5 // pred_check
      %p125 = pneg %p124
    $region22: #{pallas_forward.9} parent=5 // pred_check_branch
      %127 = sbr.rel (%p125) target = $region24
    $region23: #{pallas_forward.9} parent=5 // pred_region
      // Predicated region
      $region25: #{pallas_forward.9} parent=23 // pred_check
        %p128 = pneg %p29
      $region26: #{pallas_forward.9} parent=23 // pred_check_branch
        %130 = sbr.rel (%p128) target = $region28
      $region27: #{pallas_forward.9} parent=23 // pred_region
        %s131 = smul.u32 9, %s9
        %p132 = scmp.lt.s32.totalorder %s131, 17
        %s133 = scalar_select %p132, %s131, 17
        %s134 = smul.addr %s133, 8
        %s135 = smul.addr %s134, 4
        %s136 = scalar_lea.vmem %s0, %s135
        %s137 = smul.u32 9, %s9
      $region28: #{pallas_forward.9} parent=23 // pred_fallthru
        _
    $region24: #{pallas_forward.9} parent=5 // pred_fallthru
      _
    %p138 = scmp.le.s32.totalorder 1, %s9
    %p139 = scmp.lt.s32.totalorder %s9, 3
    %p140 = pnand %p138, %p139
    %p141 = pneg %p140
    // Predicated region
    $region29: #{pallas_forward.9} parent=5 // pred_check
      _
    $region30: #{pallas_forward.9} parent=5 // pred_check_branch
      %143 = sbr.rel (%p140) target = $region32
    $region31: #{pallas_forward.9} parent=5 // pred_region
      %s144 = ssub.s32 %s9, 1
      %s145 = smul.u32 9, %s14
      %p146 = scmp.lt.s32.totalorder %s145, 17
      %s147 = scalar_select %p146, %s145, 17
      %s148 = smul.addr %s147, 8
      %s149 = smul.addr %s148, 4
      %s150 = scalar_lea.vmem %s0, %s149
      %p151 = pneg %p35
      %p152 = pneg %p32
      %p153 = pneg %p56
      %p154 = pneg %p53
      %p155 = pneg %p77
      %p156 = pneg %p74
      %p157 = pneg %p103
      %p158 = pneg %p100
      %p159 = scmp.lt.s32.totalorder %s14, 1
      %s160 = scalar_select %p159, %s14, 1
      %s161 = smul.addr %s160, 8
      %s162 = scalar_lea.vmem %s3, %s161
      %s163 = smul.u32 9, %s14
      %p164 = scmp.lt.s32.totalorder %s163, 17
      %s165 = scalar_select %p164, %s163, 17
      %s166 = smul.addr %s165, 8
      %s167 = smul.addr %s166, 4
      %s168 = scalar_lea.vmem %s0, %s167
      %s169 = smul.u32 9, %s14
      %p170 = scmp.lt.s32.totalorder %s14, 1
      %s171 = scalar_select %p170, %s14, 1
      %s172 = smul.addr %s171, 8
      %s173 = scalar_lea.vmem %s3, %s172
      %v174 = vld [vmem:[%s1] sm:$0xff]
      %v175 = vld [vmem:[%s1 + $0x8] sm:$0xff]
      %v176 = vld [vmem:[%s1 + $0x10] sm:$0xff]
      %v177 = vld [vmem:[%s1 + $0x18] sm:$0xff]
      %v178 = vld [vmem:[%s168] sm:$0xf]
      %v179 = vld [vmem:[%s168 + $0x4] sm:$0xf]
      %v180 = vld [vmem:[%s168 + $0x8] sm:$0xf]
      %v181 = vld [vmem:[%s168 + $0xc] sm:$0xf]
      %v182 = vld [vmem:[%s168 + $0x10] sm:$0xf]
      %v183 = vld [vmem:[%s168 + $0x14] sm:$0xf]
      %v184 = vld [vmem:[%s168 + $0x18] sm:$0xf]
      %v185 = vld [vmem:[%s168 + $0x1c] sm:$0xf]
      %s186 = scalar_lea.vmem %s168, 32
      %v187 = vld [vmem:[%s186] sm:$0xf]
      %v188 = vld [vmem:[%s186 + $0x4] sm:$0xf]
      %v189 = vld [vmem:[%s186 + $0x8] sm:$0xf]
      %v190 = vld [vmem:[%s186 + $0xc] sm:$0xf]
      %v191 = vld [vmem:[%s186 + $0x10] sm:$0xf]
      %v192 = vld [vmem:[%s186 + $0x14] sm:$0xf]
      %v193 = vld [vmem:[%s186 + $0x18] sm:$0xf]
      %v194 = vld [vmem:[%s186 + $0x1c] sm:$0xf]
      %s195 = scalar_lea.vmem %s168, 64
      %v196 = vld [vmem:[%s195] sm:$0xf]
      %v197 = vld [vmem:[%s195 + $0x4] sm:$0xf]
      %v198 = vld [vmem:[%s195 + $0x8] sm:$0xf]
      %v199 = vld [vmem:[%s195 + $0xc] sm:$0xf]
      %v200 = vld [vmem:[%s195 + $0x10] sm:$0xf]
      %v201 = vld [vmem:[%s195 + $0x14] sm:$0xf]
      %v202 = vld [vmem:[%s195 + $0x18] sm:$0xf]
      %v203 = vld [vmem:[%s195 + $0x1c] sm:$0xf]
      %s204 = scalar_lea.vmem %s168, 96
      %v205 = vld [vmem:[%s204] sm:$0xf]
      %v206 = vld [vmem:[%s204 + $0x4] sm:$0xf]
      %v207 = vld [vmem:[%s204 + $0x8] sm:$0xf]
      %v208 = vld [vmem:[%s204 + $0xc] sm:$0xf]
      %v209 = vld [vmem:[%s204 + $0x10] sm:$0xf]
      %v210 = vld [vmem:[%s204 + $0x14] sm:$0xf]
      %v211 = vld [vmem:[%s204 + $0x18] sm:$0xf]
      %v212 = vld [vmem:[%s204 + $0x1c] sm:$0xf]
      %s213 = scalar_lea.vmem %s168, 128
      %v214 = vld [vmem:[%s213] sm:$0xf]
      %v215 = vld [vmem:[%s213 + $0x4] sm:$0xf]
      %v216 = vld [vmem:[%s213 + $0x8] sm:$0xf]
      %v217 = vld [vmem:[%s213 + $0xc] sm:$0xf]
      %v218 = vld [vmem:[%s213 + $0x10] sm:$0xf]
      %v219 = vld [vmem:[%s213 + $0x14] sm:$0xf]
      %v220 = vld [vmem:[%s213 + $0x18] sm:$0xf]
      %v221 = vld [vmem:[%s213 + $0x1c] sm:$0xf]
      %s222 = scalar_lea.vmem %s168, 160
      %v223 = vld [vmem:[%s222] sm:$0xf]
      %v224 = vld [vmem:[%s222 + $0x4] sm:$0xf]
      %v225 = vld [vmem:[%s222 + $0x8] sm:$0xf]
      %v226 = vld [vmem:[%s222 + $0xc] sm:$0xf]
      %v227 = vld [vmem:[%s222 + $0x10] sm:$0xf]
      %v228 = vld [vmem:[%s222 + $0x14] sm:$0xf]
      %v229 = vld [vmem:[%s222 + $0x18] sm:$0xf]
      %v230 = vld [vmem:[%s222 + $0x1c] sm:$0xf]
      %s231 = scalar_lea.vmem %s168, 192
      %v232 = vld [vmem:[%s231] sm:$0xf]
      %v233 = vld [vmem:[%s231 + $0x4] sm:$0xf]
      %v234 = vld [vmem:[%s231 + $0x8] sm:$0xf]
      %v235 = vld [vmem:[%s231 + $0xc] sm:$0xf]
      %v236 = vld [vmem:[%s231 + $0x10] sm:$0xf]
      %v237 = vld [vmem:[%s231 + $0x14] sm:$0xf]
      %v238 = vld [vmem:[%s231 + $0x18] sm:$0xf]
      %v239 = vld [vmem:[%s231 + $0x1c] sm:$0xf]
      %s240 = scalar_lea.vmem %s168, 224
      %v241 = vld [vmem:[%s240] sm:$0xf]
      %v242 = vld [vmem:[%s240 + $0x4] sm:$0xf]
      %v243 = vld [vmem:[%s240 + $0x8] sm:$0xf]
      %v244 = vld [vmem:[%s240 + $0xc] sm:$0xf]
      %v245 = vld [vmem:[%s240 + $0x10] sm:$0xf]
      %v246 = vld [vmem:[%s240 + $0x14] sm:$0xf]
      %v247 = vld [vmem:[%s240 + $0x18] sm:$0xf]
      %v248 = vld [vmem:[%s240 + $0x1c] sm:$0xf]
      %s249 = scalar_lea.vmem %s168, 256
      %v250 = vld [vmem:[%s249] sm:$0xf]
      %v251 = vld [vmem:[%s249 + $0x4] sm:$0xf]
      %v252 = vld [vmem:[%s249 + $0x8] sm:$0xf]
      %v253 = vld [vmem:[%s249 + $0xc] sm:$0xf]
      %v254 = vld [vmem:[%s249 + $0x10] sm:$0xf]
      %v255 = vld [vmem:[%s249 + $0x14] sm:$0xf]
      %v256 = vld [vmem:[%s249 + $0x18] sm:$0xf]
      %v257 = vld [vmem:[%s249 + $0x1c] sm:$0xf]
      %v266 = vunpack.c.l.b16 %v178
      %v267 = vunpack.c.l.b16 %v179
      %v268 = vunpack.c.l.b16 %v180
      %v269 = vunpack.c.l.b16 %v181
      %v270 = vunpack.c.l.b16 %v182
      %v271 = vunpack.c.l.b16 %v183
      %v272 = vunpack.c.l.b16 %v184
      %v273 = vunpack.c.l.b16 %v185
      %v274 = vpack.c.b16 %v267, %v266
      %v275 = vpack.c.b16 %v269, %v268
      %v276 = vpack.c.b16 %v271, %v270
      %v277 = vpack.c.b16 %v273, %v272
      %278 = vrot.lane.b32.xlu0 %v274, 127
      %v279 = vpop.permute.xlu0 %278
      %280 = vrot.lane.b32.xlu0 %v275, 127
      %v281 = vpop.permute.xlu0 %280
      %282 = vrot.lane.b32.xlu0 %v276, 127
      %v283 = vpop.permute.xlu0 %282
      %284 = vrot.lane.b32.xlu0 %v277, 127
      %v285 = vpop.permute.xlu0 %284
      %286 = vrot.lane.b32.xlu0 %v274, 126
      %v287 = vpop.permute.xlu0 %286
      %288 = vrot.lane.b32.xlu0 %v275, 126
      %v289 = vpop.permute.xlu0 %288
      %290 = vrot.lane.b32.xlu0 %v276, 126
      %v291 = vpop.permute.xlu0 %290
      %292 = vrot.lane.b32.xlu0 %v277, 126
      %v293 = vpop.permute.xlu0 %292
      %294 = vrot.lane.b32.xlu0 %v274, 125
      %v295 = vpop.permute.xlu0 %294
      %296 = vrot.lane.b32.xlu0 %v275, 125
      %v297 = vpop.permute.xlu0 %296
      %298 = vrot.lane.b32.xlu0 %v276, 125
      %v299 = vpop.permute.xlu0 %298
      %300 = vrot.lane.b32.xlu0 %v277, 125
      %v301 = vpop.permute.xlu0 %300
      %v310 = vunpack.c.l.b16 %v187
      %v311 = vunpack.c.l.b16 %v188
      %v312 = vunpack.c.l.b16 %v189
      %v313 = vunpack.c.l.b16 %v190
      %v314 = vunpack.c.l.b16 %v191
      %v315 = vunpack.c.l.b16 %v192
      %v316 = vunpack.c.l.b16 %v193
      %v317 = vunpack.c.l.b16 %v194
      %v318 = vpack.c.b16 %v311, %v310
      %v319 = vpack.c.b16 %v313, %v312
      %v320 = vpack.c.b16 %v315, %v314
      %v321 = vpack.c.b16 %v317, %v316
      %322 = vrot.lane.b32.xlu0 %v318, 127
      %v323 = vpop.permute.xlu0 %322
      %324 = vrot.lane.b32.xlu0 %v319, 127
      %v325 = vpop.permute.xlu0 %324
      %326 = vrot.lane.b32.xlu0 %v320, 127
      %v327 = vpop.permute.xlu0 %326
      %328 = vrot.lane.b32.xlu0 %v321, 127
      %v329 = vpop.permute.xlu0 %328
      %330 = vrot.lane.b32.xlu0 %v318, 126
      %v331 = vpop.permute.xlu0 %330
      %332 = vrot.lane.b32.xlu0 %v319, 126
      %v333 = vpop.permute.xlu0 %332
      %334 = vrot.lane.b32.xlu0 %v320, 126
      %v335 = vpop.permute.xlu0 %334
      %336 = vrot.lane.b32.xlu0 %v321, 126
      %v337 = vpop.permute.xlu0 %336
      %338 = vrot.lane.b32.xlu0 %v318, 125
      %v339 = vpop.permute.xlu0 %338
      %340 = vrot.lane.b32.xlu0 %v319, 125
      %v341 = vpop.permute.xlu0 %340
      %342 = vrot.lane.b32.xlu0 %v320, 125
      %v343 = vpop.permute.xlu0 %342
      %344 = vrot.lane.b32.xlu0 %v321, 125
      %v345 = vpop.permute.xlu0 %344
      %v354 = vunpack.c.l.b16 %v196
      %v355 = vunpack.c.l.b16 %v197
      %v356 = vunpack.c.l.b16 %v198
      %v357 = vunpack.c.l.b16 %v199
      %v358 = vunpack.c.l.b16 %v200
      %v359 = vunpack.c.l.b16 %v201
      %v360 = vunpack.c.l.b16 %v202
      %v361 = vunpack.c.l.b16 %v203
      %v362 = vpack.c.b16 %v355, %v354
      %v363 = vpack.c.b16 %v357, %v356
      %v364 = vpack.c.b16 %v359, %v358
      %v365 = vpack.c.b16 %v361, %v360
      %366 = vrot.lane.b32.xlu0 %v362, 127
      %v367 = vpop.permute.xlu0 %366
      %368 = vrot.lane.b32.xlu0 %v363, 127
      %v369 = vpop.permute.xlu0 %368
      %370 = vrot.lane.b32.xlu0 %v364, 127
      %v371 = vpop.permute.xlu0 %370
      %372 = vrot.lane.b32.xlu0 %v365, 127
      %v373 = vpop.permute.xlu0 %372
      %374 = vrot.lane.b32.xlu0 %v362, 126
      %v375 = vpop.permute.xlu0 %374
      %376 = vrot.lane.b32.xlu0 %v363, 126
      %v377 = vpop.permute.xlu0 %376
      %378 = vrot.lane.b32.xlu0 %v364, 126
      %v379 = vpop.permute.xlu0 %378
      %380 = vrot.lane.b32.xlu0 %v365, 126
      %v381 = vpop.permute.xlu0 %380
      %382 = vrot.lane.b32.xlu0 %v362, 125
      %v383 = vpop.permute.xlu0 %382
      %384 = vrot.lane.b32.xlu0 %v363, 125
      %v385 = vpop.permute.xlu0 %384
      %386 = vrot.lane.b32.xlu0 %v364, 125
      %v387 = vpop.permute.xlu0 %386
      %388 = vrot.lane.b32.xlu0 %v365, 125
      %v389 = vpop.permute.xlu0 %388
      %v398 = vunpack.c.l.b16 %v205
      %v399 = vunpack.c.l.b16 %v206
      %v400 = vunpack.c.l.b16 %v207
      %v401 = vunpack.c.l.b16 %v208
      %v402 = vunpack.c.l.b16 %v209
      %v403 = vunpack.c.l.b16 %v210
      %v404 = vunpack.c.l.b16 %v211
      %v405 = vunpack.c.l.b16 %v212
      %v406 = vpack.c.b16 %v399, %v398
      %v407 = vpack.c.b16 %v401, %v400
      %v408 = vpack.c.b16 %v403, %v402
      %v409 = vpack.c.b16 %v405, %v404
      %410 = vrot.lane.b32.xlu0 %v406, 127
      %v411 = vpop.permute.xlu0 %410
      %412 = vrot.lane.b32.xlu0 %v407, 127
      %v413 = vpop.permute.xlu0 %412
      %414 = vrot.lane.b32.xlu0 %v408, 127
      %v415 = vpop.permute.xlu0 %414
      %416 = vrot.lane.b32.xlu0 %v409, 127
      %v417 = vpop.permute.xlu0 %416
      %418 = vrot.lane.b32.xlu0 %v406, 126
      %v419 = vpop.permute.xlu0 %418
      %420 = vrot.lane.b32.xlu0 %v407, 126
      %v421 = vpop.permute.xlu0 %420
      %422 = vrot.lane.b32.xlu0 %v408, 126
      %v423 = vpop.permute.xlu0 %422
      %424 = vrot.lane.b32.xlu0 %v409, 126
      %v425 = vpop.permute.xlu0 %424
      %426 = vrot.lane.b32.xlu0 %v406, 125
      %v427 = vpop.permute.xlu0 %426
      %428 = vrot.lane.b32.xlu0 %v407, 125
      %v429 = vpop.permute.xlu0 %428
      %430 = vrot.lane.b32.xlu0 %v408, 125
      %v431 = vpop.permute.xlu0 %430
      %432 = vrot.lane.b32.xlu0 %v409, 125
      %v433 = vpop.permute.xlu0 %432
      %v442 = vunpack.c.l.b16 %v214
      %v443 = vunpack.c.l.b16 %v215
      %v444 = vunpack.c.l.b16 %v216
      %v445 = vunpack.c.l.b16 %v217
      %v446 = vunpack.c.l.b16 %v218
      %v447 = vunpack.c.l.b16 %v219
      %v448 = vunpack.c.l.b16 %v220
      %v449 = vunpack.c.l.b16 %v221
      %v450 = vpack.c.b16 %v443, %v442
      %v451 = vpack.c.b16 %v445, %v444
      %v452 = vpack.c.b16 %v447, %v446
      %v453 = vpack.c.b16 %v449, %v448
      %454 = vrot.lane.b32.xlu0 %v450, 127
      %v455 = vpop.permute.xlu0 %454
      %456 = vrot.lane.b32.xlu0 %v451, 127
      %v457 = vpop.permute.xlu0 %456
      %458 = vrot.lane.b32.xlu0 %v452, 127
      %v459 = vpop.permute.xlu0 %458
      %460 = vrot.lane.b32.xlu0 %v453, 127
      %v461 = vpop.permute.xlu0 %460
      %462 = vrot.lane.b32.xlu0 %v450, 126
      %v463 = vpop.permute.xlu0 %462
      %464 = vrot.lane.b32.xlu0 %v451, 126
      %v465 = vpop.permute.xlu0 %464
      %466 = vrot.lane.b32.xlu0 %v452, 126
      %v467 = vpop.permute.xlu0 %466
      %468 = vrot.lane.b32.xlu0 %v453, 126
      %v469 = vpop.permute.xlu0 %468
      %470 = vrot.lane.b32.xlu0 %v450, 125
      %v471 = vpop.permute.xlu0 %470
      %472 = vrot.lane.b32.xlu0 %v451, 125
      %v473 = vpop.permute.xlu0 %472
      %474 = vrot.lane.b32.xlu0 %v452, 125
      %v475 = vpop.permute.xlu0 %474
      %476 = vrot.lane.b32.xlu0 %v453, 125
      %v477 = vpop.permute.xlu0 %476
      %v486 = vunpack.c.l.b16 %v223
      %v487 = vunpack.c.l.b16 %v224
      %v488 = vunpack.c.l.b16 %v225
      %v489 = vunpack.c.l.b16 %v226
      %v490 = vunpack.c.l.b16 %v227
      %v491 = vunpack.c.l.b16 %v228
      %v492 = vunpack.c.l.b16 %v229
      %v493 = vunpack.c.l.b16 %v230
      %v494 = vpack.c.b16 %v487, %v486
      %v495 = vpack.c.b16 %v489, %v488
      %v496 = vpack.c.b16 %v491, %v490
      %v497 = vpack.c.b16 %v493, %v492
      %498 = vrot.lane.b32.xlu0 %v494, 127
      %v499 = vpop.permute.xlu0 %498
      %500 = vrot.lane.b32.xlu0 %v495, 127
      %v501 = vpop.permute.xlu0 %500
      %502 = vrot.lane.b32.xlu0 %v496, 127
      %v503 = vpop.permute.xlu0 %502
      %504 = vrot.lane.b32.xlu0 %v497, 127
      %v505 = vpop.permute.xlu0 %504
      %506 = vrot.lane.b32.xlu0 %v494, 126
      %v507 = vpop.permute.xlu0 %506
      %508 = vrot.lane.b32.xlu0 %v495, 126
      %v509 = vpop.permute.xlu0 %508
      %510 = vrot.lane.b32.xlu0 %v496, 126
      %v511 = vpop.permute.xlu0 %510
      %512 = vrot.lane.b32.xlu0 %v497, 126
      %v513 = vpop.permute.xlu0 %512
      %514 = vrot.lane.b32.xlu0 %v494, 125
      %v515 = vpop.permute.xlu0 %514
      %516 = vrot.lane.b32.xlu0 %v495, 125
      %v517 = vpop.permute.xlu0 %516
      %518 = vrot.lane.b32.xlu0 %v496, 125
      %v519 = vpop.permute.xlu0 %518
      %520 = vrot.lane.b32.xlu0 %v497, 125
      %v521 = vpop.permute.xlu0 %520
      %v530 = vunpack.c.l.b16 %v232
      %v531 = vunpack.c.l.b16 %v233
      %v532 = vunpack.c.l.b16 %v234
      %v533 = vunpack.c.l.b16 %v235
      %v534 = vunpack.c.l.b16 %v236
      %v535 = vunpack.c.l.b16 %v237
      %v536 = vunpack.c.l.b16 %v238
      %v537 = vunpack.c.l.b16 %v239
      %v538 = vpack.c.b16 %v531, %v530
      %v539 = vpack.c.b16 %v533, %v532
      %v540 = vpack.c.b16 %v535, %v534
      %v541 = vpack.c.b16 %v537, %v536
      %542 = vrot.lane.b32.xlu0 %v538, 127
      %v543 = vpop.permute.xlu0 %542
      %544 = vrot.lane.b32.xlu0 %v539, 127
      %v545 = vpop.permute.xlu0 %544
      %546 = vrot.lane.b32.xlu0 %v540, 127
      %v547 = vpop.permute.xlu0 %546
      %548 = vrot.lane.b32.xlu0 %v541, 127
      %v549 = vpop.permute.xlu0 %548
      %550 = vrot.lane.b32.xlu0 %v538, 126
      %v551 = vpop.permute.xlu0 %550
      %552 = vrot.lane.b32.xlu0 %v539, 126
      %v553 = vpop.permute.xlu0 %552
      %554 = vrot.lane.b32.xlu0 %v540, 126
      %v555 = vpop.permute.xlu0 %554
      %556 = vrot.lane.b32.xlu0 %v541, 126
      %v557 = vpop.permute.xlu0 %556
      %558 = vrot.lane.b32.xlu0 %v538, 125
      %v559 = vpop.permute.xlu0 %558
      %560 = vrot.lane.b32.xlu0 %v539, 125
      %v561 = vpop.permute.xlu0 %560
      %562 = vrot.lane.b32.xlu0 %v540, 125
      %v563 = vpop.permute.xlu0 %562
      %564 = vrot.lane.b32.xlu0 %v541, 125
      %v565 = vpop.permute.xlu0 %564
      %v574 = vunpack.c.l.b16 %v241
      %v575 = vunpack.c.l.b16 %v242
      %v576 = vunpack.c.l.b16 %v243
      %v577 = vunpack.c.l.b16 %v244
      %v578 = vunpack.c.l.b16 %v245
      %v579 = vunpack.c.l.b16 %v246
      %v580 = vunpack.c.l.b16 %v247
      %v581 = vunpack.c.l.b16 %v248
      %v582 = vpack.c.b16 %v575, %v574
      %v583 = vpack.c.b16 %v577, %v576
      %v584 = vpack.c.b16 %v579, %v578
      %v585 = vpack.c.b16 %v581, %v580
      %586 = vrot.lane.b32.xlu0 %v582, 127
      %v587 = vpop.permute.xlu0 %586
      %588 = vrot.lane.b32.xlu0 %v583, 127
      %v589 = vpop.permute.xlu0 %588
      %590 = vrot.lane.b32.xlu0 %v584, 127
      %v591 = vpop.permute.xlu0 %590
      %592 = vrot.lane.b32.xlu0 %v585, 127
      %v593 = vpop.permute.xlu0 %592
      %594 = vrot.lane.b32.xlu0 %v582, 126
      %v595 = vpop.permute.xlu0 %594
      %596 = vrot.lane.b32.xlu0 %v583, 126
      %v597 = vpop.permute.xlu0 %596
      %598 = vrot.lane.b32.xlu0 %v584, 126
      %v599 = vpop.permute.xlu0 %598
      %600 = vrot.lane.b32.xlu0 %v585, 126
      %v601 = vpop.permute.xlu0 %600
      %602 = vrot.lane.b32.xlu0 %v582, 125
      %v603 = vpop.permute.xlu0 %602
      %604 = vrot.lane.b32.xlu0 %v583, 125
      %v605 = vpop.permute.xlu0 %604
      %606 = vrot.lane.b32.xlu0 %v584, 125
      %v607 = vpop.permute.xlu0 %606
      %608 = vrot.lane.b32.xlu0 %v585, 125
      %v609 = vpop.permute.xlu0 %608
      %v618 = vunpack.c.l.b16 %v250
      %v619 = vunpack.c.l.b16 %v251
      %v620 = vunpack.c.l.b16 %v252
      %v621 = vunpack.c.l.b16 %v253
      %v622 = vunpack.c.l.b16 %v254
      %v623 = vunpack.c.l.b16 %v255
      %v624 = vunpack.c.l.b16 %v256
      %v625 = vunpack.c.l.b16 %v257
      %v626 = vpack.c.b16 %v619, %v618
      %v627 = vpack.c.b16 %v621, %v620
      %v628 = vpack.c.b16 %v623, %v622
      %v629 = vpack.c.b16 %v625, %v624
      %630 = vrot.lane.b32.xlu0 %v626, 127
      %v631 = vpop.permute.xlu0 %630
      %632 = vrot.lane.b32.xlu0 %v627, 127
      %v633 = vpop.permute.xlu0 %632
      %634 = vrot.lane.b32.xlu0 %v628, 127
      %v635 = vpop.permute.xlu0 %634
      %636 = vrot.lane.b32.xlu0 %v629, 127
      %v637 = vpop.permute.xlu0 %636
      %638 = vrot.lane.b32.xlu0 %v626, 126
      %v639 = vpop.permute.xlu0 %638
      %640 = vrot.lane.b32.xlu0 %v627, 126
      %v641 = vpop.permute.xlu0 %640
      %642 = vrot.lane.b32.xlu0 %v628, 126
      %v643 = vpop.permute.xlu0 %642
      %644 = vrot.lane.b32.xlu0 %v629, 126
      %v645 = vpop.permute.xlu0 %644
      %646 = vrot.lane.b32.xlu0 %v626, 125
      %v647 = vpop.permute.xlu0 %646
      %648 = vrot.lane.b32.xlu0 %v627, 125
      %v649 = vpop.permute.xlu0 %648
      %650 = vrot.lane.b32.xlu0 %v628, 125
      %v651 = vpop.permute.xlu0 %650
      %652 = vrot.lane.b32.xlu0 %v629, 125
      %v653 = vpop.permute.xlu0 %652
      %654 = vrot.lane.b32.xlu0 %v318, 6
      %v655 = vpop.permute.xlu0 %654
      %656 = vrot.lane.b32.xlu0 %v319, 6
      %v657 = vpop.permute.xlu0 %656
      %658 = vrot.lane.b32.xlu0 %v320, 6
      %v659 = vpop.permute.xlu0 %658
      %660 = vrot.lane.b32.xlu0 %v321, 6
      %v661 = vpop.permute.xlu0 %660
      %662 = vrot.lane.b32.xlu0 %v323, 6
      %v663 = vpop.permute.xlu0 %662
      %664 = vrot.lane.b32.xlu0 %v325, 6
      %v665 = vpop.permute.xlu0 %664
      %666 = vrot.lane.b32.xlu0 %v327, 6
      %v667 = vpop.permute.xlu0 %666
      %668 = vrot.lane.b32.xlu0 %v329, 6
      %v669 = vpop.permute.xlu0 %668
      %670 = vrot.lane.b32.xlu0 %v331, 6
      %v671 = vpop.permute.xlu0 %670
      %672 = vrot.lane.b32.xlu0 %v333, 6
      %v673 = vpop.permute.xlu0 %672
      %674 = vrot.lane.b32.xlu0 %v335, 6
      %v675 = vpop.permute.xlu0 %674
      %676 = vrot.lane.b32.xlu0 %v337, 6
      %v677 = vpop.permute.xlu0 %676
      %678 = vrot.lane.b32.xlu0 %v339, 6
      %v679 = vpop.permute.xlu0 %678
      %680 = vrot.lane.b32.xlu0 %v341, 6
      %v681 = vpop.permute.xlu0 %680
      %682 = vrot.lane.b32.xlu0 %v343, 6
      %v683 = vpop.permute.xlu0 %682
      %684 = vrot.lane.b32.xlu0 %v345, 6
      %v685 = vpop.permute.xlu0 %684
      %686 = vrot.lane.b32.xlu0 %v362, 6
      %v687 = vpop.permute.xlu0 %686
      %688 = vrot.lane.b32.xlu0 %v363, 6
      %v689 = vpop.permute.xlu0 %688
      %690 = vrot.lane.b32.xlu0 %v364, 6
      %v691 = vpop.permute.xlu0 %690
      %692 = vrot.lane.b32.xlu0 %v365, 6
      %v693 = vpop.permute.xlu0 %692
      %694 = vrot.lane.b32.xlu0 %v367, 6
      %v695 = vpop.permute.xlu0 %694
      %696 = vrot.lane.b32.xlu0 %v369, 6
      %v697 = vpop.permute.xlu0 %696
      %698 = vrot.lane.b32.xlu0 %v371, 6
      %v699 = vpop.permute.xlu0 %698
      %700 = vrot.lane.b32.xlu0 %v373, 6
      %v701 = vpop.permute.xlu0 %700
      %702 = vrot.lane.b32.xlu0 %v375, 6
      %v703 = vpop.permute.xlu0 %702
      %704 = vrot.lane.b32.xlu0 %v377, 6
      %v705 = vpop.permute.xlu0 %704
      %706 = vrot.lane.b32.xlu0 %v379, 6
      %v707 = vpop.permute.xlu0 %706
      %708 = vrot.lane.b32.xlu0 %v381, 6
      %v709 = vpop.permute.xlu0 %708
      %710 = vrot.lane.b32.xlu0 %v383, 6
      %v711 = vpop.permute.xlu0 %710
      %712 = vrot.lane.b32.xlu0 %v385, 6
      %v713 = vpop.permute.xlu0 %712
      %714 = vrot.lane.b32.xlu0 %v387, 6
      %v715 = vpop.permute.xlu0 %714
      %716 = vrot.lane.b32.xlu0 %v389, 6
      %v717 = vpop.permute.xlu0 %716
      %718 = vrot.lane.b32.xlu0 %v406, 6
      %v719 = vpop.permute.xlu0 %718
      %720 = vrot.lane.b32.xlu0 %v407, 6
      %v721 = vpop.permute.xlu0 %720
      %722 = vrot.lane.b32.xlu0 %v408, 6
      %v723 = vpop.permute.xlu0 %722
      %724 = vrot.lane.b32.xlu0 %v409, 6
      %v725 = vpop.permute.xlu0 %724
      %726 = vrot.lane.b32.xlu0 %v411, 6
      %v727 = vpop.permute.xlu0 %726
      %728 = vrot.lane.b32.xlu0 %v413, 6
      %v729 = vpop.permute.xlu0 %728
      %730 = vrot.lane.b32.xlu0 %v415, 6
      %v731 = vpop.permute.xlu0 %730
      %732 = vrot.lane.b32.xlu0 %v417, 6
      %v733 = vpop.permute.xlu0 %732
      %734 = vrot.lane.b32.xlu0 %v419, 6
      %v735 = vpop.permute.xlu0 %734
      %736 = vrot.lane.b32.xlu0 %v421, 6
      %v737 = vpop.permute.xlu0 %736
      %738 = vrot.lane.b32.xlu0 %v423, 6
      %v739 = vpop.permute.xlu0 %738
      %740 = vrot.lane.b32.xlu0 %v425, 6
      %v741 = vpop.permute.xlu0 %740
      %742 = vrot.lane.b32.xlu0 %v427, 6
      %v743 = vpop.permute.xlu0 %742
      %744 = vrot.lane.b32.xlu0 %v429, 6
      %v745 = vpop.permute.xlu0 %744
      %746 = vrot.lane.b32.xlu0 %v431, 6
      %v747 = vpop.permute.xlu0 %746
      %748 = vrot.lane.b32.xlu0 %v433, 6
      %v749 = vpop.permute.xlu0 %748
      %750 = vrot.lane.b32.xlu0 %v450, 6
      %v751 = vpop.permute.xlu0 %750
      %752 = vrot.lane.b32.xlu0 %v451, 6
      %v753 = vpop.permute.xlu0 %752
      %754 = vrot.lane.b32.xlu0 %v452, 6
      %v755 = vpop.permute.xlu0 %754
      %756 = vrot.lane.b32.xlu0 %v453, 6
      %v757 = vpop.permute.xlu0 %756
      %758 = vrot.lane.b32.xlu0 %v455, 6
      %v759 = vpop.permute.xlu0 %758
      %760 = vrot.lane.b32.xlu0 %v457, 6
      %v761 = vpop.permute.xlu0 %760
      %762 = vrot.lane.b32.xlu0 %v459, 6
      %v763 = vpop.permute.xlu0 %762
      %764 = vrot.lane.b32.xlu0 %v461, 6
      %v765 = vpop.permute.xlu0 %764
      %766 = vrot.lane.b32.xlu0 %v463, 6
      %v767 = vpop.permute.xlu0 %766
      %768 = vrot.lane.b32.xlu0 %v465, 6
      %v769 = vpop.permute.xlu0 %768
      %770 = vrot.lane.b32.xlu0 %v467, 6
      %v771 = vpop.permute.xlu0 %770
      %772 = vrot.lane.b32.xlu0 %v469, 6
      %v773 = vpop.permute.xlu0 %772
      %774 = vrot.lane.b32.xlu0 %v471, 6
      %v775 = vpop.permute.xlu0 %774
      %776 = vrot.lane.b32.xlu0 %v473, 6
      %v777 = vpop.permute.xlu0 %776
      %778 = vrot.lane.b32.xlu0 %v475, 6
      %v779 = vpop.permute.xlu0 %778
      %780 = vrot.lane.b32.xlu0 %v477, 6
      %v781 = vpop.permute.xlu0 %780
      %782 = vrot.lane.b32.xlu0 %v362, 12
      %v783 = vpop.permute.xlu0 %782
      %784 = vrot.lane.b32.xlu0 %v363, 12
      %v785 = vpop.permute.xlu0 %784
      %786 = vrot.lane.b32.xlu0 %v364, 12
      %v787 = vpop.permute.xlu0 %786
      %788 = vrot.lane.b32.xlu0 %v365, 12
      %v789 = vpop.permute.xlu0 %788
      %790 = vrot.lane.b32.xlu0 %v367, 12
      %v791 = vpop.permute.xlu0 %790
      %792 = vrot.lane.b32.xlu0 %v369, 12
      %v793 = vpop.permute.xlu0 %792
      %794 = vrot.lane.b32.xlu0 %v371, 12
      %v795 = vpop.permute.xlu0 %794
      %796 = vrot.lane.b32.xlu0 %v373, 12
      %v797 = vpop.permute.xlu0 %796
      %798 = vrot.lane.b32.xlu0 %v375, 12
      %v799 = vpop.permute.xlu0 %798
      %800 = vrot.lane.b32.xlu0 %v377, 12
      %v801 = vpop.permute.xlu0 %800
      %802 = vrot.lane.b32.xlu0 %v379, 12
      %v803 = vpop.permute.xlu0 %802
      %804 = vrot.lane.b32.xlu0 %v381, 12
      %v805 = vpop.permute.xlu0 %804
      %806 = vrot.lane.b32.xlu0 %v383, 12
      %v807 = vpop.permute.xlu0 %806
      %808 = vrot.lane.b32.xlu0 %v385, 12
      %v809 = vpop.permute.xlu0 %808
      %810 = vrot.lane.b32.xlu0 %v387, 12
      %v811 = vpop.permute.xlu0 %810
      %812 = vrot.lane.b32.xlu0 %v389, 12
      %v813 = vpop.permute.xlu0 %812
      %814 = vrot.lane.b32.xlu0 %v406, 12
      %v815 = vpop.permute.xlu0 %814
      %816 = vrot.lane.b32.xlu0 %v407, 12
      %v817 = vpop.permute.xlu0 %816
      %818 = vrot.lane.b32.xlu0 %v408, 12
      %v819 = vpop.permute.xlu0 %818
      %820 = vrot.lane.b32.xlu0 %v409, 12
      %v821 = vpop.permute.xlu0 %820
      %822 = vrot.lane.b32.xlu0 %v411, 12
      %v823 = vpop.permute.xlu0 %822
      %824 = vrot.lane.b32.xlu0 %v413, 12
      %v825 = vpop.permute.xlu0 %824
      %826 = vrot.lane.b32.xlu0 %v415, 12
      %v827 = vpop.permute.xlu0 %826
      %828 = vrot.lane.b32.xlu0 %v417, 12
      %v829 = vpop.permute.xlu0 %828
      %830 = vrot.lane.b32.xlu0 %v419, 12
      %v831 = vpop.permute.xlu0 %830
      %832 = vrot.lane.b32.xlu0 %v421, 12
      %v833 = vpop.permute.xlu0 %832
      %834 = vrot.lane.b32.xlu0 %v423, 12
      %v835 = vpop.permute.xlu0 %834
      %836 = vrot.lane.b32.xlu0 %v425, 12
      %v837 = vpop.permute.xlu0 %836
      %838 = vrot.lane.b32.xlu0 %v427, 12
      %v839 = vpop.permute.xlu0 %838
      %840 = vrot.lane.b32.xlu0 %v429, 12
      %v841 = vpop.permute.xlu0 %840
      %842 = vrot.lane.b32.xlu0 %v431, 12
      %v843 = vpop.permute.xlu0 %842
      %844 = vrot.lane.b32.xlu0 %v433, 12
      %v845 = vpop.permute.xlu0 %844
      %846 = vrot.lane.b32.xlu0 %v450, 12
      %v847 = vpop.permute.xlu0 %846
      %848 = vrot.lane.b32.xlu0 %v451, 12
      %v849 = vpop.permute.xlu0 %848
      %850 = vrot.lane.b32.xlu0 %v452, 12
      %v851 = vpop.permute.xlu0 %850
      %852 = vrot.lane.b32.xlu0 %v453, 12
      %v853 = vpop.permute.xlu0 %852
      %854 = vrot.lane.b32.xlu0 %v455, 12
      %v855 = vpop.permute.xlu0 %854
      %856 = vrot.lane.b32.xlu0 %v457, 12
      %v857 = vpop.permute.xlu0 %856
      %858 = vrot.lane.b32.xlu0 %v459, 12
      %v859 = vpop.permute.xlu0 %858
      %860 = vrot.lane.b32.xlu0 %v461, 12
      %v861 = vpop.permute.xlu0 %860
      %862 = vrot.lane.b32.xlu0 %v463, 12
      %v863 = vpop.permute.xlu0 %862
      %864 = vrot.lane.b32.xlu0 %v465, 12
      %v865 = vpop.permute.xlu0 %864
      %866 = vrot.lane.b32.xlu0 %v467, 12
      %v867 = vpop.permute.xlu0 %866
      %868 = vrot.lane.b32.xlu0 %v469, 12
      %v869 = vpop.permute.xlu0 %868
      %870 = vrot.lane.b32.xlu0 %v471, 12
      %v871 = vpop.permute.xlu0 %870
      %872 = vrot.lane.b32.xlu0 %v473, 12
      %v873 = vpop.permute.xlu0 %872
      %874 = vrot.lane.b32.xlu0 %v475, 12
      %v875 = vpop.permute.xlu0 %874
      %876 = vrot.lane.b32.xlu0 %v477, 12
      %v877 = vpop.permute.xlu0 %876
      %878 = vrot.lane.b32.xlu0 %v494, 12
      %v879 = vpop.permute.xlu0 %878
      %880 = vrot.lane.b32.xlu0 %v495, 12
      %v881 = vpop.permute.xlu0 %880
      %882 = vrot.lane.b32.xlu0 %v496, 12
      %v883 = vpop.permute.xlu0 %882
      %884 = vrot.lane.b32.xlu0 %v497, 12
      %v885 = vpop.permute.xlu0 %884
      %886 = vrot.lane.b32.xlu0 %v499, 12
      %v887 = vpop.permute.xlu0 %886
      %888 = vrot.lane.b32.xlu0 %v501, 12
      %v889 = vpop.permute.xlu0 %888
      %890 = vrot.lane.b32.xlu0 %v503, 12
      %v891 = vpop.permute.xlu0 %890
      %892 = vrot.lane.b32.xlu0 %v505, 12
      %v893 = vpop.permute.xlu0 %892
      %894 = vrot.lane.b32.xlu0 %v507, 12
      %v895 = vpop.permute.xlu0 %894
      %896 = vrot.lane.b32.xlu0 %v509, 12
      %v897 = vpop.permute.xlu0 %896
      %898 = vrot.lane.b32.xlu0 %v511, 12
      %v899 = vpop.permute.xlu0 %898
      %900 = vrot.lane.b32.xlu0 %v513, 12
      %v901 = vpop.permute.xlu0 %900
      %902 = vrot.lane.b32.xlu0 %v515, 12
      %v903 = vpop.permute.xlu0 %902
      %904 = vrot.lane.b32.xlu0 %v517, 12
      %v905 = vpop.permute.xlu0 %904
      %906 = vrot.lane.b32.xlu0 %v519, 12
      %v907 = vpop.permute.xlu0 %906
      %908 = vrot.lane.b32.xlu0 %v521, 12
      %v909 = vpop.permute.xlu0 %908
      %910 = vrot.lane.b32.xlu0 %v406, 18
      %v911 = vpop.permute.xlu0 %910
      %912 = vrot.lane.b32.xlu0 %v407, 18
      %v913 = vpop.permute.xlu0 %912
      %914 = vrot.lane.b32.xlu0 %v408, 18
      %v915 = vpop.permute.xlu0 %914
      %916 = vrot.lane.b32.xlu0 %v409, 18
      %v917 = vpop.permute.xlu0 %916
      %918 = vrot.lane.b32.xlu0 %v411, 18
      %v919 = vpop.permute.xlu0 %918
      %920 = vrot.lane.b32.xlu0 %v413, 18
      %v921 = vpop.permute.xlu0 %920
      %922 = vrot.lane.b32.xlu0 %v415, 18
      %v923 = vpop.permute.xlu0 %922
      %924 = vrot.lane.b32.xlu0 %v417, 18
      %v925 = vpop.permute.xlu0 %924
      %926 = vrot.lane.b32.xlu0 %v419, 18
      %v927 = vpop.permute.xlu0 %926
      %928 = vrot.lane.b32.xlu0 %v421, 18
      %v929 = vpop.permute.xlu0 %928
      %930 = vrot.lane.b32.xlu0 %v423, 18
      %v931 = vpop.permute.xlu0 %930
      %932 = vrot.lane.b32.xlu0 %v425, 18
      %v933 = vpop.permute.xlu0 %932
      %934 = vrot.lane.b32.xlu0 %v427, 18
      %v935 = vpop.permute.xlu0 %934
      %936 = vrot.lane.b32.xlu0 %v429, 18
      %v937 = vpop.permute.xlu0 %936
      %938 = vrot.lane.b32.xlu0 %v431, 18
      %v939 = vpop.permute.xlu0 %938
      %940 = vrot.lane.b32.xlu0 %v433, 18
      %v941 = vpop.permute.xlu0 %940
      %942 = vrot.lane.b32.xlu0 %v450, 18
      %v943 = vpop.permute.xlu0 %942
      %944 = vrot.lane.b32.xlu0 %v451, 18
      %v945 = vpop.permute.xlu0 %944
      %946 = vrot.lane.b32.xlu0 %v452, 18
      %v947 = vpop.permute.xlu0 %946
      %948 = vrot.lane.b32.xlu0 %v453, 18
      %v949 = vpop.permute.xlu0 %948
      %950 = vrot.lane.b32.xlu0 %v455, 18
      %v951 = vpop.permute.xlu0 %950
      %952 = vrot.lane.b32.xlu0 %v457, 18
      %v953 = vpop.permute.xlu0 %952
      %954 = vrot.lane.b32.xlu0 %v459, 18
      %v955 = vpop.permute.xlu0 %954
      %956 = vrot.lane.b32.xlu0 %v461, 18
      %v957 = vpop.permute.xlu0 %956
      %958 = vrot.lane.b32.xlu0 %v463, 18
      %v959 = vpop.permute.xlu0 %958
      %960 = vrot.lane.b32.xlu0 %v465, 18
      %v961 = vpop.permute.xlu0 %960
      %962 = vrot.lane.b32.xlu0 %v467, 18
      %v963 = vpop.permute.xlu0 %962
      %964 = vrot.lane.b32.xlu0 %v469, 18
      %v965 = vpop.permute.xlu0 %964
      %966 = vrot.lane.b32.xlu0 %v471, 18
      %v967 = vpop.permute.xlu0 %966
      %968 = vrot.lane.b32.xlu0 %v473, 18
      %v969 = vpop.permute.xlu0 %968
      %970 = vrot.lane.b32.xlu0 %v475, 18
      %v971 = vpop.permute.xlu0 %970
      %972 = vrot.lane.b32.xlu0 %v477, 18
      %v973 = vpop.permute.xlu0 %972
      %974 = vrot.lane.b32.xlu0 %v494, 18
      %v975 = vpop.permute.xlu0 %974
      %976 = vrot.lane.b32.xlu0 %v495, 18
      %v977 = vpop.permute.xlu0 %976
      %978 = vrot.lane.b32.xlu0 %v496, 18
      %v979 = vpop.permute.xlu0 %978
      %980 = vrot.lane.b32.xlu0 %v497, 18
      %v981 = vpop.permute.xlu0 %980
      %982 = vrot.lane.b32.xlu0 %v499, 18
      %v983 = vpop.permute.xlu0 %982
      %984 = vrot.lane.b32.xlu0 %v501, 18
      %v985 = vpop.permute.xlu0 %984
      %986 = vrot.lane.b32.xlu0 %v503, 18
      %v987 = vpop.permute.xlu0 %986
      %988 = vrot.lane.b32.xlu0 %v505, 18
      %v989 = vpop.permute.xlu0 %988
      %990 = vrot.lane.b32.xlu0 %v507, 18
      %v991 = vpop.permute.xlu0 %990
      %992 = vrot.lane.b32.xlu0 %v509, 18
      %v993 = vpop.permute.xlu0 %992
      %994 = vrot.lane.b32.xlu0 %v511, 18
      %v995 = vpop.permute.xlu0 %994
      %996 = vrot.lane.b32.xlu0 %v513, 18
      %v997 = vpop.permute.xlu0 %996
      %998 = vrot.lane.b32.xlu0 %v515, 18
      %v999 = vpop.permute.xlu0 %998
      %1000 = vrot.lane.b32.xlu0 %v517, 18
      %v1001 = vpop.permute.xlu0 %1000
      %1002 = vrot.lane.b32.xlu0 %v519, 18
      %v1003 = vpop.permute.xlu0 %1002
      %1004 = vrot.lane.b32.xlu0 %v521, 18
      %v1005 = vpop.permute.xlu0 %1004
      %1006 = vrot.lane.b32.xlu0 %v538, 18
      %v1007 = vpop.permute.xlu0 %1006
      %1008 = vrot.lane.b32.xlu0 %v539, 18
      %v1009 = vpop.permute.xlu0 %1008
      %1010 = vrot.lane.b32.xlu0 %v540, 18
      %v1011 = vpop.permute.xlu0 %1010
      %1012 = vrot.lane.b32.xlu0 %v541, 18
      %v1013 = vpop.permute.xlu0 %1012
      %1014 = vrot.lane.b32.xlu0 %v543, 18
      %v1015 = vpop.permute.xlu0 %1014
      %1016 = vrot.lane.b32.xlu0 %v545, 18
      %v1017 = vpop.permute.xlu0 %1016
      %1018 = vrot.lane.b32.xlu0 %v547, 18
      %v1019 = vpop.permute.xlu0 %1018
      %1020 = vrot.lane.b32.xlu0 %v549, 18
      %v1021 = vpop.permute.xlu0 %1020
      %1022 = vrot.lane.b32.xlu0 %v551, 18
      %v1023 = vpop.permute.xlu0 %1022
      %1024 = vrot.lane.b32.xlu0 %v553, 18
      %v1025 = vpop.permute.xlu0 %1024
      %1026 = vrot.lane.b32.xlu0 %v555, 18
      %v1027 = vpop.permute.xlu0 %1026
      %1028 = vrot.lane.b32.xlu0 %v557, 18
      %v1029 = vpop.permute.xlu0 %1028
      %1030 = vrot.lane.b32.xlu0 %v559, 18
      %v1031 = vpop.permute.xlu0 %1030
      %1032 = vrot.lane.b32.xlu0 %v561, 18
      %v1033 = vpop.permute.xlu0 %1032
      %1034 = vrot.lane.b32.xlu0 %v563, 18
      %v1035 = vpop.permute.xlu0 %1034
      %1036 = vrot.lane.b32.xlu0 %v565, 18
      %v1037 = vpop.permute.xlu0 %1036
      %1038 = vrot.lane.b32.xlu0 %v450, 24
      %v1039 = vpop.permute.xlu0 %1038
      %1040 = vrot.lane.b32.xlu0 %v451, 24
      %v1041 = vpop.permute.xlu0 %1040
      %1042 = vrot.lane.b32.xlu0 %v452, 24
      %v1043 = vpop.permute.xlu0 %1042
      %1044 = vrot.lane.b32.xlu0 %v453, 24
      %v1045 = vpop.permute.xlu0 %1044
      %1046 = vrot.lane.b32.xlu0 %v455, 24
      %v1047 = vpop.permute.xlu0 %1046
      %1048 = vrot.lane.b32.xlu0 %v457, 24
      %v1049 = vpop.permute.xlu0 %1048
      %1050 = vrot.lane.b32.xlu0 %v459, 24
      %v1051 = vpop.permute.xlu0 %1050
      %1052 = vrot.lane.b32.xlu0 %v461, 24
      %v1053 = vpop.permute.xlu0 %1052
      %1054 = vrot.lane.b32.xlu0 %v463, 24
      %v1055 = vpop.permute.xlu0 %1054
      %1056 = vrot.lane.b32.xlu0 %v465, 24
      %v1057 = vpop.permute.xlu0 %1056
      %1058 = vrot.lane.b32.xlu0 %v467, 24
      %v1059 = vpop.permute.xlu0 %1058
      %1060 = vrot.lane.b32.xlu0 %v469, 24
      %v1061 = vpop.permute.xlu0 %1060
      %1062 = vrot.lane.b32.xlu0 %v471, 24
      %v1063 = vpop.permute.xlu0 %1062
      %1064 = vrot.lane.b32.xlu0 %v473, 24
      %v1065 = vpop.permute.xlu0 %1064
      %1066 = vrot.lane.b32.xlu0 %v475, 24
      %v1067 = vpop.permute.xlu0 %1066
      %1068 = vrot.lane.b32.xlu0 %v477, 24
      %v1069 = vpop.permute.xlu0 %1068
      %1070 = vrot.lane.b32.xlu0 %v494, 24
      %v1071 = vpop.permute.xlu0 %1070
      %1072 = vrot.lane.b32.xlu0 %v495, 24
      %v1073 = vpop.permute.xlu0 %1072
      %1074 = vrot.lane.b32.xlu0 %v496, 24
      %v1075 = vpop.permute.xlu0 %1074
      %1076 = vrot.lane.b32.xlu0 %v497, 24
      %v1077 = vpop.permute.xlu0 %1076
      %1078 = vrot.lane.b32.xlu0 %v499, 24
      %v1079 = vpop.permute.xlu0 %1078
      %1080 = vrot.lane.b32.xlu0 %v501, 24
      %v1081 = vpop.permute.xlu0 %1080
      %1082 = vrot.lane.b32.xlu0 %v503, 24
      %v1083 = vpop.permute.xlu0 %1082
      %1084 = vrot.lane.b32.xlu0 %v505, 24
      %v1085 = vpop.permute.xlu0 %1084
      %1086 = vrot.lane.b32.xlu0 %v507, 24
      %v1087 = vpop.permute.xlu0 %1086
      %1088 = vrot.lane.b32.xlu0 %v509, 24
      %v1089 = vpop.permute.xlu0 %1088
      %1090 = vrot.lane.b32.xlu0 %v511, 24
      %v1091 = vpop.permute.xlu0 %1090
      %1092 = vrot.lane.b32.xlu0 %v513, 24
      %v1093 = vpop.permute.xlu0 %1092
      %1094 = vrot.lane.b32.xlu0 %v515, 24
      %v1095 = vpop.permute.xlu0 %1094
      %1096 = vrot.lane.b32.xlu0 %v517, 24
      %v1097 = vpop.permute.xlu0 %1096
      %1098 = vrot.lane.b32.xlu0 %v519, 24
      %v1099 = vpop.permute.xlu0 %1098
      %1100 = vrot.lane.b32.xlu0 %v521, 24
      %v1101 = vpop.permute.xlu0 %1100
      %1102 = vrot.lane.b32.xlu0 %v538, 24
      %v1103 = vpop.permute.xlu0 %1102
      %1104 = vrot.lane.b32.xlu0 %v539, 24
      %v1105 = vpop.permute.xlu0 %1104
      %1106 = vrot.lane.b32.xlu0 %v540, 24
      %v1107 = vpop.permute.xlu0 %1106
      %1108 = vrot.lane.b32.xlu0 %v541, 24
      %v1109 = vpop.permute.xlu0 %1108
      %1110 = vrot.lane.b32.xlu0 %v543, 24
      %v1111 = vpop.permute.xlu0 %1110
      %1112 = vrot.lane.b32.xlu0 %v545, 24
      %v1113 = vpop.permute.xlu0 %1112
      %1114 = vrot.lane.b32.xlu0 %v547, 24
      %v1115 = vpop.permute.xlu0 %1114
      %1116 = vrot.lane.b32.xlu0 %v549, 24
      %v1117 = vpop.permute.xlu0 %1116
      %1118 = vrot.lane.b32.xlu0 %v551, 24
      %v1119 = vpop.permute.xlu0 %1118
      %1120 = vrot.lane.b32.xlu0 %v553, 24
      %v1121 = vpop.permute.xlu0 %1120
      %1122 = vrot.lane.b32.xlu0 %v555, 24
      %v1123 = vpop.permute.xlu0 %1122
      %1124 = vrot.lane.b32.xlu0 %v557, 24
      %v1125 = vpop.permute.xlu0 %1124
      %1126 = vrot.lane.b32.xlu0 %v559, 24
      %v1127 = vpop.permute.xlu0 %1126
      %1128 = vrot.lane.b32.xlu0 %v561, 24
      %v1129 = vpop.permute.xlu0 %1128
      %1130 = vrot.lane.b32.xlu0 %v563, 24
      %v1131 = vpop.permute.xlu0 %1130
      %1132 = vrot.lane.b32.xlu0 %v565, 24
      %v1133 = vpop.permute.xlu0 %1132
      %1134 = vrot.lane.b32.xlu0 %v582, 24
      %v1135 = vpop.permute.xlu0 %1134
      %1136 = vrot.lane.b32.xlu0 %v583, 24
      %v1137 = vpop.permute.xlu0 %1136
      %1138 = vrot.lane.b32.xlu0 %v584, 24
      %v1139 = vpop.permute.xlu0 %1138
      %1140 = vrot.lane.b32.xlu0 %v585, 24
      %v1141 = vpop.permute.xlu0 %1140
      %1142 = vrot.lane.b32.xlu0 %v587, 24
      %v1143 = vpop.permute.xlu0 %1142
      %1144 = vrot.lane.b32.xlu0 %v589, 24
      %v1145 = vpop.permute.xlu0 %1144
      %1146 = vrot.lane.b32.xlu0 %v591, 24
      %v1147 = vpop.permute.xlu0 %1146
      %1148 = vrot.lane.b32.xlu0 %v593, 24
      %v1149 = vpop.permute.xlu0 %1148
      %1150 = vrot.lane.b32.xlu0 %v595, 24
      %v1151 = vpop.permute.xlu0 %1150
      %1152 = vrot.lane.b32.xlu0 %v597, 24
      %v1153 = vpop.permute.xlu0 %1152
      %1154 = vrot.lane.b32.xlu0 %v599, 24
      %v1155 = vpop.permute.xlu0 %1154
      %1156 = vrot.lane.b32.xlu0 %v601, 24
      %v1157 = vpop.permute.xlu0 %1156
      %1158 = vrot.lane.b32.xlu0 %v603, 24
      %v1159 = vpop.permute.xlu0 %1158
      %1160 = vrot.lane.b32.xlu0 %v605, 24
      %v1161 = vpop.permute.xlu0 %1160
      %1162 = vrot.lane.b32.xlu0 %v607, 24
      %v1163 = vpop.permute.xlu0 %1162
      %1164 = vrot.lane.b32.xlu0 %v609, 24
      %v1165 = vpop.permute.xlu0 %1164
      %1166 = vrot.lane.b32.xlu0 %v494, 30
      %v1167 = vpop.permute.xlu0 %1166
      %1168 = vrot.lane.b32.xlu0 %v495, 30
      %v1169 = vpop.permute.xlu0 %1168
      %1170 = vrot.lane.b32.xlu0 %v496, 30
      %v1171 = vpop.permute.xlu0 %1170
      %1172 = vrot.lane.b32.xlu0 %v497, 30
      %v1173 = vpop.permute.xlu0 %1172
      %1174 = vrot.lane.b32.xlu0 %v499, 30
      %v1175 = vpop.permute.xlu0 %1174
      %1176 = vrot.lane.b32.xlu0 %v501, 30
      %v1177 = vpop.permute.xlu0 %1176
      %1178 = vrot.lane.b32.xlu0 %v503, 30
      %v1179 = vpop.permute.xlu0 %1178
      %1180 = vrot.lane.b32.xlu0 %v505, 30
      %v1181 = vpop.permute.xlu0 %1180
      %1182 = vrot.lane.b32.xlu0 %v507, 30
      %v1183 = vpop.permute.xlu0 %1182
      %1184 = vrot.lane.b32.xlu0 %v509, 30
      %v1185 = vpop.permute.xlu0 %1184
      %1186 = vrot.lane.b32.xlu0 %v511, 30
      %v1187 = vpop.permute.xlu0 %1186
      %1188 = vrot.lane.b32.xlu0 %v513, 30
      %v1189 = vpop.permute.xlu0 %1188
      %1190 = vrot.lane.b32.xlu0 %v515, 30
      %v1191 = vpop.permute.xlu0 %1190
      %1192 = vrot.lane.b32.xlu0 %v517, 30
      %v1193 = vpop.permute.xlu0 %1192
      %1194 = vrot.lane.b32.xlu0 %v519, 30
      %v1195 = vpop.permute.xlu0 %1194
      %1196 = vrot.lane.b32.xlu0 %v521, 30
      %v1197 = vpop.permute.xlu0 %1196
      %1198 = vrot.lane.b32.xlu0 %v538, 30
      %v1199 = vpop.permute.xlu0 %1198
      %1200 = vrot.lane.b32.xlu0 %v539, 30
      %v1201 = vpop.permute.xlu0 %1200
      %1202 = vrot.lane.b32.xlu0 %v540, 30
      %v1203 = vpop.permute.xlu0 %1202
      %1204 = vrot.lane.b32.xlu0 %v541, 30
      %v1205 = vpop.permute.xlu0 %1204
      %1206 = vrot.lane.b32.xlu0 %v543, 30
      %v1207 = vpop.permute.xlu0 %1206
      %1208 = vrot.lane.b32.xlu0 %v545, 30
      %v1209 = vpop.permute.xlu0 %1208
      %1210 = vrot.lane.b32.xlu0 %v547, 30
      %v1211 = vpop.permute.xlu0 %1210
      %1212 = vrot.lane.b32.xlu0 %v549, 30
      %v1213 = vpop.permute.xlu0 %1212
      %1214 = vrot.lane.b32.xlu0 %v551, 30
      %v1215 = vpop.permute.xlu0 %1214
      %1216 = vrot.lane.b32.xlu0 %v553, 30
      %v1217 = vpop.permute.xlu0 %1216
      %1218 = vrot.lane.b32.xlu0 %v555, 30
      %v1219 = vpop.permute.xlu0 %1218
      %1220 = vrot.lane.b32.xlu0 %v557, 30
      %v1221 = vpop.permute.xlu0 %1220
      %1222 = vrot.lane.b32.xlu0 %v559, 30
      %v1223 = vpop.permute.xlu0 %1222
      %1224 = vrot.lane.b32.xlu0 %v561, 30
      %v1225 = vpop.permute.xlu0 %1224
      %1226 = vrot.lane.b32.xlu0 %v563, 30
      %v1227 = vpop.permute.xlu0 %1226
      %1228 = vrot.lane.b32.xlu0 %v565, 30
      %v1229 = vpop.permute.xlu0 %1228
      %1230 = vrot.lane.b32.xlu0 %v582, 30
      %v1231 = vpop.permute.xlu0 %1230
      %1232 = vrot.lane.b32.xlu0 %v583, 30
      %v1233 = vpop.permute.xlu0 %1232
      %1234 = vrot.lane.b32.xlu0 %v584, 30
      %v1235 = vpop.permute.xlu0 %1234
      %1236 = vrot.lane.b32.xlu0 %v585, 30
      %v1237 = vpop.permute.xlu0 %1236
      %1238 = vrot.lane.b32.xlu0 %v587, 30
      %v1239 = vpop.permute.xlu0 %1238
      %1240 = vrot.lane.b32.xlu0 %v589, 30
      %v1241 = vpop.permute.xlu0 %1240
      %1242 = vrot.lane.b32.xlu0 %v591, 30
      %v1243 = vpop.permute.xlu0 %1242
      %1244 = vrot.lane.b32.xlu0 %v593, 30
      %v1245 = vpop.permute.xlu0 %1244
      %1246 = vrot.lane.b32.xlu0 %v595, 30
      %v1247 = vpop.permute.xlu0 %1246
      %1248 = vrot.lane.b32.xlu0 %v597, 30
      %v1249 = vpop.permute.xlu0 %1248
      %1250 = vrot.lane.b32.xlu0 %v599, 30
      %v1251 = vpop.permute.xlu0 %1250
      %1252 = vrot.lane.b32.xlu0 %v601, 30
      %v1253 = vpop.permute.xlu0 %1252
      %1254 = vrot.lane.b32.xlu0 %v603, 30
      %v1255 = vpop.permute.xlu0 %1254
      %1256 = vrot.lane.b32.xlu0 %v605, 30
      %v1257 = vpop.permute.xlu0 %1256
      %1258 = vrot.lane.b32.xlu0 %v607, 30
      %v1259 = vpop.permute.xlu0 %1258
      %1260 = vrot.lane.b32.xlu0 %v609, 30
      %v1261 = vpop.permute.xlu0 %1260
      %1262 = vrot.lane.b32.xlu0 %v626, 30
      %v1263 = vpop.permute.xlu0 %1262
      %1264 = vrot.lane.b32.xlu0 %v627, 30
      %v1265 = vpop.permute.xlu0 %1264
      %1266 = vrot.lane.b32.xlu0 %v628, 30
      %v1267 = vpop.permute.xlu0 %1266
      %1268 = vrot.lane.b32.xlu0 %v629, 30
      %v1269 = vpop.permute.xlu0 %1268
      %1270 = vrot.lane.b32.xlu0 %v631, 30
      %v1271 = vpop.permute.xlu0 %1270
      %1272 = vrot.lane.b32.xlu0 %v633, 30
      %v1273 = vpop.permute.xlu0 %1272
      %1274 = vrot.lane.b32.xlu0 %v635, 30
      %v1275 = vpop.permute.xlu0 %1274
      %1276 = vrot.lane.b32.xlu0 %v637, 30
      %v1277 = vpop.permute.xlu0 %1276
      %1278 = vrot.lane.b32.xlu0 %v639, 30
      %v1279 = vpop.permute.xlu0 %1278
      %1280 = vrot.lane.b32.xlu0 %v641, 30
      %v1281 = vpop.permute.xlu0 %1280
      %1282 = vrot.lane.b32.xlu0 %v643, 30
      %v1283 = vpop.permute.xlu0 %1282
      %1284 = vrot.lane.b32.xlu0 %v645, 30
      %v1285 = vpop.permute.xlu0 %1284
      %1286 = vrot.lane.b32.xlu0 %v647, 30
      %v1287 = vpop.permute.xlu0 %1286
      %1288 = vrot.lane.b32.xlu0 %v649, 30
      %v1289 = vpop.permute.xlu0 %1288
      %1290 = vrot.lane.b32.xlu0 %v651, 30
      %v1291 = vpop.permute.xlu0 %1290
      %1292 = vrot.lane.b32.xlu0 %v653, 30
      %v1293 = vpop.permute.xlu0 %1292
      %vm1294 = vcmask 48128
      %v1297 = vsel %vm1294, %v274, %v655
      %v1300 = vsel %vm1294, %v275, %v657
      %v1303 = vsel %vm1294, %v276, %v659
      %v1306 = vsel %vm1294, %v277, %v661
      %v1309 = vsel %vm1294, %v279, %v663
      %v1312 = vsel %vm1294, %v281, %v665
      %v1315 = vsel %vm1294, %v283, %v667
      %v1318 = vsel %vm1294, %v285, %v669
      %v1321 = vsel %vm1294, %v287, %v671
      %v1324 = vsel %vm1294, %v289, %v673
      %v1327 = vsel %vm1294, %v291, %v675
      %v1330 = vsel %vm1294, %v293, %v677
      %v1333 = vsel %vm1294, %v295, %v679
      %v1336 = vsel %vm1294, %v297, %v681
      %v1339 = vsel %vm1294, %v299, %v683
      %v1342 = vsel %vm1294, %v301, %v685
      %v1345 = vsel %vm1294, %v318, %v687
      %v1348 = vsel %vm1294, %v319, %v689
      %v1351 = vsel %vm1294, %v320, %v691
      %v1354 = vsel %vm1294, %v321, %v693
      %v1357 = vsel %vm1294, %v323, %v695
      %v1360 = vsel %vm1294, %v325, %v697
      %v1363 = vsel %vm1294, %v327, %v699
      %v1366 = vsel %vm1294, %v329, %v701
      %v1369 = vsel %vm1294, %v331, %v703
      %v1372 = vsel %vm1294, %v333, %v705
      %v1375 = vsel %vm1294, %v335, %v707
      %v1378 = vsel %vm1294, %v337, %v709
      %v1381 = vsel %vm1294, %v339, %v711
      %v1384 = vsel %vm1294, %v341, %v713
      %v1387 = vsel %vm1294, %v343, %v715
      %v1390 = vsel %vm1294, %v345, %v717
      %v1393 = vsel %vm1294, %v362, %v719
      %v1396 = vsel %vm1294, %v363, %v721
      %v1399 = vsel %vm1294, %v364, %v723
      %v1402 = vsel %vm1294, %v365, %v725
      %v1405 = vsel %vm1294, %v367, %v727
      %v1408 = vsel %vm1294, %v369, %v729
      %v1411 = vsel %vm1294, %v371, %v731
      %v1414 = vsel %vm1294, %v373, %v733
      %v1417 = vsel %vm1294, %v375, %v735
      %v1420 = vsel %vm1294, %v377, %v737
      %v1423 = vsel %vm1294, %v379, %v739
      %v1426 = vsel %vm1294, %v381, %v741
      %v1429 = vsel %vm1294, %v383, %v743
      %v1432 = vsel %vm1294, %v385, %v745
      %v1435 = vsel %vm1294, %v387, %v747
      %v1438 = vsel %vm1294, %v389, %v749
      %v1441 = vsel %vm1294, %v406, %v751
      %v1444 = vsel %vm1294, %v407, %v753
      %v1447 = vsel %vm1294, %v408, %v755
      %v1450 = vsel %vm1294, %v409, %v757
      %v1453 = vsel %vm1294, %v411, %v759
      %v1456 = vsel %vm1294, %v413, %v761
      %v1459 = vsel %vm1294, %v415, %v763
      %v1462 = vsel %vm1294, %v417, %v765
      %v1465 = vsel %vm1294, %v419, %v767
      %v1468 = vsel %vm1294, %v421, %v769
      %v1471 = vsel %vm1294, %v423, %v771
      %v1474 = vsel %vm1294, %v425, %v773
      %v1477 = vsel %vm1294, %v427, %v775
      %v1480 = vsel %vm1294, %v429, %v777
      %v1483 = vsel %vm1294, %v431, %v779
      %v1486 = vsel %vm1294, %v433, %v781
      %vm1487 = vcmask 97280
      %v1489 = vsel %vm1487, %v1297, %v783
      %v1491 = vsel %vm1487, %v1300, %v785
      %v1493 = vsel %vm1487, %v1303, %v787
      %v1495 = vsel %vm1487, %v1306, %v789
      %v1497 = vsel %vm1487, %v1309, %v791
      %v1499 = vsel %vm1487, %v1312, %v793
      %v1501 = vsel %vm1487, %v1315, %v795
      %v1503 = vsel %vm1487, %v1318, %v797
      %v1505 = vsel %vm1487, %v1321, %v799
      %v1507 = vsel %vm1487, %v1324, %v801
      %v1509 = vsel %vm1487, %v1327, %v803
      %v1511 = vsel %vm1487, %v1330, %v805
      %v1513 = vsel %vm1487, %v1333, %v807
      %v1515 = vsel %vm1487, %v1336, %v809
      %v1517 = vsel %vm1487, %v1339, %v811
      %v1519 = vsel %vm1487, %v1342, %v813
      %v1521 = vsel %vm1487, %v1345, %v815
      %v1523 = vsel %vm1487, %v1348, %v817
      %v1525 = vsel %vm1487, %v1351, %v819
      %v1527 = vsel %vm1487, %v1354, %v821
      %v1529 = vsel %vm1487, %v1357, %v823
      %v1531 = vsel %vm1487, %v1360, %v825
      %v1533 = vsel %vm1487, %v1363, %v827
      %v1535 = vsel %vm1487, %v1366, %v829
      %v1537 = vsel %vm1487, %v1369, %v831
      %v1539 = vsel %vm1487, %v1372, %v833
      %v1541 = vsel %vm1487, %v1375, %v835
      %v1543 = vsel %vm1487, %v1378, %v837
      %v1545 = vsel %vm1487, %v1381, %v839
      %v1547 = vsel %vm1487, %v1384, %v841
      %v1549 = vsel %vm1487, %v1387, %v843
      %v1551 = vsel %vm1487, %v1390, %v845
      %v1553 = vsel %vm1487, %v1393, %v847
      %v1555 = vsel %vm1487, %v1396, %v849
      %v1557 = vsel %vm1487, %v1399, %v851
      %v1559 = vsel %vm1487, %v1402, %v853
      %v1561 = vsel %vm1487, %v1405, %v855
      %v1563 = vsel %vm1487, %v1408, %v857
      %v1565 = vsel %vm1487, %v1411, %v859
      %v1567 = vsel %vm1487, %v1414, %v861
      %v1569 = vsel %vm1487, %v1417, %v863
      %v1571 = vsel %vm1487, %v1420, %v865
      %v1573 = vsel %vm1487, %v1423, %v867
      %v1575 = vsel %vm1487, %v1426, %v869
      %v1577 = vsel %vm1487, %v1429, %v871
      %v1579 = vsel %vm1487, %v1432, %v873
      %v1581 = vsel %vm1487, %v1435, %v875
      %v1583 = vsel %vm1487, %v1438, %v877
      %v1585 = vsel %vm1487, %v1441, %v879
      %v1587 = vsel %vm1487, %v1444, %v881
      %v1589 = vsel %vm1487, %v1447, %v883
      %v1591 = vsel %vm1487, %v1450, %v885
      %v1593 = vsel %vm1487, %v1453, %v887
      %v1595 = vsel %vm1487, %v1456, %v889
      %v1597 = vsel %vm1487, %v1459, %v891
      %v1599 = vsel %vm1487, %v1462, %v893
      %v1601 = vsel %vm1487, %v1465, %v895
      %v1603 = vsel %vm1487, %v1468, %v897
      %v1605 = vsel %vm1487, %v1471, %v899
      %v1607 = vsel %vm1487, %v1474, %v901
      %v1609 = vsel %vm1487, %v1477, %v903
      %v1611 = vsel %vm1487, %v1480, %v905
      %v1613 = vsel %vm1487, %v1483, %v907
      %v1615 = vsel %vm1487, %v1486, %v909
      %vm1616 = vcmask 146432
      %v1618 = vsel %vm1616, %v1489, %v911
      %v1620 = vsel %vm1616, %v1491, %v913
      %v1622 = vsel %vm1616, %v1493, %v915
      %v1624 = vsel %vm1616, %v1495, %v917
      %v1626 = vsel %vm1616, %v1497, %v919
      %v1628 = vsel %vm1616, %v1499, %v921
      %v1630 = vsel %vm1616, %v1501, %v923
      %v1632 = vsel %vm1616, %v1503, %v925
      %v1634 = vsel %vm1616, %v1505, %v927
      %v1636 = vsel %vm1616, %v1507, %v929
      %v1638 = vsel %vm1616, %v1509, %v931
      %v1640 = vsel %vm1616, %v1511, %v933
      %v1642 = vsel %vm1616, %v1513, %v935
      %v1644 = vsel %vm1616, %v1515, %v937
      %v1646 = vsel %vm1616, %v1517, %v939
      %v1648 = vsel %vm1616, %v1519, %v941
      %v1650 = vsel %vm1616, %v1521, %v943
      %v1652 = vsel %vm1616, %v1523, %v945
      %v1654 = vsel %vm1616, %v1525, %v947
      %v1656 = vsel %vm1616, %v1527, %v949
      %v1658 = vsel %vm1616, %v1529, %v951
      %v1660 = vsel %vm1616, %v1531, %v953
      %v1662 = vsel %vm1616, %v1533, %v955
      %v1664 = vsel %vm1616, %v1535, %v957
      %v1666 = vsel %vm1616, %v1537, %v959
      %v1668 = vsel %vm1616, %v1539, %v961
      %v1670 = vsel %vm1616, %v1541, %v963
      %v1672 = vsel %vm1616, %v1543, %v965
      %v1674 = vsel %vm1616, %v1545, %v967
      %v1676 = vsel %vm1616, %v1547, %v969
      %v1678 = vsel %vm1616, %v1549, %v971
      %v1680 = vsel %vm1616, %v1551, %v973
      %v1682 = vsel %vm1616, %v1553, %v975
      %v1684 = vsel %vm1616, %v1555, %v977
      %v1686 = vsel %vm1616, %v1557, %v979
      %v1688 = vsel %vm1616, %v1559, %v981
      %v1690 = vsel %vm1616, %v1561, %v983
      %v1692 = vsel %vm1616, %v1563, %v985
      %v1694 = vsel %vm1616, %v1565, %v987
      %v1696 = vsel %vm1616, %v1567, %v989
      %v1698 = vsel %vm1616, %v1569, %v991
      %v1700 = vsel %vm1616, %v1571, %v993
      %v1702 = vsel %vm1616, %v1573, %v995
      %v1704 = vsel %vm1616, %v1575, %v997
      %v1706 = vsel %vm1616, %v1577, %v999
      %v1708 = vsel %vm1616, %v1579, %v1001
      %v1710 = vsel %vm1616, %v1581, %v1003
      %v1712 = vsel %vm1616, %v1583, %v1005
      %v1714 = vsel %vm1616, %v1585, %v1007
      %v1716 = vsel %vm1616, %v1587, %v1009
      %v1718 = vsel %vm1616, %v1589, %v1011
      %v1720 = vsel %vm1616, %v1591, %v1013
      %v1722 = vsel %vm1616, %v1593, %v1015
      %v1724 = vsel %vm1616, %v1595, %v1017
      %v1726 = vsel %vm1616, %v1597, %v1019
      %v1728 = vsel %vm1616, %v1599, %v1021
      %v1730 = vsel %vm1616, %v1601, %v1023
      %v1732 = vsel %vm1616, %v1603, %v1025
      %v1734 = vsel %vm1616, %v1605, %v1027
      %v1736 = vsel %vm1616, %v1607, %v1029
      %v1738 = vsel %vm1616, %v1609, %v1031
      %v1740 = vsel %vm1616, %v1611, %v1033
      %v1742 = vsel %vm1616, %v1613, %v1035
      %v1744 = vsel %vm1616, %v1615, %v1037
      %vm1745 = vcmask 195584
      %v1747 = vsel %vm1745, %v1618, %v1039
      %v1749 = vsel %vm1745, %v1620, %v1041
      %v1751 = vsel %vm1745, %v1622, %v1043
      %v1753 = vsel %vm1745, %v1624, %v1045
      %v1755 = vsel %vm1745, %v1626, %v1047
      %v1757 = vsel %vm1745, %v1628, %v1049
      %v1759 = vsel %vm1745, %v1630, %v1051
      %v1761 = vsel %vm1745, %v1632, %v1053
      %v1763 = vsel %vm1745, %v1634, %v1055
      %v1765 = vsel %vm1745, %v1636, %v1057
      %v1767 = vsel %vm1745, %v1638, %v1059
      %v1769 = vsel %vm1745, %v1640, %v1061
      %v1771 = vsel %vm1745, %v1642, %v1063
      %v1773 = vsel %vm1745, %v1644, %v1065
      %v1775 = vsel %vm1745, %v1646, %v1067
      %v1777 = vsel %vm1745, %v1648, %v1069
      %v1779 = vsel %vm1745, %v1650, %v1071
      %v1781 = vsel %vm1745, %v1652, %v1073
      %v1783 = vsel %vm1745, %v1654, %v1075
      %v1785 = vsel %vm1745, %v1656, %v1077
      %v1787 = vsel %vm1745, %v1658, %v1079
      %v1789 = vsel %vm1745, %v1660, %v1081
      %v1791 = vsel %vm1745, %v1662, %v1083
      %v1793 = vsel %vm1745, %v1664, %v1085
      %v1795 = vsel %vm1745, %v1666, %v1087
      %v1797 = vsel %vm1745, %v1668, %v1089
      %v1799 = vsel %vm1745, %v1670, %v1091
      %v1801 = vsel %vm1745, %v1672, %v1093
      %v1803 = vsel %vm1745, %v1674, %v1095
      %v1805 = vsel %vm1745, %v1676, %v1097
      %v1807 = vsel %vm1745, %v1678, %v1099
      %v1809 = vsel %vm1745, %v1680, %v1101
      %v1811 = vsel %vm1745, %v1682, %v1103
      %v1813 = vsel %vm1745, %v1684, %v1105
      %v1815 = vsel %vm1745, %v1686, %v1107
      %v1817 = vsel %vm1745, %v1688, %v1109
      %v1819 = vsel %vm1745, %v1690, %v1111
      %v1821 = vsel %vm1745, %v1692, %v1113
      %v1823 = vsel %vm1745, %v1694, %v1115
      %v1825 = vsel %vm1745, %v1696, %v1117
      %v1827 = vsel %vm1745, %v1698, %v1119
      %v1829 = vsel %vm1745, %v1700, %v1121
      %v1831 = vsel %vm1745, %v1702, %v1123
      %v1833 = vsel %vm1745, %v1704, %v1125
      %v1835 = vsel %vm1745, %v1706, %v1127
      %v1837 = vsel %vm1745, %v1708, %v1129
      %v1839 = vsel %vm1745, %v1710, %v1131
      %v1841 = vsel %vm1745, %v1712, %v1133
      %v1843 = vsel %vm1745, %v1714, %v1135
      %v1845 = vsel %vm1745, %v1716, %v1137
      %v1847 = vsel %vm1745, %v1718, %v1139
      %v1849 = vsel %vm1745, %v1720, %v1141
      %v1851 = vsel %vm1745, %v1722, %v1143
      %v1853 = vsel %vm1745, %v1724, %v1145
      %v1855 = vsel %vm1745, %v1726, %v1147
      %v1857 = vsel %vm1745, %v1728, %v1149
      %v1859 = vsel %vm1745, %v1730, %v1151
      %v1861 = vsel %vm1745, %v1732, %v1153
      %v1863 = vsel %vm1745, %v1734, %v1155
      %v1865 = vsel %vm1745, %v1736, %v1157
      %v1867 = vsel %vm1745, %v1738, %v1159
      %v1869 = vsel %vm1745, %v1740, %v1161
      %v1871 = vsel %vm1745, %v1742, %v1163
      %v1873 = vsel %vm1745, %v1744, %v1165
      %vm1874 = vcmask 244736
      %v1876 = vsel %vm1874, %v1747, %v1167
      %v1879 = vsel %vm1874, %v1749, %v1169
      %v1882 = vsel %vm1874, %v1751, %v1171
      %v1885 = vsel %vm1874, %v1753, %v1173
      %v1888 = vsel %vm1874, %v1755, %v1175
      %v1891 = vsel %vm1874, %v1757, %v1177
      %v1894 = vsel %vm1874, %v1759, %v1179
      %v1897 = vsel %vm1874, %v1761, %v1181
      %v1900 = vsel %vm1874, %v1763, %v1183
      %v1903 = vsel %vm1874, %v1765, %v1185
      %v1906 = vsel %vm1874, %v1767, %v1187
      %v1909 = vsel %vm1874, %v1769, %v1189
      %v1912 = vsel %vm1874, %v1771, %v1191
      %v1915 = vsel %vm1874, %v1773, %v1193
      %v1918 = vsel %vm1874, %v1775, %v1195
      %v1921 = vsel %vm1874, %v1777, %v1197
      %v1924 = vsel %vm1874, %v1779, %v1199
      %v1927 = vsel %vm1874, %v1781, %v1201
      %v1930 = vsel %vm1874, %v1783, %v1203
      %v1933 = vsel %vm1874, %v1785, %v1205
      %v1936 = vsel %vm1874, %v1787, %v1207
      %v1939 = vsel %vm1874, %v1789, %v1209
      %v1942 = vsel %vm1874, %v1791, %v1211
      %v1945 = vsel %vm1874, %v1793, %v1213
      %v1948 = vsel %vm1874, %v1795, %v1215
      %v1951 = vsel %vm1874, %v1797, %v1217
      %v1954 = vsel %vm1874, %v1799, %v1219
      %v1957 = vsel %vm1874, %v1801, %v1221
      %v1960 = vsel %vm1874, %v1803, %v1223
      %v1963 = vsel %vm1874, %v1805, %v1225
      %v1966 = vsel %vm1874, %v1807, %v1227
      %v1969 = vsel %vm1874, %v1809, %v1229
      %v1972 = vsel %vm1874, %v1811, %v1231
      %v1975 = vsel %vm1874, %v1813, %v1233
      %v1978 = vsel %vm1874, %v1815, %v1235
      %v1981 = vsel %vm1874, %v1817, %v1237
      %v1984 = vsel %vm1874, %v1819, %v1239
      %v1987 = vsel %vm1874, %v1821, %v1241
      %v1990 = vsel %vm1874, %v1823, %v1243
      %v1993 = vsel %vm1874, %v1825, %v1245
      %v1996 = vsel %vm1874, %v1827, %v1247
      %v1999 = vsel %vm1874, %v1829, %v1249
      %v2002 = vsel %vm1874, %v1831, %v1251
      %v2005 = vsel %vm1874, %v1833, %v1253
      %v2008 = vsel %vm1874, %v1835, %v1255
      %v2011 = vsel %vm1874, %v1837, %v1257
      %v2014 = vsel %vm1874, %v1839, %v1259
      %v2017 = vsel %vm1874, %v1841, %v1261
      %v2020 = vsel %vm1874, %v1843, %v1263
      %v2023 = vsel %vm1874, %v1845, %v1265
      %v2026 = vsel %vm1874, %v1847, %v1267
      %v2029 = vsel %vm1874, %v1849, %v1269
      %v2032 = vsel %vm1874, %v1851, %v1271
      %v2035 = vsel %vm1874, %v1853, %v1273
      %v2038 = vsel %vm1874, %v1855, %v1275
      %v2041 = vsel %vm1874, %v1857, %v1277
      %v2044 = vsel %vm1874, %v1859, %v1279
      %v2047 = vsel %vm1874, %v1861, %v1281
      %v2050 = vsel %vm1874, %v1863, %v1283
      %v2053 = vsel %vm1874, %v1865, %v1285
      %v2056 = vsel %vm1874, %v1867, %v1287
      %v2059 = vsel %vm1874, %v1869, %v1289
      %v2062 = vsel %vm1874, %v1871, %v1291
      %v2065 = vsel %vm1874, %v1873, %v1293
      %v2067 = vld [vmem:[%s2] sm:$0xff]
      %2069 = vset.pattern.permute.xlu0 0
      %2070 = vperm.xlu0 %2069, %v2067
      %v2071 = vpop.permute.xlu0 %2070
      %v2077 = vunpack.c.l.b16 %v174
      %v2078 = vunpack.c.h.b16 %v174
      %v2079 = vunpack.c.l.b16 %v175
      %v2080 = vunpack.c.h.b16 %v175
      %v2081 = vunpack.c.l.b16 %v176
      %v2082 = vunpack.c.h.b16 %v176
      %v2083 = vunpack.c.l.b16 %v177
      %v2084 = vunpack.c.h.b16 %v177
      %v2085 = vpack.c.b16 %v2077, %v2077
      %v2086 = vpack.c.b16 %v2078, %v2078
      %v2087 = vpack.c.b16 %v2079, %v2079
      %v2088 = vpack.c.b16 %v2080, %v2080
      %v2089 = vpack.c.b16 %v2081, %v2081
      %v2090 = vpack.c.b16 %v2082, %v2082
      %v2091 = vpack.c.b16 %v2083, %v2083
      %v2092 = vpack.c.b16 %v2084, %v2084
      %2101 = vmatpush.bf16.msra.mxu0 %v1897
      %2102 = vmatpush.bf16.msra.mxu0 %v1894
      %2103 = vmatpush.bf16.msra.mxu0 %v1891
      %2104 = vmatpush.bf16.msra.mxu0 %v1888
      %2105 = vmatpush.bf16.msra.mxu0 %v1885
      %2106 = vmatpush.bf16.msra.mxu0 %v1882
      %2107 = vmatpush.bf16.msra.mxu0 %v1879
      %2108 = vmatpush.bf16.msra.mxu0 %v1876
      %2109 = vmatmul.bf16.gmra.mxu0 %v2085
      %v2110 = vpop.f32.mrf.mxu0
      %v2111 = vadd.f32 %v2071, %v2110
      %v2112 = vpop.f32.mrf.mxu0
      %2113 = vdwg.mxu0
      %2114 = vmatpush.bf16.msra.mxu0 %v1921
      %2115 = vmatpush.bf16.msra.mxu0 %v1918
      %2116 = vmatpush.bf16.msra.mxu0 %v1915
      %2117 = vmatpush.bf16.msra.mxu0 %v1912
      %2118 = vmatpush.bf16.msra.mxu0 %v1909
      %2119 = vmatpush.bf16.msra.mxu0 %v1906
      %2120 = vmatpush.bf16.msra.mxu0 %v1903
      %2121 = vmatpush.bf16.msra.mxu0 %v1900
      %2122 = vmatmul.bf16.gmra.mxu0 %v2086
      %v2123 = vpop.f32.mrf.mxu0
      %v2124 = vadd.f32 %v2111, %v2123
      %v2125 = vpop.f32.mrf.mxu0
      %2126 = vdwg.mxu0
      %2127 = vmatpush.bf16.msra.mxu0 %v1945
      %2128 = vmatpush.bf16.msra.mxu0 %v1942
      %2129 = vmatpush.bf16.msra.mxu0 %v1939
      %2130 = vmatpush.bf16.msra.mxu0 %v1936
      %2131 = vmatpush.bf16.msra.mxu0 %v1933
      %2132 = vmatpush.bf16.msra.mxu0 %v1930
      %2133 = vmatpush.bf16.msra.mxu0 %v1927
      %2134 = vmatpush.bf16.msra.mxu0 %v1924
      %2135 = vmatmul.bf16.gmra.mxu0 %v2087
      %v2136 = vpop.f32.mrf.mxu0
      %v2137 = vadd.f32 %v2124, %v2136
      %v2138 = vpop.f32.mrf.mxu0
      %2139 = vdwg.mxu0
      %2140 = vmatpush.bf16.msra.mxu0 %v1969
      %2141 = vmatpush.bf16.msra.mxu0 %v1966
      %2142 = vmatpush.bf16.msra.mxu0 %v1963
      %2143 = vmatpush.bf16.msra.mxu0 %v1960
      %2144 = vmatpush.bf16.msra.mxu0 %v1957
      %2145 = vmatpush.bf16.msra.mxu0 %v1954
      %2146 = vmatpush.bf16.msra.mxu0 %v1951
      %2147 = vmatpush.bf16.msra.mxu0 %v1948
      %2148 = vmatmul.bf16.gmra.mxu0 %v2088
      %v2149 = vpop.f32.mrf.mxu0
      %v2150 = vadd.f32 %v2137, %v2149
      %v2151 = vpop.f32.mrf.mxu0
      %2152 = vdwg.mxu0
      %2153 = vmatpush.bf16.msra.mxu0 %v1993
      %2154 = vmatpush.bf16.msra.mxu0 %v1990
      %2155 = vmatpush.bf16.msra.mxu0 %v1987
      %2156 = vmatpush.bf16.msra.mxu0 %v1984
      %2157 = vmatpush.bf16.msra.mxu0 %v1981
      %2158 = vmatpush.bf16.msra.mxu0 %v1978
      %2159 = vmatpush.bf16.msra.mxu0 %v1975
      %2160 = vmatpush.bf16.msra.mxu0 %v1972
      %2161 = vmatmul.bf16.gmra.mxu0 %v2089
      %v2162 = vpop.f32.mrf.mxu0
      %v2163 = vadd.f32 %v2150, %v2162
      %v2164 = vpop.f32.mrf.mxu0
      %2165 = vdwg.mxu0
      %2166 = vmatpush.bf16.msra.mxu0 %v2017
      %2167 = vmatpush.bf16.msra.mxu0 %v2014
      %2168 = vmatpush.bf16.msra.mxu0 %v2011
      %2169 = vmatpush.bf16.msra.mxu0 %v2008
      %2170 = vmatpush.bf16.msra.mxu0 %v2005
      %2171 = vmatpush.bf16.msra.mxu0 %v2002
      %2172 = vmatpush.bf16.msra.mxu0 %v1999
      %2173 = vmatpush.bf16.msra.mxu0 %v1996
      %2174 = vmatmul.bf16.gmra.mxu0 %v2090
      %v2175 = vpop.f32.mrf.mxu0
      %v2176 = vadd.f32 %v2163, %v2175
      %v2177 = vpop.f32.mrf.mxu0
      %2178 = vdwg.mxu0
      %2179 = vmatpush.bf16.msra.mxu0 %v2041
      %2180 = vmatpush.bf16.msra.mxu0 %v2038
      %2181 = vmatpush.bf16.msra.mxu0 %v2035
      %2182 = vmatpush.bf16.msra.mxu0 %v2032
      %2183 = vmatpush.bf16.msra.mxu0 %v2029
      %2184 = vmatpush.bf16.msra.mxu0 %v2026
      %2185 = vmatpush.bf16.msra.mxu0 %v2023
      %2186 = vmatpush.bf16.msra.mxu0 %v2020
      %2187 = vmatmul.bf16.gmra.mxu0 %v2091
      %v2188 = vpop.f32.mrf.mxu0
      %v2189 = vadd.f32 %v2176, %v2188
      %v2190 = vpop.f32.mrf.mxu0
      %2191 = vdwg.mxu0
      %2192 = vmatpush.bf16.msra.mxu0 %v2065
      %2193 = vmatpush.bf16.msra.mxu0 %v2062
      %2194 = vmatpush.bf16.msra.mxu0 %v2059
      %2195 = vmatpush.bf16.msra.mxu0 %v2056
      %2196 = vmatpush.bf16.msra.mxu0 %v2053
      %2197 = vmatpush.bf16.msra.mxu0 %v2050
      %2198 = vmatpush.bf16.msra.mxu0 %v2047
      %2199 = vmatpush.bf16.msra.mxu0 %v2044
      %2200 = vmatmul.bf16.gmra.mxu0 %v2092
      %v2201 = vpop.f32.mrf.mxu0
      %v2202 = vadd.f32 %v2189, %v2201
      %v2203 = vpop.f32.mrf.mxu0
      %2204 = vdwg.mxu0
      %vm2205 = vcmask 293888
      %2206 = vst.msk [vmem:[%s173] sm:$0xff] %vm2205, %v2202
      %p2207 = scmp.lt.s32.totalorder %s14, 1
      %s2208 = scalar_select %p2207, %s14, 1
      %s2209 = smul.addr %s2208, 8
      %s2210 = scalar_lea.vmem %s3, %s2209
      // Predicated region
      $region33: #{pallas_forward.9} parent=31 // pred_check
        %p2211 = pneg %p100
      $region34: #{pallas_forward.9} parent=31 // pred_check_branch
        %2213 = sbr.rel (%p2211) target = $region36
      $region35: #{pallas_forward.9} parent=31 // pred_region
        _
      $region36: #{pallas_forward.9} parent=31 // pred_fallthru
        _
    $region32: #{pallas_forward.9} parent=5 // pred_fallthru
      _
    %p2214 = scmp.le.s32.totalorder 2, %s9
    // Predicated region
    $region37: #{pallas_forward.9} parent=5 // pred_check
      %p2215 = pneg %p2214
    $region38: #{pallas_forward.9} parent=5 // pred_check_branch
      %2217 = sbr.rel (%p2215) target = $region40
    $region39: #{pallas_forward.9} parent=5 // pred_region
      %s2218 = ssub.s32 %s9, 2
      // Predicated region
      $region41: #{pallas_forward.9} parent=39 // pred_check
        %p2219 = pneg %p106
      $region42: #{pallas_forward.9} parent=39 // pred_check_branch
        %2221 = sbr.rel (%p2219) target = $region44
      $region43: #{pallas_forward.9} parent=39 // pred_region
        %p2222 = scmp.lt.s32.totalorder %s15, 1
        %s2223 = scalar_select %p2222, %s15, 1
        %s2224 = smul.addr %s2223, 8
        %s2225 = scalar_lea.vmem %s3, %s2224
      $region44: #{pallas_forward.9} parent=39 // pred_fallthru
        _
    $region40: #{pallas_forward.9} parent=5 // pred_fallthru
      _
  $region6: #{pallas_forward.9} parent=0 // loop_footer
    %s13 = sadd.s32 1, %s9
  $region7: #{pallas_forward.9} parent=0 // loop_footer_branch
    %8 = sbr.rel target = $region3
  $region8: #{pallas_forward.9} parent=0 // loop_exit
    _

</llo_original>
